<compile_context>
chip_gen: v7x
topology: tpu7x:2x2x1
jax: 0.10.0
libtpu: 0.0.40
codegen_flags: <defaults>
</compile_context>

<pallas_src>
import functools
import math

import jax
import jax.numpy as jnp
from jax import lax
from jax.experimental import pallas as pl
from jax.experimental.pallas import tpu as pltpu

HIDDEN = 128
NUM_GRU_LAYERS = 4
# TODO(synk): layer_nums_nobi comes from KAN.train_kan (not provided); using
#             [128, 64, 1] so that sigmoid + squeeze(1) yields a (B,) vector.
LAYER_NUMS = [128, 64, 1]
KAN_GRID = 5    # pykan default grid size
KAN_K = 3       # pykan default spline order
N_BASIS = KAN_GRID + KAN_K
OUT_PAD = 128   # pad the final out_dim (=1) to a full lane width


def _vmem_spec():
    return pl.BlockSpec(memory_space=pltpu.MemorySpace.VMEM)


# --------------------------------------------------------------------------
# Uniform-grid B-spline basis (Cox-de Boor) with compile-time scalar knots.
# Returns N_BASIS arrays of shape x.shape, t-major ordering.
# --------------------------------------------------------------------------
def _spline_basis_list(x):
    h = 2.0 / KAN_GRID
    n_pts = KAN_GRID + 2 * KAN_K + 1
    knots = [-1.0 - KAN_K * h + j * h for j in range(n_pts)]
    basis = [jnp.where((x >= knots[j]) & (x < knots[j + 1]), 1.0, 0.0)
             for j in range(n_pts - 1)]
    for p in range(1, KAN_K + 1):
        inv = 1.0 / (p * h)   # uniform grid -> constant denominator
        basis = [((x - knots[j]) * basis[j]
                  + (knots[j + p + 1] - x) * basis[j + 1]) * inv
                 for j in range(n_pts - 1 - p)]
    return basis


# --------------------------------------------------------------------------
# Fused kernel: 4-layer GRU (wavefront) + KAN head + final sigmoid.
# refs = (x, wih0, whh0, bih0, bhh0, [w_stk,b_stk]*n_stk, kan*n_kan,
#         out, gx_scr)
# --------------------------------------------------------------------------
def _gru_kan_kernel(*refs, seq_len, batch, hidden, n_stk, n_kan):
    T, Bp, H = seq_len, batch, hidden
    L = n_stk + 1                                    # total GRU layers

    x_ref = refs[0]
    wih0_ref, whh0_ref, bih0_ref, bhh0_ref = refs[1:5]
    stk_refs = refs[5:5 + 2 * n_stk]
    kan_refs = refs[5 + 2 * n_stk:5 + 2 * n_stk + n_kan]
    out_ref = refs[5 + 2 * n_stk + n_kan]
    gx_scr = refs[5 + 2 * n_stk + n_kan + 1]         # (T*Bp, 3H) f32

    # Hoisted layer-0 input projection: one big MXU matmul over all T steps.
    gx_scr[...] = (jnp.dot(x_ref[...], wih0_ref[...],
                           preferred_element_type=jnp.float32) + bih0_ref[...])

    # Hoist weight loads and bias broadcasts out of the recurrent loops.
    whh0 = whh0_ref[...]                                       # (H, 3H) bf16
    bhh0_b = jnp.broadcast_to(bhh0_ref[...], (Bp, 3 * H))
    w_stk = [stk_refs[2 * l][...] for l in range(n_stk)]       # (2H, 4H) bf16
    b_stk_b = [jnp.broadcast_to(stk_refs[2 * l + 1][...], (Bp, 4 * H))
               for l in range(n_stk)]

    def gx_at(t):
        row = t * Bp
        if not isinstance(t, int):
            row = pl.multiple_of(row, Bp)
        return gx_scr[pl.ds(row, Bp), :]

    def cell0(t, h):
        # Layer 0: hoisted gx + per-step (Bp,H)x(H,3H) recurrent matmul.
        gx = gx_at(t)
        gh = jnp.dot(h.astype(jnp.bfloat16), whh0,
                     preferred_element_type=jnp.float32) + bhh0_b
        r = jax.nn.sigmoid(gx[:, 0:H] + gh[:, 0:H])
        z = jax.nn.sigmoid(gx[:, H:2 * H] + gh[:, H:2 * H])
        n = jnp.tanh(gx[:, 2 * H:3 * H] + r * gh[:, 2 * H:3 * H])
        return (1.0 - z) * n + z * h

    def cell_stk(l, h_below, h):
        # Layers 1..3: ONE fused (Bp,2H)x(2H,4H) matmul on [h_below | h].
        inp = jnp.concatenate([h_below, h], axis=1).astype(jnp.bfloat16)
        g = jnp.dot(inp, w_stk[l], preferred_element_type=jnp.float32) \
            + b_stk_b[l]
        r = jax.nn.sigmoid(g[:, 0:H])
        z = jax.nn.sigmoid(g[:, H:2 * H])
        n = jnp.tanh(g[:, 2 * H:3 * H] + r * g[:, 3 * H:4 * H])
        return (1.0 - z) * n + z * h

    def wave(hs, s, active):
        # All active layers read the PREVIOUS wavefront step's states.
        new = list(hs)
        if 0 in active:
            new[0] = cell0(s, hs[0])
        for l in range(1, L):
            if l in active:
                new[l] = cell_stk(l - 1, hs[l - 1], hs[l])
        return tuple(new)

    hs = tuple(jnp.zeros((Bp, H), jnp.float32) for _ in range(L))

    # Prologue: wavefront steps 0 .. L-2 (statically known active sets).
    for s in range(0, L - 1):
        active = [l for l in range(L) if 0 <= s - l <= T - 1]
        if active:
            hs = wave(hs, s, active)

    # Steady state: all layers active, s = L-1 .. T-1.
    if T >= L:
        steady_len = T - (L - 1)
        unroll = True if steady_len <= 8 else 2
        hs = lax.fori_loop(L - 1, T,
                           lambda s, carry: wave(carry, s, list(range(L))),
                           hs, unroll=unroll)

    # Epilogue: drain, s = T .. T+L-2.
    for s in range(max(T, L - 1), T + L - 1):
        active = [l for l in range(L) if 0 <= s - l <= T - 1]
        if active:
            hs = wave(hs, s, active)

    # KAN head on h_{top, T-1}: SiLU base + B-spline, one fused dot per layer.
    act = hs[L - 1]                                            # (Bp, H) f32
    for li in range(n_kan):
        base = act * jax.nn.sigmoid(act)                       # SiLU
        feat = jnp.concatenate([base] + _spline_basis_list(act), axis=1)
        act = jnp.dot(feat.astype(jnp.bfloat16), kan_refs[li][...],
                      preferred_element_type=jnp.float32)
    out_ref[...] = jax.nn.sigmoid(act)                         # (Bp, OUT_PAD)


# --------------------------------------------------------------------------
# Deterministic parameter initialization (PyTorch-like layouts, repacked)
# --------------------------------------------------------------------------
def init_params(key, feature_number):
    assert LAYER_NUMS[0] == HIDDEN
    H = HIDDEN
    std = 1.0 / math.sqrt(H)
    keys = iter(jax.random.split(key, 64))

    def u(shape, scale):
        return jax.random.uniform(next(keys), shape, jnp.float32, -scale, scale)

    # GRU layer 0: keep W_ih / W_hh separate (x-projection is hoisted).
    wih0 = u((3 * H, feature_number), std)     # (3H, F), gate order r|z|n
    whh0 = u((3 * H, H), std)
    b_ih0 = u((3 * H,), std)
    b_hh0 = u((3 * H,), std)
    gru0 = dict(wih_t=jnp.transpose(wih0).astype(jnp.bfloat16),   # (F, 3H)
                whh_t=jnp.transpose(whh0).astype(jnp.bfloat16),   # (H, 3H)
                b_ih=b_ih0.reshape(1, 3 * H).astype(jnp.float32),
                b_hh=b_hh0.reshape(1, 3 * H).astype(jnp.float32))

    # GRU layers 1..3: wavefront-stacked weights [W_ih ; W_hh] with column
    # layout [r(x+h) | z(x+h) | n_x | n_h] so each step is a single
    # (Bp, 2H) x (2H, 4H) matmul while keeping n = tanh(gx_n + r*gh_n) exact.
    gru_stk = []
    zeros_hh = jnp.zeros((H, H), jnp.float32)
    for _ in range(1, NUM_GRU_LAYERS):
        wih = u((3 * H, H), std)
        whh = u((3 * H, H), std)
        b_ih = u((3 * H,), std)
        b_hh = u((3 * H,), std)
        wih_t = jnp.transpose(wih)      # (H, 3H), cols r|z|n
        whh_t = jnp.transpose(whh)
        top = jnp.concatenate([wih_t[:, 0:H], wih_t[:, H:2 * H],
                               wih_t[:, 2 * H:3 * H], zeros_hh], axis=1)
        bot = jnp.concatenate([whh_t[:, 0:H], whh_t[:, H:2 * H],
                               zeros_hh, whh_t[:, 2 * H:3 * H]], axis=1)
        w = jnp.concatenate([top, bot], axis=0).astype(jnp.bfloat16)  # (2H, 4H)
        b = jnp.concatenate([b_ih[0:H] + b_hh[0:H],
                             b_ih[H:2 * H] + b_hh[H:2 * H],
                             b_ih[2 * H:3 * H],
                             b_hh[2 * H:3 * H]]).reshape(1, 4 * H)
        gru_stk.append(dict(w=w, b=b.astype(jnp.float32)))

    # KAN layers: stack [scale_base ; coef (t-major)] so kernel does one dot.
    kan = []
    n_layers = len(LAYER_NUMS) - 1
    for li in range(n_layers):
        in_dim, out_dim = LAYER_NUMS[li], LAYER_NUMS[li + 1]
        coef = 0.1 * jax.random.normal(next(keys), (in_dim, out_dim, N_BASIS),
                                       jnp.float32)
        scale_sp = jnp.ones((in_dim, out_dim), jnp.float32)
        scale_base = u((in_dim, out_dim), 1.0 / math.sqrt(in_dim))
        coef_mat = jnp.transpose(coef * scale_sp[:, :, None], (2, 0, 1)).reshape(
            N_BASIS * in_dim, out_dim)                         # rows = t*in_dim + i
        stacked = jnp.concatenate([scale_base, coef_mat], axis=0)
        if li == n_layers - 1:
            stacked = jnp.pad(stacked, ((0, 0), (0, OUT_PAD - out_dim)))
        kan.append(stacked.astype(jnp.bfloat16))

    return {'gru0': gru0, 'gru_stk': gru_stk, 'kan': kan}


# --------------------------------------------------------------------------
# Full forward pass
# --------------------------------------------------------------------------
def forward(params, x):
    # x: (B, T, F), batch-first like nn.GRU(batch_first=True)
    B, T, F = x.shape
    Bp = max(8, ((B + 7) // 8) * 8)                            # sublane-dense batch
    xs = jnp.transpose(x, (1, 0, 2))                           # (T, B, F)
    xs = jnp.pad(xs, ((0, 0), (0, Bp - B), (0, 0)))
    # Pass x to the kernel already in bf16 (matmul LHS dtype; halves VMEM/DMA).
    x_flat = xs.reshape(T * Bp, F).astype(jnp.bfloat16)        # row = t*Bp + b

    args = [x_flat,
            params['gru0']['wih_t'], params['gru0']['whh_t'],
            params['gru0']['b_ih'], params['gru0']['b_hh']]
    for lw in params['gru_stk']:
        args += [lw['w'], lw['b']]
    args += list(params['kan'])

    n_stk = len(params['gru_stk'])
    n_kan = len(params['kan'])
    kernel = functools.partial(_gru_kan_kernel, seq_len=T, batch=Bp,
                               hidden=HIDDEN, n_stk=n_stk, n_kan=n_kan)

    # Explicit scoped-VMEM limit sized to the real footprint (+ headroom),
    # so moderate T*Bp does not hit the 16/32 MiB default ceiling.
    scratch_bytes = T * Bp * 3 * HIDDEN * 4
    arg_bytes = sum(int(a.size) * a.dtype.itemsize for a in args)
    out_bytes = Bp * OUT_PAD * 4
    vmem_limit = int(min(100 << 20,
                         max(32 << 20,
                             2 * (arg_bytes + out_bytes + scratch_bytes)
                             + (4 << 20))))

    out = pl.pallas_call(
        kernel,
        out_shape=jax.ShapeDtypeStruct((Bp, OUT_PAD), jnp.float32),
        in_specs=[_vmem_spec()] * len(args),
        out_specs=_vmem_spec(),
        scratch_shapes=[pltpu.VMEM((T * Bp, 3 * HIDDEN), jnp.float32)],
        compiler_params=pltpu.CompilerParams(vmem_limit_bytes=vmem_limit),
    )(*args)
    return out[:B, 0]                                          # sigmoid(...).squeeze(1)


if __name__ == "__main__":
    key = jax.random.PRNGKey(0)
    pkey, xkey = jax.random.split(key)
    B, T, F = 2, 8, 16
    params = init_params(pkey, F)
    x = jax.random.normal(xkey, (B, T, F), jnp.float32)
    y = forward(params, x)
    y = jax.block_until_ready(y)
    assert y.shape == (B,)
    assert bool(jnp.all(jnp.isfinite(y)))
    print("KERNEL_OK")
</pallas_src>

<mosaic_0001>
module attributes {stable_mosaic.version = 11 : i64} {
  func.func @_gru_kan_kernel(%arg0: memref<64x16xbf16, #tpu.memory_space<vmem>>, %arg1: memref<16x384xbf16, #tpu.memory_space<vmem>>, %arg2: memref<128x384xbf16, #tpu.memory_space<vmem>>, %arg3: memref<1x384xf32, #tpu.memory_space<vmem>>, %arg4: memref<1x384xf32, #tpu.memory_space<vmem>>, %arg5: memref<256x512xbf16, #tpu.memory_space<vmem>>, %arg6: memref<1x512xf32, #tpu.memory_space<vmem>>, %arg7: memref<256x512xbf16, #tpu.memory_space<vmem>>, %arg8: memref<1x512xf32, #tpu.memory_space<vmem>>, %arg9: memref<256x512xbf16, #tpu.memory_space<vmem>>, %arg10: memref<1x512xf32, #tpu.memory_space<vmem>>, %arg11: memref<1152x64xbf16, #tpu.memory_space<vmem>>, %arg12: memref<576x128xbf16, #tpu.memory_space<vmem>>, %arg13: memref<8x128xf32, #tpu.memory_space<vmem>>, %arg14: memref<64x384xf32, #tpu.memory_space<vmem>>) attributes {dimension_semantics = [], scalar_prefetch = 0 : i64, scratch_operands = 1 : i64, tpu.core_type = #tpu.core_type<tc>} {
    %c0 = arith.constant 0 : index
    %c0_0 = arith.constant 0 : index
    %0 = vector.load %arg0[%c0, %c0_0] : memref<64x16xbf16, #tpu.memory_space<vmem>>, vector<64x16xbf16>
    %c0_1 = arith.constant 0 : index
    %c0_2 = arith.constant 0 : index
    %1 = vector.load %arg1[%c0_1, %c0_2] : memref<16x384xbf16, #tpu.memory_space<vmem>>, vector<16x384xbf16>
    %cst = arith.constant dense<0.000000e+00> : vector<64x384xf32>
    %2 = tpu.matmul %0, %1, %cst {dimension_numbers = #tpu.dot_dimension_numbers<[1], [0], [0], [1], [0, 0, 1, 1], [], []>} : vector<64x16xbf16>, vector<16x384xbf16>, vector<64x384xf32> -> vector<64x384xf32>
    %c0_3 = arith.constant 0 : index
    %c0_4 = arith.constant 0 : index
    %3 = vector.load %arg3[%c0_3, %c0_4] : memref<1x384xf32, #tpu.memory_space<vmem>>, vector<1x384xf32>
    %4 = vector.broadcast %3 : vector<1x384xf32> to vector<64x384xf32>
    %5 = arith.addf %2, %4 : vector<64x384xf32>
    %c0_5 = arith.constant 0 : index
    %c0_6 = arith.constant 0 : index
    %6 = vector.load %arg14[%c0_5, %c0_6] : memref<64x384xf32, #tpu.memory_space<vmem>>, vector<64x384xf32>
    tpu.vector_store %arg14[%c0_5, %c0_6], %5 {strides = array<i32>} : memref<64x384xf32, #tpu.memory_space<vmem>>, vector<64x384xf32>,
    %c0_7 = arith.constant 0 : index
    %c0_8 = arith.constant 0 : index
    %7 = vector.load %arg2[%c0_7, %c0_8] : memref<128x384xbf16, #tpu.memory_space<vmem>>, vector<128x384xbf16>
    %c0_9 = arith.constant 0 : index
    %c0_10 = arith.constant 0 : index
    %8 = vector.load %arg4[%c0_9, %c0_10] : memref<1x384xf32, #tpu.memory_space<vmem>>, vector<1x384xf32>
    %9 = vector.shape_cast %8 : vector<1x384xf32> to vector<1x384xf32>
    %10 = vector.broadcast %9 : vector<1x384xf32> to vector<8x384xf32>
    %c0_11 = arith.constant 0 : index
    %c0_12 = arith.constant 0 : index
    %11 = vector.load %arg5[%c0_11, %c0_12] : memref<256x512xbf16, #tpu.memory_space<vmem>>, vector<256x512xbf16>
    %c0_13 = arith.constant 0 : index
    %c0_14 = arith.constant 0 : index
    %12 = vector.load %arg7[%c0_13, %c0_14] : memref<256x512xbf16, #tpu.memory_space<vmem>>, vector<256x512xbf16>
    %c0_15 = arith.constant 0 : index
    %c0_16 = arith.constant 0 : index
    %13 = vector.load %arg9[%c0_15, %c0_16] : memref<256x512xbf16, #tpu.memory_space<vmem>>, vector<256x512xbf16>
    %c0_17 = arith.constant 0 : index
    %c0_18 = arith.constant 0 : index
    %14 = vector.load %arg6[%c0_17, %c0_18] : memref<1x512xf32, #tpu.memory_space<vmem>>, vector<1x512xf32>
    %15 = vector.shape_cast %14 : vector<1x512xf32> to vector<1x512xf32>
    %16 = vector.broadcast %15 : vector<1x512xf32> to vector<8x512xf32>
    %c0_19 = arith.constant 0 : index
    %c0_20 = arith.constant 0 : index
    %17 = vector.load %arg8[%c0_19, %c0_20] : memref<1x512xf32, #tpu.memory_space<vmem>>, vector<1x512xf32>
    %18 = vector.shape_cast %17 : vector<1x512xf32> to vector<1x512xf32>
    %19 = vector.broadcast %18 : vector<1x512xf32> to vector<8x512xf32>
    %c0_21 = arith.constant 0 : index
    %c0_22 = arith.constant 0 : index
    %20 = vector.load %arg10[%c0_21, %c0_22] : memref<1x512xf32, #tpu.memory_space<vmem>>, vector<1x512xf32>
    %21 = vector.shape_cast %20 : vector<1x512xf32> to vector<1x512xf32>
    %22 = vector.broadcast %21 : vector<1x512xf32> to vector<8x512xf32>
    %cst_23 = arith.constant 0.000000e+00 : f32
    %23 = vector.broadcast %cst_23 : f32 to vector<8x128xf32>
    %cst_24 = arith.constant 0.000000e+00 : f32
    %24 = vector.broadcast %cst_24 : f32 to vector<8x128xf32>
    %cst_25 = arith.constant 0.000000e+00 : f32
    %25 = vector.broadcast %cst_25 : f32 to vector<8x128xf32>
    %cst_26 = arith.constant 0.000000e+00 : f32
    %26 = vector.broadcast %cst_26 : f32 to vector<8x128xf32>
    %c0_27 = arith.constant 0 : index
    %c0_28 = arith.constant 0 : index
    %27 = vector.load %arg14[%c0_27, %c0_28] : memref<64x384xf32, #tpu.memory_space<vmem>>, vector<8x384xf32>
    %28 = arith.truncf %23 : vector<8x128xf32> to vector<8x128xbf16>
    %cst_29 = arith.constant dense<0.000000e+00> : vector<8x384xf32>
    %29 = tpu.matmul %28, %7, %cst_29 {dimension_numbers = #tpu.dot_dimension_numbers<[1], [0], [0], [1], [0, 0, 1, 1], [], []>} : vector<8x128xbf16>, vector<128x384xbf16>, vector<8x384xf32> -> vector<8x384xf32>
    %30 = arith.addf %29, %10 : vector<8x384xf32>
    %31 = vector.extract_strided_slice %27 {offsets = [0, 0], sizes = [8, 128], strides = [1, 1]} : vector<8x384xf32> to vector<8x128xf32>
    %32 = vector.extract_strided_slice %30 {offsets = [0, 0], sizes = [8, 128], strides = [1, 1]} : vector<8x384xf32> to vector<8x128xf32>
    %33 = arith.addf %31, %32 : vector<8x128xf32>
    %34 = arith.negf %33 : vector<8x128xf32>
    %35 = math.exp %34 : vector<8x128xf32>
    %cst_30 = arith.constant 1.000000e+00 : f32
    %36 = vector.broadcast %cst_30 : f32 to vector<8x128xf32>
    %37 = arith.addf %36, %35 : vector<8x128xf32>
    %38 = arith.divf %36, %37 : vector<8x128xf32>
    %39 = vector.extract_strided_slice %27 {offsets = [0, 128], sizes = [8, 128], strides = [1, 1]} : vector<8x384xf32> to vector<8x128xf32>
    %40 = vector.extract_strided_slice %30 {offsets = [0, 128], sizes = [8, 128], strides = [1, 1]} : vector<8x384xf32> to vector<8x128xf32>
    %41 = arith.addf %39, %40 : vector<8x128xf32>
    %42 = arith.negf %41 : vector<8x128xf32>
    %43 = math.exp %42 : vector<8x128xf32>
    %cst_31 = arith.constant 1.000000e+00 : f32
    %44 = vector.broadcast %cst_31 : f32 to vector<8x128xf32>
    %45 = arith.addf %44, %43 : vector<8x128xf32>
    %46 = arith.divf %44, %45 : vector<8x128xf32>
    %47 = vector.extract_strided_slice %27 {offsets = [0, 256], sizes = [8, 128], strides = [1, 1]} : vector<8x384xf32> to vector<8x128xf32>
    %48 = vector.extract_strided_slice %30 {offsets = [0, 256], sizes = [8, 128], strides = [1, 1]} : vector<8x384xf32> to vector<8x128xf32>
    %49 = arith.mulf %38, %48 : vector<8x128xf32>
    %50 = arith.addf %47, %49 : vector<8x128xf32>
    %51 = math.tanh %50 : vector<8x128xf32>
    %cst_32 = arith.constant 1.000000e+00 : f32
    %52 = vector.broadcast %cst_32 : f32 to vector<8x128xf32>
    %53 = arith.subf %52, %46 : vector<8x128xf32>
    %54 = arith.mulf %53, %51 : vector<8x128xf32>
    %55 = arith.mulf %46, %23 : vector<8x128xf32>
    %56 = arith.addf %54, %55 : vector<8x128xf32>
    %c8 = arith.constant 8 : index
    %c0_33 = arith.constant 0 : index
    %57 = vector.load %arg14[%c8, %c0_33] : memref<64x384xf32, #tpu.memory_space<vmem>>, vector<8x384xf32>
    %58 = arith.truncf %56 : vector<8x128xf32> to vector<8x128xbf16>
    %cst_34 = arith.constant dense<0.000000e+00> : vector<8x384xf32>
    %59 = tpu.matmul %58, %7, %cst_34 {dimension_numbers = #tpu.dot_dimension_numbers<[1], [0], [0], [1], [0, 0, 1, 1], [], []>} : vector<8x128xbf16>, vector<128x384xbf16>, vector<8x384xf32> -> vector<8x384xf32>
    %60 = arith.addf %59, %10 : vector<8x384xf32>
    %61 = vector.extract_strided_slice %57 {offsets = [0, 0], sizes = [8, 128], strides = [1, 1]} : vector<8x384xf32> to vector<8x128xf32>
    %62 = vector.extract_strided_slice %60 {offsets = [0, 0], sizes = [8, 128], strides = [1, 1]} : vector<8x384xf32> to vector<8x128xf32>
    %63 = arith.addf %61, %62 : vector<8x128xf32>
    %64 = arith.negf %63 : vector<8x128xf32>
    %65 = math.exp %64 : vector<8x128xf32>
    %cst_35 = arith.constant 1.000000e+00 : f32
    %66 = vector.broadcast %cst_35 : f32 to vector<8x128xf32>
    %67 = arith.addf %66, %65 : vector<8x128xf32>
    %68 = arith.divf %66, %67 : vector<8x128xf32>
    %69 = vector.extract_strided_slice %57 {offsets = [0, 128], sizes = [8, 128], strides = [1, 1]} : vector<8x384xf32> to vector<8x128xf32>
    %70 = vector.extract_strided_slice %60 {offsets = [0, 128], sizes = [8, 128], strides = [1, 1]} : vector<8x384xf32> to vector<8x128xf32>
    %71 = arith.addf %69, %70 : vector<8x128xf32>
    %72 = arith.negf %71 : vector<8x128xf32>
    %73 = math.exp %72 : vector<8x128xf32>
    %cst_36 = arith.constant 1.000000e+00 : f32
    %74 = vector.broadcast %cst_36 : f32 to vector<8x128xf32>
    %75 = arith.addf %74, %73 : vector<8x128xf32>
    %76 = arith.divf %74, %75 : vector<8x128xf32>
    %77 = vector.extract_strided_slice %57 {offsets = [0, 256], sizes = [8, 128], strides = [1, 1]} : vector<8x384xf32> to vector<8x128xf32>
    %78 = vector.extract_strided_slice %60 {offsets = [0, 256], sizes = [8, 128], strides = [1, 1]} : vector<8x384xf32> to vector<8x128xf32>
    %79 = arith.mulf %68, %78 : vector<8x128xf32>
    %80 = arith.addf %77, %79 : vector<8x128xf32>
    %81 = math.tanh %80 : vector<8x128xf32>
    %cst_37 = arith.constant 1.000000e+00 : f32
    %82 = vector.broadcast %cst_37 : f32 to vector<8x128xf32>
    %83 = arith.subf %82, %76 : vector<8x128xf32>
    %84 = arith.mulf %83, %81 : vector<8x128xf32>
    %85 = arith.mulf %76, %56 : vector<8x128xf32>
    %86 = arith.addf %84, %85 : vector<8x128xf32>
    %87 = tpu.concatenate %56, %24 in 1 : vector<8x128xf32>, vector<8x128xf32> -> vector<8x256xf32>
    %88 = arith.truncf %87 : vector<8x256xf32> to vector<8x256xbf16>
    %cst_38 = arith.constant dense<0.000000e+00> : vector<8x512xf32>
    %89 = tpu.matmul %88, %11, %cst_38 {dimension_numbers = #tpu.dot_dimension_numbers<[1], [0], [0], [1], [0, 0, 1, 1], [], []>} : vector<8x256xbf16>, vector<256x512xbf16>, vector<8x512xf32> -> vector<8x512xf32>
    %90 = arith.addf %89, %16 : vector<8x512xf32>
    %91 = vector.extract_strided_slice %90 {offsets = [0, 0], sizes = [8, 128], strides = [1, 1]} : vector<8x512xf32> to vector<8x128xf32>
    %92 = arith.negf %91 : vector<8x128xf32>
    %93 = math.exp %92 : vector<8x128xf32>
    %cst_39 = arith.constant 1.000000e+00 : f32
    %94 = vector.broadcast %cst_39 : f32 to vector<8x128xf32>
    %95 = arith.addf %94, %93 : vector<8x128xf32>
    %96 = arith.divf %94, %95 : vector<8x128xf32>
    %97 = vector.extract_strided_slice %90 {offsets = [0, 128], sizes = [8, 128], strides = [1, 1]} : vector<8x512xf32> to vector<8x128xf32>
    %98 = arith.negf %97 : vector<8x128xf32>
    %99 = math.exp %98 : vector<8x128xf32>
    %cst_40 = arith.constant 1.000000e+00 : f32
    %100 = vector.broadcast %cst_40 : f32 to vector<8x128xf32>
    %101 = arith.addf %100, %99 : vector<8x128xf32>
    %102 = arith.divf %100, %101 : vector<8x128xf32>
    %103 = vector.extract_strided_slice %90 {offsets = [0, 256], sizes = [8, 128], strides = [1, 1]} : vector<8x512xf32> to vector<8x128xf32>
    %104 = vector.extract_strided_slice %90 {offsets = [0, 384], sizes = [8, 128], strides = [1, 1]} : vector<8x512xf32> to vector<8x128xf32>
    %105 = arith.mulf %96, %104 : vector<8x128xf32>
    %106 = arith.addf %103, %105 : vector<8x128xf32>
    %107 = math.tanh %106 : vector<8x128xf32>
    %cst_41 = arith.constant 1.000000e+00 : f32
    %108 = vector.broadcast %cst_41 : f32 to vector<8x128xf32>
    %109 = arith.subf %108, %102 : vector<8x128xf32>
    %110 = arith.mulf %109, %107 : vector<8x128xf32>
    %111 = arith.mulf %102, %24 : vector<8x128xf32>
    %112 = arith.addf %110, %111 : vector<8x128xf32>
    %c16 = arith.constant 16 : index
    %c0_42 = arith.constant 0 : index
    %113 = vector.load %arg14[%c16, %c0_42] : memref<64x384xf32, #tpu.memory_space<vmem>>, vector<8x384xf32>
    %114 = arith.truncf %86 : vector<8x128xf32> to vector<8x128xbf16>
    %cst_43 = arith.constant dense<0.000000e+00> : vector<8x384xf32>
    %115 = tpu.matmul %114, %7, %cst_43 {dimension_numbers = #tpu.dot_dimension_numbers<[1], [0], [0], [1], [0, 0, 1, 1], [], []>} : vector<8x128xbf16>, vector<128x384xbf16>, vector<8x384xf32> -> vector<8x384xf32>
    %116 = arith.addf %115, %10 : vector<8x384xf32>
    %117 = vector.extract_strided_slice %113 {offsets = [0, 0], sizes = [8, 128], strides = [1, 1]} : vector<8x384xf32> to vector<8x128xf32>
    %118 = vector.extract_strided_slice %116 {offsets = [0, 0], sizes = [8, 128], strides = [1, 1]} : vector<8x384xf32> to vector<8x128xf32>
    %119 = arith.addf %117, %118 : vector<8x128xf32>
    %120 = arith.negf %119 : vector<8x128xf32>
    %121 = math.exp %120 : vector<8x128xf32>
    %cst_44 = arith.constant 1.000000e+00 : f32
    %122 = vector.broadcast %cst_44 : f32 to vector<8x128xf32>
    %123 = arith.addf %122, %121 : vector<8x128xf32>
    %124 = arith.divf %122, %123 : vector<8x128xf32>
    %125 = vector.extract_strided_slice %113 {offsets = [0, 128], sizes = [8, 128], strides = [1, 1]} : vector<8x384xf32> to vector<8x128xf32>
    %126 = vector.extract_strided_slice %116 {offsets = [0, 128], sizes = [8, 128], strides = [1, 1]} : vector<8x384xf32> to vector<8x128xf32>
    %127 = arith.addf %125, %126 : vector<8x128xf32>
    %128 = arith.negf %127 : vector<8x128xf32>
    %129 = math.exp %128 : vector<8x128xf32>
    %cst_45 = arith.constant 1.000000e+00 : f32
    %130 = vector.broadcast %cst_45 : f32 to vector<8x128xf32>
    %131 = arith.addf %130, %129 : vector<8x128xf32>
    %132 = arith.divf %130, %131 : vector<8x128xf32>
    %133 = vector.extract_strided_slice %113 {offsets = [0, 256], sizes = [8, 128], strides = [1, 1]} : vector<8x384xf32> to vector<8x128xf32>
    %134 = vector.extract_strided_slice %116 {offsets = [0, 256], sizes = [8, 128], strides = [1, 1]} : vector<8x384xf32> to vector<8x128xf32>
    %135 = arith.mulf %124, %134 : vector<8x128xf32>
    %136 = arith.addf %133, %135 : vector<8x128xf32>
    %137 = math.tanh %136 : vector<8x128xf32>
    %cst_46 = arith.constant 1.000000e+00 : f32
    %138 = vector.broadcast %cst_46 : f32 to vector<8x128xf32>
    %139 = arith.subf %138, %132 : vector<8x128xf32>
    %140 = arith.mulf %139, %137 : vector<8x128xf32>
    %141 = arith.mulf %132, %86 : vector<8x128xf32>
    %142 = arith.addf %140, %141 : vector<8x128xf32>
    %143 = tpu.concatenate %86, %112 in 1 : vector<8x128xf32>, vector<8x128xf32> -> vector<8x256xf32>
    %144 = arith.truncf %143 : vector<8x256xf32> to vector<8x256xbf16>
    %cst_47 = arith.constant dense<0.000000e+00> : vector<8x512xf32>
    %145 = tpu.matmul %144, %11, %cst_47 {dimension_numbers = #tpu.dot_dimension_numbers<[1], [0], [0], [1], [0, 0, 1, 1], [], []>} : vector<8x256xbf16>, vector<256x512xbf16>, vector<8x512xf32> -> vector<8x512xf32>
    %146 = arith.addf %145, %16 : vector<8x512xf32>
    %147 = vector.extract_strided_slice %146 {offsets = [0, 0], sizes = [8, 128], strides = [1, 1]} : vector<8x512xf32> to vector<8x128xf32>
    %148 = arith.negf %147 : vector<8x128xf32>
    %149 = math.exp %148 : vector<8x128xf32>
    %cst_48 = arith.constant 1.000000e+00 : f32
    %150 = vector.broadcast %cst_48 : f32 to vector<8x128xf32>
    %151 = arith.addf %150, %149 : vector<8x128xf32>
    %152 = arith.divf %150, %151 : vector<8x128xf32>
    %153 = vector.extract_strided_slice %146 {offsets = [0, 128], sizes = [8, 128], strides = [1, 1]} : vector<8x512xf32> to vector<8x128xf32>
    %154 = arith.negf %153 : vector<8x128xf32>
    %155 = math.exp %154 : vector<8x128xf32>
    %cst_49 = arith.constant 1.000000e+00 : f32
    %156 = vector.broadcast %cst_49 : f32 to vector<8x128xf32>
    %157 = arith.addf %156, %155 : vector<8x128xf32>
    %158 = arith.divf %156, %157 : vector<8x128xf32>
    %159 = vector.extract_strided_slice %146 {offsets = [0, 256], sizes = [8, 128], strides = [1, 1]} : vector<8x512xf32> to vector<8x128xf32>
    %160 = vector.extract_strided_slice %146 {offsets = [0, 384], sizes = [8, 128], strides = [1, 1]} : vector<8x512xf32> to vector<8x128xf32>
    %161 = arith.mulf %152, %160 : vector<8x128xf32>
    %162 = arith.addf %159, %161 : vector<8x128xf32>
    %163 = math.tanh %162 : vector<8x128xf32>
    %cst_50 = arith.constant 1.000000e+00 : f32
    %164 = vector.broadcast %cst_50 : f32 to vector<8x128xf32>
    %165 = arith.subf %164, %158 : vector<8x128xf32>
    %166 = arith.mulf %165, %163 : vector<8x128xf32>
    %167 = arith.mulf %158, %112 : vector<8x128xf32>
    %168 = arith.addf %166, %167 : vector<8x128xf32>
    %169 = tpu.concatenate %112, %25 in 1 : vector<8x128xf32>, vector<8x128xf32> -> vector<8x256xf32>
    %170 = arith.truncf %169 : vector<8x256xf32> to vector<8x256xbf16>
    %cst_51 = arith.constant dense<0.000000e+00> : vector<8x512xf32>
    %171 = tpu.matmul %170, %12, %cst_51 {dimension_numbers = #tpu.dot_dimension_numbers<[1], [0], [0], [1], [0, 0, 1, 1], [], []>} : vector<8x256xbf16>, vector<256x512xbf16>, vector<8x512xf32> -> vector<8x512xf32>
    %172 = arith.addf %171, %19 : vector<8x512xf32>
    %173 = vector.extract_strided_slice %172 {offsets = [0, 0], sizes = [8, 128], strides = [1, 1]} : vector<8x512xf32> to vector<8x128xf32>
    %174 = arith.negf %173 : vector<8x128xf32>
    %175 = math.exp %174 : vector<8x128xf32>
    %cst_52 = arith.constant 1.000000e+00 : f32
    %176 = vector.broadcast %cst_52 : f32 to vector<8x128xf32>
    %177 = arith.addf %176, %175 : vector<8x128xf32>
    %178 = arith.divf %176, %177 : vector<8x128xf32>
    %179 = vector.extract_strided_slice %172 {offsets = [0, 128], sizes = [8, 128], strides = [1, 1]} : vector<8x512xf32> to vector<8x128xf32>
    %180 = arith.negf %179 : vector<8x128xf32>
    %181 = math.exp %180 : vector<8x128xf32>
    %cst_53 = arith.constant 1.000000e+00 : f32
    %182 = vector.broadcast %cst_53 : f32 to vector<8x128xf32>
    %183 = arith.addf %182, %181 : vector<8x128xf32>
    %184 = arith.divf %182, %183 : vector<8x128xf32>
    %185 = vector.extract_strided_slice %172 {offsets = [0, 256], sizes = [8, 128], strides = [1, 1]} : vector<8x512xf32> to vector<8x128xf32>
    %186 = vector.extract_strided_slice %172 {offsets = [0, 384], sizes = [8, 128], strides = [1, 1]} : vector<8x512xf32> to vector<8x128xf32>
    %187 = arith.mulf %178, %186 : vector<8x128xf32>
    %188 = arith.addf %185, %187 : vector<8x128xf32>
    %189 = math.tanh %188 : vector<8x128xf32>
    %cst_54 = arith.constant 1.000000e+00 : f32
    %190 = vector.broadcast %cst_54 : f32 to vector<8x128xf32>
    %191 = arith.subf %190, %184 : vector<8x128xf32>
    %192 = arith.mulf %191, %189 : vector<8x128xf32>
    %193 = arith.mulf %184, %25 : vector<8x128xf32>
    %194 = arith.addf %192, %193 : vector<8x128xf32>
    %c3_i32 = arith.constant 3 : i32
    %c8_i32 = arith.constant 8 : i32
    %195 = arith.muli %c3_i32, %c8_i32 : i32
    %196 = tpu.assume_multiple %195, 8 : i32
    %197 = arith.index_cast %196 : i32 to index
    %c0_55 = arith.constant 0 : index
    %198 = vector.load %arg14[%197, %c0_55] : memref<64x384xf32, #tpu.memory_space<vmem>>, vector<8x384xf32>
    %199 = arith.truncf %142 : vector<8x128xf32> to vector<8x128xbf16>
    %cst_56 = arith.constant dense<0.000000e+00> : vector<8x384xf32>
    %200 = tpu.matmul %199, %7, %cst_56 {dimension_numbers = #tpu.dot_dimension_numbers<[1], [0], [0], [1], [0, 0, 1, 1], [], []>} : vector<8x128xbf16>, vector<128x384xbf16>, vector<8x384xf32> -> vector<8x384xf32>
    %201 = arith.addf %200, %10 : vector<8x384xf32>
    %202 = vector.extract_strided_slice %198 {offsets = [0, 0], sizes = [8, 128], strides = [1, 1]} : vector<8x384xf32> to vector<8x128xf32>
    %203 = vector.extract_strided_slice %201 {offsets = [0, 0], sizes = [8, 128], strides = [1, 1]} : vector<8x384xf32> to vector<8x128xf32>
    %204 = arith.addf %202, %203 : vector<8x128xf32>
    %205 = arith.negf %204 : vector<8x128xf32>
    %206 = math.exp %205 : vector<8x128xf32>
    %cst_57 = arith.constant 1.000000e+00 : f32
    %207 = vector.broadcast %cst_57 : f32 to vector<8x128xf32>
    %208 = arith.addf %207, %206 : vector<8x128xf32>
    %209 = arith.divf %207, %208 : vector<8x128xf32>
    %210 = vector.extract_strided_slice %198 {offsets = [0, 128], sizes = [8, 128], strides = [1, 1]} : vector<8x384xf32> to vector<8x128xf32>
    %211 = vector.extract_strided_slice %201 {offsets = [0, 128], sizes = [8, 128], strides = [1, 1]} : vector<8x384xf32> to vector<8x128xf32>
    %212 = arith.addf %210, %211 : vector<8x128xf32>
    %213 = arith.negf %212 : vector<8x128xf32>
    %214 = math.exp %213 : vector<8x128xf32>
    %cst_58 = arith.constant 1.000000e+00 : f32
    %215 = vector.broadcast %cst_58 : f32 to vector<8x128xf32>
    %216 = arith.addf %215, %214 : vector<8x128xf32>
    %217 = arith.divf %215, %216 : vector<8x128xf32>
    %218 = vector.extract_strided_slice %198 {offsets = [0, 256], sizes = [8, 128], strides = [1, 1]} : vector<8x384xf32> to vector<8x128xf32>
    %219 = vector.extract_strided_slice %201 {offsets = [0, 256], sizes = [8, 128], strides = [1, 1]} : vector<8x384xf32> to vector<8x128xf32>
    %220 = arith.mulf %209, %219 : vector<8x128xf32>
    %221 = arith.addf %218, %220 : vector<8x128xf32>
    %222 = math.tanh %221 : vector<8x128xf32>
    %cst_59 = arith.constant 1.000000e+00 : f32
    %223 = vector.broadcast %cst_59 : f32 to vector<8x128xf32>
    %224 = arith.subf %223, %217 : vector<8x128xf32>
    %225 = arith.mulf %224, %222 : vector<8x128xf32>
    %226 = arith.mulf %217, %142 : vector<8x128xf32>
    %227 = arith.addf %225, %226 : vector<8x128xf32>
    %228 = tpu.concatenate %142, %168 in 1 : vector<8x128xf32>, vector<8x128xf32> -> vector<8x256xf32>
    %229 = arith.truncf %228 : vector<8x256xf32> to vector<8x256xbf16>
    %cst_60 = arith.constant dense<0.000000e+00> : vector<8x512xf32>
    %230 = tpu.matmul %229, %11, %cst_60 {dimension_numbers = #tpu.dot_dimension_numbers<[1], [0], [0], [1], [0, 0, 1, 1], [], []>} : vector<8x256xbf16>, vector<256x512xbf16>, vector<8x512xf32> -> vector<8x512xf32>
    %231 = arith.addf %230, %16 : vector<8x512xf32>
    %232 = vector.extract_strided_slice %231 {offsets = [0, 0], sizes = [8, 128], strides = [1, 1]} : vector<8x512xf32> to vector<8x128xf32>
    %233 = arith.negf %232 : vector<8x128xf32>
    %234 = math.exp %233 : vector<8x128xf32>
    %cst_61 = arith.constant 1.000000e+00 : f32
    %235 = vector.broadcast %cst_61 : f32 to vector<8x128xf32>
    %236 = arith.addf %235, %234 : vector<8x128xf32>
    %237 = arith.divf %235, %236 : vector<8x128xf32>
    %238 = vector.extract_strided_slice %231 {offsets = [0, 128], sizes = [8, 128], strides = [1, 1]} : vector<8x512xf32> to vector<8x128xf32>
    %239 = arith.negf %238 : vector<8x128xf32>
    %240 = math.exp %239 : vector<8x128xf32>
    %cst_62 = arith.constant 1.000000e+00 : f32
    %241 = vector.broadcast %cst_62 : f32 to vector<8x128xf32>
    %242 = arith.addf %241, %240 : vector<8x128xf32>
    %243 = arith.divf %241, %242 : vector<8x128xf32>
    %244 = vector.extract_strided_slice %231 {offsets = [0, 256], sizes = [8, 128], strides = [1, 1]} : vector<8x512xf32> to vector<8x128xf32>
    %245 = vector.extract_strided_slice %231 {offsets = [0, 384], sizes = [8, 128], strides = [1, 1]} : vector<8x512xf32> to vector<8x128xf32>
    %246 = arith.mulf %237, %245 : vector<8x128xf32>
    %247 = arith.addf %244, %246 : vector<8x128xf32>
    %248 = math.tanh %247 : vector<8x128xf32>
    %cst_63 = arith.constant 1.000000e+00 : f32
    %249 = vector.broadcast %cst_63 : f32 to vector<8x128xf32>
    %250 = arith.subf %249, %243 : vector<8x128xf32>
    %251 = arith.mulf %250, %248 : vector<8x128xf32>
    %252 = arith.mulf %243, %168 : vector<8x128xf32>
    %253 = arith.addf %251, %252 : vector<8x128xf32>
    %254 = tpu.concatenate %168, %194 in 1 : vector<8x128xf32>, vector<8x128xf32> -> vector<8x256xf32>
    %255 = arith.truncf %254 : vector<8x256xf32> to vector<8x256xbf16>
    %cst_64 = arith.constant dense<0.000000e+00> : vector<8x512xf32>
    %256 = tpu.matmul %255, %12, %cst_64 {dimension_numbers = #tpu.dot_dimension_numbers<[1], [0], [0], [1], [0, 0, 1, 1], [], []>} : vector<8x256xbf16>, vector<256x512xbf16>, vector<8x512xf32> -> vector<8x512xf32>
    %257 = arith.addf %256, %19 : vector<8x512xf32>
    %258 = vector.extract_strided_slice %257 {offsets = [0, 0], sizes = [8, 128], strides = [1, 1]} : vector<8x512xf32> to vector<8x128xf32>
    %259 = arith.negf %258 : vector<8x128xf32>
    %260 = math.exp %259 : vector<8x128xf32>
    %cst_65 = arith.constant 1.000000e+00 : f32
    %261 = vector.broadcast %cst_65 : f32 to vector<8x128xf32>
    %262 = arith.addf %261, %260 : vector<8x128xf32>
    %263 = arith.divf %261, %262 : vector<8x128xf32>
    %264 = vector.extract_strided_slice %257 {offsets = [0, 128], sizes = [8, 128], strides = [1, 1]} : vector<8x512xf32> to vector<8x128xf32>
    %265 = arith.negf %264 : vector<8x128xf32>
    %266 = math.exp %265 : vector<8x128xf32>
    %cst_66 = arith.constant 1.000000e+00 : f32
    %267 = vector.broadcast %cst_66 : f32 to vector<8x128xf32>
    %268 = arith.addf %267, %266 : vector<8x128xf32>
    %269 = arith.divf %267, %268 : vector<8x128xf32>
    %270 = vector.extract_strided_slice %257 {offsets = [0, 256], sizes = [8, 128], strides = [1, 1]} : vector<8x512xf32> to vector<8x128xf32>
    %271 = vector.extract_strided_slice %257 {offsets = [0, 384], sizes = [8, 128], strides = [1, 1]} : vector<8x512xf32> to vector<8x128xf32>
    %272 = arith.mulf %263, %271 : vector<8x128xf32>
    %273 = arith.addf %270, %272 : vector<8x128xf32>
    %274 = math.tanh %273 : vector<8x128xf32>
    %cst_67 = arith.constant 1.000000e+00 : f32
    %275 = vector.broadcast %cst_67 : f32 to vector<8x128xf32>
    %276 = arith.subf %275, %269 : vector<8x128xf32>
    %277 = arith.mulf %276, %274 : vector<8x128xf32>
    %278 = arith.mulf %269, %194 : vector<8x128xf32>
    %279 = arith.addf %277, %278 : vector<8x128xf32>
    %280 = tpu.concatenate %194, %26 in 1 : vector<8x128xf32>, vector<8x128xf32> -> vector<8x256xf32>
    %281 = arith.truncf %280 : vector<8x256xf32> to vector<8x256xbf16>
    %cst_68 = arith.constant dense<0.000000e+00> : vector<8x512xf32>
    %282 = tpu.matmul %281, %13, %cst_68 {dimension_numbers = #tpu.dot_dimension_numbers<[1], [0], [0], [1], [0, 0, 1, 1], [], []>} : vector<8x256xbf16>, vector<256x512xbf16>, vector<8x512xf32> -> vector<8x512xf32>
    %283 = arith.addf %282, %22 : vector<8x512xf32>
    %284 = vector.extract_strided_slice %283 {offsets = [0, 0], sizes = [8, 128], strides = [1, 1]} : vector<8x512xf32> to vector<8x128xf32>
    %285 = arith.negf %284 : vector<8x128xf32>
    %286 = math.exp %285 : vector<8x128xf32>
    %cst_69 = arith.constant 1.000000e+00 : f32
    %287 = vector.broadcast %cst_69 : f32 to vector<8x128xf32>
    %288 = arith.addf %287, %286 : vector<8x128xf32>
    %289 = arith.divf %287, %288 : vector<8x128xf32>
    %290 = vector.extract_strided_slice %283 {offsets = [0, 128], sizes = [8, 128], strides = [1, 1]} : vector<8x512xf32> to vector<8x128xf32>
    %291 = arith.negf %290 : vector<8x128xf32>
    %292 = math.exp %291 : vector<8x128xf32>
    %cst_70 = arith.constant 1.000000e+00 : f32
    %293 = vector.broadcast %cst_70 : f32 to vector<8x128xf32>
    %294 = arith.addf %293, %292 : vector<8x128xf32>
    %295 = arith.divf %293, %294 : vector<8x128xf32>
    %296 = vector.extract_strided_slice %283 {offsets = [0, 256], sizes = [8, 128], strides = [1, 1]} : vector<8x512xf32> to vector<8x128xf32>
    %297 = vector.extract_strided_slice %283 {offsets = [0, 384], sizes = [8, 128], strides = [1, 1]} : vector<8x512xf32> to vector<8x128xf32>
    %298 = arith.mulf %289, %297 : vector<8x128xf32>
    %299 = arith.addf %296, %298 : vector<8x128xf32>
    %300 = math.tanh %299 : vector<8x128xf32>
    %cst_71 = arith.constant 1.000000e+00 : f32
    %301 = vector.broadcast %cst_71 : f32 to vector<8x128xf32>
    %302 = arith.subf %301, %295 : vector<8x128xf32>
    %303 = arith.mulf %302, %300 : vector<8x128xf32>
    %304 = arith.mulf %295, %26 : vector<8x128xf32>
    %305 = arith.addf %303, %304 : vector<8x128xf32>
    %c4_i32 = arith.constant 4 : i32
    %c8_i32_72 = arith.constant 8 : i32
    %306 = arith.muli %c4_i32, %c8_i32_72 : i32
    %307 = tpu.assume_multiple %306, 8 : i32
    %308 = arith.index_cast %307 : i32 to index
    %c0_73 = arith.constant 0 : index
    %309 = vector.load %arg14[%308, %c0_73] : memref<64x384xf32, #tpu.memory_space<vmem>>, vector<8x384xf32>
    %310 = arith.truncf %227 : vector<8x128xf32> to vector<8x128xbf16>
    %cst_74 = arith.constant dense<0.000000e+00> : vector<8x384xf32>
    %311 = tpu.matmul %310, %7, %cst_74 {dimension_numbers = #tpu.dot_dimension_numbers<[1], [0], [0], [1], [0, 0, 1, 1], [], []>} : vector<8x128xbf16>, vector<128x384xbf16>, vector<8x384xf32> -> vector<8x384xf32>
    %312 = arith.addf %311, %10 : vector<8x384xf32>
    %313 = vector.extract_strided_slice %309 {offsets = [0, 0], sizes = [8, 128], strides = [1, 1]} : vector<8x384xf32> to vector<8x128xf32>
    %314 = vector.extract_strided_slice %312 {offsets = [0, 0], sizes = [8, 128], strides = [1, 1]} : vector<8x384xf32> to vector<8x128xf32>
    %315 = arith.addf %313, %314 : vector<8x128xf32>
    %316 = arith.negf %315 : vector<8x128xf32>
    %317 = math.exp %316 : vector<8x128xf32>
    %cst_75 = arith.constant 1.000000e+00 : f32
    %318 = vector.broadcast %cst_75 : f32 to vector<8x128xf32>
    %319 = arith.addf %318, %317 : vector<8x128xf32>
    %320 = arith.divf %318, %319 : vector<8x128xf32>
    %321 = vector.extract_strided_slice %309 {offsets = [0, 128], sizes = [8, 128], strides = [1, 1]} : vector<8x384xf32> to vector<8x128xf32>
    %322 = vector.extract_strided_slice %312 {offsets = [0, 128], sizes = [8, 128], strides = [1, 1]} : vector<8x384xf32> to vector<8x128xf32>
    %323 = arith.addf %321, %322 : vector<8x128xf32>
    %324 = arith.negf %323 : vector<8x128xf32>
    %325 = math.exp %324 : vector<8x128xf32>
    %cst_76 = arith.constant 1.000000e+00 : f32
    %326 = vector.broadcast %cst_76 : f32 to vector<8x128xf32>
    %327 = arith.addf %326, %325 : vector<8x128xf32>
    %328 = arith.divf %326, %327 : vector<8x128xf32>
    %329 = vector.extract_strided_slice %309 {offsets = [0, 256], sizes = [8, 128], strides = [1, 1]} : vector<8x384xf32> to vector<8x128xf32>
    %330 = vector.extract_strided_slice %312 {offsets = [0, 256], sizes = [8, 128], strides = [1, 1]} : vector<8x384xf32> to vector<8x128xf32>
    %331 = arith.mulf %320, %330 : vector<8x128xf32>
    %332 = arith.addf %329, %331 : vector<8x128xf32>
    %333 = math.tanh %332 : vector<8x128xf32>
    %cst_77 = arith.constant 1.000000e+00 : f32
    %334 = vector.broadcast %cst_77 : f32 to vector<8x128xf32>
    %335 = arith.subf %334, %328 : vector<8x128xf32>
    %336 = arith.mulf %335, %333 : vector<8x128xf32>
    %337 = arith.mulf %328, %227 : vector<8x128xf32>
    %338 = arith.addf %336, %337 : vector<8x128xf32>
    %339 = tpu.concatenate %227, %253 in 1 : vector<8x128xf32>, vector<8x128xf32> -> vector<8x256xf32>
    %340 = arith.truncf %339 : vector<8x256xf32> to vector<8x256xbf16>
    %cst_78 = arith.constant dense<0.000000e+00> : vector<8x512xf32>
    %341 = tpu.matmul %340, %11, %cst_78 {dimension_numbers = #tpu.dot_dimension_numbers<[1], [0], [0], [1], [0, 0, 1, 1], [], []>} : vector<8x256xbf16>, vector<256x512xbf16>, vector<8x512xf32> -> vector<8x512xf32>
    %342 = arith.addf %341, %16 : vector<8x512xf32>
    %343 = vector.extract_strided_slice %342 {offsets = [0, 0], sizes = [8, 128], strides = [1, 1]} : vector<8x512xf32> to vector<8x128xf32>
    %344 = arith.negf %343 : vector<8x128xf32>
    %345 = math.exp %344 : vector<8x128xf32>
    %cst_79 = arith.constant 1.000000e+00 : f32
    %346 = vector.broadcast %cst_79 : f32 to vector<8x128xf32>
    %347 = arith.addf %346, %345 : vector<8x128xf32>
    %348 = arith.divf %346, %347 : vector<8x128xf32>
    %349 = vector.extract_strided_slice %342 {offsets = [0, 128], sizes = [8, 128], strides = [1, 1]} : vector<8x512xf32> to vector<8x128xf32>
    %350 = arith.negf %349 : vector<8x128xf32>
    %351 = math.exp %350 : vector<8x128xf32>
    %cst_80 = arith.constant 1.000000e+00 : f32
    %352 = vector.broadcast %cst_80 : f32 to vector<8x128xf32>
    %353 = arith.addf %352, %351 : vector<8x128xf32>
    %354 = arith.divf %352, %353 : vector<8x128xf32>
    %355 = vector.extract_strided_slice %342 {offsets = [0, 256], sizes = [8, 128], strides = [1, 1]} : vector<8x512xf32> to vector<8x128xf32>
    %356 = vector.extract_strided_slice %342 {offsets = [0, 384], sizes = [8, 128], strides = [1, 1]} : vector<8x512xf32> to vector<8x128xf32>
    %357 = arith.mulf %348, %356 : vector<8x128xf32>
    %358 = arith.addf %355, %357 : vector<8x128xf32>
    %359 = math.tanh %358 : vector<8x128xf32>
    %cst_81 = arith.constant 1.000000e+00 : f32
    %360 = vector.broadcast %cst_81 : f32 to vector<8x128xf32>
    %361 = arith.subf %360, %354 : vector<8x128xf32>
    %362 = arith.mulf %361, %359 : vector<8x128xf32>
    %363 = arith.mulf %354, %253 : vector<8x128xf32>
    %364 = arith.addf %362, %363 : vector<8x128xf32>
    %365 = tpu.concatenate %253, %279 in 1 : vector<8x128xf32>, vector<8x128xf32> -> vector<8x256xf32>
    %366 = arith.truncf %365 : vector<8x256xf32> to vector<8x256xbf16>
    %cst_82 = arith.constant dense<0.000000e+00> : vector<8x512xf32>
    %367 = tpu.matmul %366, %12, %cst_82 {dimension_numbers = #tpu.dot_dimension_numbers<[1], [0], [0], [1], [0, 0, 1, 1], [], []>} : vector<8x256xbf16>, vector<256x512xbf16>, vector<8x512xf32> -> vector<8x512xf32>
    %368 = arith.addf %367, %19 : vector<8x512xf32>
    %369 = vector.extract_strided_slice %368 {offsets = [0, 0], sizes = [8, 128], strides = [1, 1]} : vector<8x512xf32> to vector<8x128xf32>
    %370 = arith.negf %369 : vector<8x128xf32>
    %371 = math.exp %370 : vector<8x128xf32>
    %cst_83 = arith.constant 1.000000e+00 : f32
    %372 = vector.broadcast %cst_83 : f32 to vector<8x128xf32>
    %373 = arith.addf %372, %371 : vector<8x128xf32>
    %374 = arith.divf %372, %373 : vector<8x128xf32>
    %375 = vector.extract_strided_slice %368 {offsets = [0, 128], sizes = [8, 128], strides = [1, 1]} : vector<8x512xf32> to vector<8x128xf32>
    %376 = arith.negf %375 : vector<8x128xf32>
    %377 = math.exp %376 : vector<8x128xf32>
    %cst_84 = arith.constant 1.000000e+00 : f32
    %378 = vector.broadcast %cst_84 : f32 to vector<8x128xf32>
    %379 = arith.addf %378, %377 : vector<8x128xf32>
    %380 = arith.divf %378, %379 : vector<8x128xf32>
    %381 = vector.extract_strided_slice %368 {offsets = [0, 256], sizes = [8, 128], strides = [1, 1]} : vector<8x512xf32> to vector<8x128xf32>
    %382 = vector.extract_strided_slice %368 {offsets = [0, 384], sizes = [8, 128], strides = [1, 1]} : vector<8x512xf32> to vector<8x128xf32>
    %383 = arith.mulf %374, %382 : vector<8x128xf32>
    %384 = arith.addf %381, %383 : vector<8x128xf32>
    %385 = math.tanh %384 : vector<8x128xf32>
    %cst_85 = arith.constant 1.000000e+00 : f32
    %386 = vector.broadcast %cst_85 : f32 to vector<8x128xf32>
    %387 = arith.subf %386, %380 : vector<8x128xf32>
    %388 = arith.mulf %387, %385 : vector<8x128xf32>
    %389 = arith.mulf %380, %279 : vector<8x128xf32>
    %390 = arith.addf %388, %389 : vector<8x128xf32>
    %391 = tpu.concatenate %279, %305 in 1 : vector<8x128xf32>, vector<8x128xf32> -> vector<8x256xf32>
    %392 = arith.truncf %391 : vector<8x256xf32> to vector<8x256xbf16>
    %cst_86 = arith.constant dense<0.000000e+00> : vector<8x512xf32>
    %393 = tpu.matmul %392, %13, %cst_86 {dimension_numbers = #tpu.dot_dimension_numbers<[1], [0], [0], [1], [0, 0, 1, 1], [], []>} : vector<8x256xbf16>, vector<256x512xbf16>, vector<8x512xf32> -> vector<8x512xf32>
    %394 = arith.addf %393, %22 : vector<8x512xf32>
    %395 = vector.extract_strided_slice %394 {offsets = [0, 0], sizes = [8, 128], strides = [1, 1]} : vector<8x512xf32> to vector<8x128xf32>
    %396 = arith.negf %395 : vector<8x128xf32>
    %397 = math.exp %396 : vector<8x128xf32>
    %cst_87 = arith.constant 1.000000e+00 : f32
    %398 = vector.broadcast %cst_87 : f32 to vector<8x128xf32>
    %399 = arith.addf %398, %397 : vector<8x128xf32>
    %400 = arith.divf %398, %399 : vector<8x128xf32>
    %401 = vector.extract_strided_slice %394 {offsets = [0, 128], sizes = [8, 128], strides = [1, 1]} : vector<8x512xf32> to vector<8x128xf32>
    %402 = arith.negf %401 : vector<8x128xf32>
    %403 = math.exp %402 : vector<8x128xf32>
    %cst_88 = arith.constant 1.000000e+00 : f32
    %404 = vector.broadcast %cst_88 : f32 to vector<8x128xf32>
    %405 = arith.addf %404, %403 : vector<8x128xf32>
    %406 = arith.divf %404, %405 : vector<8x128xf32>
    %407 = vector.extract_strided_slice %394 {offsets = [0, 256], sizes = [8, 128], strides = [1, 1]} : vector<8x512xf32> to vector<8x128xf32>
    %408 = vector.extract_strided_slice %394 {offsets = [0, 384], sizes = [8, 128], strides = [1, 1]} : vector<8x512xf32> to vector<8x128xf32>
    %409 = arith.mulf %400, %408 : vector<8x128xf32>
    %410 = arith.addf %407, %409 : vector<8x128xf32>
    %411 = math.tanh %410 : vector<8x128xf32>
    %cst_89 = arith.constant 1.000000e+00 : f32
    %412 = vector.broadcast %cst_89 : f32 to vector<8x128xf32>
    %413 = arith.subf %412, %406 : vector<8x128xf32>
    %414 = arith.mulf %413, %411 : vector<8x128xf32>
    %415 = arith.mulf %406, %305 : vector<8x128xf32>
    %416 = arith.addf %414, %415 : vector<8x128xf32>
    %c5_i32 = arith.constant 5 : i32
    %c8_i32_90 = arith.constant 8 : i32
    %417 = arith.muli %c5_i32, %c8_i32_90 : i32
    %418 = tpu.assume_multiple %417, 8 : i32
    %419 = arith.index_cast %418 : i32 to index
    %c0_91 = arith.constant 0 : index
    %420 = vector.load %arg14[%419, %c0_91] : memref<64x384xf32, #tpu.memory_space<vmem>>, vector<8x384xf32>
    %421 = arith.truncf %338 : vector<8x128xf32> to vector<8x128xbf16>
    %cst_92 = arith.constant dense<0.000000e+00> : vector<8x384xf32>
    %422 = tpu.matmul %421, %7, %cst_92 {dimension_numbers = #tpu.dot_dimension_numbers<[1], [0], [0], [1], [0, 0, 1, 1], [], []>} : vector<8x128xbf16>, vector<128x384xbf16>, vector<8x384xf32> -> vector<8x384xf32>
    %423 = arith.addf %422, %10 : vector<8x384xf32>
    %424 = vector.extract_strided_slice %420 {offsets = [0, 0], sizes = [8, 128], strides = [1, 1]} : vector<8x384xf32> to vector<8x128xf32>
    %425 = vector.extract_strided_slice %423 {offsets = [0, 0], sizes = [8, 128], strides = [1, 1]} : vector<8x384xf32> to vector<8x128xf32>
    %426 = arith.addf %424, %425 : vector<8x128xf32>
    %427 = arith.negf %426 : vector<8x128xf32>
    %428 = math.exp %427 : vector<8x128xf32>
    %cst_93 = arith.constant 1.000000e+00 : f32
    %429 = vector.broadcast %cst_93 : f32 to vector<8x128xf32>
    %430 = arith.addf %429, %428 : vector<8x128xf32>
    %431 = arith.divf %429, %430 : vector<8x128xf32>
    %432 = vector.extract_strided_slice %420 {offsets = [0, 128], sizes = [8, 128], strides = [1, 1]} : vector<8x384xf32> to vector<8x128xf32>
    %433 = vector.extract_strided_slice %423 {offsets = [0, 128], sizes = [8, 128], strides = [1, 1]} : vector<8x384xf32> to vector<8x128xf32>
    %434 = arith.addf %432, %433 : vector<8x128xf32>
    %435 = arith.negf %434 : vector<8x128xf32>
    %436 = math.exp %435 : vector<8x128xf32>
    %cst_94 = arith.constant 1.000000e+00 : f32
    %437 = vector.broadcast %cst_94 : f32 to vector<8x128xf32>
    %438 = arith.addf %437, %436 : vector<8x128xf32>
    %439 = arith.divf %437, %438 : vector<8x128xf32>
    %440 = vector.extract_strided_slice %420 {offsets = [0, 256], sizes = [8, 128], strides = [1, 1]} : vector<8x384xf32> to vector<8x128xf32>
    %441 = vector.extract_strided_slice %423 {offsets = [0, 256], sizes = [8, 128], strides = [1, 1]} : vector<8x384xf32> to vector<8x128xf32>
    %442 = arith.mulf %431, %441 : vector<8x128xf32>
    %443 = arith.addf %440, %442 : vector<8x128xf32>
    %444 = math.tanh %443 : vector<8x128xf32>
    %cst_95 = arith.constant 1.000000e+00 : f32
    %445 = vector.broadcast %cst_95 : f32 to vector<8x128xf32>
    %446 = arith.subf %445, %439 : vector<8x128xf32>
    %447 = arith.mulf %446, %444 : vector<8x128xf32>
    %448 = arith.mulf %439, %338 : vector<8x128xf32>
    %449 = arith.addf %447, %448 : vector<8x128xf32>
    %450 = tpu.concatenate %338, %364 in 1 : vector<8x128xf32>, vector<8x128xf32> -> vector<8x256xf32>
    %451 = arith.truncf %450 : vector<8x256xf32> to vector<8x256xbf16>
    %cst_96 = arith.constant dense<0.000000e+00> : vector<8x512xf32>
    %452 = tpu.matmul %451, %11, %cst_96 {dimension_numbers = #tpu.dot_dimension_numbers<[1], [0], [0], [1], [0, 0, 1, 1], [], []>} : vector<8x256xbf16>, vector<256x512xbf16>, vector<8x512xf32> -> vector<8x512xf32>
    %453 = arith.addf %452, %16 : vector<8x512xf32>
    %454 = vector.extract_strided_slice %453 {offsets = [0, 0], sizes = [8, 128], strides = [1, 1]} : vector<8x512xf32> to vector<8x128xf32>
    %455 = arith.negf %454 : vector<8x128xf32>
    %456 = math.exp %455 : vector<8x128xf32>
    %cst_97 = arith.constant 1.000000e+00 : f32
    %457 = vector.broadcast %cst_97 : f32 to vector<8x128xf32>
    %458 = arith.addf %457, %456 : vector<8x128xf32>
    %459 = arith.divf %457, %458 : vector<8x128xf32>
    %460 = vector.extract_strided_slice %453 {offsets = [0, 128], sizes = [8, 128], strides = [1, 1]} : vector<8x512xf32> to vector<8x128xf32>
    %461 = arith.negf %460 : vector<8x128xf32>
    %462 = math.exp %461 : vector<8x128xf32>
    %cst_98 = arith.constant 1.000000e+00 : f32
    %463 = vector.broadcast %cst_98 : f32 to vector<8x128xf32>
    %464 = arith.addf %463, %462 : vector<8x128xf32>
    %465 = arith.divf %463, %464 : vector<8x128xf32>
    %466 = vector.extract_strided_slice %453 {offsets = [0, 256], sizes = [8, 128], strides = [1, 1]} : vector<8x512xf32> to vector<8x128xf32>
    %467 = vector.extract_strided_slice %453 {offsets = [0, 384], sizes = [8, 128], strides = [1, 1]} : vector<8x512xf32> to vector<8x128xf32>
    %468 = arith.mulf %459, %467 : vector<8x128xf32>
    %469 = arith.addf %466, %468 : vector<8x128xf32>
    %470 = math.tanh %469 : vector<8x128xf32>
    %cst_99 = arith.constant 1.000000e+00 : f32
    %471 = vector.broadcast %cst_99 : f32 to vector<8x128xf32>
    %472 = arith.subf %471, %465 : vector<8x128xf32>
    %473 = arith.mulf %472, %470 : vector<8x128xf32>
    %474 = arith.mulf %465, %364 : vector<8x128xf32>
    %475 = arith.addf %473, %474 : vector<8x128xf32>
    %476 = tpu.concatenate %364, %390 in 1 : vector<8x128xf32>, vector<8x128xf32> -> vector<8x256xf32>
    %477 = arith.truncf %476 : vector<8x256xf32> to vector<8x256xbf16>
    %cst_100 = arith.constant dense<0.000000e+00> : vector<8x512xf32>
    %478 = tpu.matmul %477, %12, %cst_100 {dimension_numbers = #tpu.dot_dimension_numbers<[1], [0], [0], [1], [0, 0, 1, 1], [], []>} : vector<8x256xbf16>, vector<256x512xbf16>, vector<8x512xf32> -> vector<8x512xf32>
    %479 = arith.addf %478, %19 : vector<8x512xf32>
    %480 = vector.extract_strided_slice %479 {offsets = [0, 0], sizes = [8, 128], strides = [1, 1]} : vector<8x512xf32> to vector<8x128xf32>
    %481 = arith.negf %480 : vector<8x128xf32>
    %482 = math.exp %481 : vector<8x128xf32>
    %cst_101 = arith.constant 1.000000e+00 : f32
    %483 = vector.broadcast %cst_101 : f32 to vector<8x128xf32>
    %484 = arith.addf %483, %482 : vector<8x128xf32>
    %485 = arith.divf %483, %484 : vector<8x128xf32>
    %486 = vector.extract_strided_slice %479 {offsets = [0, 128], sizes = [8, 128], strides = [1, 1]} : vector<8x512xf32> to vector<8x128xf32>
    %487 = arith.negf %486 : vector<8x128xf32>
    %488 = math.exp %487 : vector<8x128xf32>
    %cst_102 = arith.constant 1.000000e+00 : f32
    %489 = vector.broadcast %cst_102 : f32 to vector<8x128xf32>
    %490 = arith.addf %489, %488 : vector<8x128xf32>
    %491 = arith.divf %489, %490 : vector<8x128xf32>
    %492 = vector.extract_strided_slice %479 {offsets = [0, 256], sizes = [8, 128], strides = [1, 1]} : vector<8x512xf32> to vector<8x128xf32>
    %493 = vector.extract_strided_slice %479 {offsets = [0, 384], sizes = [8, 128], strides = [1, 1]} : vector<8x512xf32> to vector<8x128xf32>
    %494 = arith.mulf %485, %493 : vector<8x128xf32>
    %495 = arith.addf %492, %494 : vector<8x128xf32>
    %496 = math.tanh %495 : vector<8x128xf32>
    %cst_103 = arith.constant 1.000000e+00 : f32
    %497 = vector.broadcast %cst_103 : f32 to vector<8x128xf32>
    %498 = arith.subf %497, %491 : vector<8x128xf32>
    %499 = arith.mulf %498, %496 : vector<8x128xf32>
    %500 = arith.mulf %491, %390 : vector<8x128xf32>
    %501 = arith.addf %499, %500 : vector<8x128xf32>
    %502 = tpu.concatenate %390, %416 in 1 : vector<8x128xf32>, vector<8x128xf32> -> vector<8x256xf32>
    %503 = arith.truncf %502 : vector<8x256xf32> to vector<8x256xbf16>
    %cst_104 = arith.constant dense<0.000000e+00> : vector<8x512xf32>
    %504 = tpu.matmul %503, %13, %cst_104 {dimension_numbers = #tpu.dot_dimension_numbers<[1], [0], [0], [1], [0, 0, 1, 1], [], []>} : vector<8x256xbf16>, vector<256x512xbf16>, vector<8x512xf32> -> vector<8x512xf32>
    %505 = arith.addf %504, %22 : vector<8x512xf32>
    %506 = vector.extract_strided_slice %505 {offsets = [0, 0], sizes = [8, 128], strides = [1, 1]} : vector<8x512xf32> to vector<8x128xf32>
    %507 = arith.negf %506 : vector<8x128xf32>
    %508 = math.exp %507 : vector<8x128xf32>
    %cst_105 = arith.constant 1.000000e+00 : f32
    %509 = vector.broadcast %cst_105 : f32 to vector<8x128xf32>
    %510 = arith.addf %509, %508 : vector<8x128xf32>
    %511 = arith.divf %509, %510 : vector<8x128xf32>
    %512 = vector.extract_strided_slice %505 {offsets = [0, 128], sizes = [8, 128], strides = [1, 1]} : vector<8x512xf32> to vector<8x128xf32>
    %513 = arith.negf %512 : vector<8x128xf32>
    %514 = math.exp %513 : vector<8x128xf32>
    %cst_106 = arith.constant 1.000000e+00 : f32
    %515 = vector.broadcast %cst_106 : f32 to vector<8x128xf32>
    %516 = arith.addf %515, %514 : vector<8x128xf32>
    %517 = arith.divf %515, %516 : vector<8x128xf32>
    %518 = vector.extract_strided_slice %505 {offsets = [0, 256], sizes = [8, 128], strides = [1, 1]} : vector<8x512xf32> to vector<8x128xf32>
    %519 = vector.extract_strided_slice %505 {offsets = [0, 384], sizes = [8, 128], strides = [1, 1]} : vector<8x512xf32> to vector<8x128xf32>
    %520 = arith.mulf %511, %519 : vector<8x128xf32>
    %521 = arith.addf %518, %520 : vector<8x128xf32>
    %522 = math.tanh %521 : vector<8x128xf32>
    %cst_107 = arith.constant 1.000000e+00 : f32
    %523 = vector.broadcast %cst_107 : f32 to vector<8x128xf32>
    %524 = arith.subf %523, %517 : vector<8x128xf32>
    %525 = arith.mulf %524, %522 : vector<8x128xf32>
    %526 = arith.mulf %517, %416 : vector<8x128xf32>
    %527 = arith.addf %525, %526 : vector<8x128xf32>
    %c6_i32 = arith.constant 6 : i32
    %c8_i32_108 = arith.constant 8 : i32
    %528 = arith.muli %c6_i32, %c8_i32_108 : i32
    %529 = tpu.assume_multiple %528, 8 : i32
    %530 = arith.index_cast %529 : i32 to index
    %c0_109 = arith.constant 0 : index
    %531 = vector.load %arg14[%530, %c0_109] : memref<64x384xf32, #tpu.memory_space<vmem>>, vector<8x384xf32>
    %532 = arith.truncf %449 : vector<8x128xf32> to vector<8x128xbf16>
    %cst_110 = arith.constant dense<0.000000e+00> : vector<8x384xf32>
    %533 = tpu.matmul %532, %7, %cst_110 {dimension_numbers = #tpu.dot_dimension_numbers<[1], [0], [0], [1], [0, 0, 1, 1], [], []>} : vector<8x128xbf16>, vector<128x384xbf16>, vector<8x384xf32> -> vector<8x384xf32>
    %534 = arith.addf %533, %10 : vector<8x384xf32>
    %535 = vector.extract_strided_slice %531 {offsets = [0, 0], sizes = [8, 128], strides = [1, 1]} : vector<8x384xf32> to vector<8x128xf32>
    %536 = vector.extract_strided_slice %534 {offsets = [0, 0], sizes = [8, 128], strides = [1, 1]} : vector<8x384xf32> to vector<8x128xf32>
    %537 = arith.addf %535, %536 : vector<8x128xf32>
    %538 = arith.negf %537 : vector<8x128xf32>
    %539 = math.exp %538 : vector<8x128xf32>
    %cst_111 = arith.constant 1.000000e+00 : f32
    %540 = vector.broadcast %cst_111 : f32 to vector<8x128xf32>
    %541 = arith.addf %540, %539 : vector<8x128xf32>
    %542 = arith.divf %540, %541 : vector<8x128xf32>
    %543 = vector.extract_strided_slice %531 {offsets = [0, 128], sizes = [8, 128], strides = [1, 1]} : vector<8x384xf32> to vector<8x128xf32>
    %544 = vector.extract_strided_slice %534 {offsets = [0, 128], sizes = [8, 128], strides = [1, 1]} : vector<8x384xf32> to vector<8x128xf32>
    %545 = arith.addf %543, %544 : vector<8x128xf32>
    %546 = arith.negf %545 : vector<8x128xf32>
    %547 = math.exp %546 : vector<8x128xf32>
    %cst_112 = arith.constant 1.000000e+00 : f32
    %548 = vector.broadcast %cst_112 : f32 to vector<8x128xf32>
    %549 = arith.addf %548, %547 : vector<8x128xf32>
    %550 = arith.divf %548, %549 : vector<8x128xf32>
    %551 = vector.extract_strided_slice %531 {offsets = [0, 256], sizes = [8, 128], strides = [1, 1]} : vector<8x384xf32> to vector<8x128xf32>
    %552 = vector.extract_strided_slice %534 {offsets = [0, 256], sizes = [8, 128], strides = [1, 1]} : vector<8x384xf32> to vector<8x128xf32>
    %553 = arith.mulf %542, %552 : vector<8x128xf32>
    %554 = arith.addf %551, %553 : vector<8x128xf32>
    %555 = math.tanh %554 : vector<8x128xf32>
    %cst_113 = arith.constant 1.000000e+00 : f32
    %556 = vector.broadcast %cst_113 : f32 to vector<8x128xf32>
    %557 = arith.subf %556, %550 : vector<8x128xf32>
    %558 = arith.mulf %557, %555 : vector<8x128xf32>
    %559 = arith.mulf %550, %449 : vector<8x128xf32>
    %560 = arith.addf %558, %559 : vector<8x128xf32>
    %561 = tpu.concatenate %449, %475 in 1 : vector<8x128xf32>, vector<8x128xf32> -> vector<8x256xf32>
    %562 = arith.truncf %561 : vector<8x256xf32> to vector<8x256xbf16>
    %cst_114 = arith.constant dense<0.000000e+00> : vector<8x512xf32>
    %563 = tpu.matmul %562, %11, %cst_114 {dimension_numbers = #tpu.dot_dimension_numbers<[1], [0], [0], [1], [0, 0, 1, 1], [], []>} : vector<8x256xbf16>, vector<256x512xbf16>, vector<8x512xf32> -> vector<8x512xf32>
    %564 = arith.addf %563, %16 : vector<8x512xf32>
    %565 = vector.extract_strided_slice %564 {offsets = [0, 0], sizes = [8, 128], strides = [1, 1]} : vector<8x512xf32> to vector<8x128xf32>
    %566 = arith.negf %565 : vector<8x128xf32>
    %567 = math.exp %566 : vector<8x128xf32>
    %cst_115 = arith.constant 1.000000e+00 : f32
    %568 = vector.broadcast %cst_115 : f32 to vector<8x128xf32>
    %569 = arith.addf %568, %567 : vector<8x128xf32>
    %570 = arith.divf %568, %569 : vector<8x128xf32>
    %571 = vector.extract_strided_slice %564 {offsets = [0, 128], sizes = [8, 128], strides = [1, 1]} : vector<8x512xf32> to vector<8x128xf32>
    %572 = arith.negf %571 : vector<8x128xf32>
    %573 = math.exp %572 : vector<8x128xf32>
    %cst_116 = arith.constant 1.000000e+00 : f32
    %574 = vector.broadcast %cst_116 : f32 to vector<8x128xf32>
    %575 = arith.addf %574, %573 : vector<8x128xf32>
    %576 = arith.divf %574, %575 : vector<8x128xf32>
    %577 = vector.extract_strided_slice %564 {offsets = [0, 256], sizes = [8, 128], strides = [1, 1]} : vector<8x512xf32> to vector<8x128xf32>
    %578 = vector.extract_strided_slice %564 {offsets = [0, 384], sizes = [8, 128], strides = [1, 1]} : vector<8x512xf32> to vector<8x128xf32>
    %579 = arith.mulf %570, %578 : vector<8x128xf32>
    %580 = arith.addf %577, %579 : vector<8x128xf32>
    %581 = math.tanh %580 : vector<8x128xf32>
    %cst_117 = arith.constant 1.000000e+00 : f32
    %582 = vector.broadcast %cst_117 : f32 to vector<8x128xf32>
    %583 = arith.subf %582, %576 : vector<8x128xf32>
    %584 = arith.mulf %583, %581 : vector<8x128xf32>
    %585 = arith.mulf %576, %475 : vector<8x128xf32>
    %586 = arith.addf %584, %585 : vector<8x128xf32>
    %587 = tpu.concatenate %475, %501 in 1 : vector<8x128xf32>, vector<8x128xf32> -> vector<8x256xf32>
    %588 = arith.truncf %587 : vector<8x256xf32> to vector<8x256xbf16>
    %cst_118 = arith.constant dense<0.000000e+00> : vector<8x512xf32>
    %589 = tpu.matmul %588, %12, %cst_118 {dimension_numbers = #tpu.dot_dimension_numbers<[1], [0], [0], [1], [0, 0, 1, 1], [], []>} : vector<8x256xbf16>, vector<256x512xbf16>, vector<8x512xf32> -> vector<8x512xf32>
    %590 = arith.addf %589, %19 : vector<8x512xf32>
    %591 = vector.extract_strided_slice %590 {offsets = [0, 0], sizes = [8, 128], strides = [1, 1]} : vector<8x512xf32> to vector<8x128xf32>
    %592 = arith.negf %591 : vector<8x128xf32>
    %593 = math.exp %592 : vector<8x128xf32>
    %cst_119 = arith.constant 1.000000e+00 : f32
    %594 = vector.broadcast %cst_119 : f32 to vector<8x128xf32>
    %595 = arith.addf %594, %593 : vector<8x128xf32>
    %596 = arith.divf %594, %595 : vector<8x128xf32>
    %597 = vector.extract_strided_slice %590 {offsets = [0, 128], sizes = [8, 128], strides = [1, 1]} : vector<8x512xf32> to vector<8x128xf32>
    %598 = arith.negf %597 : vector<8x128xf32>
    %599 = math.exp %598 : vector<8x128xf32>
    %cst_120 = arith.constant 1.000000e+00 : f32
    %600 = vector.broadcast %cst_120 : f32 to vector<8x128xf32>
    %601 = arith.addf %600, %599 : vector<8x128xf32>
    %602 = arith.divf %600, %601 : vector<8x128xf32>
    %603 = vector.extract_strided_slice %590 {offsets = [0, 256], sizes = [8, 128], strides = [1, 1]} : vector<8x512xf32> to vector<8x128xf32>
    %604 = vector.extract_strided_slice %590 {offsets = [0, 384], sizes = [8, 128], strides = [1, 1]} : vector<8x512xf32> to vector<8x128xf32>
    %605 = arith.mulf %596, %604 : vector<8x128xf32>
    %606 = arith.addf %603, %605 : vector<8x128xf32>
    %607 = math.tanh %606 : vector<8x128xf32>
    %cst_121 = arith.constant 1.000000e+00 : f32
    %608 = vector.broadcast %cst_121 : f32 to vector<8x128xf32>
    %609 = arith.subf %608, %602 : vector<8x128xf32>
    %610 = arith.mulf %609, %607 : vector<8x128xf32>
    %611 = arith.mulf %602, %501 : vector<8x128xf32>
    %612 = arith.addf %610, %611 : vector<8x128xf32>
    %613 = tpu.concatenate %501, %527 in 1 : vector<8x128xf32>, vector<8x128xf32> -> vector<8x256xf32>
    %614 = arith.truncf %613 : vector<8x256xf32> to vector<8x256xbf16>
    %cst_122 = arith.constant dense<0.000000e+00> : vector<8x512xf32>
    %615 = tpu.matmul %614, %13, %cst_122 {dimension_numbers = #tpu.dot_dimension_numbers<[1], [0], [0], [1], [0, 0, 1, 1], [], []>} : vector<8x256xbf16>, vector<256x512xbf16>, vector<8x512xf32> -> vector<8x512xf32>
    %616 = arith.addf %615, %22 : vector<8x512xf32>
    %617 = vector.extract_strided_slice %616 {offsets = [0, 0], sizes = [8, 128], strides = [1, 1]} : vector<8x512xf32> to vector<8x128xf32>
    %618 = arith.negf %617 : vector<8x128xf32>
    %619 = math.exp %618 : vector<8x128xf32>
    %cst_123 = arith.constant 1.000000e+00 : f32
    %620 = vector.broadcast %cst_123 : f32 to vector<8x128xf32>
    %621 = arith.addf %620, %619 : vector<8x128xf32>
    %622 = arith.divf %620, %621 : vector<8x128xf32>
    %623 = vector.extract_strided_slice %616 {offsets = [0, 128], sizes = [8, 128], strides = [1, 1]} : vector<8x512xf32> to vector<8x128xf32>
    %624 = arith.negf %623 : vector<8x128xf32>
    %625 = math.exp %624 : vector<8x128xf32>
    %cst_124 = arith.constant 1.000000e+00 : f32
    %626 = vector.broadcast %cst_124 : f32 to vector<8x128xf32>
    %627 = arith.addf %626, %625 : vector<8x128xf32>
    %628 = arith.divf %626, %627 : vector<8x128xf32>
    %629 = vector.extract_strided_slice %616 {offsets = [0, 256], sizes = [8, 128], strides = [1, 1]} : vector<8x512xf32> to vector<8x128xf32>
    %630 = vector.extract_strided_slice %616 {offsets = [0, 384], sizes = [8, 128], strides = [1, 1]} : vector<8x512xf32> to vector<8x128xf32>
    %631 = arith.mulf %622, %630 : vector<8x128xf32>
    %632 = arith.addf %629, %631 : vector<8x128xf32>
    %633 = math.tanh %632 : vector<8x128xf32>
    %cst_125 = arith.constant 1.000000e+00 : f32
    %634 = vector.broadcast %cst_125 : f32 to vector<8x128xf32>
    %635 = arith.subf %634, %628 : vector<8x128xf32>
    %636 = arith.mulf %635, %633 : vector<8x128xf32>
    %637 = arith.mulf %628, %527 : vector<8x128xf32>
    %638 = arith.addf %636, %637 : vector<8x128xf32>
    %c7_i32 = arith.constant 7 : i32
    %c8_i32_126 = arith.constant 8 : i32
    %639 = arith.muli %c7_i32, %c8_i32_126 : i32
    %640 = tpu.assume_multiple %639, 8 : i32
    %641 = arith.index_cast %640 : i32 to index
    %c0_127 = arith.constant 0 : index
    %642 = vector.load %arg14[%641, %c0_127] : memref<64x384xf32, #tpu.memory_space<vmem>>, vector<8x384xf32>
    %643 = arith.truncf %560 : vector<8x128xf32> to vector<8x128xbf16>
    %cst_128 = arith.constant dense<0.000000e+00> : vector<8x384xf32>
    %644 = tpu.matmul %643, %7, %cst_128 {dimension_numbers = #tpu.dot_dimension_numbers<[1], [0], [0], [1], [0, 0, 1, 1], [], []>} : vector<8x128xbf16>, vector<128x384xbf16>, vector<8x384xf32> -> vector<8x384xf32>
    %645 = arith.addf %644, %10 : vector<8x384xf32>
    %646 = vector.extract_strided_slice %642 {offsets = [0, 0], sizes = [8, 128], strides = [1, 1]} : vector<8x384xf32> to vector<8x128xf32>
    %647 = vector.extract_strided_slice %645 {offsets = [0, 0], sizes = [8, 128], strides = [1, 1]} : vector<8x384xf32> to vector<8x128xf32>
    %648 = arith.addf %646, %647 : vector<8x128xf32>
    %649 = arith.negf %648 : vector<8x128xf32>
    %650 = math.exp %649 : vector<8x128xf32>
    %cst_129 = arith.constant 1.000000e+00 : f32
    %651 = vector.broadcast %cst_129 : f32 to vector<8x128xf32>
    %652 = arith.addf %651, %650 : vector<8x128xf32>
    %653 = arith.divf %651, %652 : vector<8x128xf32>
    %654 = vector.extract_strided_slice %642 {offsets = [0, 128], sizes = [8, 128], strides = [1, 1]} : vector<8x384xf32> to vector<8x128xf32>
    %655 = vector.extract_strided_slice %645 {offsets = [0, 128], sizes = [8, 128], strides = [1, 1]} : vector<8x384xf32> to vector<8x128xf32>
    %656 = arith.addf %654, %655 : vector<8x128xf32>
    %657 = arith.negf %656 : vector<8x128xf32>
    %658 = math.exp %657 : vector<8x128xf32>
    %cst_130 = arith.constant 1.000000e+00 : f32
    %659 = vector.broadcast %cst_130 : f32 to vector<8x128xf32>
    %660 = arith.addf %659, %658 : vector<8x128xf32>
    %661 = arith.divf %659, %660 : vector<8x128xf32>
    %662 = vector.extract_strided_slice %642 {offsets = [0, 256], sizes = [8, 128], strides = [1, 1]} : vector<8x384xf32> to vector<8x128xf32>
    %663 = vector.extract_strided_slice %645 {offsets = [0, 256], sizes = [8, 128], strides = [1, 1]} : vector<8x384xf32> to vector<8x128xf32>
    %664 = arith.mulf %653, %663 : vector<8x128xf32>
    %665 = arith.addf %662, %664 : vector<8x128xf32>
    %666 = math.tanh %665 : vector<8x128xf32>
    %cst_131 = arith.constant 1.000000e+00 : f32
    %667 = vector.broadcast %cst_131 : f32 to vector<8x128xf32>
    %668 = arith.subf %667, %661 : vector<8x128xf32>
    %669 = arith.mulf %668, %666 : vector<8x128xf32>
    %670 = arith.mulf %661, %560 : vector<8x128xf32>
    %671 = arith.addf %669, %670 : vector<8x128xf32>
    %672 = tpu.concatenate %560, %586 in 1 : vector<8x128xf32>, vector<8x128xf32> -> vector<8x256xf32>
    %673 = arith.truncf %672 : vector<8x256xf32> to vector<8x256xbf16>
    %cst_132 = arith.constant dense<0.000000e+00> : vector<8x512xf32>
    %674 = tpu.matmul %673, %11, %cst_132 {dimension_numbers = #tpu.dot_dimension_numbers<[1], [0], [0], [1], [0, 0, 1, 1], [], []>} : vector<8x256xbf16>, vector<256x512xbf16>, vector<8x512xf32> -> vector<8x512xf32>
    %675 = arith.addf %674, %16 : vector<8x512xf32>
    %676 = vector.extract_strided_slice %675 {offsets = [0, 0], sizes = [8, 128], strides = [1, 1]} : vector<8x512xf32> to vector<8x128xf32>
    %677 = arith.negf %676 : vector<8x128xf32>
    %678 = math.exp %677 : vector<8x128xf32>
    %cst_133 = arith.constant 1.000000e+00 : f32
    %679 = vector.broadcast %cst_133 : f32 to vector<8x128xf32>
    %680 = arith.addf %679, %678 : vector<8x128xf32>
    %681 = arith.divf %679, %680 : vector<8x128xf32>
    %682 = vector.extract_strided_slice %675 {offsets = [0, 128], sizes = [8, 128], strides = [1, 1]} : vector<8x512xf32> to vector<8x128xf32>
    %683 = arith.negf %682 : vector<8x128xf32>
    %684 = math.exp %683 : vector<8x128xf32>
    %cst_134 = arith.constant 1.000000e+00 : f32
    %685 = vector.broadcast %cst_134 : f32 to vector<8x128xf32>
    %686 = arith.addf %685, %684 : vector<8x128xf32>
    %687 = arith.divf %685, %686 : vector<8x128xf32>
    %688 = vector.extract_strided_slice %675 {offsets = [0, 256], sizes = [8, 128], strides = [1, 1]} : vector<8x512xf32> to vector<8x128xf32>
    %689 = vector.extract_strided_slice %675 {offsets = [0, 384], sizes = [8, 128], strides = [1, 1]} : vector<8x512xf32> to vector<8x128xf32>
    %690 = arith.mulf %681, %689 : vector<8x128xf32>
    %691 = arith.addf %688, %690 : vector<8x128xf32>
    %692 = math.tanh %691 : vector<8x128xf32>
    %cst_135 = arith.constant 1.000000e+00 : f32
    %693 = vector.broadcast %cst_135 : f32 to vector<8x128xf32>
    %694 = arith.subf %693, %687 : vector<8x128xf32>
    %695 = arith.mulf %694, %692 : vector<8x128xf32>
    %696 = arith.mulf %687, %586 : vector<8x128xf32>
    %697 = arith.addf %695, %696 : vector<8x128xf32>
    %698 = tpu.concatenate %586, %612 in 1 : vector<8x128xf32>, vector<8x128xf32> -> vector<8x256xf32>
    %699 = arith.truncf %698 : vector<8x256xf32> to vector<8x256xbf16>
    %cst_136 = arith.constant dense<0.000000e+00> : vector<8x512xf32>
    %700 = tpu.matmul %699, %12, %cst_136 {dimension_numbers = #tpu.dot_dimension_numbers<[1], [0], [0], [1], [0, 0, 1, 1], [], []>} : vector<8x256xbf16>, vector<256x512xbf16>, vector<8x512xf32> -> vector<8x512xf32>
    %701 = arith.addf %700, %19 : vector<8x512xf32>
    %702 = vector.extract_strided_slice %701 {offsets = [0, 0], sizes = [8, 128], strides = [1, 1]} : vector<8x512xf32> to vector<8x128xf32>
    %703 = arith.negf %702 : vector<8x128xf32>
    %704 = math.exp %703 : vector<8x128xf32>
    %cst_137 = arith.constant 1.000000e+00 : f32
    %705 = vector.broadcast %cst_137 : f32 to vector<8x128xf32>
    %706 = arith.addf %705, %704 : vector<8x128xf32>
    %707 = arith.divf %705, %706 : vector<8x128xf32>
    %708 = vector.extract_strided_slice %701 {offsets = [0, 128], sizes = [8, 128], strides = [1, 1]} : vector<8x512xf32> to vector<8x128xf32>
    %709 = arith.negf %708 : vector<8x128xf32>
    %710 = math.exp %709 : vector<8x128xf32>
    %cst_138 = arith.constant 1.000000e+00 : f32
    %711 = vector.broadcast %cst_138 : f32 to vector<8x128xf32>
    %712 = arith.addf %711, %710 : vector<8x128xf32>
    %713 = arith.divf %711, %712 : vector<8x128xf32>
    %714 = vector.extract_strided_slice %701 {offsets = [0, 256], sizes = [8, 128], strides = [1, 1]} : vector<8x512xf32> to vector<8x128xf32>
    %715 = vector.extract_strided_slice %701 {offsets = [0, 384], sizes = [8, 128], strides = [1, 1]} : vector<8x512xf32> to vector<8x128xf32>
    %716 = arith.mulf %707, %715 : vector<8x128xf32>
    %717 = arith.addf %714, %716 : vector<8x128xf32>
    %718 = math.tanh %717 : vector<8x128xf32>
    %cst_139 = arith.constant 1.000000e+00 : f32
    %719 = vector.broadcast %cst_139 : f32 to vector<8x128xf32>
    %720 = arith.subf %719, %713 : vector<8x128xf32>
    %721 = arith.mulf %720, %718 : vector<8x128xf32>
    %722 = arith.mulf %713, %612 : vector<8x128xf32>
    %723 = arith.addf %721, %722 : vector<8x128xf32>
    %724 = tpu.concatenate %612, %638 in 1 : vector<8x128xf32>, vector<8x128xf32> -> vector<8x256xf32>
    %725 = arith.truncf %724 : vector<8x256xf32> to vector<8x256xbf16>
    %cst_140 = arith.constant dense<0.000000e+00> : vector<8x512xf32>
    %726 = tpu.matmul %725, %13, %cst_140 {dimension_numbers = #tpu.dot_dimension_numbers<[1], [0], [0], [1], [0, 0, 1, 1], [], []>} : vector<8x256xbf16>, vector<256x512xbf16>, vector<8x512xf32> -> vector<8x512xf32>
    %727 = arith.addf %726, %22 : vector<8x512xf32>
    %728 = vector.extract_strided_slice %727 {offsets = [0, 0], sizes = [8, 128], strides = [1, 1]} : vector<8x512xf32> to vector<8x128xf32>
    %729 = arith.negf %728 : vector<8x128xf32>
    %730 = math.exp %729 : vector<8x128xf32>
    %cst_141 = arith.constant 1.000000e+00 : f32
    %731 = vector.broadcast %cst_141 : f32 to vector<8x128xf32>
    %732 = arith.addf %731, %730 : vector<8x128xf32>
    %733 = arith.divf %731, %732 : vector<8x128xf32>
    %734 = vector.extract_strided_slice %727 {offsets = [0, 128], sizes = [8, 128], strides = [1, 1]} : vector<8x512xf32> to vector<8x128xf32>
    %735 = arith.negf %734 : vector<8x128xf32>
    %736 = math.exp %735 : vector<8x128xf32>
    %cst_142 = arith.constant 1.000000e+00 : f32
    %737 = vector.broadcast %cst_142 : f32 to vector<8x128xf32>
    %738 = arith.addf %737, %736 : vector<8x128xf32>
    %739 = arith.divf %737, %738 : vector<8x128xf32>
    %740 = vector.extract_strided_slice %727 {offsets = [0, 256], sizes = [8, 128], strides = [1, 1]} : vector<8x512xf32> to vector<8x128xf32>
    %741 = vector.extract_strided_slice %727 {offsets = [0, 384], sizes = [8, 128], strides = [1, 1]} : vector<8x512xf32> to vector<8x128xf32>
    %742 = arith.mulf %733, %741 : vector<8x128xf32>
    %743 = arith.addf %740, %742 : vector<8x128xf32>
    %744 = math.tanh %743 : vector<8x128xf32>
    %cst_143 = arith.constant 1.000000e+00 : f32
    %745 = vector.broadcast %cst_143 : f32 to vector<8x128xf32>
    %746 = arith.subf %745, %739 : vector<8x128xf32>
    %747 = arith.mulf %746, %744 : vector<8x128xf32>
    %748 = arith.mulf %739, %638 : vector<8x128xf32>
    %749 = arith.addf %747, %748 : vector<8x128xf32>
    %c5_i32_144 = arith.constant 5 : i32
    %750 = tpu.concatenate %671, %697 in 1 : vector<8x128xf32>, vector<8x128xf32> -> vector<8x256xf32>
    %751 = arith.truncf %750 : vector<8x256xf32> to vector<8x256xbf16>
    %cst_145 = arith.constant dense<0.000000e+00> : vector<8x512xf32>
    %752 = tpu.matmul %751, %11, %cst_145 {dimension_numbers = #tpu.dot_dimension_numbers<[1], [0], [0], [1], [0, 0, 1, 1], [], []>} : vector<8x256xbf16>, vector<256x512xbf16>, vector<8x512xf32> -> vector<8x512xf32>
    %753 = arith.addf %752, %16 : vector<8x512xf32>
    %754 = vector.extract_strided_slice %753 {offsets = [0, 0], sizes = [8, 128], strides = [1, 1]} : vector<8x512xf32> to vector<8x128xf32>
    %755 = arith.negf %754 : vector<8x128xf32>
    %756 = math.exp %755 : vector<8x128xf32>
    %cst_146 = arith.constant 1.000000e+00 : f32
    %757 = vector.broadcast %cst_146 : f32 to vector<8x128xf32>
    %758 = arith.addf %757, %756 : vector<8x128xf32>
    %759 = arith.divf %757, %758 : vector<8x128xf32>
    %760 = vector.extract_strided_slice %753 {offsets = [0, 128], sizes = [8, 128], strides = [1, 1]} : vector<8x512xf32> to vector<8x128xf32>
    %761 = arith.negf %760 : vector<8x128xf32>
    %762 = math.exp %761 : vector<8x128xf32>
    %cst_147 = arith.constant 1.000000e+00 : f32
    %763 = vector.broadcast %cst_147 : f32 to vector<8x128xf32>
    %764 = arith.addf %763, %762 : vector<8x128xf32>
    %765 = arith.divf %763, %764 : vector<8x128xf32>
    %766 = vector.extract_strided_slice %753 {offsets = [0, 256], sizes = [8, 128], strides = [1, 1]} : vector<8x512xf32> to vector<8x128xf32>
    %767 = vector.extract_strided_slice %753 {offsets = [0, 384], sizes = [8, 128], strides = [1, 1]} : vector<8x512xf32> to vector<8x128xf32>
    %768 = arith.mulf %759, %767 : vector<8x128xf32>
    %769 = arith.addf %766, %768 : vector<8x128xf32>
    %770 = math.tanh %769 : vector<8x128xf32>
    %cst_148 = arith.constant 1.000000e+00 : f32
    %771 = vector.broadcast %cst_148 : f32 to vector<8x128xf32>
    %772 = arith.subf %771, %765 : vector<8x128xf32>
    %773 = arith.mulf %772, %770 : vector<8x128xf32>
    %774 = arith.mulf %765, %697 : vector<8x128xf32>
    %775 = arith.addf %773, %774 : vector<8x128xf32>
    %776 = tpu.concatenate %697, %723 in 1 : vector<8x128xf32>, vector<8x128xf32> -> vector<8x256xf32>
    %777 = arith.truncf %776 : vector<8x256xf32> to vector<8x256xbf16>
    %cst_149 = arith.constant dense<0.000000e+00> : vector<8x512xf32>
    %778 = tpu.matmul %777, %12, %cst_149 {dimension_numbers = #tpu.dot_dimension_numbers<[1], [0], [0], [1], [0, 0, 1, 1], [], []>} : vector<8x256xbf16>, vector<256x512xbf16>, vector<8x512xf32> -> vector<8x512xf32>
    %779 = arith.addf %778, %19 : vector<8x512xf32>
    %780 = vector.extract_strided_slice %779 {offsets = [0, 0], sizes = [8, 128], strides = [1, 1]} : vector<8x512xf32> to vector<8x128xf32>
    %781 = arith.negf %780 : vector<8x128xf32>
    %782 = math.exp %781 : vector<8x128xf32>
    %cst_150 = arith.constant 1.000000e+00 : f32
    %783 = vector.broadcast %cst_150 : f32 to vector<8x128xf32>
    %784 = arith.addf %783, %782 : vector<8x128xf32>
    %785 = arith.divf %783, %784 : vector<8x128xf32>
    %786 = vector.extract_strided_slice %779 {offsets = [0, 128], sizes = [8, 128], strides = [1, 1]} : vector<8x512xf32> to vector<8x128xf32>
    %787 = arith.negf %786 : vector<8x128xf32>
    %788 = math.exp %787 : vector<8x128xf32>
    %cst_151 = arith.constant 1.000000e+00 : f32
    %789 = vector.broadcast %cst_151 : f32 to vector<8x128xf32>
    %790 = arith.addf %789, %788 : vector<8x128xf32>
    %791 = arith.divf %789, %790 : vector<8x128xf32>
    %792 = vector.extract_strided_slice %779 {offsets = [0, 256], sizes = [8, 128], strides = [1, 1]} : vector<8x512xf32> to vector<8x128xf32>
    %793 = vector.extract_strided_slice %779 {offsets = [0, 384], sizes = [8, 128], strides = [1, 1]} : vector<8x512xf32> to vector<8x128xf32>
    %794 = arith.mulf %785, %793 : vector<8x128xf32>
    %795 = arith.addf %792, %794 : vector<8x128xf32>
    %796 = math.tanh %795 : vector<8x128xf32>
    %cst_152 = arith.constant 1.000000e+00 : f32
    %797 = vector.broadcast %cst_152 : f32 to vector<8x128xf32>
    %798 = arith.subf %797, %791 : vector<8x128xf32>
    %799 = arith.mulf %798, %796 : vector<8x128xf32>
    %800 = arith.mulf %791, %723 : vector<8x128xf32>
    %801 = arith.addf %799, %800 : vector<8x128xf32>
    %802 = tpu.concatenate %723, %749 in 1 : vector<8x128xf32>, vector<8x128xf32> -> vector<8x256xf32>
    %803 = arith.truncf %802 : vector<8x256xf32> to vector<8x256xbf16>
    %cst_153 = arith.constant dense<0.000000e+00> : vector<8x512xf32>
    %804 = tpu.matmul %803, %13, %cst_153 {dimension_numbers = #tpu.dot_dimension_numbers<[1], [0], [0], [1], [0, 0, 1, 1], [], []>} : vector<8x256xbf16>, vector<256x512xbf16>, vector<8x512xf32> -> vector<8x512xf32>
    %805 = arith.addf %804, %22 : vector<8x512xf32>
    %806 = vector.extract_strided_slice %805 {offsets = [0, 0], sizes = [8, 128], strides = [1, 1]} : vector<8x512xf32> to vector<8x128xf32>
    %807 = arith.negf %806 : vector<8x128xf32>
    %808 = math.exp %807 : vector<8x128xf32>
    %cst_154 = arith.constant 1.000000e+00 : f32
    %809 = vector.broadcast %cst_154 : f32 to vector<8x128xf32>
    %810 = arith.addf %809, %808 : vector<8x128xf32>
    %811 = arith.divf %809, %810 : vector<8x128xf32>
    %812 = vector.extract_strided_slice %805 {offsets = [0, 128], sizes = [8, 128], strides = [1, 1]} : vector<8x512xf32> to vector<8x128xf32>
    %813 = arith.negf %812 : vector<8x128xf32>
    %814 = math.exp %813 : vector<8x128xf32>
    %cst_155 = arith.constant 1.000000e+00 : f32
    %815 = vector.broadcast %cst_155 : f32 to vector<8x128xf32>
    %816 = arith.addf %815, %814 : vector<8x128xf32>
    %817 = arith.divf %815, %816 : vector<8x128xf32>
    %818 = vector.extract_strided_slice %805 {offsets = [0, 256], sizes = [8, 128], strides = [1, 1]} : vector<8x512xf32> to vector<8x128xf32>
    %819 = vector.extract_strided_slice %805 {offsets = [0, 384], sizes = [8, 128], strides = [1, 1]} : vector<8x512xf32> to vector<8x128xf32>
    %820 = arith.mulf %811, %819 : vector<8x128xf32>
    %821 = arith.addf %818, %820 : vector<8x128xf32>
    %822 = math.tanh %821 : vector<8x128xf32>
    %cst_156 = arith.constant 1.000000e+00 : f32
    %823 = vector.broadcast %cst_156 : f32 to vector<8x128xf32>
    %824 = arith.subf %823, %817 : vector<8x128xf32>
    %825 = arith.mulf %824, %822 : vector<8x128xf32>
    %826 = arith.mulf %817, %749 : vector<8x128xf32>
    %827 = arith.addf %825, %826 : vector<8x128xf32>
    %828 = tpu.concatenate %775, %801 in 1 : vector<8x128xf32>, vector<8x128xf32> -> vector<8x256xf32>
    %829 = arith.truncf %828 : vector<8x256xf32> to vector<8x256xbf16>
    %cst_157 = arith.constant dense<0.000000e+00> : vector<8x512xf32>
    %830 = tpu.matmul %829, %12, %cst_157 {dimension_numbers = #tpu.dot_dimension_numbers<[1], [0], [0], [1], [0, 0, 1, 1], [], []>} : vector<8x256xbf16>, vector<256x512xbf16>, vector<8x512xf32> -> vector<8x512xf32>
    %831 = arith.addf %830, %19 : vector<8x512xf32>
    %832 = vector.extract_strided_slice %831 {offsets = [0, 0], sizes = [8, 128], strides = [1, 1]} : vector<8x512xf32> to vector<8x128xf32>
    %833 = arith.negf %832 : vector<8x128xf32>
    %834 = math.exp %833 : vector<8x128xf32>
    %cst_158 = arith.constant 1.000000e+00 : f32
    %835 = vector.broadcast %cst_158 : f32 to vector<8x128xf32>
    %836 = arith.addf %835, %834 : vector<8x128xf32>
    %837 = arith.divf %835, %836 : vector<8x128xf32>
    %838 = vector.extract_strided_slice %831 {offsets = [0, 128], sizes = [8, 128], strides = [1, 1]} : vector<8x512xf32> to vector<8x128xf32>
    %839 = arith.negf %838 : vector<8x128xf32>
    %840 = math.exp %839 : vector<8x128xf32>
    %cst_159 = arith.constant 1.000000e+00 : f32
    %841 = vector.broadcast %cst_159 : f32 to vector<8x128xf32>
    %842 = arith.addf %841, %840 : vector<8x128xf32>
    %843 = arith.divf %841, %842 : vector<8x128xf32>
    %844 = vector.extract_strided_slice %831 {offsets = [0, 256], sizes = [8, 128], strides = [1, 1]} : vector<8x512xf32> to vector<8x128xf32>
    %845 = vector.extract_strided_slice %831 {offsets = [0, 384], sizes = [8, 128], strides = [1, 1]} : vector<8x512xf32> to vector<8x128xf32>
    %846 = arith.mulf %837, %845 : vector<8x128xf32>
    %847 = arith.addf %844, %846 : vector<8x128xf32>
    %848 = math.tanh %847 : vector<8x128xf32>
    %cst_160 = arith.constant 1.000000e+00 : f32
    %849 = vector.broadcast %cst_160 : f32 to vector<8x128xf32>
    %850 = arith.subf %849, %843 : vector<8x128xf32>
    %851 = arith.mulf %850, %848 : vector<8x128xf32>
    %852 = arith.mulf %843, %801 : vector<8x128xf32>
    %853 = arith.addf %851, %852 : vector<8x128xf32>
    %854 = tpu.concatenate %801, %827 in 1 : vector<8x128xf32>, vector<8x128xf32> -> vector<8x256xf32>
    %855 = arith.truncf %854 : vector<8x256xf32> to vector<8x256xbf16>
    %cst_161 = arith.constant dense<0.000000e+00> : vector<8x512xf32>
    %856 = tpu.matmul %855, %13, %cst_161 {dimension_numbers = #tpu.dot_dimension_numbers<[1], [0], [0], [1], [0, 0, 1, 1], [], []>} : vector<8x256xbf16>, vector<256x512xbf16>, vector<8x512xf32> -> vector<8x512xf32>
    %857 = arith.addf %856, %22 : vector<8x512xf32>
    %858 = vector.extract_strided_slice %857 {offsets = [0, 0], sizes = [8, 128], strides = [1, 1]} : vector<8x512xf32> to vector<8x128xf32>
    %859 = arith.negf %858 : vector<8x128xf32>
    %860 = math.exp %859 : vector<8x128xf32>
    %cst_162 = arith.constant 1.000000e+00 : f32
    %861 = vector.broadcast %cst_162 : f32 to vector<8x128xf32>
    %862 = arith.addf %861, %860 : vector<8x128xf32>
    %863 = arith.divf %861, %862 : vector<8x128xf32>
    %864 = vector.extract_strided_slice %857 {offsets = [0, 128], sizes = [8, 128], strides = [1, 1]} : vector<8x512xf32> to vector<8x128xf32>
    %865 = arith.negf %864 : vector<8x128xf32>
    %866 = math.exp %865 : vector<8x128xf32>
    %cst_163 = arith.constant 1.000000e+00 : f32
    %867 = vector.broadcast %cst_163 : f32 to vector<8x128xf32>
    %868 = arith.addf %867, %866 : vector<8x128xf32>
    %869 = arith.divf %867, %868 : vector<8x128xf32>
    %870 = vector.extract_strided_slice %857 {offsets = [0, 256], sizes = [8, 128], strides = [1, 1]} : vector<8x512xf32> to vector<8x128xf32>
    %871 = vector.extract_strided_slice %857 {offsets = [0, 384], sizes = [8, 128], strides = [1, 1]} : vector<8x512xf32> to vector<8x128xf32>
    %872 = arith.mulf %863, %871 : vector<8x128xf32>
    %873 = arith.addf %870, %872 : vector<8x128xf32>
    %874 = math.tanh %873 : vector<8x128xf32>
    %cst_164 = arith.constant 1.000000e+00 : f32
    %875 = vector.broadcast %cst_164 : f32 to vector<8x128xf32>
    %876 = arith.subf %875, %869 : vector<8x128xf32>
    %877 = arith.mulf %876, %874 : vector<8x128xf32>
    %878 = arith.mulf %869, %827 : vector<8x128xf32>
    %879 = arith.addf %877, %878 : vector<8x128xf32>
    %880 = tpu.concatenate %853, %879 in 1 : vector<8x128xf32>, vector<8x128xf32> -> vector<8x256xf32>
    %881 = arith.truncf %880 : vector<8x256xf32> to vector<8x256xbf16>
    %cst_165 = arith.constant dense<0.000000e+00> : vector<8x512xf32>
    %882 = tpu.matmul %881, %13, %cst_165 {dimension_numbers = #tpu.dot_dimension_numbers<[1], [0], [0], [1], [0, 0, 1, 1], [], []>} : vector<8x256xbf16>, vector<256x512xbf16>, vector<8x512xf32> -> vector<8x512xf32>
    %883 = arith.addf %882, %22 : vector<8x512xf32>
    %884 = vector.extract_strided_slice %883 {offsets = [0, 0], sizes = [8, 128], strides = [1, 1]} : vector<8x512xf32> to vector<8x128xf32>
    %885 = arith.negf %884 : vector<8x128xf32>
    %886 = math.exp %885 : vector<8x128xf32>
    %cst_166 = arith.constant 1.000000e+00 : f32
    %887 = vector.broadcast %cst_166 : f32 to vector<8x128xf32>
    %888 = arith.addf %887, %886 : vector<8x128xf32>
    %889 = arith.divf %887, %888 : vector<8x128xf32>
    %890 = vector.extract_strided_slice %883 {offsets = [0, 128], sizes = [8, 128], strides = [1, 1]} : vector<8x512xf32> to vector<8x128xf32>
    %891 = arith.negf %890 : vector<8x128xf32>
    %892 = math.exp %891 : vector<8x128xf32>
    %cst_167 = arith.constant 1.000000e+00 : f32
    %893 = vector.broadcast %cst_167 : f32 to vector<8x128xf32>
    %894 = arith.addf %893, %892 : vector<8x128xf32>
    %895 = arith.divf %893, %894 : vector<8x128xf32>
    %896 = vector.extract_strided_slice %883 {offsets = [0, 256], sizes = [8, 128], strides = [1, 1]} : vector<8x512xf32> to vector<8x128xf32>
    %897 = vector.extract_strided_slice %883 {offsets = [0, 384], sizes = [8, 128], strides = [1, 1]} : vector<8x512xf32> to vector<8x128xf32>
    %898 = arith.mulf %889, %897 : vector<8x128xf32>
    %899 = arith.addf %896, %898 : vector<8x128xf32>
    %900 = math.tanh %899 : vector<8x128xf32>
    %cst_168 = arith.constant 1.000000e+00 : f32
    %901 = vector.broadcast %cst_168 : f32 to vector<8x128xf32>
    %902 = arith.subf %901, %895 : vector<8x128xf32>
    %903 = arith.mulf %902, %900 : vector<8x128xf32>
    %904 = arith.mulf %895, %879 : vector<8x128xf32>
    %905 = arith.addf %903, %904 : vector<8x128xf32>
    %906 = arith.negf %905 : vector<8x128xf32>
    %907 = math.exp %906 : vector<8x128xf32>
    %cst_169 = arith.constant 1.000000e+00 : f32
    %908 = vector.broadcast %cst_169 : f32 to vector<8x128xf32>
    %909 = arith.addf %908, %907 : vector<8x128xf32>
    %910 = arith.divf %908, %909 : vector<8x128xf32>
    %911 = arith.mulf %905, %910 : vector<8x128xf32>
    %cst_170 = arith.constant -2.200000e+00 : f32
    %912 = vector.broadcast %cst_170 : f32 to vector<8x128xf32>
    %913 = arith.cmpf oge, %905, %912 : vector<8x128xf32>
    %cst_171 = arith.constant -1.800000e+00 : f32
    %914 = vector.broadcast %cst_171 : f32 to vector<8x128xf32>
    %915 = arith.cmpf olt, %905, %914 : vector<8x128xf32>
    %916 = arith.andi %913, %915 : vector<8x128xi1>
    %cst_172 = arith.constant 1.000000e+00 : f32
    %cst_173 = arith.constant 0.000000e+00 : f32
    %917 = vector.broadcast %cst_172 : f32 to vector<8x128xf32>
    %918 = vector.broadcast %cst_173 : f32 to vector<8x128xf32>
    %919 = arith.select %916, %917, %918 : vector<8x128xi1>, vector<8x128xf32>
    %cst_174 = arith.constant -1.800000e+00 : f32
    %920 = vector.broadcast %cst_174 : f32 to vector<8x128xf32>
    %921 = arith.cmpf oge, %905, %920 : vector<8x128xf32>
    %cst_175 = arith.constant -1.400000e+00 : f32
    %922 = vector.broadcast %cst_175 : f32 to vector<8x128xf32>
    %923 = arith.cmpf olt, %905, %922 : vector<8x128xf32>
    %924 = arith.andi %921, %923 : vector<8x128xi1>
    %cst_176 = arith.constant 1.000000e+00 : f32
    %cst_177 = arith.constant 0.000000e+00 : f32
    %925 = vector.broadcast %cst_176 : f32 to vector<8x128xf32>
    %926 = vector.broadcast %cst_177 : f32 to vector<8x128xf32>
    %927 = arith.select %924, %925, %926 : vector<8x128xi1>, vector<8x128xf32>
    %cst_178 = arith.constant -1.400000e+00 : f32
    %928 = vector.broadcast %cst_178 : f32 to vector<8x128xf32>
    %929 = arith.cmpf oge, %905, %928 : vector<8x128xf32>
    %cst_179 = arith.constant -1.000000e+00 : f32
    %930 = vector.broadcast %cst_179 : f32 to vector<8x128xf32>
    %931 = arith.cmpf olt, %905, %930 : vector<8x128xf32>
    %932 = arith.andi %929, %931 : vector<8x128xi1>
    %cst_180 = arith.constant 1.000000e+00 : f32
    %cst_181 = arith.constant 0.000000e+00 : f32
    %933 = vector.broadcast %cst_180 : f32 to vector<8x128xf32>
    %934 = vector.broadcast %cst_181 : f32 to vector<8x128xf32>
    %935 = arith.select %932, %933, %934 : vector<8x128xi1>, vector<8x128xf32>
    %cst_182 = arith.constant -1.000000e+00 : f32
    %936 = vector.broadcast %cst_182 : f32 to vector<8x128xf32>
    %937 = arith.cmpf oge, %905, %936 : vector<8x128xf32>
    %cst_183 = arith.constant -6.000000e-01 : f32
    %938 = vector.broadcast %cst_183 : f32 to vector<8x128xf32>
    %939 = arith.cmpf olt, %905, %938 : vector<8x128xf32>
    %940 = arith.andi %937, %939 : vector<8x128xi1>
    %cst_184 = arith.constant 1.000000e+00 : f32
    %cst_185 = arith.constant 0.000000e+00 : f32
    %941 = vector.broadcast %cst_184 : f32 to vector<8x128xf32>
    %942 = vector.broadcast %cst_185 : f32 to vector<8x128xf32>
    %943 = arith.select %940, %941, %942 : vector<8x128xi1>, vector<8x128xf32>
    %cst_186 = arith.constant -6.000000e-01 : f32
    %944 = vector.broadcast %cst_186 : f32 to vector<8x128xf32>
    %945 = arith.cmpf oge, %905, %944 : vector<8x128xf32>
    %cst_187 = arith.constant -2.000000e-01 : f32
    %946 = vector.broadcast %cst_187 : f32 to vector<8x128xf32>
    %947 = arith.cmpf olt, %905, %946 : vector<8x128xf32>
    %948 = arith.andi %945, %947 : vector<8x128xi1>
    %cst_188 = arith.constant 1.000000e+00 : f32
    %cst_189 = arith.constant 0.000000e+00 : f32
    %949 = vector.broadcast %cst_188 : f32 to vector<8x128xf32>
    %950 = vector.broadcast %cst_189 : f32 to vector<8x128xf32>
    %951 = arith.select %948, %949, %950 : vector<8x128xi1>, vector<8x128xf32>
    %cst_190 = arith.constant -2.000000e-01 : f32
    %952 = vector.broadcast %cst_190 : f32 to vector<8x128xf32>
    %953 = arith.cmpf oge, %905, %952 : vector<8x128xf32>
    %cst_191 = arith.constant 2.000000e-01 : f32
    %954 = vector.broadcast %cst_191 : f32 to vector<8x128xf32>
    %955 = arith.cmpf olt, %905, %954 : vector<8x128xf32>
    %956 = arith.andi %953, %955 : vector<8x128xi1>
    %cst_192 = arith.constant 1.000000e+00 : f32
    %cst_193 = arith.constant 0.000000e+00 : f32
    %957 = vector.broadcast %cst_192 : f32 to vector<8x128xf32>
    %958 = vector.broadcast %cst_193 : f32 to vector<8x128xf32>
    %959 = arith.select %956, %957, %958 : vector<8x128xi1>, vector<8x128xf32>
    %cst_194 = arith.constant 2.000000e-01 : f32
    %960 = vector.broadcast %cst_194 : f32 to vector<8x128xf32>
    %961 = arith.cmpf oge, %905, %960 : vector<8x128xf32>
    %cst_195 = arith.constant 6.000000e-01 : f32
    %962 = vector.broadcast %cst_195 : f32 to vector<8x128xf32>
    %963 = arith.cmpf olt, %905, %962 : vector<8x128xf32>
    %964 = arith.andi %961, %963 : vector<8x128xi1>
    %cst_196 = arith.constant 1.000000e+00 : f32
    %cst_197 = arith.constant 0.000000e+00 : f32
    %965 = vector.broadcast %cst_196 : f32 to vector<8x128xf32>
    %966 = vector.broadcast %cst_197 : f32 to vector<8x128xf32>
    %967 = arith.select %964, %965, %966 : vector<8x128xi1>, vector<8x128xf32>
    %cst_198 = arith.constant 6.000000e-01 : f32
    %968 = vector.broadcast %cst_198 : f32 to vector<8x128xf32>
    %969 = arith.cmpf oge, %905, %968 : vector<8x128xf32>
    %cst_199 = arith.constant 1.000000e+00 : f32
    %970 = vector.broadcast %cst_199 : f32 to vector<8x128xf32>
    %971 = arith.cmpf olt, %905, %970 : vector<8x128xf32>
    %972 = arith.andi %969, %971 : vector<8x128xi1>
    %cst_200 = arith.constant 1.000000e+00 : f32
    %cst_201 = arith.constant 0.000000e+00 : f32
    %973 = vector.broadcast %cst_200 : f32 to vector<8x128xf32>
    %974 = vector.broadcast %cst_201 : f32 to vector<8x128xf32>
    %975 = arith.select %972, %973, %974 : vector<8x128xi1>, vector<8x128xf32>
    %cst_202 = arith.constant 1.000000e+00 : f32
    %976 = vector.broadcast %cst_202 : f32 to vector<8x128xf32>
    %977 = arith.cmpf oge, %905, %976 : vector<8x128xf32>
    %cst_203 = arith.constant 1.400000e+00 : f32
    %978 = vector.broadcast %cst_203 : f32 to vector<8x128xf32>
    %979 = arith.cmpf olt, %905, %978 : vector<8x128xf32>
    %980 = arith.andi %977, %979 : vector<8x128xi1>
    %cst_204 = arith.constant 1.000000e+00 : f32
    %cst_205 = arith.constant 0.000000e+00 : f32
    %981 = vector.broadcast %cst_204 : f32 to vector<8x128xf32>
    %982 = vector.broadcast %cst_205 : f32 to vector<8x128xf32>
    %983 = arith.select %980, %981, %982 : vector<8x128xi1>, vector<8x128xf32>
    %cst_206 = arith.constant 1.400000e+00 : f32
    %984 = vector.broadcast %cst_206 : f32 to vector<8x128xf32>
    %985 = arith.cmpf oge, %905, %984 : vector<8x128xf32>
    %cst_207 = arith.constant 1.800000e+00 : f32
    %986 = vector.broadcast %cst_207 : f32 to vector<8x128xf32>
    %987 = arith.cmpf olt, %905, %986 : vector<8x128xf32>
    %988 = arith.andi %985, %987 : vector<8x128xi1>
    %cst_208 = arith.constant 1.000000e+00 : f32
    %cst_209 = arith.constant 0.000000e+00 : f32
    %989 = vector.broadcast %cst_208 : f32 to vector<8x128xf32>
    %990 = vector.broadcast %cst_209 : f32 to vector<8x128xf32>
    %991 = arith.select %988, %989, %990 : vector<8x128xi1>, vector<8x128xf32>
    %cst_210 = arith.constant 1.800000e+00 : f32
    %992 = vector.broadcast %cst_210 : f32 to vector<8x128xf32>
    %993 = arith.cmpf oge, %905, %992 : vector<8x128xf32>
    %cst_211 = arith.constant 2.200000e+00 : f32
    %994 = vector.broadcast %cst_211 : f32 to vector<8x128xf32>
    %995 = arith.cmpf olt, %905, %994 : vector<8x128xf32>
    %996 = arith.andi %993, %995 : vector<8x128xi1>
    %cst_212 = arith.constant 1.000000e+00 : f32
    %cst_213 = arith.constant 0.000000e+00 : f32
    %997 = vector.broadcast %cst_212 : f32 to vector<8x128xf32>
    %998 = vector.broadcast %cst_213 : f32 to vector<8x128xf32>
    %999 = arith.select %996, %997, %998 : vector<8x128xi1>, vector<8x128xf32>
    %cst_214 = arith.constant -2.200000e+00 : f32
    %1000 = vector.broadcast %cst_214 : f32 to vector<8x128xf32>
    %1001 = arith.subf %905, %1000 : vector<8x128xf32>
    %1002 = arith.mulf %1001, %919 : vector<8x128xf32>
    %cst_215 = arith.constant -1.400000e+00 : f32
    %1003 = vector.broadcast %cst_215 : f32 to vector<8x128xf32>
    %1004 = arith.subf %1003, %905 : vector<8x128xf32>
    %1005 = arith.mulf %1004, %927 : vector<8x128xf32>
    %1006 = arith.addf %1002, %1005 : vector<8x128xf32>
    %cst_216 = arith.constant 2.500000e+00 : f32
    %1007 = vector.broadcast %cst_216 : f32 to vector<8x128xf32>
    %1008 = arith.mulf %1006, %1007 : vector<8x128xf32>
    %cst_217 = arith.constant -1.800000e+00 : f32
    %1009 = vector.broadcast %cst_217 : f32 to vector<8x128xf32>
    %1010 = arith.subf %905, %1009 : vector<8x128xf32>
    %1011 = arith.mulf %1010, %927 : vector<8x128xf32>
    %cst_218 = arith.constant -1.000000e+00 : f32
    %1012 = vector.broadcast %cst_218 : f32 to vector<8x128xf32>
    %1013 = arith.subf %1012, %905 : vector<8x128xf32>
    %1014 = arith.mulf %1013, %935 : vector<8x128xf32>
    %1015 = arith.addf %1011, %1014 : vector<8x128xf32>
    %cst_219 = arith.constant 2.500000e+00 : f32
    %1016 = vector.broadcast %cst_219 : f32 to vector<8x128xf32>
    %1017 = arith.mulf %1015, %1016 : vector<8x128xf32>
    %cst_220 = arith.constant -1.400000e+00 : f32
    %1018 = vector.broadcast %cst_220 : f32 to vector<8x128xf32>
    %1019 = arith.subf %905, %1018 : vector<8x128xf32>
    %1020 = arith.mulf %1019, %935 : vector<8x128xf32>
    %cst_221 = arith.constant -6.000000e-01 : f32
    %1021 = vector.broadcast %cst_221 : f32 to vector<8x128xf32>
    %1022 = arith.subf %1021, %905 : vector<8x128xf32>
    %1023 = arith.mulf %1022, %943 : vector<8x128xf32>
    %1024 = arith.addf %1020, %1023 : vector<8x128xf32>
    %cst_222 = arith.constant 2.500000e+00 : f32
    %1025 = vector.broadcast %cst_222 : f32 to vector<8x128xf32>
    %1026 = arith.mulf %1024, %1025 : vector<8x128xf32>
    %cst_223 = arith.constant -1.000000e+00 : f32
    %1027 = vector.broadcast %cst_223 : f32 to vector<8x128xf32>
    %1028 = arith.subf %905, %1027 : vector<8x128xf32>
    %1029 = arith.mulf %1028, %943 : vector<8x128xf32>
    %cst_224 = arith.constant -2.000000e-01 : f32
    %1030 = vector.broadcast %cst_224 : f32 to vector<8x128xf32>
    %1031 = arith.subf %1030, %905 : vector<8x128xf32>
    %1032 = arith.mulf %1031, %951 : vector<8x128xf32>
    %1033 = arith.addf %1029, %1032 : vector<8x128xf32>
    %cst_225 = arith.constant 2.500000e+00 : f32
    %1034 = vector.broadcast %cst_225 : f32 to vector<8x128xf32>
    %1035 = arith.mulf %1033, %1034 : vector<8x128xf32>
    %cst_226 = arith.constant -6.000000e-01 : f32
    %1036 = vector.broadcast %cst_226 : f32 to vector<8x128xf32>
    %1037 = arith.subf %905, %1036 : vector<8x128xf32>
    %1038 = arith.mulf %1037, %951 : vector<8x128xf32>
    %cst_227 = arith.constant 2.000000e-01 : f32
    %1039 = vector.broadcast %cst_227 : f32 to vector<8x128xf32>
    %1040 = arith.subf %1039, %905 : vector<8x128xf32>
    %1041 = arith.mulf %1040, %959 : vector<8x128xf32>
    %1042 = arith.addf %1038, %1041 : vector<8x128xf32>
    %cst_228 = arith.constant 2.500000e+00 : f32
    %1043 = vector.broadcast %cst_228 : f32 to vector<8x128xf32>
    %1044 = arith.mulf %1042, %1043 : vector<8x128xf32>
    %cst_229 = arith.constant -2.000000e-01 : f32
    %1045 = vector.broadcast %cst_229 : f32 to vector<8x128xf32>
    %1046 = arith.subf %905, %1045 : vector<8x128xf32>
    %1047 = arith.mulf %1046, %959 : vector<8x128xf32>
    %cst_230 = arith.constant 6.000000e-01 : f32
    %1048 = vector.broadcast %cst_230 : f32 to vector<8x128xf32>
    %1049 = arith.subf %1048, %905 : vector<8x128xf32>
    %1050 = arith.mulf %1049, %967 : vector<8x128xf32>
    %1051 = arith.addf %1047, %1050 : vector<8x128xf32>
    %cst_231 = arith.constant 2.500000e+00 : f32
    %1052 = vector.broadcast %cst_231 : f32 to vector<8x128xf32>
    %1053 = arith.mulf %1051, %1052 : vector<8x128xf32>
    %cst_232 = arith.constant 2.000000e-01 : f32
    %1054 = vector.broadcast %cst_232 : f32 to vector<8x128xf32>
    %1055 = arith.subf %905, %1054 : vector<8x128xf32>
    %1056 = arith.mulf %1055, %967 : vector<8x128xf32>
    %cst_233 = arith.constant 1.000000e+00 : f32
    %1057 = vector.broadcast %cst_233 : f32 to vector<8x128xf32>
    %1058 = arith.subf %1057, %905 : vector<8x128xf32>
    %1059 = arith.mulf %1058, %975 : vector<8x128xf32>
    %1060 = arith.addf %1056, %1059 : vector<8x128xf32>
    %cst_234 = arith.constant 2.500000e+00 : f32
    %1061 = vector.broadcast %cst_234 : f32 to vector<8x128xf32>
    %1062 = arith.mulf %1060, %1061 : vector<8x128xf32>
    %cst_235 = arith.constant 6.000000e-01 : f32
    %1063 = vector.broadcast %cst_235 : f32 to vector<8x128xf32>
    %1064 = arith.subf %905, %1063 : vector<8x128xf32>
    %1065 = arith.mulf %1064, %975 : vector<8x128xf32>
    %cst_236 = arith.constant 1.400000e+00 : f32
    %1066 = vector.broadcast %cst_236 : f32 to vector<8x128xf32>
    %1067 = arith.subf %1066, %905 : vector<8x128xf32>
    %1068 = arith.mulf %1067, %983 : vector<8x128xf32>
    %1069 = arith.addf %1065, %1068 : vector<8x128xf32>
    %cst_237 = arith.constant 2.500000e+00 : f32
    %1070 = vector.broadcast %cst_237 : f32 to vector<8x128xf32>
    %1071 = arith.mulf %1069, %1070 : vector<8x128xf32>
    %cst_238 = arith.constant 1.000000e+00 : f32
    %1072 = vector.broadcast %cst_238 : f32 to vector<8x128xf32>
    %1073 = arith.subf %905, %1072 : vector<8x128xf32>
    %1074 = arith.mulf %1073, %983 : vector<8x128xf32>
    %cst_239 = arith.constant 1.800000e+00 : f32
    %1075 = vector.broadcast %cst_239 : f32 to vector<8x128xf32>
    %1076 = arith.subf %1075, %905 : vector<8x128xf32>
    %1077 = arith.mulf %1076, %991 : vector<8x128xf32>
    %1078 = arith.addf %1074, %1077 : vector<8x128xf32>
    %cst_240 = arith.constant 2.500000e+00 : f32
    %1079 = vector.broadcast %cst_240 : f32 to vector<8x128xf32>
    %1080 = arith.mulf %1078, %1079 : vector<8x128xf32>
    %cst_241 = arith.constant 1.400000e+00 : f32
    %1081 = vector.broadcast %cst_241 : f32 to vector<8x128xf32>
    %1082 = arith.subf %905, %1081 : vector<8x128xf32>
    %1083 = arith.mulf %1082, %991 : vector<8x128xf32>
    %cst_242 = arith.constant 2.200000e+00 : f32
    %1084 = vector.broadcast %cst_242 : f32 to vector<8x128xf32>
    %1085 = arith.subf %1084, %905 : vector<8x128xf32>
    %1086 = arith.mulf %1085, %999 : vector<8x128xf32>
    %1087 = arith.addf %1083, %1086 : vector<8x128xf32>
    %cst_243 = arith.constant 2.500000e+00 : f32
    %1088 = vector.broadcast %cst_243 : f32 to vector<8x128xf32>
    %1089 = arith.mulf %1087, %1088 : vector<8x128xf32>
    %cst_244 = arith.constant -2.200000e+00 : f32
    %1090 = vector.broadcast %cst_244 : f32 to vector<8x128xf32>
    %1091 = arith.subf %905, %1090 : vector<8x128xf32>
    %1092 = arith.mulf %1091, %1008 : vector<8x128xf32>
    %cst_245 = arith.constant -1.000000e+00 : f32
    %1093 = vector.broadcast %cst_245 : f32 to vector<8x128xf32>
    %1094 = arith.subf %1093, %905 : vector<8x128xf32>
    %1095 = arith.mulf %1094, %1017 : vector<8x128xf32>
    %1096 = arith.addf %1092, %1095 : vector<8x128xf32>
    %cst_246 = arith.constant 1.250000e+00 : f32
    %1097 = vector.broadcast %cst_246 : f32 to vector<8x128xf32>
    %1098 = arith.mulf %1096, %1097 : vector<8x128xf32>
    %cst_247 = arith.constant -1.800000e+00 : f32
    %1099 = vector.broadcast %cst_247 : f32 to vector<8x128xf32>
    %1100 = arith.subf %905, %1099 : vector<8x128xf32>
    %1101 = arith.mulf %1100, %1017 : vector<8x128xf32>
    %cst_248 = arith.constant -6.000000e-01 : f32
    %1102 = vector.broadcast %cst_248 : f32 to vector<8x128xf32>
    %1103 = arith.subf %1102, %905 : vector<8x128xf32>
    %1104 = arith.mulf %1103, %1026 : vector<8x128xf32>
    %1105 = arith.addf %1101, %1104 : vector<8x128xf32>
    %cst_249 = arith.constant 1.250000e+00 : f32
    %1106 = vector.broadcast %cst_249 : f32 to vector<8x128xf32>
    %1107 = arith.mulf %1105, %1106 : vector<8x128xf32>
    %cst_250 = arith.constant -1.400000e+00 : f32
    %1108 = vector.broadcast %cst_250 : f32 to vector<8x128xf32>
    %1109 = arith.subf %905, %1108 : vector<8x128xf32>
    %1110 = arith.mulf %1109, %1026 : vector<8x128xf32>
    %cst_251 = arith.constant -2.000000e-01 : f32
    %1111 = vector.broadcast %cst_251 : f32 to vector<8x128xf32>
    %1112 = arith.subf %1111, %905 : vector<8x128xf32>
    %1113 = arith.mulf %1112, %1035 : vector<8x128xf32>
    %1114 = arith.addf %1110, %1113 : vector<8x128xf32>
    %cst_252 = arith.constant 1.250000e+00 : f32
    %1115 = vector.broadcast %cst_252 : f32 to vector<8x128xf32>
    %1116 = arith.mulf %1114, %1115 : vector<8x128xf32>
    %cst_253 = arith.constant -1.000000e+00 : f32
    %1117 = vector.broadcast %cst_253 : f32 to vector<8x128xf32>
    %1118 = arith.subf %905, %1117 : vector<8x128xf32>
    %1119 = arith.mulf %1118, %1035 : vector<8x128xf32>
    %cst_254 = arith.constant 2.000000e-01 : f32
    %1120 = vector.broadcast %cst_254 : f32 to vector<8x128xf32>
    %1121 = arith.subf %1120, %905 : vector<8x128xf32>
    %1122 = arith.mulf %1121, %1044 : vector<8x128xf32>
    %1123 = arith.addf %1119, %1122 : vector<8x128xf32>
    %cst_255 = arith.constant 1.250000e+00 : f32
    %1124 = vector.broadcast %cst_255 : f32 to vector<8x128xf32>
    %1125 = arith.mulf %1123, %1124 : vector<8x128xf32>
    %cst_256 = arith.constant -6.000000e-01 : f32
    %1126 = vector.broadcast %cst_256 : f32 to vector<8x128xf32>
    %1127 = arith.subf %905, %1126 : vector<8x128xf32>
    %1128 = arith.mulf %1127, %1044 : vector<8x128xf32>
    %cst_257 = arith.constant 6.000000e-01 : f32
    %1129 = vector.broadcast %cst_257 : f32 to vector<8x128xf32>
    %1130 = arith.subf %1129, %905 : vector<8x128xf32>
    %1131 = arith.mulf %1130, %1053 : vector<8x128xf32>
    %1132 = arith.addf %1128, %1131 : vector<8x128xf32>
    %cst_258 = arith.constant 1.250000e+00 : f32
    %1133 = vector.broadcast %cst_258 : f32 to vector<8x128xf32>
    %1134 = arith.mulf %1132, %1133 : vector<8x128xf32>
    %cst_259 = arith.constant -2.000000e-01 : f32
    %1135 = vector.broadcast %cst_259 : f32 to vector<8x128xf32>
    %1136 = arith.subf %905, %1135 : vector<8x128xf32>
    %1137 = arith.mulf %1136, %1053 : vector<8x128xf32>
    %cst_260 = arith.constant 1.000000e+00 : f32
    %1138 = vector.broadcast %cst_260 : f32 to vector<8x128xf32>
    %1139 = arith.subf %1138, %905 : vector<8x128xf32>
    %1140 = arith.mulf %1139, %1062 : vector<8x128xf32>
    %1141 = arith.addf %1137, %1140 : vector<8x128xf32>
    %cst_261 = arith.constant 1.250000e+00 : f32
    %1142 = vector.broadcast %cst_261 : f32 to vector<8x128xf32>
    %1143 = arith.mulf %1141, %1142 : vector<8x128xf32>
    %cst_262 = arith.constant 2.000000e-01 : f32
    %1144 = vector.broadcast %cst_262 : f32 to vector<8x128xf32>
    %1145 = arith.subf %905, %1144 : vector<8x128xf32>
    %1146 = arith.mulf %1145, %1062 : vector<8x128xf32>
    %cst_263 = arith.constant 1.400000e+00 : f32
    %1147 = vector.broadcast %cst_263 : f32 to vector<8x128xf32>
    %1148 = arith.subf %1147, %905 : vector<8x128xf32>
    %1149 = arith.mulf %1148, %1071 : vector<8x128xf32>
    %1150 = arith.addf %1146, %1149 : vector<8x128xf32>
    %cst_264 = arith.constant 1.250000e+00 : f32
    %1151 = vector.broadcast %cst_264 : f32 to vector<8x128xf32>
    %1152 = arith.mulf %1150, %1151 : vector<8x128xf32>
    %cst_265 = arith.constant 6.000000e-01 : f32
    %1153 = vector.broadcast %cst_265 : f32 to vector<8x128xf32>
    %1154 = arith.subf %905, %1153 : vector<8x128xf32>
    %1155 = arith.mulf %1154, %1071 : vector<8x128xf32>
    %cst_266 = arith.constant 1.800000e+00 : f32
    %1156 = vector.broadcast %cst_266 : f32 to vector<8x128xf32>
    %1157 = arith.subf %1156, %905 : vector<8x128xf32>
    %1158 = arith.mulf %1157, %1080 : vector<8x128xf32>
    %1159 = arith.addf %1155, %1158 : vector<8x128xf32>
    %cst_267 = arith.constant 1.250000e+00 : f32
    %1160 = vector.broadcast %cst_267 : f32 to vector<8x128xf32>
    %1161 = arith.mulf %1159, %1160 : vector<8x128xf32>
    %cst_268 = arith.constant 1.000000e+00 : f32
    %1162 = vector.broadcast %cst_268 : f32 to vector<8x128xf32>
    %1163 = arith.subf %905, %1162 : vector<8x128xf32>
    %1164 = arith.mulf %1163, %1080 : vector<8x128xf32>
    %cst_269 = arith.constant 2.200000e+00 : f32
    %1165 = vector.broadcast %cst_269 : f32 to vector<8x128xf32>
    %1166 = arith.subf %1165, %905 : vector<8x128xf32>
    %1167 = arith.mulf %1166, %1089 : vector<8x128xf32>
    %1168 = arith.addf %1164, %1167 : vector<8x128xf32>
    %cst_270 = arith.constant 1.250000e+00 : f32
    %1169 = vector.broadcast %cst_270 : f32 to vector<8x128xf32>
    %1170 = arith.mulf %1168, %1169 : vector<8x128xf32>
    %cst_271 = arith.constant -2.200000e+00 : f32
    %1171 = vector.broadcast %cst_271 : f32 to vector<8x128xf32>
    %1172 = arith.subf %905, %1171 : vector<8x128xf32>
    %1173 = arith.mulf %1172, %1098 : vector<8x128xf32>
    %cst_272 = arith.constant -6.000000e-01 : f32
    %1174 = vector.broadcast %cst_272 : f32 to vector<8x128xf32>
    %1175 = arith.subf %1174, %905 : vector<8x128xf32>
    %1176 = arith.mulf %1175, %1107 : vector<8x128xf32>
    %1177 = arith.addf %1173, %1176 : vector<8x128xf32>
    %cst_273 = arith.constant 0.833333313 : f32
    %1178 = vector.broadcast %cst_273 : f32 to vector<8x128xf32>
    %1179 = arith.mulf %1177, %1178 : vector<8x128xf32>
    %cst_274 = arith.constant -1.800000e+00 : f32
    %1180 = vector.broadcast %cst_274 : f32 to vector<8x128xf32>
    %1181 = arith.subf %905, %1180 : vector<8x128xf32>
    %1182 = arith.mulf %1181, %1107 : vector<8x128xf32>
    %cst_275 = arith.constant -2.000000e-01 : f32
    %1183 = vector.broadcast %cst_275 : f32 to vector<8x128xf32>
    %1184 = arith.subf %1183, %905 : vector<8x128xf32>
    %1185 = arith.mulf %1184, %1116 : vector<8x128xf32>
    %1186 = arith.addf %1182, %1185 : vector<8x128xf32>
    %cst_276 = arith.constant 0.833333313 : f32
    %1187 = vector.broadcast %cst_276 : f32 to vector<8x128xf32>
    %1188 = arith.mulf %1186, %1187 : vector<8x128xf32>
    %cst_277 = arith.constant -1.400000e+00 : f32
    %1189 = vector.broadcast %cst_277 : f32 to vector<8x128xf32>
    %1190 = arith.subf %905, %1189 : vector<8x128xf32>
    %1191 = arith.mulf %1190, %1116 : vector<8x128xf32>
    %cst_278 = arith.constant 2.000000e-01 : f32
    %1192 = vector.broadcast %cst_278 : f32 to vector<8x128xf32>
    %1193 = arith.subf %1192, %905 : vector<8x128xf32>
    %1194 = arith.mulf %1193, %1125 : vector<8x128xf32>
    %1195 = arith.addf %1191, %1194 : vector<8x128xf32>
    %cst_279 = arith.constant 0.833333313 : f32
    %1196 = vector.broadcast %cst_279 : f32 to vector<8x128xf32>
    %1197 = arith.mulf %1195, %1196 : vector<8x128xf32>
    %cst_280 = arith.constant -1.000000e+00 : f32
    %1198 = vector.broadcast %cst_280 : f32 to vector<8x128xf32>
    %1199 = arith.subf %905, %1198 : vector<8x128xf32>
    %1200 = arith.mulf %1199, %1125 : vector<8x128xf32>
    %cst_281 = arith.constant 6.000000e-01 : f32
    %1201 = vector.broadcast %cst_281 : f32 to vector<8x128xf32>
    %1202 = arith.subf %1201, %905 : vector<8x128xf32>
    %1203 = arith.mulf %1202, %1134 : vector<8x128xf32>
    %1204 = arith.addf %1200, %1203 : vector<8x128xf32>
    %cst_282 = arith.constant 0.833333313 : f32
    %1205 = vector.broadcast %cst_282 : f32 to vector<8x128xf32>
    %1206 = arith.mulf %1204, %1205 : vector<8x128xf32>
    %cst_283 = arith.constant -6.000000e-01 : f32
    %1207 = vector.broadcast %cst_283 : f32 to vector<8x128xf32>
    %1208 = arith.subf %905, %1207 : vector<8x128xf32>
    %1209 = arith.mulf %1208, %1134 : vector<8x128xf32>
    %cst_284 = arith.constant 1.000000e+00 : f32
    %1210 = vector.broadcast %cst_284 : f32 to vector<8x128xf32>
    %1211 = arith.subf %1210, %905 : vector<8x128xf32>
    %1212 = arith.mulf %1211, %1143 : vector<8x128xf32>
    %1213 = arith.addf %1209, %1212 : vector<8x128xf32>
    %cst_285 = arith.constant 0.833333313 : f32
    %1214 = vector.broadcast %cst_285 : f32 to vector<8x128xf32>
    %1215 = arith.mulf %1213, %1214 : vector<8x128xf32>
    %cst_286 = arith.constant -2.000000e-01 : f32
    %1216 = vector.broadcast %cst_286 : f32 to vector<8x128xf32>
    %1217 = arith.subf %905, %1216 : vector<8x128xf32>
    %1218 = arith.mulf %1217, %1143 : vector<8x128xf32>
    %cst_287 = arith.constant 1.400000e+00 : f32
    %1219 = vector.broadcast %cst_287 : f32 to vector<8x128xf32>
    %1220 = arith.subf %1219, %905 : vector<8x128xf32>
    %1221 = arith.mulf %1220, %1152 : vector<8x128xf32>
    %1222 = arith.addf %1218, %1221 : vector<8x128xf32>
    %cst_288 = arith.constant 0.833333313 : f32
    %1223 = vector.broadcast %cst_288 : f32 to vector<8x128xf32>
    %1224 = arith.mulf %1222, %1223 : vector<8x128xf32>
    %cst_289 = arith.constant 2.000000e-01 : f32
    %1225 = vector.broadcast %cst_289 : f32 to vector<8x128xf32>
    %1226 = arith.subf %905, %1225 : vector<8x128xf32>
    %1227 = arith.mulf %1226, %1152 : vector<8x128xf32>
    %cst_290 = arith.constant 1.800000e+00 : f32
    %1228 = vector.broadcast %cst_290 : f32 to vector<8x128xf32>
    %1229 = arith.subf %1228, %905 : vector<8x128xf32>
    %1230 = arith.mulf %1229, %1161 : vector<8x128xf32>
    %1231 = arith.addf %1227, %1230 : vector<8x128xf32>
    %cst_291 = arith.constant 0.833333313 : f32
    %1232 = vector.broadcast %cst_291 : f32 to vector<8x128xf32>
    %1233 = arith.mulf %1231, %1232 : vector<8x128xf32>
    %cst_292 = arith.constant 6.000000e-01 : f32
    %1234 = vector.broadcast %cst_292 : f32 to vector<8x128xf32>
    %1235 = arith.subf %905, %1234 : vector<8x128xf32>
    %1236 = arith.mulf %1235, %1161 : vector<8x128xf32>
    %cst_293 = arith.constant 2.200000e+00 : f32
    %1237 = vector.broadcast %cst_293 : f32 to vector<8x128xf32>
    %1238 = arith.subf %1237, %905 : vector<8x128xf32>
    %1239 = arith.mulf %1238, %1170 : vector<8x128xf32>
    %1240 = arith.addf %1236, %1239 : vector<8x128xf32>
    %cst_294 = arith.constant 0.833333313 : f32
    %1241 = vector.broadcast %cst_294 : f32 to vector<8x128xf32>
    %1242 = arith.mulf %1240, %1241 : vector<8x128xf32>
    %1243 = tpu.concatenate %911, %1179, %1188, %1197, %1206, %1215, %1224, %1233, %1242 in 1 : vector<8x128xf32>, vector<8x128xf32>, vector<8x128xf32>, vector<8x128xf32>, vector<8x128xf32>, vector<8x128xf32>, vector<8x128xf32>, vector<8x128xf32>, vector<8x128xf32> -> vector<8x1152xf32>
    %1244 = arith.truncf %1243 : vector<8x1152xf32> to vector<8x1152xbf16>
    %c0_295 = arith.constant 0 : index
    %c0_296 = arith.constant 0 : index
    %1245 = vector.load %arg11[%c0_295, %c0_296] : memref<1152x64xbf16, #tpu.memory_space<vmem>>, vector<1152x64xbf16>
    %cst_297 = arith.constant dense<0.000000e+00> : vector<8x64xf32>
    %1246 = tpu.matmul %1244, %1245, %cst_297 {dimension_numbers = #tpu.dot_dimension_numbers<[1], [0], [0], [1], [0, 0, 1, 1], [], []>} : vector<8x1152xbf16>, vector<1152x64xbf16>, vector<8x64xf32> -> vector<8x64xf32>
    %1247 = arith.negf %1246 : vector<8x64xf32>
    %1248 = math.exp %1247 : vector<8x64xf32>
    %cst_298 = arith.constant 1.000000e+00 : f32
    %1249 = vector.broadcast %cst_298 : f32 to vector<8x64xf32>
    %1250 = arith.addf %1249, %1248 : vector<8x64xf32>
    %1251 = arith.divf %1249, %1250 : vector<8x64xf32>
    %1252 = arith.mulf %1246, %1251 : vector<8x64xf32>
    %cst_299 = arith.constant -2.200000e+00 : f32
    %1253 = vector.broadcast %cst_299 : f32 to vector<8x64xf32>
    %1254 = arith.cmpf oge, %1246, %1253 : vector<8x64xf32>
    %cst_300 = arith.constant -1.800000e+00 : f32
    %1255 = vector.broadcast %cst_300 : f32 to vector<8x64xf32>
    %1256 = arith.cmpf olt, %1246, %1255 : vector<8x64xf32>
    %1257 = arith.andi %1254, %1256 : vector<8x64xi1>
    %cst_301 = arith.constant 1.000000e+00 : f32
    %cst_302 = arith.constant 0.000000e+00 : f32
    %1258 = vector.broadcast %cst_301 : f32 to vector<8x64xf32>
    %1259 = vector.broadcast %cst_302 : f32 to vector<8x64xf32>
    %1260 = arith.select %1257, %1258, %1259 : vector<8x64xi1>, vector<8x64xf32>
    %cst_303 = arith.constant -1.800000e+00 : f32
    %1261 = vector.broadcast %cst_303 : f32 to vector<8x64xf32>
    %1262 = arith.cmpf oge, %1246, %1261 : vector<8x64xf32>
    %cst_304 = arith.constant -1.400000e+00 : f32
    %1263 = vector.broadcast %cst_304 : f32 to vector<8x64xf32>
    %1264 = arith.cmpf olt, %1246, %1263 : vector<8x64xf32>
    %1265 = arith.andi %1262, %1264 : vector<8x64xi1>
    %cst_305 = arith.constant 1.000000e+00 : f32
    %cst_306 = arith.constant 0.000000e+00 : f32
    %1266 = vector.broadcast %cst_305 : f32 to vector<8x64xf32>
    %1267 = vector.broadcast %cst_306 : f32 to vector<8x64xf32>
    %1268 = arith.select %1265, %1266, %1267 : vector<8x64xi1>, vector<8x64xf32>
    %cst_307 = arith.constant -1.400000e+00 : f32
    %1269 = vector.broadcast %cst_307 : f32 to vector<8x64xf32>
    %1270 = arith.cmpf oge, %1246, %1269 : vector<8x64xf32>
    %cst_308 = arith.constant -1.000000e+00 : f32
    %1271 = vector.broadcast %cst_308 : f32 to vector<8x64xf32>
    %1272 = arith.cmpf olt, %1246, %1271 : vector<8x64xf32>
    %1273 = arith.andi %1270, %1272 : vector<8x64xi1>
    %cst_309 = arith.constant 1.000000e+00 : f32
    %cst_310 = arith.constant 0.000000e+00 : f32
    %1274 = vector.broadcast %cst_309 : f32 to vector<8x64xf32>
    %1275 = vector.broadcast %cst_310 : f32 to vector<8x64xf32>
    %1276 = arith.select %1273, %1274, %1275 : vector<8x64xi1>, vector<8x64xf32>
    %cst_311 = arith.constant -1.000000e+00 : f32
    %1277 = vector.broadcast %cst_311 : f32 to vector<8x64xf32>
    %1278 = arith.cmpf oge, %1246, %1277 : vector<8x64xf32>
    %cst_312 = arith.constant -6.000000e-01 : f32
    %1279 = vector.broadcast %cst_312 : f32 to vector<8x64xf32>
    %1280 = arith.cmpf olt, %1246, %1279 : vector<8x64xf32>
    %1281 = arith.andi %1278, %1280 : vector<8x64xi1>
    %cst_313 = arith.constant 1.000000e+00 : f32
    %cst_314 = arith.constant 0.000000e+00 : f32
    %1282 = vector.broadcast %cst_313 : f32 to vector<8x64xf32>
    %1283 = vector.broadcast %cst_314 : f32 to vector<8x64xf32>
    %1284 = arith.select %1281, %1282, %1283 : vector<8x64xi1>, vector<8x64xf32>
    %cst_315 = arith.constant -6.000000e-01 : f32
    %1285 = vector.broadcast %cst_315 : f32 to vector<8x64xf32>
    %1286 = arith.cmpf oge, %1246, %1285 : vector<8x64xf32>
    %cst_316 = arith.constant -2.000000e-01 : f32
    %1287 = vector.broadcast %cst_316 : f32 to vector<8x64xf32>
    %1288 = arith.cmpf olt, %1246, %1287 : vector<8x64xf32>
    %1289 = arith.andi %1286, %1288 : vector<8x64xi1>
    %cst_317 = arith.constant 1.000000e+00 : f32
    %cst_318 = arith.constant 0.000000e+00 : f32
    %1290 = vector.broadcast %cst_317 : f32 to vector<8x64xf32>
    %1291 = vector.broadcast %cst_318 : f32 to vector<8x64xf32>
    %1292 = arith.select %1289, %1290, %1291 : vector<8x64xi1>, vector<8x64xf32>
    %cst_319 = arith.constant -2.000000e-01 : f32
    %1293 = vector.broadcast %cst_319 : f32 to vector<8x64xf32>
    %1294 = arith.cmpf oge, %1246, %1293 : vector<8x64xf32>
    %cst_320 = arith.constant 2.000000e-01 : f32
    %1295 = vector.broadcast %cst_320 : f32 to vector<8x64xf32>
    %1296 = arith.cmpf olt, %1246, %1295 : vector<8x64xf32>
    %1297 = arith.andi %1294, %1296 : vector<8x64xi1>
    %cst_321 = arith.constant 1.000000e+00 : f32
    %cst_322 = arith.constant 0.000000e+00 : f32
    %1298 = vector.broadcast %cst_321 : f32 to vector<8x64xf32>
    %1299 = vector.broadcast %cst_322 : f32 to vector<8x64xf32>
    %1300 = arith.select %1297, %1298, %1299 : vector<8x64xi1>, vector<8x64xf32>
    %cst_323 = arith.constant 2.000000e-01 : f32
    %1301 = vector.broadcast %cst_323 : f32 to vector<8x64xf32>
    %1302 = arith.cmpf oge, %1246, %1301 : vector<8x64xf32>
    %cst_324 = arith.constant 6.000000e-01 : f32
    %1303 = vector.broadcast %cst_324 : f32 to vector<8x64xf32>
    %1304 = arith.cmpf olt, %1246, %1303 : vector<8x64xf32>
    %1305 = arith.andi %1302, %1304 : vector<8x64xi1>
    %cst_325 = arith.constant 1.000000e+00 : f32
    %cst_326 = arith.constant 0.000000e+00 : f32
    %1306 = vector.broadcast %cst_325 : f32 to vector<8x64xf32>
    %1307 = vector.broadcast %cst_326 : f32 to vector<8x64xf32>
    %1308 = arith.select %1305, %1306, %1307 : vector<8x64xi1>, vector<8x64xf32>
    %cst_327 = arith.constant 6.000000e-01 : f32
    %1309 = vector.broadcast %cst_327 : f32 to vector<8x64xf32>
    %1310 = arith.cmpf oge, %1246, %1309 : vector<8x64xf32>
    %cst_328 = arith.constant 1.000000e+00 : f32
    %1311 = vector.broadcast %cst_328 : f32 to vector<8x64xf32>
    %1312 = arith.cmpf olt, %1246, %1311 : vector<8x64xf32>
    %1313 = arith.andi %1310, %1312 : vector<8x64xi1>
    %cst_329 = arith.constant 1.000000e+00 : f32
    %cst_330 = arith.constant 0.000000e+00 : f32
    %1314 = vector.broadcast %cst_329 : f32 to vector<8x64xf32>
    %1315 = vector.broadcast %cst_330 : f32 to vector<8x64xf32>
    %1316 = arith.select %1313, %1314, %1315 : vector<8x64xi1>, vector<8x64xf32>
    %cst_331 = arith.constant 1.000000e+00 : f32
    %1317 = vector.broadcast %cst_331 : f32 to vector<8x64xf32>
    %1318 = arith.cmpf oge, %1246, %1317 : vector<8x64xf32>
    %cst_332 = arith.constant 1.400000e+00 : f32
    %1319 = vector.broadcast %cst_332 : f32 to vector<8x64xf32>
    %1320 = arith.cmpf olt, %1246, %1319 : vector<8x64xf32>
    %1321 = arith.andi %1318, %1320 : vector<8x64xi1>
    %cst_333 = arith.constant 1.000000e+00 : f32
    %cst_334 = arith.constant 0.000000e+00 : f32
    %1322 = vector.broadcast %cst_333 : f32 to vector<8x64xf32>
    %1323 = vector.broadcast %cst_334 : f32 to vector<8x64xf32>
    %1324 = arith.select %1321, %1322, %1323 : vector<8x64xi1>, vector<8x64xf32>
    %cst_335 = arith.constant 1.400000e+00 : f32
    %1325 = vector.broadcast %cst_335 : f32 to vector<8x64xf32>
    %1326 = arith.cmpf oge, %1246, %1325 : vector<8x64xf32>
    %cst_336 = arith.constant 1.800000e+00 : f32
    %1327 = vector.broadcast %cst_336 : f32 to vector<8x64xf32>
    %1328 = arith.cmpf olt, %1246, %1327 : vector<8x64xf32>
    %1329 = arith.andi %1326, %1328 : vector<8x64xi1>
    %cst_337 = arith.constant 1.000000e+00 : f32
    %cst_338 = arith.constant 0.000000e+00 : f32
    %1330 = vector.broadcast %cst_337 : f32 to vector<8x64xf32>
    %1331 = vector.broadcast %cst_338 : f32 to vector<8x64xf32>
    %1332 = arith.select %1329, %1330, %1331 : vector<8x64xi1>, vector<8x64xf32>
    %cst_339 = arith.constant 1.800000e+00 : f32
    %1333 = vector.broadcast %cst_339 : f32 to vector<8x64xf32>
    %1334 = arith.cmpf oge, %1246, %1333 : vector<8x64xf32>
    %cst_340 = arith.constant 2.200000e+00 : f32
    %1335 = vector.broadcast %cst_340 : f32 to vector<8x64xf32>
    %1336 = arith.cmpf olt, %1246, %1335 : vector<8x64xf32>
    %1337 = arith.andi %1334, %1336 : vector<8x64xi1>
    %cst_341 = arith.constant 1.000000e+00 : f32
    %cst_342 = arith.constant 0.000000e+00 : f32
    %1338 = vector.broadcast %cst_341 : f32 to vector<8x64xf32>
    %1339 = vector.broadcast %cst_342 : f32 to vector<8x64xf32>
    %1340 = arith.select %1337, %1338, %1339 : vector<8x64xi1>, vector<8x64xf32>
    %cst_343 = arith.constant -2.200000e+00 : f32
    %1341 = vector.broadcast %cst_343 : f32 to vector<8x64xf32>
    %1342 = arith.subf %1246, %1341 : vector<8x64xf32>
    %1343 = arith.mulf %1342, %1260 : vector<8x64xf32>
    %cst_344 = arith.constant -1.400000e+00 : f32
    %1344 = vector.broadcast %cst_344 : f32 to vector<8x64xf32>
    %1345 = arith.subf %1344, %1246 : vector<8x64xf32>
    %1346 = arith.mulf %1345, %1268 : vector<8x64xf32>
    %1347 = arith.addf %1343, %1346 : vector<8x64xf32>
    %cst_345 = arith.constant 2.500000e+00 : f32
    %1348 = vector.broadcast %cst_345 : f32 to vector<8x64xf32>
    %1349 = arith.mulf %1347, %1348 : vector<8x64xf32>
    %cst_346 = arith.constant -1.800000e+00 : f32
    %1350 = vector.broadcast %cst_346 : f32 to vector<8x64xf32>
    %1351 = arith.subf %1246, %1350 : vector<8x64xf32>
    %1352 = arith.mulf %1351, %1268 : vector<8x64xf32>
    %cst_347 = arith.constant -1.000000e+00 : f32
    %1353 = vector.broadcast %cst_347 : f32 to vector<8x64xf32>
    %1354 = arith.subf %1353, %1246 : vector<8x64xf32>
    %1355 = arith.mulf %1354, %1276 : vector<8x64xf32>
    %1356 = arith.addf %1352, %1355 : vector<8x64xf32>
    %cst_348 = arith.constant 2.500000e+00 : f32
    %1357 = vector.broadcast %cst_348 : f32 to vector<8x64xf32>
    %1358 = arith.mulf %1356, %1357 : vector<8x64xf32>
    %cst_349 = arith.constant -1.400000e+00 : f32
    %1359 = vector.broadcast %cst_349 : f32 to vector<8x64xf32>
    %1360 = arith.subf %1246, %1359 : vector<8x64xf32>
    %1361 = arith.mulf %1360, %1276 : vector<8x64xf32>
    %cst_350 = arith.constant -6.000000e-01 : f32
    %1362 = vector.broadcast %cst_350 : f32 to vector<8x64xf32>
    %1363 = arith.subf %1362, %1246 : vector<8x64xf32>
    %1364 = arith.mulf %1363, %1284 : vector<8x64xf32>
    %1365 = arith.addf %1361, %1364 : vector<8x64xf32>
    %cst_351 = arith.constant 2.500000e+00 : f32
    %1366 = vector.broadcast %cst_351 : f32 to vector<8x64xf32>
    %1367 = arith.mulf %1365, %1366 : vector<8x64xf32>
    %cst_352 = arith.constant -1.000000e+00 : f32
    %1368 = vector.broadcast %cst_352 : f32 to vector<8x64xf32>
    %1369 = arith.subf %1246, %1368 : vector<8x64xf32>
    %1370 = arith.mulf %1369, %1284 : vector<8x64xf32>
    %cst_353 = arith.constant -2.000000e-01 : f32
    %1371 = vector.broadcast %cst_353 : f32 to vector<8x64xf32>
    %1372 = arith.subf %1371, %1246 : vector<8x64xf32>
    %1373 = arith.mulf %1372, %1292 : vector<8x64xf32>
    %1374 = arith.addf %1370, %1373 : vector<8x64xf32>
    %cst_354 = arith.constant 2.500000e+00 : f32
    %1375 = vector.broadcast %cst_354 : f32 to vector<8x64xf32>
    %1376 = arith.mulf %1374, %1375 : vector<8x64xf32>
    %cst_355 = arith.constant -6.000000e-01 : f32
    %1377 = vector.broadcast %cst_355 : f32 to vector<8x64xf32>
    %1378 = arith.subf %1246, %1377 : vector<8x64xf32>
    %1379 = arith.mulf %1378, %1292 : vector<8x64xf32>
    %cst_356 = arith.constant 2.000000e-01 : f32
    %1380 = vector.broadcast %cst_356 : f32 to vector<8x64xf32>
    %1381 = arith.subf %1380, %1246 : vector<8x64xf32>
    %1382 = arith.mulf %1381, %1300 : vector<8x64xf32>
    %1383 = arith.addf %1379, %1382 : vector<8x64xf32>
    %cst_357 = arith.constant 2.500000e+00 : f32
    %1384 = vector.broadcast %cst_357 : f32 to vector<8x64xf32>
    %1385 = arith.mulf %1383, %1384 : vector<8x64xf32>
    %cst_358 = arith.constant -2.000000e-01 : f32
    %1386 = vector.broadcast %cst_358 : f32 to vector<8x64xf32>
    %1387 = arith.subf %1246, %1386 : vector<8x64xf32>
    %1388 = arith.mulf %1387, %1300 : vector<8x64xf32>
    %cst_359 = arith.constant 6.000000e-01 : f32
    %1389 = vector.broadcast %cst_359 : f32 to vector<8x64xf32>
    %1390 = arith.subf %1389, %1246 : vector<8x64xf32>
    %1391 = arith.mulf %1390, %1308 : vector<8x64xf32>
    %1392 = arith.addf %1388, %1391 : vector<8x64xf32>
    %cst_360 = arith.constant 2.500000e+00 : f32
    %1393 = vector.broadcast %cst_360 : f32 to vector<8x64xf32>
    %1394 = arith.mulf %1392, %1393 : vector<8x64xf32>
    %cst_361 = arith.constant 2.000000e-01 : f32
    %1395 = vector.broadcast %cst_361 : f32 to vector<8x64xf32>
    %1396 = arith.subf %1246, %1395 : vector<8x64xf32>
    %1397 = arith.mulf %1396, %1308 : vector<8x64xf32>
    %cst_362 = arith.constant 1.000000e+00 : f32
    %1398 = vector.broadcast %cst_362 : f32 to vector<8x64xf32>
    %1399 = arith.subf %1398, %1246 : vector<8x64xf32>
    %1400 = arith.mulf %1399, %1316 : vector<8x64xf32>
    %1401 = arith.addf %1397, %1400 : vector<8x64xf32>
    %cst_363 = arith.constant 2.500000e+00 : f32
    %1402 = vector.broadcast %cst_363 : f32 to vector<8x64xf32>
    %1403 = arith.mulf %1401, %1402 : vector<8x64xf32>
    %cst_364 = arith.constant 6.000000e-01 : f32
    %1404 = vector.broadcast %cst_364 : f32 to vector<8x64xf32>
    %1405 = arith.subf %1246, %1404 : vector<8x64xf32>
    %1406 = arith.mulf %1405, %1316 : vector<8x64xf32>
    %cst_365 = arith.constant 1.400000e+00 : f32
    %1407 = vector.broadcast %cst_365 : f32 to vector<8x64xf32>
    %1408 = arith.subf %1407, %1246 : vector<8x64xf32>
    %1409 = arith.mulf %1408, %1324 : vector<8x64xf32>
    %1410 = arith.addf %1406, %1409 : vector<8x64xf32>
    %cst_366 = arith.constant 2.500000e+00 : f32
    %1411 = vector.broadcast %cst_366 : f32 to vector<8x64xf32>
    %1412 = arith.mulf %1410, %1411 : vector<8x64xf32>
    %cst_367 = arith.constant 1.000000e+00 : f32
    %1413 = vector.broadcast %cst_367 : f32 to vector<8x64xf32>
    %1414 = arith.subf %1246, %1413 : vector<8x64xf32>
    %1415 = arith.mulf %1414, %1324 : vector<8x64xf32>
    %cst_368 = arith.constant 1.800000e+00 : f32
    %1416 = vector.broadcast %cst_368 : f32 to vector<8x64xf32>
    %1417 = arith.subf %1416, %1246 : vector<8x64xf32>
    %1418 = arith.mulf %1417, %1332 : vector<8x64xf32>
    %1419 = arith.addf %1415, %1418 : vector<8x64xf32>
    %cst_369 = arith.constant 2.500000e+00 : f32
    %1420 = vector.broadcast %cst_369 : f32 to vector<8x64xf32>
    %1421 = arith.mulf %1419, %1420 : vector<8x64xf32>
    %cst_370 = arith.constant 1.400000e+00 : f32
    %1422 = vector.broadcast %cst_370 : f32 to vector<8x64xf32>
    %1423 = arith.subf %1246, %1422 : vector<8x64xf32>
    %1424 = arith.mulf %1423, %1332 : vector<8x64xf32>
    %cst_371 = arith.constant 2.200000e+00 : f32
    %1425 = vector.broadcast %cst_371 : f32 to vector<8x64xf32>
    %1426 = arith.subf %1425, %1246 : vector<8x64xf32>
    %1427 = arith.mulf %1426, %1340 : vector<8x64xf32>
    %1428 = arith.addf %1424, %1427 : vector<8x64xf32>
    %cst_372 = arith.constant 2.500000e+00 : f32
    %1429 = vector.broadcast %cst_372 : f32 to vector<8x64xf32>
    %1430 = arith.mulf %1428, %1429 : vector<8x64xf32>
    %cst_373 = arith.constant -2.200000e+00 : f32
    %1431 = vector.broadcast %cst_373 : f32 to vector<8x64xf32>
    %1432 = arith.subf %1246, %1431 : vector<8x64xf32>
    %1433 = arith.mulf %1432, %1349 : vector<8x64xf32>
    %cst_374 = arith.constant -1.000000e+00 : f32
    %1434 = vector.broadcast %cst_374 : f32 to vector<8x64xf32>
    %1435 = arith.subf %1434, %1246 : vector<8x64xf32>
    %1436 = arith.mulf %1435, %1358 : vector<8x64xf32>
    %1437 = arith.addf %1433, %1436 : vector<8x64xf32>
    %cst_375 = arith.constant 1.250000e+00 : f32
    %1438 = vector.broadcast %cst_375 : f32 to vector<8x64xf32>
    %1439 = arith.mulf %1437, %1438 : vector<8x64xf32>
    %cst_376 = arith.constant -1.800000e+00 : f32
    %1440 = vector.broadcast %cst_376 : f32 to vector<8x64xf32>
    %1441 = arith.subf %1246, %1440 : vector<8x64xf32>
    %1442 = arith.mulf %1441, %1358 : vector<8x64xf32>
    %cst_377 = arith.constant -6.000000e-01 : f32
    %1443 = vector.broadcast %cst_377 : f32 to vector<8x64xf32>
    %1444 = arith.subf %1443, %1246 : vector<8x64xf32>
    %1445 = arith.mulf %1444, %1367 : vector<8x64xf32>
    %1446 = arith.addf %1442, %1445 : vector<8x64xf32>
    %cst_378 = arith.constant 1.250000e+00 : f32
    %1447 = vector.broadcast %cst_378 : f32 to vector<8x64xf32>
    %1448 = arith.mulf %1446, %1447 : vector<8x64xf32>
    %cst_379 = arith.constant -1.400000e+00 : f32
    %1449 = vector.broadcast %cst_379 : f32 to vector<8x64xf32>
    %1450 = arith.subf %1246, %1449 : vector<8x64xf32>
    %1451 = arith.mulf %1450, %1367 : vector<8x64xf32>
    %cst_380 = arith.constant -2.000000e-01 : f32
    %1452 = vector.broadcast %cst_380 : f32 to vector<8x64xf32>
    %1453 = arith.subf %1452, %1246 : vector<8x64xf32>
    %1454 = arith.mulf %1453, %1376 : vector<8x64xf32>
    %1455 = arith.addf %1451, %1454 : vector<8x64xf32>
    %cst_381 = arith.constant 1.250000e+00 : f32
    %1456 = vector.broadcast %cst_381 : f32 to vector<8x64xf32>
    %1457 = arith.mulf %1455, %1456 : vector<8x64xf32>
    %cst_382 = arith.constant -1.000000e+00 : f32
    %1458 = vector.broadcast %cst_382 : f32 to vector<8x64xf32>
    %1459 = arith.subf %1246, %1458 : vector<8x64xf32>
    %1460 = arith.mulf %1459, %1376 : vector<8x64xf32>
    %cst_383 = arith.constant 2.000000e-01 : f32
    %1461 = vector.broadcast %cst_383 : f32 to vector<8x64xf32>
    %1462 = arith.subf %1461, %1246 : vector<8x64xf32>
    %1463 = arith.mulf %1462, %1385 : vector<8x64xf32>
    %1464 = arith.addf %1460, %1463 : vector<8x64xf32>
    %cst_384 = arith.constant 1.250000e+00 : f32
    %1465 = vector.broadcast %cst_384 : f32 to vector<8x64xf32>
    %1466 = arith.mulf %1464, %1465 : vector<8x64xf32>
    %cst_385 = arith.constant -6.000000e-01 : f32
    %1467 = vector.broadcast %cst_385 : f32 to vector<8x64xf32>
    %1468 = arith.subf %1246, %1467 : vector<8x64xf32>
    %1469 = arith.mulf %1468, %1385 : vector<8x64xf32>
    %cst_386 = arith.constant 6.000000e-01 : f32
    %1470 = vector.broadcast %cst_386 : f32 to vector<8x64xf32>
    %1471 = arith.subf %1470, %1246 : vector<8x64xf32>
    %1472 = arith.mulf %1471, %1394 : vector<8x64xf32>
    %1473 = arith.addf %1469, %1472 : vector<8x64xf32>
    %cst_387 = arith.constant 1.250000e+00 : f32
    %1474 = vector.broadcast %cst_387 : f32 to vector<8x64xf32>
    %1475 = arith.mulf %1473, %1474 : vector<8x64xf32>
    %cst_388 = arith.constant -2.000000e-01 : f32
    %1476 = vector.broadcast %cst_388 : f32 to vector<8x64xf32>
    %1477 = arith.subf %1246, %1476 : vector<8x64xf32>
    %1478 = arith.mulf %1477, %1394 : vector<8x64xf32>
    %cst_389 = arith.constant 1.000000e+00 : f32
    %1479 = vector.broadcast %cst_389 : f32 to vector<8x64xf32>
    %1480 = arith.subf %1479, %1246 : vector<8x64xf32>
    %1481 = arith.mulf %1480, %1403 : vector<8x64xf32>
    %1482 = arith.addf %1478, %1481 : vector<8x64xf32>
    %cst_390 = arith.constant 1.250000e+00 : f32
    %1483 = vector.broadcast %cst_390 : f32 to vector<8x64xf32>
    %1484 = arith.mulf %1482, %1483 : vector<8x64xf32>
    %cst_391 = arith.constant 2.000000e-01 : f32
    %1485 = vector.broadcast %cst_391 : f32 to vector<8x64xf32>
    %1486 = arith.subf %1246, %1485 : vector<8x64xf32>
    %1487 = arith.mulf %1486, %1403 : vector<8x64xf32>
    %cst_392 = arith.constant 1.400000e+00 : f32
    %1488 = vector.broadcast %cst_392 : f32 to vector<8x64xf32>
    %1489 = arith.subf %1488, %1246 : vector<8x64xf32>
    %1490 = arith.mulf %1489, %1412 : vector<8x64xf32>
    %1491 = arith.addf %1487, %1490 : vector<8x64xf32>
    %cst_393 = arith.constant 1.250000e+00 : f32
    %1492 = vector.broadcast %cst_393 : f32 to vector<8x64xf32>
    %1493 = arith.mulf %1491, %1492 : vector<8x64xf32>
    %cst_394 = arith.constant 6.000000e-01 : f32
    %1494 = vector.broadcast %cst_394 : f32 to vector<8x64xf32>
    %1495 = arith.subf %1246, %1494 : vector<8x64xf32>
    %1496 = arith.mulf %1495, %1412 : vector<8x64xf32>
    %cst_395 = arith.constant 1.800000e+00 : f32
    %1497 = vector.broadcast %cst_395 : f32 to vector<8x64xf32>
    %1498 = arith.subf %1497, %1246 : vector<8x64xf32>
    %1499 = arith.mulf %1498, %1421 : vector<8x64xf32>
    %1500 = arith.addf %1496, %1499 : vector<8x64xf32>
    %cst_396 = arith.constant 1.250000e+00 : f32
    %1501 = vector.broadcast %cst_396 : f32 to vector<8x64xf32>
    %1502 = arith.mulf %1500, %1501 : vector<8x64xf32>
    %cst_397 = arith.constant 1.000000e+00 : f32
    %1503 = vector.broadcast %cst_397 : f32 to vector<8x64xf32>
    %1504 = arith.subf %1246, %1503 : vector<8x64xf32>
    %1505 = arith.mulf %1504, %1421 : vector<8x64xf32>
    %cst_398 = arith.constant 2.200000e+00 : f32
    %1506 = vector.broadcast %cst_398 : f32 to vector<8x64xf32>
    %1507 = arith.subf %1506, %1246 : vector<8x64xf32>
    %1508 = arith.mulf %1507, %1430 : vector<8x64xf32>
    %1509 = arith.addf %1505, %1508 : vector<8x64xf32>
    %cst_399 = arith.constant 1.250000e+00 : f32
    %1510 = vector.broadcast %cst_399 : f32 to vector<8x64xf32>
    %1511 = arith.mulf %1509, %1510 : vector<8x64xf32>
    %cst_400 = arith.constant -2.200000e+00 : f32
    %1512 = vector.broadcast %cst_400 : f32 to vector<8x64xf32>
    %1513 = arith.subf %1246, %1512 : vector<8x64xf32>
    %1514 = arith.mulf %1513, %1439 : vector<8x64xf32>
    %cst_401 = arith.constant -6.000000e-01 : f32
    %1515 = vector.broadcast %cst_401 : f32 to vector<8x64xf32>
    %1516 = arith.subf %1515, %1246 : vector<8x64xf32>
    %1517 = arith.mulf %1516, %1448 : vector<8x64xf32>
    %1518 = arith.addf %1514, %1517 : vector<8x64xf32>
    %cst_402 = arith.constant 0.833333313 : f32
    %1519 = vector.broadcast %cst_402 : f32 to vector<8x64xf32>
    %1520 = arith.mulf %1518, %1519 : vector<8x64xf32>
    %cst_403 = arith.constant -1.800000e+00 : f32
    %1521 = vector.broadcast %cst_403 : f32 to vector<8x64xf32>
    %1522 = arith.subf %1246, %1521 : vector<8x64xf32>
    %1523 = arith.mulf %1522, %1448 : vector<8x64xf32>
    %cst_404 = arith.constant -2.000000e-01 : f32
    %1524 = vector.broadcast %cst_404 : f32 to vector<8x64xf32>
    %1525 = arith.subf %1524, %1246 : vector<8x64xf32>
    %1526 = arith.mulf %1525, %1457 : vector<8x64xf32>
    %1527 = arith.addf %1523, %1526 : vector<8x64xf32>
    %cst_405 = arith.constant 0.833333313 : f32
    %1528 = vector.broadcast %cst_405 : f32 to vector<8x64xf32>
    %1529 = arith.mulf %1527, %1528 : vector<8x64xf32>
    %cst_406 = arith.constant -1.400000e+00 : f32
    %1530 = vector.broadcast %cst_406 : f32 to vector<8x64xf32>
    %1531 = arith.subf %1246, %1530 : vector<8x64xf32>
    %1532 = arith.mulf %1531, %1457 : vector<8x64xf32>
    %cst_407 = arith.constant 2.000000e-01 : f32
    %1533 = vector.broadcast %cst_407 : f32 to vector<8x64xf32>
    %1534 = arith.subf %1533, %1246 : vector<8x64xf32>
    %1535 = arith.mulf %1534, %1466 : vector<8x64xf32>
    %1536 = arith.addf %1532, %1535 : vector<8x64xf32>
    %cst_408 = arith.constant 0.833333313 : f32
    %1537 = vector.broadcast %cst_408 : f32 to vector<8x64xf32>
    %1538 = arith.mulf %1536, %1537 : vector<8x64xf32>
    %cst_409 = arith.constant -1.000000e+00 : f32
    %1539 = vector.broadcast %cst_409 : f32 to vector<8x64xf32>
    %1540 = arith.subf %1246, %1539 : vector<8x64xf32>
    %1541 = arith.mulf %1540, %1466 : vector<8x64xf32>
    %cst_410 = arith.constant 6.000000e-01 : f32
    %1542 = vector.broadcast %cst_410 : f32 to vector<8x64xf32>
    %1543 = arith.subf %1542, %1246 : vector<8x64xf32>
    %1544 = arith.mulf %1543, %1475 : vector<8x64xf32>
    %1545 = arith.addf %1541, %1544 : vector<8x64xf32>
    %cst_411 = arith.constant 0.833333313 : f32
    %1546 = vector.broadcast %cst_411 : f32 to vector<8x64xf32>
    %1547 = arith.mulf %1545, %1546 : vector<8x64xf32>
    %cst_412 = arith.constant -6.000000e-01 : f32
    %1548 = vector.broadcast %cst_412 : f32 to vector<8x64xf32>
    %1549 = arith.subf %1246, %1548 : vector<8x64xf32>
    %1550 = arith.mulf %1549, %1475 : vector<8x64xf32>
    %cst_413 = arith.constant 1.000000e+00 : f32
    %1551 = vector.broadcast %cst_413 : f32 to vector<8x64xf32>
    %1552 = arith.subf %1551, %1246 : vector<8x64xf32>
    %1553 = arith.mulf %1552, %1484 : vector<8x64xf32>
    %1554 = arith.addf %1550, %1553 : vector<8x64xf32>
    %cst_414 = arith.constant 0.833333313 : f32
    %1555 = vector.broadcast %cst_414 : f32 to vector<8x64xf32>
    %1556 = arith.mulf %1554, %1555 : vector<8x64xf32>
    %cst_415 = arith.constant -2.000000e-01 : f32
    %1557 = vector.broadcast %cst_415 : f32 to vector<8x64xf32>
    %1558 = arith.subf %1246, %1557 : vector<8x64xf32>
    %1559 = arith.mulf %1558, %1484 : vector<8x64xf32>
    %cst_416 = arith.constant 1.400000e+00 : f32
    %1560 = vector.broadcast %cst_416 : f32 to vector<8x64xf32>
    %1561 = arith.subf %1560, %1246 : vector<8x64xf32>
    %1562 = arith.mulf %1561, %1493 : vector<8x64xf32>
    %1563 = arith.addf %1559, %1562 : vector<8x64xf32>
    %cst_417 = arith.constant 0.833333313 : f32
    %1564 = vector.broadcast %cst_417 : f32 to vector<8x64xf32>
    %1565 = arith.mulf %1563, %1564 : vector<8x64xf32>
    %cst_418 = arith.constant 2.000000e-01 : f32
    %1566 = vector.broadcast %cst_418 : f32 to vector<8x64xf32>
    %1567 = arith.subf %1246, %1566 : vector<8x64xf32>
    %1568 = arith.mulf %1567, %1493 : vector<8x64xf32>
    %cst_419 = arith.constant 1.800000e+00 : f32
    %1569 = vector.broadcast %cst_419 : f32 to vector<8x64xf32>
    %1570 = arith.subf %1569, %1246 : vector<8x64xf32>
    %1571 = arith.mulf %1570, %1502 : vector<8x64xf32>
    %1572 = arith.addf %1568, %1571 : vector<8x64xf32>
    %cst_420 = arith.constant 0.833333313 : f32
    %1573 = vector.broadcast %cst_420 : f32 to vector<8x64xf32>
    %1574 = arith.mulf %1572, %1573 : vector<8x64xf32>
    %cst_421 = arith.constant 6.000000e-01 : f32
    %1575 = vector.broadcast %cst_421 : f32 to vector<8x64xf32>
    %1576 = arith.subf %1246, %1575 : vector<8x64xf32>
    %1577 = arith.mulf %1576, %1502 : vector<8x64xf32>
    %cst_422 = arith.constant 2.200000e+00 : f32
    %1578 = vector.broadcast %cst_422 : f32 to vector<8x64xf32>
    %1579 = arith.subf %1578, %1246 : vector<8x64xf32>
    %1580 = arith.mulf %1579, %1511 : vector<8x64xf32>
    %1581 = arith.addf %1577, %1580 : vector<8x64xf32>
    %cst_423 = arith.constant 0.833333313 : f32
    %1582 = vector.broadcast %cst_423 : f32 to vector<8x64xf32>
    %1583 = arith.mulf %1581, %1582 : vector<8x64xf32>
    %1584 = tpu.concatenate %1252, %1520, %1529, %1538, %1547, %1556, %1565, %1574, %1583 in 1 : vector<8x64xf32>, vector<8x64xf32>, vector<8x64xf32>, vector<8x64xf32>, vector<8x64xf32>, vector<8x64xf32>, vector<8x64xf32>, vector<8x64xf32>, vector<8x64xf32> -> vector<8x576xf32>
    %1585 = arith.truncf %1584 : vector<8x576xf32> to vector<8x576xbf16>
    %c0_424 = arith.constant 0 : index
    %c0_425 = arith.constant 0 : index
    %1586 = vector.load %arg12[%c0_424, %c0_425] : memref<576x128xbf16, #tpu.memory_space<vmem>>, vector<576x128xbf16>
    %cst_426 = arith.constant dense<0.000000e+00> : vector<8x128xf32>
    %1587 = tpu.matmul %1585, %1586, %cst_426 {dimension_numbers = #tpu.dot_dimension_numbers<[1], [0], [0], [1], [0, 0, 1, 1], [], []>} : vector<8x576xbf16>, vector<576x128xbf16>, vector<8x128xf32> -> vector<8x128xf32>
    %1588 = arith.negf %1587 : vector<8x128xf32>
    %1589 = math.exp %1588 : vector<8x128xf32>
    %cst_427 = arith.constant 1.000000e+00 : f32
    %1590 = vector.broadcast %cst_427 : f32 to vector<8x128xf32>
    %1591 = arith.addf %1590, %1589 : vector<8x128xf32>
    %1592 = arith.divf %1590, %1591 : vector<8x128xf32>
    %c0_428 = arith.constant 0 : index
    %c0_429 = arith.constant 0 : index
    %1593 = vector.load %arg13[%c0_428, %c0_429] : memref<8x128xf32, #tpu.memory_space<vmem>>, vector<8x128xf32>
    tpu.vector_store %arg13[%c0_428, %c0_429], %1592 {strides = array<i32>} : memref<8x128xf32, #tpu.memory_space<vmem>>, vector<8x128xf32>,
    return
  }
}

</mosaic_0001>

<llo_original>
// kernel: tpu_custom_call.1
$region0: #{tpu_custom_call.1}
  #allocation0 [shape = 'u32[]', space=smem, size = 0x4, offset = 0x4, fixed_abs, tag = 'smem constant byte address 0x4 - core index']
  #allocation1 [shape = 'u32[144,128]{1,0:T(1,128)}', space=vmem, size = 0x12000, scoped, tag = 'internal scratch']
  #allocation2 [shape = 'f32[64,384]{1,0:T(8,128)}', space=vmem, size = 0x18000, scoped, tag = 'scratch operand']
  %s0 = inlined_call_operand.vmem [shape: bf16[64,16], index: 0, kind: input, shape index: {}]
  %s1 = inlined_call_operand.vmem [shape: bf16[16,384], index: 1, kind: input, shape index: {}]
  %s2 = inlined_call_operand.hbm [shape: bf16[128,384], index: 2, kind: input, shape index: {}]
  %s3 = inlined_call_operand.vmem [shape: f32[1,384], index: 3, kind: input, shape index: {}]
  %s4 = inlined_call_operand.vmem [shape: f32[1,384], index: 4, kind: input, shape index: {}]
  %s5 = inlined_call_operand.vmem [shape: bf16[256,512], index: 5, kind: input, shape index: {}]
  %s6 = inlined_call_operand.vmem [shape: f32[1,512], index: 6, kind: input, shape index: {}]
  %s7 = inlined_call_operand.hbm [shape: bf16[256,512], index: 7, kind: input, shape index: {}]
  %s8 = inlined_call_operand.vmem [shape: f32[1,512], index: 8, kind: input, shape index: {}]
  %s9 = inlined_call_operand.hbm [shape: bf16[256,512], index: 9, kind: input, shape index: {}]
  %s10 = inlined_call_operand.vmem [shape: f32[1,512], index: 10, kind: input, shape index: {}]
  %s11 = inlined_call_operand.vmem [shape: bf16[1152,64], index: 11, kind: input, shape index: {}]
  %s12 = inlined_call_operand.vmem [shape: bf16[576,128], index: 12, kind: input, shape index: {}]
  %s13 = inlined_call_operand.hbm [shape: f32[8,128], index: 13, kind: output, shape index: {}]
  %s14 = sld [smem:[#allocation0]]
  $region74: #{tpu_custom_call.1} parent=0
    _
  %s16 = ssub.s32 1, %s14
  %s17 = scalar_select 0, %s16, %s14
  $region1: #{tpu_custom_call.1} parent=0
    #allocation3 [shape = 'u8[98304]{0}', space=vmem, size = 0x18000, scoped, tag = 'input window, operand 2, single buffered']
    #allocation4 [shape = 's32[1]{0}', space=sflag, size = 0x4, scoped, tag = 'scoped memory for tpu_custom_call.1']
    #allocation5 [shape = 's32[1]{0}', space=sflag, size = 0x4, scoped, tag = 'scoped memory for tpu_custom_call.1']
    #allocation6 [shape = 'u8[262144]{0}', space=vmem, size = 0x40000, scoped, tag = 'input window, operand 7, single buffered']
    #allocation7 [shape = 's32[1]{0}', space=sflag, size = 0x4, scoped, tag = 'scoped memory for tpu_custom_call.1']
    #allocation8 [shape = 'u8[262144]{0}', space=vmem, size = 0x40000, scoped, tag = 'input window, operand 9, single buffered']
    #allocation9 [shape = 'u8[4096]{0}', space=vmem, size = 0x1000, scoped, tag = 'output window, operand 0, single buffered']
    %18 = vsyncpa [#allocation4], 0
    %19 = vsyncpa [#allocation7], 0
    %20 = vsyncpa [#allocation5], 0
    // Predicated region
    $region2: #{tpu_custom_call.1} parent=1 // pred_check
      _
    $region3: #{tpu_custom_call.1} parent=1 // pred_check_branch
      %22 = sbr.rel (0) target = $region5
    $region4: #{tpu_custom_call.1} parent=1 // pred_region
      _
    $region5: #{tpu_custom_call.1} parent=1 // pred_fallthru
      _
    // Predicated region
    $region6: #{tpu_custom_call.1} parent=1 // pred_check
      _
    $region7: #{tpu_custom_call.1} parent=1 // pred_check_branch
      %24 = sbr.rel (0) target = $region9
    $region8: #{tpu_custom_call.1} parent=1 // pred_region
      _
    $region9: #{tpu_custom_call.1} parent=1 // pred_fallthru
      _
    // Predicated region
    $region10: #{tpu_custom_call.1} parent=1 // pred_check
      _
    $region11: #{tpu_custom_call.1} parent=1 // pred_check_branch
      %26 = sbr.rel (0) target = $region13
    $region12: #{tpu_custom_call.1} parent=1 // pred_region
      %s28 = ssub.s32 3072, 3072
      %29 = vsyncadd [#allocation4], %s28
      %s30 = sshll.u32 [#allocation3], 4
      %s31 = int_to_ptr.vmem [resolvable:$true] %s30
      %36 = dma.hbm_to_vmem [thread:$0]  %s2, 3072, %s31, [#allocation4], 192, 192, 12
    $region13: #{tpu_custom_call.1} parent=1 // pred_fallthru
      _
    // Predicated region
    $region14: #{tpu_custom_call.1} parent=1 // pred_check
      _
    $region15: #{tpu_custom_call.1} parent=1 // pred_check_branch
      %38 = sbr.rel (0) target = $region17
    $region16: #{tpu_custom_call.1} parent=1 // pred_region
      _
    $region17: #{tpu_custom_call.1} parent=1 // pred_fallthru
      _
    // Predicated region
    $region18: #{tpu_custom_call.1} parent=1 // pred_check
      _
    $region19: #{tpu_custom_call.1} parent=1 // pred_check_branch
      %40 = sbr.rel (0) target = $region21
    $region20: #{tpu_custom_call.1} parent=1 // pred_region
      _
    $region21: #{tpu_custom_call.1} parent=1 // pred_fallthru
      _
    // Predicated region
    $region22: #{tpu_custom_call.1} parent=1 // pred_check
      _
    $region23: #{tpu_custom_call.1} parent=1 // pred_check_branch
      %42 = sbr.rel (0) target = $region25
    $region24: #{tpu_custom_call.1} parent=1 // pred_region
      _
    $region25: #{tpu_custom_call.1} parent=1 // pred_fallthru
      _
    // Predicated region
    $region26: #{tpu_custom_call.1} parent=1 // pred_check
      _
    $region27: #{tpu_custom_call.1} parent=1 // pred_check_branch
      %44 = sbr.rel (0) target = $region29
    $region28: #{tpu_custom_call.1} parent=1 // pred_region
      _
    $region29: #{tpu_custom_call.1} parent=1 // pred_fallthru
      _
    // Predicated region
    $region30: #{tpu_custom_call.1} parent=1 // pred_check
      _
    $region31: #{tpu_custom_call.1} parent=1 // pred_check_branch
      %46 = sbr.rel (0) target = $region33
    $region32: #{tpu_custom_call.1} parent=1 // pred_region
      %s48 = ssub.s32 8192, 8192
      %49 = vsyncadd [#allocation7], %s48
      %s50 = sshll.u32 [#allocation6], 4
      %s51 = int_to_ptr.vmem [resolvable:$true] %s50
      %56 = dma.hbm_to_vmem [thread:$0]  %s7, 8192, %s51, [#allocation7], 256, 256, 16
    $region33: #{tpu_custom_call.1} parent=1 // pred_fallthru
      _
    // Predicated region
    $region34: #{tpu_custom_call.1} parent=1 // pred_check
      _
    $region35: #{tpu_custom_call.1} parent=1 // pred_check_branch
      %58 = sbr.rel (0) target = $region37
    $region36: #{tpu_custom_call.1} parent=1 // pred_region
      _
    $region37: #{tpu_custom_call.1} parent=1 // pred_fallthru
      _
    // Predicated region
    $region38: #{tpu_custom_call.1} parent=1 // pred_check
      _
    $region39: #{tpu_custom_call.1} parent=1 // pred_check_branch
      %60 = sbr.rel (0) target = $region41
    $region40: #{tpu_custom_call.1} parent=1 // pred_region
      %s62 = ssub.s32 8192, 8192
      %63 = vsyncadd [#allocation7], %s62
      %s64 = sshll.u32 [#allocation8], 4
      %s65 = int_to_ptr.vmem [resolvable:$true] %s64
      %70 = dma.hbm_to_vmem [thread:$0]  %s9, 8192, %s65, [#allocation7], 256, 256, 16
    $region41: #{tpu_custom_call.1} parent=1 // pred_fallthru
      _
    // Predicated region
    $region42: #{tpu_custom_call.1} parent=1 // pred_check
      _
    $region43: #{tpu_custom_call.1} parent=1 // pred_check_branch
      %72 = sbr.rel (0) target = $region45
    $region44: #{tpu_custom_call.1} parent=1 // pred_region
      _
    $region45: #{tpu_custom_call.1} parent=1 // pred_fallthru
      _
    // Predicated region
    $region46: #{tpu_custom_call.1} parent=1 // pred_check
      _
    $region47: #{tpu_custom_call.1} parent=1 // pred_check_branch
      %74 = sbr.rel (0) target = $region49
    $region48: #{tpu_custom_call.1} parent=1 // pred_region
      _
    $region49: #{tpu_custom_call.1} parent=1 // pred_fallthru
      _
    // Predicated region
    $region50: #{tpu_custom_call.1} parent=1 // pred_check
      _
    $region51: #{tpu_custom_call.1} parent=1 // pred_check_branch
      %76 = sbr.rel (0) target = $region53
    $region52: #{tpu_custom_call.1} parent=1 // pred_region
      _
    $region53: #{tpu_custom_call.1} parent=1 // pred_fallthru
      _
    // Predicated region
    $region54: #{tpu_custom_call.1} parent=1 // pred_check
      _
    $region55: #{tpu_custom_call.1} parent=1 // pred_check_branch
      %78 = sbr.rel (0) target = $region57
    $region56: #{tpu_custom_call.1} parent=1 // pred_region
      %79 = dma.done [#allocation4], 3072
    $region57: #{tpu_custom_call.1} parent=1 // pred_fallthru
      _
    // Predicated region
    $region58: #{tpu_custom_call.1} parent=1 // pred_check
      _
    $region59: #{tpu_custom_call.1} parent=1 // pred_check_branch
      %81 = sbr.rel (0) target = $region61
    $region60: #{tpu_custom_call.1} parent=1 // pred_region
      %82 = dma.done [#allocation7], 8192
    $region61: #{tpu_custom_call.1} parent=1 // pred_fallthru
      _
    // Predicated region
    $region62: #{tpu_custom_call.1} parent=1 // pred_check
      _
    $region63: #{tpu_custom_call.1} parent=1 // pred_check_branch
      %84 = sbr.rel (0) target = $region65
    $region64: #{tpu_custom_call.1} parent=1 // pred_region
      %85 = dma.done [#allocation7], 8192
    $region65: #{tpu_custom_call.1} parent=1 // pred_fallthru
      _
    %v87 = vld [vmem:[%s0] sm:$0xf]
    %v88 = vld [vmem:[%s0 + $0x4] sm:$0xf]
    %v89 = vld [vmem:[%s0 + $0x8] sm:$0xf]
    %v90 = vld [vmem:[%s0 + $0xc] sm:$0xf]
    %v91 = vld [vmem:[%s0 + $0x10] sm:$0xf]
    %v92 = vld [vmem:[%s0 + $0x14] sm:$0xf]
    %v93 = vld [vmem:[%s0 + $0x18] sm:$0xf]
    %v94 = vld [vmem:[%s0 + $0x1c] sm:$0xf]
    %v95 = vld [vmem:[%s1] sm:$0xff]
    %v96 = vld [vmem:[%s1 + $0x8] sm:$0xf]
    %v97 = vld [vmem:[%s1 + $0xc] sm:$0xff]
    %v98 = vld [vmem:[%s1 + $0x14] sm:$0xf]
    %v99 = vld [vmem:[%s3] sm:$0x7]
    %v101 = vlaneseq
    %v102 = vshrl.u32 %v101, 7
    %v103 = vsub.s32 0, %v102
    %v104 = vrot.slane %v99, %v103
    %v105 = vlaneseq
    %v106 = vshrl.u32 %v105, 7
    %v107 = vsub.s32 1, %v106
    %v108 = vrot.slane %v99, %v107
    %v109 = vlaneseq
    %v110 = vshrl.u32 %v109, 7
    %v111 = vsub.s32 2, %v110
    %v112 = vrot.slane %v99, %v111
    %v124 = vunpack.c.l.b16 %v87
    %v125 = vunpack.c.l.b16 %v88
    %v126 = vunpack.c.l.b16 %v89
    %v127 = vunpack.c.l.b16 %v90
    %v128 = vunpack.c.l.b16 %v91
    %v129 = vunpack.c.l.b16 %v92
    %v130 = vunpack.c.l.b16 %v93
    %v131 = vunpack.c.l.b16 %v94
    %v132 = vpack.c.b16 %v125, %v124
    %v133 = vpack.c.b16 %v127, %v126
    %v134 = vpack.c.b16 %v129, %v128
    %v135 = vpack.c.b16 %v131, %v130
    %v140 = vunpack.c.l.b16 %v95
    %v141 = vunpack.c.h.b16 %v95
    %v142 = vunpack.c.l.b16 %v96
    %v143 = vunpack.c.l.b16 %v97
    %v144 = vunpack.c.h.b16 %v97
    %v145 = vunpack.c.l.b16 %v98
    %v146 = vpack.c.b16 %v143, %v140
    %v147 = vpack.c.b16 %v144, %v141
    %v148 = vpack.c.b16 %v145, %v142
    %vm152 = vcmask 130048
    %v154 = vsel %vm152, %v132, 0
    %v157 = vsel %vm152, %v133, 0
    %v160 = vsel %vm152, %v134, 0
    %v163 = vsel %vm152, %v135, 0
    %165 = vmatprep.subr.bf16.mxu0 %v147
    %166 = vmatpush1.bf16.msra.mxu0 %v146
    %167 = vmatprep.subr.bf16.mxu0 0
    %168 = vmatpush1.bf16.msra.mxu0 0
    %169 = vmatprep.subr.bf16.mxu0 0
    %170 = vmatpush1.bf16.msra.mxu0 0
    %171 = vmatprep.subr.bf16.mxu0 0
    %172 = vmatpush1.bf16.msra.mxu0 0
    %173 = vmatprep.subr.bf16.mxu0 0
    %174 = vmatpush1.bf16.msra.mxu0 0
    %175 = vmatprep.subr.bf16.mxu0 0
    %176 = vmatpush1.bf16.msra.mxu0 0
    %177 = vmatprep.subr.bf16.mxu0 0
    %178 = vmatpush1.bf16.msra.mxu0 0
    %179 = vmatprep.subr.bf16.mxu0 0
    %180 = vmatpush1.bf16.msra.mxu0 0
    %181 = vmatprep.subr.bf16.mxu0 0
    %182 = vmatpush1.bf16.msra.mxu0 0
    %183 = vmatprep.subr.bf16.mxu0 0
    %184 = vmatpush1.bf16.msra.mxu0 0
    %185 = vmatprep.subr.bf16.mxu0 0
    %186 = vmatpush1.bf16.msra.mxu0 0
    %187 = vmatprep.subr.bf16.mxu0 0
    %188 = vmatpush1.bf16.msra.mxu0 0
    %189 = vmatprep.subr.bf16.mxu0 0
    %190 = vmatpush1.bf16.msra.mxu0 0
    %191 = vmatprep.subr.bf16.mxu0 0
    %192 = vmatpush1.bf16.msra.mxu0 0
    %193 = vmatprep.subr.bf16.mxu0 0
    %194 = vmatpush1.bf16.msra.mxu0 0
    %195 = vmatprep.subr.bf16.mxu0 0
    %196 = vmatpush1.bf16.msra.mxu0 0
    %197 = vmatprep.mubr.bf16.mxu0 0
    %198 = vmatmul.mubr.bf16.gmra.mrb[0].mxu0 %v154
    %v199 = vpop.f32.mrb[0].mxu0
    %v200 = vadd.f32 %v104, %v199
    %v201 = vpop.f32.mrb[0].mxu0
    %v202 = vadd.f32 %v108, %v201
    %v203 = vpop.f32.mrb[0].mxu0
    %v204 = vadd.f32 %v104, %v203
    %v205 = vpop.f32.mrb[0].mxu0
    %v206 = vadd.f32 %v108, %v205
    %207 = vmatprep.mubr.bf16.mxu0 0
    %208 = vmatmul.mubr.bf16.gmra.mrb[0].mxu0 %v157
    %v209 = vpop.f32.mrb[0].mxu0
    %v210 = vadd.f32 %v104, %v209
    %v211 = vpop.f32.mrb[0].mxu0
    %v212 = vadd.f32 %v108, %v211
    %v213 = vpop.f32.mrb[0].mxu0
    %v214 = vadd.f32 %v104, %v213
    %v215 = vpop.f32.mrb[0].mxu0
    %v216 = vadd.f32 %v108, %v215
    %217 = vmatprep.mubr.bf16.mxu0 0
    %218 = vmatmul.mubr.bf16.gmra.mrb[0].mxu0 %v160
    %v219 = vpop.f32.mrb[0].mxu0
    %v220 = vadd.f32 %v104, %v219
    %v221 = vpop.f32.mrb[0].mxu0
    %v222 = vadd.f32 %v108, %v221
    %v223 = vpop.f32.mrb[0].mxu0
    %v224 = vadd.f32 %v104, %v223
    %v225 = vpop.f32.mrb[0].mxu0
    %v226 = vadd.f32 %v108, %v225
    %227 = vmatprep.mubr.bf16.mxu0 0
    %228 = vmatmul.mubr.bf16.gmra.mrb[0].mxu0 %v163
    %v229 = vpop.f32.mrb[0].mxu0
    %v230 = vadd.f32 %v104, %v229
    %v231 = vpop.f32.mrb[0].mxu0
    %v232 = vadd.f32 %v108, %v231
    %v233 = vpop.f32.mrb[0].mxu0
    %v234 = vadd.f32 %v104, %v233
    %v235 = vpop.f32.mrb[0].mxu0
    %v236 = vadd.f32 %v108, %v235
    %237 = vdwg.mxu0
    %238 = vmatprep.subr.bf16.mxu0 0
    %239 = vmatpush1.bf16.msra.mxu0 %v148
    %240 = vmatprep.subr.bf16.mxu0 0
    %241 = vmatpush1.bf16.msra.mxu0 0
    %242 = vmatprep.subr.bf16.mxu0 0
    %243 = vmatpush1.bf16.msra.mxu0 0
    %244 = vmatprep.subr.bf16.mxu0 0
    %245 = vmatpush1.bf16.msra.mxu0 0
    %246 = vmatprep.subr.bf16.mxu0 0
    %247 = vmatpush1.bf16.msra.mxu0 0
    %248 = vmatprep.subr.bf16.mxu0 0
    %249 = vmatpush1.bf16.msra.mxu0 0
    %250 = vmatprep.subr.bf16.mxu0 0
    %251 = vmatpush1.bf16.msra.mxu0 0
    %252 = vmatprep.subr.bf16.mxu0 0
    %253 = vmatpush1.bf16.msra.mxu0 0
    %254 = vmatprep.subr.bf16.mxu0 0
    %255 = vmatpush1.bf16.msra.mxu0 0
    %256 = vmatprep.subr.bf16.mxu0 0
    %257 = vmatpush1.bf16.msra.mxu0 0
    %258 = vmatprep.subr.bf16.mxu0 0
    %259 = vmatpush1.bf16.msra.mxu0 0
    %260 = vmatprep.subr.bf16.mxu0 0
    %261 = vmatpush1.bf16.msra.mxu0 0
    %262 = vmatprep.subr.bf16.mxu0 0
    %263 = vmatpush1.bf16.msra.mxu0 0
    %264 = vmatprep.subr.bf16.mxu0 0
    %265 = vmatpush1.bf16.msra.mxu0 0
    %266 = vmatprep.subr.bf16.mxu0 0
    %267 = vmatpush1.bf16.msra.mxu0 0
    %268 = vmatprep.subr.bf16.mxu0 0
    %269 = vmatpush1.bf16.msra.mxu0 0
    %270 = vmatprep.mubr.bf16.mxu0 0
    %271 = vmatmul.mubr.bf16.gmra.mrb[0].mxu0 %v154
    %v272 = vpop.f32.mrb[0].mxu0
    %v273 = vadd.f32 %v112, %v272
    %v274 = vpop.f32.mrb[0].mxu0
    %v275 = vpop.f32.mrb[0].mxu0
    %v276 = vadd.f32 %v112, %v275
    %v277 = vpop.f32.mrb[0].mxu0
    %278 = vmatprep.mubr.bf16.mxu0 0
    %279 = vmatmul.mubr.bf16.gmra.mrb[0].mxu0 %v157
    %v280 = vpop.f32.mrb[0].mxu0
    %v281 = vadd.f32 %v112, %v280
    %v282 = vpop.f32.mrb[0].mxu0
    %v283 = vpop.f32.mrb[0].mxu0
    %v284 = vadd.f32 %v112, %v283
    %v285 = vpop.f32.mrb[0].mxu0
    %286 = vmatprep.mubr.bf16.mxu0 0
    %287 = vmatmul.mubr.bf16.gmra.mrb[0].mxu0 %v160
    %v288 = vpop.f32.mrb[0].mxu0
    %v289 = vadd.f32 %v112, %v288
    %v290 = vpop.f32.mrb[0].mxu0
    %v291 = vpop.f32.mrb[0].mxu0
    %v292 = vadd.f32 %v112, %v291
    %v293 = vpop.f32.mrb[0].mxu0
    %294 = vmatprep.mubr.bf16.mxu0 0
    %295 = vmatmul.mubr.bf16.gmra.mrb[0].mxu0 %v163
    %v296 = vpop.f32.mrb[0].mxu0
    %v297 = vadd.f32 %v112, %v296
    %v298 = vpop.f32.mrb[0].mxu0
    %v299 = vpop.f32.mrb[0].mxu0
    %v300 = vadd.f32 %v112, %v299
    %v301 = vpop.f32.mrb[0].mxu0
    %302 = vdwg.mxu0
    %303 = vst [vmem:[#allocation2] sm:$0xff] %v200
    %304 = vst [vmem:[#allocation2 + $0x8] sm:$0xff] %v202
    %305 = vst [vmem:[#allocation2 + $0x10] sm:$0xff] %v273
    %306 = vst [vmem:[#allocation2 + $0x18] sm:$0xff] %v204
    %307 = vst [vmem:[#allocation2 + $0x20] sm:$0xff] %v206
    %308 = vst [vmem:[#allocation2 + $0x28] sm:$0xff] %v276
    %309 = vst [vmem:[#allocation2 + $0x30] sm:$0xff] %v210
    %310 = vst [vmem:[#allocation2 + $0x38] sm:$0xff] %v212
    %311 = vst [vmem:[#allocation2 + $0x40] sm:$0xff] %v281
    %312 = vst [vmem:[#allocation2 + $0x48] sm:$0xff] %v214
    %313 = vst [vmem:[#allocation2 + $0x50] sm:$0xff] %v216
    %314 = vst [vmem:[#allocation2 + $0x58] sm:$0xff] %v284
    %315 = vst [vmem:[#allocation2 + $0x60] sm:$0xff] %v220
    %316 = vst [vmem:[#allocation2 + $0x68] sm:$0xff] %v222
    %317 = vst [vmem:[#allocation2 + $0x70] sm:$0xff] %v289
    %318 = vst [vmem:[#allocation2 + $0x78] sm:$0xff] %v224
    %319 = vst [vmem:[#allocation2 + $0x80] sm:$0xff] %v226
    %320 = vst [vmem:[#allocation2 + $0x88] sm:$0xff] %v292
    %321 = vst [vmem:[#allocation2 + $0x90] sm:$0xff] %v230
    %322 = vst [vmem:[#allocation2 + $0x98] sm:$0xff] %v232
    %323 = vst [vmem:[#allocation2 + $0xa0] sm:$0xff] %v297
    %324 = vst [vmem:[#allocation2 + $0xa8] sm:$0xff] %v234
    %325 = vst [vmem:[#allocation2 + $0xb0] sm:$0xff] %v236
    %326 = vst [vmem:[#allocation2 + $0xb8] sm:$0xff] %v300
    %v327 = vld [vmem:[#allocation3] sm:$0xff]
    %v328 = vld [vmem:[#allocation3 + $0x8] sm:$0xf]
    %v329 = vld [vmem:[#allocation3 + $0xc] sm:$0xff]
    %v330 = vld [vmem:[#allocation3 + $0x14] sm:$0xf]
    %v331 = vld [vmem:[#allocation3 + $0x18] sm:$0xff]
    %v332 = vld [vmem:[#allocation3 + $0x20] sm:$0xf]
    %v333 = vld [vmem:[#allocation3 + $0x24] sm:$0xff]
    %v334 = vld [vmem:[#allocation3 + $0x2c] sm:$0xf]
    %v335 = vld [vmem:[#allocation3 + $0x30] sm:$0xff]
    %v336 = vld [vmem:[#allocation3 + $0x38] sm:$0xf]
    %v337 = vld [vmem:[#allocation3 + $0x3c] sm:$0xff]
    %v338 = vld [vmem:[#allocation3 + $0x44] sm:$0xf]
    %v339 = vld [vmem:[#allocation3 + $0x48] sm:$0xff]
    %v340 = vld [vmem:[#allocation3 + $0x50] sm:$0xf]
    %v341 = vld [vmem:[#allocation3 + $0x54] sm:$0xff]
    %v342 = vld [vmem:[#allocation3 + $0x5c] sm:$0xf]
    %v343 = vld [vmem:[#allocation3 + $0x60] sm:$0xff]
    %v344 = vld [vmem:[#allocation3 + $0x68] sm:$0xf]
    %v345 = vld [vmem:[#allocation3 + $0x6c] sm:$0xff]
    %v346 = vld [vmem:[#allocation3 + $0x74] sm:$0xf]
    %v347 = vld [vmem:[#allocation3 + $0x78] sm:$0xff]
    %v348 = vld [vmem:[#allocation3 + $0x80] sm:$0xf]
    %v349 = vld [vmem:[#allocation3 + $0x84] sm:$0xff]
    %v350 = vld [vmem:[#allocation3 + $0x8c] sm:$0xf]
    %v351 = vld [vmem:[#allocation3 + $0x90] sm:$0xff]
    %v352 = vld [vmem:[#allocation3 + $0x98] sm:$0xf]
    %v353 = vld [vmem:[#allocation3 + $0x9c] sm:$0xff]
    %v354 = vld [vmem:[#allocation3 + $0xa4] sm:$0xf]
    %v355 = vld [vmem:[#allocation3 + $0xa8] sm:$0xff]
    %v356 = vld [vmem:[#allocation3 + $0xb0] sm:$0xf]
    %v357 = vld [vmem:[#allocation3 + $0xb4] sm:$0xff]
    %v358 = vld [vmem:[#allocation3 + $0xbc] sm:$0xf]
    %v359 = vld [vmem:[%s4] sm:$0x7]
    %v361 = vlaneseq
    %v362 = vshrl.u32 %v361, 7
    %v363 = vsub.s32 0, %v362
    %v364 = vrot.slane %v359, %v363
    %v365 = vlaneseq
    %v366 = vshrl.u32 %v365, 7
    %v367 = vsub.s32 1, %v366
    %v368 = vrot.slane %v359, %v367
    %v369 = vlaneseq
    %v370 = vshrl.u32 %v369, 7
    %v371 = vsub.s32 2, %v370
    %v372 = vrot.slane %v359, %v371
    %v376 = vld [vmem:[%s5] sm:$0xff]
    %v377 = vld [vmem:[%s5 + $0x8] sm:$0xff]
    %v378 = vld [vmem:[%s5 + $0x10] sm:$0xff]
    %v379 = vld [vmem:[%s5 + $0x18] sm:$0xff]
    %v380 = vld [vmem:[%s5 + $0x20] sm:$0xff]
    %v381 = vld [vmem:[%s5 + $0x28] sm:$0xff]
    %v382 = vld [vmem:[%s5 + $0x30] sm:$0xff]
    %v383 = vld [vmem:[%s5 + $0x38] sm:$0xff]
    %v384 = vld [vmem:[%s5 + $0x40] sm:$0xff]
    %v385 = vld [vmem:[%s5 + $0x48] sm:$0xff]
    %v386 = vld [vmem:[%s5 + $0x50] sm:$0xff]
    %v387 = vld [vmem:[%s5 + $0x58] sm:$0xff]
    %v388 = vld [vmem:[%s5 + $0x60] sm:$0xff]
    %v389 = vld [vmem:[%s5 + $0x68] sm:$0xff]
    %v390 = vld [vmem:[%s5 + $0x70] sm:$0xff]
    %v391 = vld [vmem:[%s5 + $0x78] sm:$0xff]
    %v392 = vld [vmem:[%s5 + $0x80] sm:$0xff]
    %v393 = vld [vmem:[%s5 + $0x88] sm:$0xff]
    %v394 = vld [vmem:[%s5 + $0x90] sm:$0xff]
    %v395 = vld [vmem:[%s5 + $0x98] sm:$0xff]
    %v396 = vld [vmem:[%s5 + $0xa0] sm:$0xff]
    %v397 = vld [vmem:[%s5 + $0xa8] sm:$0xff]
    %v398 = vld [vmem:[%s5 + $0xb0] sm:$0xff]
    %v399 = vld [vmem:[%s5 + $0xb8] sm:$0xff]
    %v400 = vld [vmem:[%s5 + $0xc0] sm:$0xff]
    %v401 = vld [vmem:[%s5 + $0xc8] sm:$0xff]
    %v402 = vld [vmem:[%s5 + $0xd0] sm:$0xff]
    %v403 = vld [vmem:[%s5 + $0xd8] sm:$0xff]
    %v404 = vld [vmem:[%s5 + $0xe0] sm:$0xff]
    %v405 = vld [vmem:[%s5 + $0xe8] sm:$0xff]
    %v406 = vld [vmem:[%s5 + $0xf0] sm:$0xff]
    %v407 = vld [vmem:[%s5 + $0xf8] sm:$0xff]
    %v408 = vld [vmem:[%s5 + $0x100] sm:$0xff]
    %v409 = vld [vmem:[%s5 + $0x108] sm:$0xff]
    %v410 = vld [vmem:[%s5 + $0x110] sm:$0xff]
    %v411 = vld [vmem:[%s5 + $0x118] sm:$0xff]
    %v412 = vld [vmem:[%s5 + $0x120] sm:$0xff]
    %v413 = vld [vmem:[%s5 + $0x128] sm:$0xff]
    %v414 = vld [vmem:[%s5 + $0x130] sm:$0xff]
    %v415 = vld [vmem:[%s5 + $0x138] sm:$0xff]
    %v416 = vld [vmem:[%s5 + $0x140] sm:$0xff]
    %v417 = vld [vmem:[%s5 + $0x148] sm:$0xff]
    %v418 = vld [vmem:[%s5 + $0x150] sm:$0xff]
    %v419 = vld [vmem:[%s5 + $0x158] sm:$0xff]
    %v420 = vld [vmem:[%s5 + $0x160] sm:$0xff]
    %v421 = vld [vmem:[%s5 + $0x168] sm:$0xff]
    %v422 = vld [vmem:[%s5 + $0x170] sm:$0xff]
    %v423 = vld [vmem:[%s5 + $0x178] sm:$0xff]
    %v424 = vld [vmem:[%s5 + $0x180] sm:$0xff]
    %v425 = vld [vmem:[%s5 + $0x188] sm:$0xff]
    %v426 = vld [vmem:[%s5 + $0x190] sm:$0xff]
    %v427 = vld [vmem:[%s5 + $0x198] sm:$0xff]
    %v428 = vld [vmem:[%s5 + $0x1a0] sm:$0xff]
    %v429 = vld [vmem:[%s5 + $0x1a8] sm:$0xff]
    %v430 = vld [vmem:[%s5 + $0x1b0] sm:$0xff]
    %v431 = vld [vmem:[%s5 + $0x1b8] sm:$0xff]
    %v432 = vld [vmem:[%s5 + $0x1c0] sm:$0xff]
    %v433 = vld [vmem:[%s5 + $0x1c8] sm:$0xff]
    %v434 = vld [vmem:[%s5 + $0x1d0] sm:$0xff]
    %v435 = vld [vmem:[%s5 + $0x1d8] sm:$0xff]
    %v436 = vld [vmem:[%s5 + $0x1e0] sm:$0xff]
    %v437 = vld [vmem:[%s5 + $0x1e8] sm:$0xff]
    %v438 = vld [vmem:[%s5 + $0x1f0] sm:$0xff]
    %v439 = vld [vmem:[%s5 + $0x1f8] sm:$0xff]
    %v440 = vld [vmem:[#allocation6] sm:$0xff]
    %v441 = vld [vmem:[#allocation6 + $0x8] sm:$0xff]
    %v442 = vld [vmem:[#allocation6 + $0x10] sm:$0xff]
    %v443 = vld [vmem:[#allocation6 + $0x18] sm:$0xff]
    %v444 = vld [vmem:[#allocation6 + $0x20] sm:$0xff]
    %v445 = vld [vmem:[#allocation6 + $0x28] sm:$0xff]
    %v446 = vld [vmem:[#allocation6 + $0x30] sm:$0xff]
    %v447 = vld [vmem:[#allocation6 + $0x38] sm:$0xff]
    %v448 = vld [vmem:[#allocation6 + $0x40] sm:$0xff]
    %v449 = vld [vmem:[#allocation6 + $0x48] sm:$0xff]
    %v450 = vld [vmem:[#allocation6 + $0x50] sm:$0xff]
    %v451 = vld [vmem:[#allocation6 + $0x58] sm:$0xff]
    %v452 = vld [vmem:[#allocation6 + $0x60] sm:$0xff]
    %v453 = vld [vmem:[#allocation6 + $0x68] sm:$0xff]
    %v454 = vld [vmem:[#allocation6 + $0x70] sm:$0xff]
    %v455 = vld [vmem:[#allocation6 + $0x78] sm:$0xff]
    %v456 = vld [vmem:[#allocation6 + $0x80] sm:$0xff]
    %v457 = vld [vmem:[#allocation6 + $0x88] sm:$0xff]
    %v458 = vld [vmem:[#allocation6 + $0x90] sm:$0xff]
    %v459 = vld [vmem:[#allocation6 + $0x98] sm:$0xff]
    %v460 = vld [vmem:[#allocation6 + $0xa0] sm:$0xff]
    %v461 = vld [vmem:[#allocation6 + $0xa8] sm:$0xff]
    %v462 = vld [vmem:[#allocation6 + $0xb0] sm:$0xff]
    %v463 = vld [vmem:[#allocation6 + $0xb8] sm:$0xff]
    %v464 = vld [vmem:[#allocation6 + $0xc0] sm:$0xff]
    %v465 = vld [vmem:[#allocation6 + $0xc8] sm:$0xff]
    %v466 = vld [vmem:[#allocation6 + $0xd0] sm:$0xff]
    %v467 = vld [vmem:[#allocation6 + $0xd8] sm:$0xff]
    %v468 = vld [vmem:[#allocation6 + $0xe0] sm:$0xff]
    %v469 = vld [vmem:[#allocation6 + $0xe8] sm:$0xff]
    %v470 = vld [vmem:[#allocation6 + $0xf0] sm:$0xff]
    %v471 = vld [vmem:[#allocation6 + $0xf8] sm:$0xff]
    %v472 = vld [vmem:[#allocation6 + $0x100] sm:$0xff]
    %v473 = vld [vmem:[#allocation6 + $0x108] sm:$0xff]
    %v474 = vld [vmem:[#allocation6 + $0x110] sm:$0xff]
    %v475 = vld [vmem:[#allocation6 + $0x118] sm:$0xff]
    %v476 = vld [vmem:[#allocation6 + $0x120] sm:$0xff]
    %v477 = vld [vmem:[#allocation6 + $0x128] sm:$0xff]
    %v478 = vld [vmem:[#allocation6 + $0x130] sm:$0xff]
    %v479 = vld [vmem:[#allocation6 + $0x138] sm:$0xff]
    %v480 = vld [vmem:[#allocation6 + $0x140] sm:$0xff]
    %v481 = vld [vmem:[#allocation6 + $0x148] sm:$0xff]
    %v482 = vld [vmem:[#allocation6 + $0x150] sm:$0xff]
    %v483 = vld [vmem:[#allocation6 + $0x158] sm:$0xff]
    %v484 = vld [vmem:[#allocation6 + $0x160] sm:$0xff]
    %v485 = vld [vmem:[#allocation6 + $0x168] sm:$0xff]
    %v486 = vld [vmem:[#allocation6 + $0x170] sm:$0xff]
    %v487 = vld [vmem:[#allocation6 + $0x178] sm:$0xff]
    %v488 = vld [vmem:[#allocation6 + $0x180] sm:$0xff]
    %v489 = vld [vmem:[#allocation6 + $0x188] sm:$0xff]
    %v490 = vld [vmem:[#allocation6 + $0x190] sm:$0xff]
    %v491 = vld [vmem:[#allocation6 + $0x198] sm:$0xff]
    %v492 = vld [vmem:[#allocation6 + $0x1a0] sm:$0xff]
    %v493 = vld [vmem:[#allocation6 + $0x1a8] sm:$0xff]
    %v494 = vld [vmem:[#allocation6 + $0x1b0] sm:$0xff]
    %v495 = vld [vmem:[#allocation6 + $0x1b8] sm:$0xff]
    %v496 = vld [vmem:[#allocation6 + $0x1c0] sm:$0xff]
    %v497 = vld [vmem:[#allocation6 + $0x1c8] sm:$0xff]
    %v498 = vld [vmem:[#allocation6 + $0x1d0] sm:$0xff]
    %v499 = vld [vmem:[#allocation6 + $0x1d8] sm:$0xff]
    %v500 = vld [vmem:[#allocation6 + $0x1e0] sm:$0xff]
    %v501 = vld [vmem:[#allocation6 + $0x1e8] sm:$0xff]
    %v502 = vld [vmem:[#allocation6 + $0x1f0] sm:$0xff]
    %v503 = vld [vmem:[#allocation6 + $0x1f8] sm:$0xff]
    %v504 = vld [vmem:[#allocation8] sm:$0xff]
    %v505 = vld [vmem:[#allocation8 + $0x8] sm:$0xff]
    %v506 = vld [vmem:[#allocation8 + $0x10] sm:$0xff]
    %v507 = vld [vmem:[#allocation8 + $0x18] sm:$0xff]
    %v508 = vld [vmem:[#allocation8 + $0x20] sm:$0xff]
    %v509 = vld [vmem:[#allocation8 + $0x28] sm:$0xff]
    %v510 = vld [vmem:[#allocation8 + $0x30] sm:$0xff]
    %v511 = vld [vmem:[#allocation8 + $0x38] sm:$0xff]
    %v512 = vld [vmem:[#allocation8 + $0x40] sm:$0xff]
    %v513 = vld [vmem:[#allocation8 + $0x48] sm:$0xff]
    %v514 = vld [vmem:[#allocation8 + $0x50] sm:$0xff]
    %v515 = vld [vmem:[#allocation8 + $0x58] sm:$0xff]
    %v516 = vld [vmem:[#allocation8 + $0x60] sm:$0xff]
    %v517 = vld [vmem:[#allocation8 + $0x68] sm:$0xff]
    %v518 = vld [vmem:[#allocation8 + $0x70] sm:$0xff]
    %v519 = vld [vmem:[#allocation8 + $0x78] sm:$0xff]
    %v520 = vld [vmem:[#allocation8 + $0x80] sm:$0xff]
    %v521 = vld [vmem:[#allocation8 + $0x88] sm:$0xff]
    %v522 = vld [vmem:[#allocation8 + $0x90] sm:$0xff]
    %v523 = vld [vmem:[#allocation8 + $0x98] sm:$0xff]
    %v524 = vld [vmem:[#allocation8 + $0xa0] sm:$0xff]
    %v525 = vld [vmem:[#allocation8 + $0xa8] sm:$0xff]
    %v526 = vld [vmem:[#allocation8 + $0xb0] sm:$0xff]
    %v527 = vld [vmem:[#allocation8 + $0xb8] sm:$0xff]
    %v528 = vld [vmem:[#allocation8 + $0xc0] sm:$0xff]
    %v529 = vld [vmem:[#allocation8 + $0xc8] sm:$0xff]
    %v530 = vld [vmem:[#allocation8 + $0xd0] sm:$0xff]
    %v531 = vld [vmem:[#allocation8 + $0xd8] sm:$0xff]
    %v532 = vld [vmem:[#allocation8 + $0xe0] sm:$0xff]
    %v533 = vld [vmem:[#allocation8 + $0xe8] sm:$0xff]
    %v534 = vld [vmem:[#allocation8 + $0xf0] sm:$0xff]
    %v535 = vld [vmem:[#allocation8 + $0xf8] sm:$0xff]
    %v536 = vld [vmem:[#allocation8 + $0x100] sm:$0xff]
    %v537 = vld [vmem:[#allocation8 + $0x108] sm:$0xff]
    %v538 = vld [vmem:[#allocation8 + $0x110] sm:$0xff]
    %v539 = vld [vmem:[#allocation8 + $0x118] sm:$0xff]
    %v540 = vld [vmem:[#allocation8 + $0x120] sm:$0xff]
    %v541 = vld [vmem:[#allocation8 + $0x128] sm:$0xff]
    %v542 = vld [vmem:[#allocation8 + $0x130] sm:$0xff]
    %v543 = vld [vmem:[#allocation8 + $0x138] sm:$0xff]
    %v544 = vld [vmem:[#allocation8 + $0x140] sm:$0xff]
    %v545 = vld [vmem:[#allocation8 + $0x148] sm:$0xff]
    %v546 = vld [vmem:[#allocation8 + $0x150] sm:$0xff]
    %v547 = vld [vmem:[#allocation8 + $0x158] sm:$0xff]
    %v548 = vld [vmem:[#allocation8 + $0x160] sm:$0xff]
    %v549 = vld [vmem:[#allocation8 + $0x168] sm:$0xff]
    %v550 = vld [vmem:[#allocation8 + $0x170] sm:$0xff]
    %v551 = vld [vmem:[#allocation8 + $0x178] sm:$0xff]
    %v552 = vld [vmem:[#allocation8 + $0x180] sm:$0xff]
    %v553 = vld [vmem:[#allocation8 + $0x188] sm:$0xff]
    %v554 = vld [vmem:[#allocation8 + $0x190] sm:$0xff]
    %v555 = vld [vmem:[#allocation8 + $0x198] sm:$0xff]
    %v556 = vld [vmem:[#allocation8 + $0x1a0] sm:$0xff]
    %v557 = vld [vmem:[#allocation8 + $0x1a8] sm:$0xff]
    %v558 = vld [vmem:[#allocation8 + $0x1b0] sm:$0xff]
    %v559 = vld [vmem:[#allocation8 + $0x1b8] sm:$0xff]
    %v560 = vld [vmem:[#allocation8 + $0x1c0] sm:$0xff]
    %v561 = vld [vmem:[#allocation8 + $0x1c8] sm:$0xff]
    %v562 = vld [vmem:[#allocation8 + $0x1d0] sm:$0xff]
    %v563 = vld [vmem:[#allocation8 + $0x1d8] sm:$0xff]
    %v564 = vld [vmem:[#allocation8 + $0x1e0] sm:$0xff]
    %v565 = vld [vmem:[#allocation8 + $0x1e8] sm:$0xff]
    %v566 = vld [vmem:[#allocation8 + $0x1f0] sm:$0xff]
    %v567 = vld [vmem:[#allocation8 + $0x1f8] sm:$0xff]
    %v568 = vld [vmem:[%s6] sm:$0xf]
    %v570 = vlaneseq
    %v571 = vshrl.u32 %v570, 7
    %v572 = vsub.s32 0, %v571
    %v573 = vrot.slane %v568, %v572
    %v574 = vlaneseq
    %v575 = vshrl.u32 %v574, 7
    %v576 = vsub.s32 1, %v575
    %v577 = vrot.slane %v568, %v576
    %v578 = vlaneseq
    %v579 = vshrl.u32 %v578, 7
    %v580 = vsub.s32 2, %v579
    %v581 = vrot.slane %v568, %v580
    %v582 = vlaneseq
    %v583 = vshrl.u32 %v582, 7
    %v584 = vsub.s32 3, %v583
    %v585 = vrot.slane %v568, %v584
    %v590 = vld [vmem:[%s8] sm:$0xf]
    %v592 = vlaneseq
    %v593 = vshrl.u32 %v592, 7
    %v594 = vsub.s32 0, %v593
    %v595 = vrot.slane %v590, %v594
    %v596 = vlaneseq
    %v597 = vshrl.u32 %v596, 7
    %v598 = vsub.s32 1, %v597
    %v599 = vrot.slane %v590, %v598
    %v600 = vlaneseq
    %v601 = vshrl.u32 %v600, 7
    %v602 = vsub.s32 2, %v601
    %v603 = vrot.slane %v590, %v602
    %v604 = vlaneseq
    %v605 = vshrl.u32 %v604, 7
    %v606 = vsub.s32 3, %v605
    %v607 = vrot.slane %v590, %v606
    %v612 = vld [vmem:[%s10] sm:$0xf]
    %v614 = vlaneseq
    %v615 = vshrl.u32 %v614, 7
    %v616 = vsub.s32 0, %v615
    %v617 = vrot.slane %v612, %v616
    %v618 = vlaneseq
    %v619 = vshrl.u32 %v618, 7
    %v620 = vsub.s32 1, %v619
    %v621 = vrot.slane %v612, %v620
    %v622 = vlaneseq
    %v623 = vshrl.u32 %v622, 7
    %v624 = vsub.s32 2, %v623
    %v625 = vrot.slane %v612, %v624
    %v626 = vlaneseq
    %v627 = vshrl.u32 %v626, 7
    %v628 = vsub.s32 3, %v627
    %v629 = vrot.slane %v612, %v628
    %v634 = vld [vmem:[#allocation2] sm:$0xff]
    %v635 = vld [vmem:[#allocation2 + $0x8] sm:$0xff]
    %v636 = vld [vmem:[#allocation2 + $0x10] sm:$0xff]
    %v669 = vunpack.c.l.b16 %v327
    %v670 = vunpack.c.h.b16 %v327
    %v671 = vunpack.c.l.b16 %v328
    %v672 = vunpack.c.l.b16 %v329
    %v673 = vunpack.c.h.b16 %v329
    %v674 = vunpack.c.l.b16 %v330
    %v675 = vunpack.c.l.b16 %v331
    %v676 = vunpack.c.h.b16 %v331
    %v677 = vunpack.c.l.b16 %v332
    %v678 = vunpack.c.l.b16 %v333
    %v679 = vunpack.c.h.b16 %v333
    %v680 = vunpack.c.l.b16 %v334
    %v681 = vunpack.c.l.b16 %v335
    %v682 = vunpack.c.h.b16 %v335
    %v683 = vunpack.c.l.b16 %v336
    %v684 = vunpack.c.l.b16 %v337
    %v685 = vunpack.c.h.b16 %v337
    %v686 = vunpack.c.l.b16 %v338
    %v687 = vunpack.c.l.b16 %v339
    %v688 = vunpack.c.h.b16 %v339
    %v689 = vunpack.c.l.b16 %v340
    %v690 = vunpack.c.l.b16 %v341
    %v691 = vunpack.c.h.b16 %v341
    %v692 = vunpack.c.l.b16 %v342
    %v693 = vunpack.c.l.b16 %v343
    %v694 = vunpack.c.h.b16 %v343
    %v695 = vunpack.c.l.b16 %v344
    %v696 = vunpack.c.l.b16 %v345
    %v697 = vunpack.c.h.b16 %v345
    %v698 = vunpack.c.l.b16 %v346
    %v699 = vunpack.c.l.b16 %v347
    %v700 = vunpack.c.h.b16 %v347
    %v701 = vunpack.c.l.b16 %v348
    %v702 = vunpack.c.l.b16 %v349
    %v703 = vunpack.c.h.b16 %v349
    %v704 = vunpack.c.l.b16 %v350
    %v705 = vunpack.c.l.b16 %v351
    %v706 = vunpack.c.h.b16 %v351
    %v707 = vunpack.c.l.b16 %v352
    %v708 = vunpack.c.l.b16 %v353
    %v709 = vunpack.c.h.b16 %v353
    %v710 = vunpack.c.l.b16 %v354
    %v711 = vunpack.c.l.b16 %v355
    %v712 = vunpack.c.h.b16 %v355
    %v713 = vunpack.c.l.b16 %v356
    %v714 = vunpack.c.l.b16 %v357
    %v715 = vunpack.c.h.b16 %v357
    %v716 = vunpack.c.l.b16 %v358
    %v717 = vpack.c.b16 %v672, %v669
    %v718 = vpack.c.b16 %v673, %v670
    %v719 = vpack.c.b16 %v674, %v671
    %v720 = vpack.c.b16 %v678, %v675
    %v721 = vpack.c.b16 %v679, %v676
    %v722 = vpack.c.b16 %v680, %v677
    %v723 = vpack.c.b16 %v684, %v681
    %v724 = vpack.c.b16 %v685, %v682
    %v725 = vpack.c.b16 %v686, %v683
    %v726 = vpack.c.b16 %v690, %v687
    %v727 = vpack.c.b16 %v691, %v688
    %v728 = vpack.c.b16 %v692, %v689
    %v729 = vpack.c.b16 %v696, %v693
    %v730 = vpack.c.b16 %v697, %v694
    %v731 = vpack.c.b16 %v698, %v695
    %v732 = vpack.c.b16 %v702, %v699
    %v733 = vpack.c.b16 %v703, %v700
    %v734 = vpack.c.b16 %v704, %v701
    %v735 = vpack.c.b16 %v708, %v705
    %v736 = vpack.c.b16 %v709, %v706
    %v737 = vpack.c.b16 %v710, %v707
    %v738 = vpack.c.b16 %v714, %v711
    %v739 = vpack.c.b16 %v715, %v712
    %v740 = vpack.c.b16 %v716, %v713
    %765 = vmatprep.subr.bf16.mxu0 %v718
    %766 = vmatpush1.bf16.msra.mxu0 %v717
    %767 = vmatprep.subr.bf16.mxu0 %v721
    %768 = vmatpush1.bf16.msra.mxu0 %v720
    %769 = vmatprep.subr.bf16.mxu0 %v724
    %770 = vmatpush1.bf16.msra.mxu0 %v723
    %771 = vmatprep.subr.bf16.mxu0 %v727
    %772 = vmatpush1.bf16.msra.mxu0 %v726
    %773 = vmatprep.subr.bf16.mxu0 %v730
    %774 = vmatpush1.bf16.msra.mxu0 %v729
    %775 = vmatprep.subr.bf16.mxu0 %v733
    %776 = vmatpush1.bf16.msra.mxu0 %v732
    %777 = vmatprep.subr.bf16.mxu0 %v736
    %778 = vmatpush1.bf16.msra.mxu0 %v735
    %779 = vmatprep.subr.bf16.mxu0 %v739
    %780 = vmatpush1.bf16.msra.mxu0 %v738
    %781 = vmatprep.subr.bf16.mxu0 0
    %782 = vmatpush1.bf16.msra.mxu0 0
    %783 = vmatprep.subr.bf16.mxu0 0
    %784 = vmatpush1.bf16.msra.mxu0 0
    %785 = vmatprep.subr.bf16.mxu0 0
    %786 = vmatpush1.bf16.msra.mxu0 0
    %787 = vmatprep.subr.bf16.mxu0 0
    %788 = vmatpush1.bf16.msra.mxu0 0
    %789 = vmatprep.subr.bf16.mxu0 0
    %790 = vmatpush1.bf16.msra.mxu0 0
    %791 = vmatprep.subr.bf16.mxu0 0
    %792 = vmatpush1.bf16.msra.mxu0 0
    %793 = vmatprep.subr.bf16.mxu0 0
    %794 = vmatpush1.bf16.msra.mxu0 0
    %795 = vmatprep.subr.bf16.mxu0 0
    %796 = vmatpush1.bf16.msra.mxu0 0
    %797 = vmatprep.mubr.bf16.mxu0 0
    %798 = vmatmul.mubr.bf16.gmra.mrb[0].mxu0 0
    %v799 = vpop.f32.mrb[0].mxu0
    %v800 = vadd.f32 %v364, %v799
    %v801 = vpop.f32.mrb[0].mxu0
    %v802 = vadd.f32 %v368, %v801
    %v803 = vpop.f32.mrb[0].mxu0
    %v804 = vpop.f32.mrb[0].mxu0
    %805 = vdwg.mxu0
    %806 = vmatprep.subr.bf16.mxu0 0
    %807 = vmatpush1.bf16.msra.mxu0 %v719
    %808 = vmatprep.subr.bf16.mxu0 0
    %809 = vmatpush1.bf16.msra.mxu0 %v722
    %810 = vmatprep.subr.bf16.mxu0 0
    %811 = vmatpush1.bf16.msra.mxu0 %v725
    %812 = vmatprep.subr.bf16.mxu0 0
    %813 = vmatpush1.bf16.msra.mxu0 %v728
    %814 = vmatprep.subr.bf16.mxu0 0
    %815 = vmatpush1.bf16.msra.mxu0 %v731
    %816 = vmatprep.subr.bf16.mxu0 0
    %817 = vmatpush1.bf16.msra.mxu0 %v734
    %818 = vmatprep.subr.bf16.mxu0 0
    %819 = vmatpush1.bf16.msra.mxu0 %v737
    %820 = vmatprep.subr.bf16.mxu0 0
    %821 = vmatpush1.bf16.msra.mxu0 %v740
    %822 = vmatprep.subr.bf16.mxu0 0
    %823 = vmatpush1.bf16.msra.mxu0 0
    %824 = vmatprep.subr.bf16.mxu0 0
    %825 = vmatpush1.bf16.msra.mxu0 0
    %826 = vmatprep.subr.bf16.mxu0 0
    %827 = vmatpush1.bf16.msra.mxu0 0
    %828 = vmatprep.subr.bf16.mxu0 0
    %829 = vmatpush1.bf16.msra.mxu0 0
    %830 = vmatprep.subr.bf16.mxu0 0
    %831 = vmatpush1.bf16.msra.mxu0 0
    %832 = vmatprep.subr.bf16.mxu0 0
    %833 = vmatpush1.bf16.msra.mxu0 0
    %834 = vmatprep.subr.bf16.mxu0 0
    %835 = vmatpush1.bf16.msra.mxu0 0
    %836 = vmatprep.subr.bf16.mxu0 0
    %837 = vmatpush1.bf16.msra.mxu0 0
    %838 = vmatprep.mubr.bf16.mxu0 0
    %839 = vmatmul.mubr.bf16.gmra.mrb[0].mxu0 0
    %v840 = vpop.f32.mrb[0].mxu0
    %v841 = vadd.f32 %v372, %v840
    %v842 = vpop.f32.mrb[0].mxu0
    %v843 = vpop.f32.mrb[0].mxu0
    %v844 = vpop.f32.mrb[0].mxu0
    %845 = vdwg.mxu0
    %v846 = vadd.f32 %v634, %v800
    %v847 = vxor.u32 %v846, 2147483648
    %v848 = vmul.f32 %v847, 1.442695
    %v849 = vpow.pop %v848
    %v850 = vadd.f32 %v849, 1.0
    %v851 = vrcp.pop %v850
    %v852 = vmul.f32 1.0, %v851
    %v853 = vadd.f32 %v635, %v802
    %v854 = vxor.u32 %v853, 2147483648
    %v855 = vmul.f32 %v854, 1.442695
    %v856 = vpow.pop %v855
    %v857 = vadd.f32 %v856, 1.0
    %v858 = vrcp.pop %v857
    %v859 = vmul.f32 1.0, %v858
    %v860 = vmul.f32 %v852, %v841
    %v861 = vadd.f32 %v636, %v860
    %v862 = vtanh.pop %v861
    %v863 = vsub.f32 1.0, %v859
    %v864 = vmul.f32 %v863, %v862
    %v865 = vmul.f32 %v859, 0.0
    %v866 = vadd.f32 %v864, %v865
    %v867 = vld [vmem:[#allocation2 + $0x18] sm:$0xff]
    %v868 = vld [vmem:[#allocation2 + $0x20] sm:$0xff]
    %v869 = vld [vmem:[#allocation2 + $0x28] sm:$0xff]
    %v870 = vpack.c.bf16 %v866, %v866
    %871 = vmatprep.subr.bf16.mxu0 %v718
    %872 = vmatpush1.bf16.msra.mxu0 %v717
    %873 = vmatprep.subr.bf16.mxu0 %v721
    %874 = vmatpush1.bf16.msra.mxu0 %v720
    %875 = vmatprep.subr.bf16.mxu0 %v724
    %876 = vmatpush1.bf16.msra.mxu0 %v723
    %877 = vmatprep.subr.bf16.mxu0 %v727
    %878 = vmatpush1.bf16.msra.mxu0 %v726
    %879 = vmatprep.subr.bf16.mxu0 %v730
    %880 = vmatpush1.bf16.msra.mxu0 %v729
    %881 = vmatprep.subr.bf16.mxu0 %v733
    %882 = vmatpush1.bf16.msra.mxu0 %v732
    %883 = vmatprep.subr.bf16.mxu0 %v736
    %884 = vmatpush1.bf16.msra.mxu0 %v735
    %885 = vmatprep.subr.bf16.mxu0 %v739
    %886 = vmatpush1.bf16.msra.mxu0 %v738
    %887 = vmatprep.subr.bf16.mxu0 0
    %888 = vmatpush1.bf16.msra.mxu0 0
    %889 = vmatprep.subr.bf16.mxu0 0
    %890 = vmatpush1.bf16.msra.mxu0 0
    %891 = vmatprep.subr.bf16.mxu0 0
    %892 = vmatpush1.bf16.msra.mxu0 0
    %893 = vmatprep.subr.bf16.mxu0 0
    %894 = vmatpush1.bf16.msra.mxu0 0
    %895 = vmatprep.subr.bf16.mxu0 0
    %896 = vmatpush1.bf16.msra.mxu0 0
    %897 = vmatprep.subr.bf16.mxu0 0
    %898 = vmatpush1.bf16.msra.mxu0 0
    %899 = vmatprep.subr.bf16.mxu0 0
    %900 = vmatpush1.bf16.msra.mxu0 0
    %901 = vmatprep.subr.bf16.mxu0 0
    %902 = vmatpush1.bf16.msra.mxu0 0
    %903 = vmatprep.mubr.bf16.mxu0 0
    %904 = vmatmul.mubr.bf16.gmra.mrb[0].mxu0 %v870
    %v905 = vpop.f32.mrb[0].mxu0
    %v906 = vadd.f32 %v364, %v905
    %v907 = vpop.f32.mrb[0].mxu0
    %v908 = vadd.f32 %v368, %v907
    %v909 = vpop.f32.mrb[0].mxu0
    %v910 = vpop.f32.mrb[0].mxu0
    %911 = vdwg.mxu0
    %912 = vmatprep.subr.bf16.mxu0 0
    %913 = vmatpush1.bf16.msra.mxu0 %v719
    %914 = vmatprep.subr.bf16.mxu0 0
    %915 = vmatpush1.bf16.msra.mxu0 %v722
    %916 = vmatprep.subr.bf16.mxu0 0
    %917 = vmatpush1.bf16.msra.mxu0 %v725
    %918 = vmatprep.subr.bf16.mxu0 0
    %919 = vmatpush1.bf16.msra.mxu0 %v728
    %920 = vmatprep.subr.bf16.mxu0 0
    %921 = vmatpush1.bf16.msra.mxu0 %v731
    %922 = vmatprep.subr.bf16.mxu0 0
    %923 = vmatpush1.bf16.msra.mxu0 %v734
    %924 = vmatprep.subr.bf16.mxu0 0
    %925 = vmatpush1.bf16.msra.mxu0 %v737
    %926 = vmatprep.subr.bf16.mxu0 0
    %927 = vmatpush1.bf16.msra.mxu0 %v740
    %928 = vmatprep.subr.bf16.mxu0 0
    %929 = vmatpush1.bf16.msra.mxu0 0
    %930 = vmatprep.subr.bf16.mxu0 0
    %931 = vmatpush1.bf16.msra.mxu0 0
    %932 = vmatprep.subr.bf16.mxu0 0
    %933 = vmatpush1.bf16.msra.mxu0 0
    %934 = vmatprep.subr.bf16.mxu0 0
    %935 = vmatpush1.bf16.msra.mxu0 0
    %936 = vmatprep.subr.bf16.mxu0 0
    %937 = vmatpush1.bf16.msra.mxu0 0
    %938 = vmatprep.subr.bf16.mxu0 0
    %939 = vmatpush1.bf16.msra.mxu0 0
    %940 = vmatprep.subr.bf16.mxu0 0
    %941 = vmatpush1.bf16.msra.mxu0 0
    %942 = vmatprep.subr.bf16.mxu0 0
    %943 = vmatpush1.bf16.msra.mxu0 0
    %944 = vmatprep.mubr.bf16.mxu0 0
    %945 = vmatmul.mubr.bf16.gmra.mrb[0].mxu0 %v870
    %v946 = vpop.f32.mrb[0].mxu0
    %v947 = vadd.f32 %v372, %v946
    %v948 = vpop.f32.mrb[0].mxu0
    %v949 = vpop.f32.mrb[0].mxu0
    %v950 = vpop.f32.mrb[0].mxu0
    %951 = vdwg.mxu0
    %v952 = vadd.f32 %v867, %v906
    %v953 = vxor.u32 %v952, 2147483648
    %v954 = vmul.f32 %v953, 1.442695
    %v955 = vpow.pop %v954
    %v956 = vadd.f32 %v955, 1.0
    %v957 = vrcp.pop %v956
    %v958 = vmul.f32 1.0, %v957
    %v959 = vadd.f32 %v868, %v908
    %v960 = vxor.u32 %v959, 2147483648
    %v961 = vmul.f32 %v960, 1.442695
    %v962 = vpow.pop %v961
    %v963 = vadd.f32 %v962, 1.0
    %v964 = vrcp.pop %v963
    %v965 = vmul.f32 1.0, %v964
    %v966 = vmul.f32 %v958, %v947
    %v967 = vadd.f32 %v869, %v966
    %v968 = vtanh.pop %v967
    %v969 = vsub.f32 1.0, %v965
    %v970 = vmul.f32 %v969, %v968
    %v971 = vmul.f32 %v965, %v866
    %v972 = vadd.f32 %v970, %v971
    %v973 = vpack.c.bf16 0.0, 0.0
    %v1038 = vunpack.c.l.b16 %v376
    %v1039 = vunpack.c.h.b16 %v376
    %v1040 = vunpack.c.l.b16 %v377
    %v1041 = vunpack.c.h.b16 %v377
    %v1042 = vunpack.c.l.b16 %v378
    %v1043 = vunpack.c.h.b16 %v378
    %v1044 = vunpack.c.l.b16 %v379
    %v1045 = vunpack.c.h.b16 %v379
    %v1046 = vunpack.c.l.b16 %v380
    %v1047 = vunpack.c.h.b16 %v380
    %v1048 = vunpack.c.l.b16 %v381
    %v1049 = vunpack.c.h.b16 %v381
    %v1050 = vunpack.c.l.b16 %v382
    %v1051 = vunpack.c.h.b16 %v382
    %v1052 = vunpack.c.l.b16 %v383
    %v1053 = vunpack.c.h.b16 %v383
    %v1054 = vunpack.c.l.b16 %v384
    %v1055 = vunpack.c.h.b16 %v384
    %v1056 = vunpack.c.l.b16 %v385
    %v1057 = vunpack.c.h.b16 %v385
    %v1058 = vunpack.c.l.b16 %v386
    %v1059 = vunpack.c.h.b16 %v386
    %v1060 = vunpack.c.l.b16 %v387
    %v1061 = vunpack.c.h.b16 %v387
    %v1062 = vunpack.c.l.b16 %v388
    %v1063 = vunpack.c.h.b16 %v388
    %v1064 = vunpack.c.l.b16 %v389
    %v1065 = vunpack.c.h.b16 %v389
    %v1066 = vunpack.c.l.b16 %v390
    %v1067 = vunpack.c.h.b16 %v390
    %v1068 = vunpack.c.l.b16 %v391
    %v1069 = vunpack.c.h.b16 %v391
    %v1070 = vunpack.c.l.b16 %v392
    %v1071 = vunpack.c.h.b16 %v392
    %v1072 = vunpack.c.l.b16 %v393
    %v1073 = vunpack.c.h.b16 %v393
    %v1074 = vunpack.c.l.b16 %v394
    %v1075 = vunpack.c.h.b16 %v394
    %v1076 = vunpack.c.l.b16 %v395
    %v1077 = vunpack.c.h.b16 %v395
    %v1078 = vunpack.c.l.b16 %v396
    %v1079 = vunpack.c.h.b16 %v396
    %v1080 = vunpack.c.l.b16 %v397
    %v1081 = vunpack.c.h.b16 %v397
    %v1082 = vunpack.c.l.b16 %v398
    %v1083 = vunpack.c.h.b16 %v398
    %v1084 = vunpack.c.l.b16 %v399
    %v1085 = vunpack.c.h.b16 %v399
    %v1086 = vunpack.c.l.b16 %v400
    %v1087 = vunpack.c.h.b16 %v400
    %v1088 = vunpack.c.l.b16 %v401
    %v1089 = vunpack.c.h.b16 %v401
    %v1090 = vunpack.c.l.b16 %v402
    %v1091 = vunpack.c.h.b16 %v402
    %v1092 = vunpack.c.l.b16 %v403
    %v1093 = vunpack.c.h.b16 %v403
    %v1094 = vunpack.c.l.b16 %v404
    %v1095 = vunpack.c.h.b16 %v404
    %v1096 = vunpack.c.l.b16 %v405
    %v1097 = vunpack.c.h.b16 %v405
    %v1098 = vunpack.c.l.b16 %v406
    %v1099 = vunpack.c.h.b16 %v406
    %v1100 = vunpack.c.l.b16 %v407
    %v1101 = vunpack.c.h.b16 %v407
    %v1102 = vunpack.c.l.b16 %v408
    %v1103 = vunpack.c.h.b16 %v408
    %v1104 = vunpack.c.l.b16 %v409
    %v1105 = vunpack.c.h.b16 %v409
    %v1106 = vunpack.c.l.b16 %v410
    %v1107 = vunpack.c.h.b16 %v410
    %v1108 = vunpack.c.l.b16 %v411
    %v1109 = vunpack.c.h.b16 %v411
    %v1110 = vunpack.c.l.b16 %v412
    %v1111 = vunpack.c.h.b16 %v412
    %v1112 = vunpack.c.l.b16 %v413
    %v1113 = vunpack.c.h.b16 %v413
    %v1114 = vunpack.c.l.b16 %v414
    %v1115 = vunpack.c.h.b16 %v414
    %v1116 = vunpack.c.l.b16 %v415
    %v1117 = vunpack.c.h.b16 %v415
    %v1118 = vunpack.c.l.b16 %v416
    %v1119 = vunpack.c.h.b16 %v416
    %v1120 = vunpack.c.l.b16 %v417
    %v1121 = vunpack.c.h.b16 %v417
    %v1122 = vunpack.c.l.b16 %v418
    %v1123 = vunpack.c.h.b16 %v418
    %v1124 = vunpack.c.l.b16 %v419
    %v1125 = vunpack.c.h.b16 %v419
    %v1126 = vunpack.c.l.b16 %v420
    %v1127 = vunpack.c.h.b16 %v420
    %v1128 = vunpack.c.l.b16 %v421
    %v1129 = vunpack.c.h.b16 %v421
    %v1130 = vunpack.c.l.b16 %v422
    %v1131 = vunpack.c.h.b16 %v422
    %v1132 = vunpack.c.l.b16 %v423
    %v1133 = vunpack.c.h.b16 %v423
    %v1134 = vunpack.c.l.b16 %v424
    %v1135 = vunpack.c.h.b16 %v424
    %v1136 = vunpack.c.l.b16 %v425
    %v1137 = vunpack.c.h.b16 %v425
    %v1138 = vunpack.c.l.b16 %v426
    %v1139 = vunpack.c.h.b16 %v426
    %v1140 = vunpack.c.l.b16 %v427
    %v1141 = vunpack.c.h.b16 %v427
    %v1142 = vunpack.c.l.b16 %v428
    %v1143 = vunpack.c.h.b16 %v428
    %v1144 = vunpack.c.l.b16 %v429
    %v1145 = vunpack.c.h.b16 %v429
    %v1146 = vunpack.c.l.b16 %v430
    %v1147 = vunpack.c.h.b16 %v430
    %v1148 = vunpack.c.l.b16 %v431
    %v1149 = vunpack.c.h.b16 %v431
    %v1150 = vunpack.c.l.b16 %v432
    %v1151 = vunpack.c.h.b16 %v432
    %v1152 = vunpack.c.l.b16 %v433
    %v1153 = vunpack.c.h.b16 %v433
    %v1154 = vunpack.c.l.b16 %v434
    %v1155 = vunpack.c.h.b16 %v434
    %v1156 = vunpack.c.l.b16 %v435
    %v1157 = vunpack.c.h.b16 %v435
    %v1158 = vunpack.c.l.b16 %v436
    %v1159 = vunpack.c.h.b16 %v436
    %v1160 = vunpack.c.l.b16 %v437
    %v1161 = vunpack.c.h.b16 %v437
    %v1162 = vunpack.c.l.b16 %v438
    %v1163 = vunpack.c.h.b16 %v438
    %v1164 = vunpack.c.l.b16 %v439
    %v1165 = vunpack.c.h.b16 %v439
    %v1166 = vpack.c.b16 %v1042, %v1038
    %v1167 = vpack.c.b16 %v1043, %v1039
    %v1168 = vpack.c.b16 %v1044, %v1040
    %v1169 = vpack.c.b16 %v1045, %v1041
    %v1170 = vpack.c.b16 %v1050, %v1046
    %v1171 = vpack.c.b16 %v1051, %v1047
    %v1172 = vpack.c.b16 %v1052, %v1048
    %v1173 = vpack.c.b16 %v1053, %v1049
    %v1174 = vpack.c.b16 %v1058, %v1054
    %v1175 = vpack.c.b16 %v1059, %v1055
    %v1176 = vpack.c.b16 %v1060, %v1056
    %v1177 = vpack.c.b16 %v1061, %v1057
    %v1178 = vpack.c.b16 %v1066, %v1062
    %v1179 = vpack.c.b16 %v1067, %v1063
    %v1180 = vpack.c.b16 %v1068, %v1064
    %v1181 = vpack.c.b16 %v1069, %v1065
    %v1182 = vpack.c.b16 %v1074, %v1070
    %v1183 = vpack.c.b16 %v1075, %v1071
    %v1184 = vpack.c.b16 %v1076, %v1072
    %v1185 = vpack.c.b16 %v1077, %v1073
    %v1186 = vpack.c.b16 %v1082, %v1078
    %v1187 = vpack.c.b16 %v1083, %v1079
    %v1188 = vpack.c.b16 %v1084, %v1080
    %v1189 = vpack.c.b16 %v1085, %v1081
    %v1190 = vpack.c.b16 %v1090, %v1086
    %v1191 = vpack.c.b16 %v1091, %v1087
    %v1192 = vpack.c.b16 %v1092, %v1088
    %v1193 = vpack.c.b16 %v1093, %v1089
    %v1194 = vpack.c.b16 %v1098, %v1094
    %v1195 = vpack.c.b16 %v1099, %v1095
    %v1196 = vpack.c.b16 %v1100, %v1096
    %v1197 = vpack.c.b16 %v1101, %v1097
    %v1198 = vpack.c.b16 %v1106, %v1102
    %v1199 = vpack.c.b16 %v1107, %v1103
    %v1200 = vpack.c.b16 %v1108, %v1104
    %v1201 = vpack.c.b16 %v1109, %v1105
    %v1202 = vpack.c.b16 %v1114, %v1110
    %v1203 = vpack.c.b16 %v1115, %v1111
    %v1204 = vpack.c.b16 %v1116, %v1112
    %v1205 = vpack.c.b16 %v1117, %v1113
    %v1206 = vpack.c.b16 %v1122, %v1118
    %v1207 = vpack.c.b16 %v1123, %v1119
    %v1208 = vpack.c.b16 %v1124, %v1120
    %v1209 = vpack.c.b16 %v1125, %v1121
    %v1210 = vpack.c.b16 %v1130, %v1126
    %v1211 = vpack.c.b16 %v1131, %v1127
    %v1212 = vpack.c.b16 %v1132, %v1128
    %v1213 = vpack.c.b16 %v1133, %v1129
    %v1214 = vpack.c.b16 %v1138, %v1134
    %v1215 = vpack.c.b16 %v1139, %v1135
    %v1216 = vpack.c.b16 %v1140, %v1136
    %v1217 = vpack.c.b16 %v1141, %v1137
    %v1218 = vpack.c.b16 %v1146, %v1142
    %v1219 = vpack.c.b16 %v1147, %v1143
    %v1220 = vpack.c.b16 %v1148, %v1144
    %v1221 = vpack.c.b16 %v1149, %v1145
    %v1222 = vpack.c.b16 %v1154, %v1150
    %v1223 = vpack.c.b16 %v1155, %v1151
    %v1224 = vpack.c.b16 %v1156, %v1152
    %v1225 = vpack.c.b16 %v1157, %v1153
    %v1226 = vpack.c.b16 %v1162, %v1158
    %v1227 = vpack.c.b16 %v1163, %v1159
    %v1228 = vpack.c.b16 %v1164, %v1160
    %v1229 = vpack.c.b16 %v1165, %v1161
    %1294 = vmatprep.subr.bf16.mxu0 %v1167
    %1295 = vmatpush1.bf16.msra.mxu0 %v1166
    %1296 = vmatprep.subr.bf16.mxu0 %v1171
    %1297 = vmatpush1.bf16.msra.mxu0 %v1170
    %1298 = vmatprep.subr.bf16.mxu0 %v1175
    %1299 = vmatpush1.bf16.msra.mxu0 %v1174
    %1300 = vmatprep.subr.bf16.mxu0 %v1179
    %1301 = vmatpush1.bf16.msra.mxu0 %v1178
    %1302 = vmatprep.subr.bf16.mxu0 %v1183
    %1303 = vmatpush1.bf16.msra.mxu0 %v1182
    %1304 = vmatprep.subr.bf16.mxu0 %v1187
    %1305 = vmatpush1.bf16.msra.mxu0 %v1186
    %1306 = vmatprep.subr.bf16.mxu0 %v1191
    %1307 = vmatpush1.bf16.msra.mxu0 %v1190
    %1308 = vmatprep.subr.bf16.mxu0 %v1195
    %1309 = vmatpush1.bf16.msra.mxu0 %v1194
    %1310 = vmatprep.subr.bf16.mxu0 %v1199
    %1311 = vmatpush1.bf16.msra.mxu0 %v1198
    %1312 = vmatprep.subr.bf16.mxu0 %v1203
    %1313 = vmatpush1.bf16.msra.mxu0 %v1202
    %1314 = vmatprep.subr.bf16.mxu0 %v1207
    %1315 = vmatpush1.bf16.msra.mxu0 %v1206
    %1316 = vmatprep.subr.bf16.mxu0 %v1211
    %1317 = vmatpush1.bf16.msra.mxu0 %v1210
    %1318 = vmatprep.subr.bf16.mxu0 %v1215
    %1319 = vmatpush1.bf16.msra.mxu0 %v1214
    %1320 = vmatprep.subr.bf16.mxu0 %v1219
    %1321 = vmatpush1.bf16.msra.mxu0 %v1218
    %1322 = vmatprep.subr.bf16.mxu0 %v1223
    %1323 = vmatpush1.bf16.msra.mxu0 %v1222
    %1324 = vmatprep.subr.bf16.mxu0 %v1227
    %1325 = vmatpush1.bf16.msra.mxu0 %v1226
    %1326 = vmatprep.mubr.bf16.mxu0 %v973
    %1327 = vmatmul.mubr.bf16.gmra.mrb[0].mxu0 %v870
    %v1328 = vpop.f32.mrb[0].mxu0
    %v1329 = vadd.f32 %v573, %v1328
    %v1330 = vpop.f32.mrb[0].mxu0
    %v1331 = vadd.f32 %v577, %v1330
    %v1332 = vpop.f32.mrb[0].mxu0
    %v1333 = vpop.f32.mrb[0].mxu0
    %1334 = vdwg.mxu0
    %1335 = vmatprep.subr.bf16.mxu0 %v1169
    %1336 = vmatpush1.bf16.msra.mxu0 %v1168
    %1337 = vmatprep.subr.bf16.mxu0 %v1173
    %1338 = vmatpush1.bf16.msra.mxu0 %v1172
    %1339 = vmatprep.subr.bf16.mxu0 %v1177
    %1340 = vmatpush1.bf16.msra.mxu0 %v1176
    %1341 = vmatprep.subr.bf16.mxu0 %v1181
    %1342 = vmatpush1.bf16.msra.mxu0 %v1180
    %1343 = vmatprep.subr.bf16.mxu0 %v1185
    %1344 = vmatpush1.bf16.msra.mxu0 %v1184
    %1345 = vmatprep.subr.bf16.mxu0 %v1189
    %1346 = vmatpush1.bf16.msra.mxu0 %v1188
    %1347 = vmatprep.subr.bf16.mxu0 %v1193
    %1348 = vmatpush1.bf16.msra.mxu0 %v1192
    %1349 = vmatprep.subr.bf16.mxu0 %v1197
    %1350 = vmatpush1.bf16.msra.mxu0 %v1196
    %1351 = vmatprep.subr.bf16.mxu0 %v1201
    %1352 = vmatpush1.bf16.msra.mxu0 %v1200
    %1353 = vmatprep.subr.bf16.mxu0 %v1205
    %1354 = vmatpush1.bf16.msra.mxu0 %v1204
    %1355 = vmatprep.subr.bf16.mxu0 %v1209
    %1356 = vmatpush1.bf16.msra.mxu0 %v1208
    %1357 = vmatprep.subr.bf16.mxu0 %v1213
    %1358 = vmatpush1.bf16.msra.mxu0 %v1212
    %1359 = vmatprep.subr.bf16.mxu0 %v1217
    %1360 = vmatpush1.bf16.msra.mxu0 %v1216
    %1361 = vmatprep.subr.bf16.mxu0 %v1221
    %1362 = vmatpush1.bf16.msra.mxu0 %v1220
    %1363 = vmatprep.subr.bf16.mxu0 %v1225
    %1364 = vmatpush1.bf16.msra.mxu0 %v1224
    %1365 = vmatprep.subr.bf16.mxu0 %v1229
    %1366 = vmatpush1.bf16.msra.mxu0 %v1228
    %1367 = vmatprep.mubr.bf16.mxu0 %v973
    %1368 = vmatmul.mubr.bf16.gmra.mrb[0].mxu0 %v870
    %v1369 = vpop.f32.mrb[0].mxu0
    %v1370 = vadd.f32 %v581, %v1369
    %v1371 = vpop.f32.mrb[0].mxu0
    %v1372 = vadd.f32 %v585, %v1371
    %v1373 = vpop.f32.mrb[0].mxu0
    %v1374 = vpop.f32.mrb[0].mxu0
    %1375 = vdwg.mxu0
    %v1376 = vxor.u32 %v1329, 2147483648
    %v1377 = vmul.f32 %v1376, 1.442695
    %v1378 = vpow.pop %v1377
    %v1379 = vadd.f32 %v1378, 1.0
    %v1380 = vrcp.pop %v1379
    %v1381 = vmul.f32 1.0, %v1380
    %v1382 = vxor.u32 %v1331, 2147483648
    %v1383 = vmul.f32 %v1382, 1.442695
    %v1384 = vpow.pop %v1383
    %v1385 = vadd.f32 %v1384, 1.0
    %v1386 = vrcp.pop %v1385
    %v1387 = vmul.f32 1.0, %v1386
    %v1388 = vmul.f32 %v1381, %v1372
    %v1389 = vadd.f32 %v1370, %v1388
    %v1390 = vtanh.pop %v1389
    %v1391 = vsub.f32 1.0, %v1387
    %v1392 = vmul.f32 %v1391, %v1390
    %v1393 = vmul.f32 %v1387, 0.0
    %v1394 = vadd.f32 %v1392, %v1393
    %v1395 = vld [vmem:[#allocation2 + $0x30] sm:$0xff]
    %v1396 = vld [vmem:[#allocation2 + $0x38] sm:$0xff]
    %v1397 = vld [vmem:[#allocation2 + $0x40] sm:$0xff]
    %v1398 = vpack.c.bf16 %v972, %v972
    %1399 = vmatprep.subr.bf16.mxu0 %v718
    %1400 = vmatpush1.bf16.msra.mxu0 %v717
    %1401 = vmatprep.subr.bf16.mxu0 %v721
    %1402 = vmatpush1.bf16.msra.mxu0 %v720
    %1403 = vmatprep.subr.bf16.mxu0 %v724
    %1404 = vmatpush1.bf16.msra.mxu0 %v723
    %1405 = vmatprep.subr.bf16.mxu0 %v727
    %1406 = vmatpush1.bf16.msra.mxu0 %v726
    %1407 = vmatprep.subr.bf16.mxu0 %v730
    %1408 = vmatpush1.bf16.msra.mxu0 %v729
    %1409 = vmatprep.subr.bf16.mxu0 %v733
    %1410 = vmatpush1.bf16.msra.mxu0 %v732
    %1411 = vmatprep.subr.bf16.mxu0 %v736
    %1412 = vmatpush1.bf16.msra.mxu0 %v735
    %1413 = vmatprep.subr.bf16.mxu0 %v739
    %1414 = vmatpush1.bf16.msra.mxu0 %v738
    %1415 = vmatprep.subr.bf16.mxu0 0
    %1416 = vmatpush1.bf16.msra.mxu0 0
    %1417 = vmatprep.subr.bf16.mxu0 0
    %1418 = vmatpush1.bf16.msra.mxu0 0
    %1419 = vmatprep.subr.bf16.mxu0 0
    %1420 = vmatpush1.bf16.msra.mxu0 0
    %1421 = vmatprep.subr.bf16.mxu0 0
    %1422 = vmatpush1.bf16.msra.mxu0 0
    %1423 = vmatprep.subr.bf16.mxu0 0
    %1424 = vmatpush1.bf16.msra.mxu0 0
    %1425 = vmatprep.subr.bf16.mxu0 0
    %1426 = vmatpush1.bf16.msra.mxu0 0
    %1427 = vmatprep.subr.bf16.mxu0 0
    %1428 = vmatpush1.bf16.msra.mxu0 0
    %1429 = vmatprep.subr.bf16.mxu0 0
    %1430 = vmatpush1.bf16.msra.mxu0 0
    %1431 = vmatprep.mubr.bf16.mxu0 0
    %1432 = vmatmul.mubr.bf16.gmra.mrb[0].mxu0 %v1398
    %v1433 = vpop.f32.mrb[0].mxu0
    %v1434 = vadd.f32 %v364, %v1433
    %v1435 = vpop.f32.mrb[0].mxu0
    %v1436 = vadd.f32 %v368, %v1435
    %v1437 = vpop.f32.mrb[0].mxu0
    %v1438 = vpop.f32.mrb[0].mxu0
    %1439 = vdwg.mxu0
    %1440 = vmatprep.subr.bf16.mxu0 0
    %1441 = vmatpush1.bf16.msra.mxu0 %v719
    %1442 = vmatprep.subr.bf16.mxu0 0
    %1443 = vmatpush1.bf16.msra.mxu0 %v722
    %1444 = vmatprep.subr.bf16.mxu0 0
    %1445 = vmatpush1.bf16.msra.mxu0 %v725
    %1446 = vmatprep.subr.bf16.mxu0 0
    %1447 = vmatpush1.bf16.msra.mxu0 %v728
    %1448 = vmatprep.subr.bf16.mxu0 0
    %1449 = vmatpush1.bf16.msra.mxu0 %v731
    %1450 = vmatprep.subr.bf16.mxu0 0
    %1451 = vmatpush1.bf16.msra.mxu0 %v734
    %1452 = vmatprep.subr.bf16.mxu0 0
    %1453 = vmatpush1.bf16.msra.mxu0 %v737
    %1454 = vmatprep.subr.bf16.mxu0 0
    %1455 = vmatpush1.bf16.msra.mxu0 %v740
    %1456 = vmatprep.subr.bf16.mxu0 0
    %1457 = vmatpush1.bf16.msra.mxu0 0
    %1458 = vmatprep.subr.bf16.mxu0 0
    %1459 = vmatpush1.bf16.msra.mxu0 0
    %1460 = vmatprep.subr.bf16.mxu0 0
    %1461 = vmatpush1.bf16.msra.mxu0 0
    %1462 = vmatprep.subr.bf16.mxu0 0
    %1463 = vmatpush1.bf16.msra.mxu0 0
    %1464 = vmatprep.subr.bf16.mxu0 0
    %1465 = vmatpush1.bf16.msra.mxu0 0
    %1466 = vmatprep.subr.bf16.mxu0 0
    %1467 = vmatpush1.bf16.msra.mxu0 0
    %1468 = vmatprep.subr.bf16.mxu0 0
    %1469 = vmatpush1.bf16.msra.mxu0 0
    %1470 = vmatprep.subr.bf16.mxu0 0
    %1471 = vmatpush1.bf16.msra.mxu0 0
    %1472 = vmatprep.mubr.bf16.mxu0 0
    %1473 = vmatmul.mubr.bf16.gmra.mrb[0].mxu0 %v1398
    %v1474 = vpop.f32.mrb[0].mxu0
    %v1475 = vadd.f32 %v372, %v1474
    %v1476 = vpop.f32.mrb[0].mxu0
    %v1477 = vpop.f32.mrb[0].mxu0
    %v1478 = vpop.f32.mrb[0].mxu0
    %1479 = vdwg.mxu0
    %v1480 = vadd.f32 %v1395, %v1434
    %v1481 = vxor.u32 %v1480, 2147483648
    %v1482 = vmul.f32 %v1481, 1.442695
    %v1483 = vpow.pop %v1482
    %v1484 = vadd.f32 %v1483, 1.0
    %v1485 = vrcp.pop %v1484
    %v1486 = vmul.f32 1.0, %v1485
    %v1487 = vadd.f32 %v1396, %v1436
    %v1488 = vxor.u32 %v1487, 2147483648
    %v1489 = vmul.f32 %v1488, 1.442695
    %v1490 = vpow.pop %v1489
    %v1491 = vadd.f32 %v1490, 1.0
    %v1492 = vrcp.pop %v1491
    %v1493 = vmul.f32 1.0, %v1492
    %v1494 = vmul.f32 %v1486, %v1475
    %v1495 = vadd.f32 %v1397, %v1494
    %v1496 = vtanh.pop %v1495
    %v1497 = vsub.f32 1.0, %v1493
    %v1498 = vmul.f32 %v1497, %v1496
    %v1499 = vmul.f32 %v1493, %v972
    %v1500 = vadd.f32 %v1498, %v1499
    %v1501 = vpack.c.bf16 %v1394, %v1394
    %1502 = vmatprep.subr.bf16.mxu0 %v1167
    %1503 = vmatpush1.bf16.msra.mxu0 %v1166
    %1504 = vmatprep.subr.bf16.mxu0 %v1171
    %1505 = vmatpush1.bf16.msra.mxu0 %v1170
    %1506 = vmatprep.subr.bf16.mxu0 %v1175
    %1507 = vmatpush1.bf16.msra.mxu0 %v1174
    %1508 = vmatprep.subr.bf16.mxu0 %v1179
    %1509 = vmatpush1.bf16.msra.mxu0 %v1178
    %1510 = vmatprep.subr.bf16.mxu0 %v1183
    %1511 = vmatpush1.bf16.msra.mxu0 %v1182
    %1512 = vmatprep.subr.bf16.mxu0 %v1187
    %1513 = vmatpush1.bf16.msra.mxu0 %v1186
    %1514 = vmatprep.subr.bf16.mxu0 %v1191
    %1515 = vmatpush1.bf16.msra.mxu0 %v1190
    %1516 = vmatprep.subr.bf16.mxu0 %v1195
    %1517 = vmatpush1.bf16.msra.mxu0 %v1194
    %1518 = vmatprep.subr.bf16.mxu0 %v1199
    %1519 = vmatpush1.bf16.msra.mxu0 %v1198
    %1520 = vmatprep.subr.bf16.mxu0 %v1203
    %1521 = vmatpush1.bf16.msra.mxu0 %v1202
    %1522 = vmatprep.subr.bf16.mxu0 %v1207
    %1523 = vmatpush1.bf16.msra.mxu0 %v1206
    %1524 = vmatprep.subr.bf16.mxu0 %v1211
    %1525 = vmatpush1.bf16.msra.mxu0 %v1210
    %1526 = vmatprep.subr.bf16.mxu0 %v1215
    %1527 = vmatpush1.bf16.msra.mxu0 %v1214
    %1528 = vmatprep.subr.bf16.mxu0 %v1219
    %1529 = vmatpush1.bf16.msra.mxu0 %v1218
    %1530 = vmatprep.subr.bf16.mxu0 %v1223
    %1531 = vmatpush1.bf16.msra.mxu0 %v1222
    %1532 = vmatprep.subr.bf16.mxu0 %v1227
    %1533 = vmatpush1.bf16.msra.mxu0 %v1226
    %1534 = vmatprep.mubr.bf16.mxu0 %v1501
    %1535 = vmatmul.mubr.bf16.gmra.mrb[0].mxu0 %v1398
    %v1536 = vpop.f32.mrb[0].mxu0
    %v1537 = vadd.f32 %v573, %v1536
    %v1538 = vpop.f32.mrb[0].mxu0
    %v1539 = vadd.f32 %v577, %v1538
    %v1540 = vpop.f32.mrb[0].mxu0
    %v1541 = vpop.f32.mrb[0].mxu0
    %1542 = vdwg.mxu0
    %1543 = vmatprep.subr.bf16.mxu0 %v1169
    %1544 = vmatpush1.bf16.msra.mxu0 %v1168
    %1545 = vmatprep.subr.bf16.mxu0 %v1173
    %1546 = vmatpush1.bf16.msra.mxu0 %v1172
    %1547 = vmatprep.subr.bf16.mxu0 %v1177
    %1548 = vmatpush1.bf16.msra.mxu0 %v1176
    %1549 = vmatprep.subr.bf16.mxu0 %v1181
    %1550 = vmatpush1.bf16.msra.mxu0 %v1180
    %1551 = vmatprep.subr.bf16.mxu0 %v1185
    %1552 = vmatpush1.bf16.msra.mxu0 %v1184
    %1553 = vmatprep.subr.bf16.mxu0 %v1189
    %1554 = vmatpush1.bf16.msra.mxu0 %v1188
    %1555 = vmatprep.subr.bf16.mxu0 %v1193
    %1556 = vmatpush1.bf16.msra.mxu0 %v1192
    %1557 = vmatprep.subr.bf16.mxu0 %v1197
    %1558 = vmatpush1.bf16.msra.mxu0 %v1196
    %1559 = vmatprep.subr.bf16.mxu0 %v1201
    %1560 = vmatpush1.bf16.msra.mxu0 %v1200
    %1561 = vmatprep.subr.bf16.mxu0 %v1205
    %1562 = vmatpush1.bf16.msra.mxu0 %v1204
    %1563 = vmatprep.subr.bf16.mxu0 %v1209
    %1564 = vmatpush1.bf16.msra.mxu0 %v1208
    %1565 = vmatprep.subr.bf16.mxu0 %v1213
    %1566 = vmatpush1.bf16.msra.mxu0 %v1212
    %1567 = vmatprep.subr.bf16.mxu0 %v1217
    %1568 = vmatpush1.bf16.msra.mxu0 %v1216
    %1569 = vmatprep.subr.bf16.mxu0 %v1221
    %1570 = vmatpush1.bf16.msra.mxu0 %v1220
    %1571 = vmatprep.subr.bf16.mxu0 %v1225
    %1572 = vmatpush1.bf16.msra.mxu0 %v1224
    %1573 = vmatprep.subr.bf16.mxu0 %v1229
    %1574 = vmatpush1.bf16.msra.mxu0 %v1228
    %1575 = vmatprep.mubr.bf16.mxu0 %v1501
    %1576 = vmatmul.mubr.bf16.gmra.mrb[0].mxu0 %v1398
    %v1577 = vpop.f32.mrb[0].mxu0
    %v1578 = vadd.f32 %v581, %v1577
    %v1579 = vpop.f32.mrb[0].mxu0
    %v1580 = vadd.f32 %v585, %v1579
    %v1581 = vpop.f32.mrb[0].mxu0
    %v1582 = vpop.f32.mrb[0].mxu0
    %1583 = vdwg.mxu0
    %v1584 = vxor.u32 %v1537, 2147483648
    %v1585 = vmul.f32 %v1584, 1.442695
    %v1586 = vpow.pop %v1585
    %v1587 = vadd.f32 %v1586, 1.0
    %v1588 = vrcp.pop %v1587
    %v1589 = vmul.f32 1.0, %v1588
    %v1590 = vxor.u32 %v1539, 2147483648
    %v1591 = vmul.f32 %v1590, 1.442695
    %v1592 = vpow.pop %v1591
    %v1593 = vadd.f32 %v1592, 1.0
    %v1594 = vrcp.pop %v1593
    %v1595 = vmul.f32 1.0, %v1594
    %v1596 = vmul.f32 %v1589, %v1580
    %v1597 = vadd.f32 %v1578, %v1596
    %v1598 = vtanh.pop %v1597
    %v1599 = vsub.f32 1.0, %v1595
    %v1600 = vmul.f32 %v1599, %v1598
    %v1601 = vmul.f32 %v1595, %v1394
    %v1602 = vadd.f32 %v1600, %v1601
    %v1667 = vunpack.c.l.b16 %v440
    %v1668 = vunpack.c.h.b16 %v440
    %v1669 = vunpack.c.l.b16 %v441
    %v1670 = vunpack.c.h.b16 %v441
    %v1671 = vunpack.c.l.b16 %v442
    %v1672 = vunpack.c.h.b16 %v442
    %v1673 = vunpack.c.l.b16 %v443
    %v1674 = vunpack.c.h.b16 %v443
    %v1675 = vunpack.c.l.b16 %v444
    %v1676 = vunpack.c.h.b16 %v444
    %v1677 = vunpack.c.l.b16 %v445
    %v1678 = vunpack.c.h.b16 %v445
    %v1679 = vunpack.c.l.b16 %v446
    %v1680 = vunpack.c.h.b16 %v446
    %v1681 = vunpack.c.l.b16 %v447
    %v1682 = vunpack.c.h.b16 %v447
    %v1683 = vunpack.c.l.b16 %v448
    %v1684 = vunpack.c.h.b16 %v448
    %v1685 = vunpack.c.l.b16 %v449
    %v1686 = vunpack.c.h.b16 %v449
    %v1687 = vunpack.c.l.b16 %v450
    %v1688 = vunpack.c.h.b16 %v450
    %v1689 = vunpack.c.l.b16 %v451
    %v1690 = vunpack.c.h.b16 %v451
    %v1691 = vunpack.c.l.b16 %v452
    %v1692 = vunpack.c.h.b16 %v452
    %v1693 = vunpack.c.l.b16 %v453
    %v1694 = vunpack.c.h.b16 %v453
    %v1695 = vunpack.c.l.b16 %v454
    %v1696 = vunpack.c.h.b16 %v454
    %v1697 = vunpack.c.l.b16 %v455
    %v1698 = vunpack.c.h.b16 %v455
    %v1699 = vunpack.c.l.b16 %v456
    %v1700 = vunpack.c.h.b16 %v456
    %v1701 = vunpack.c.l.b16 %v457
    %v1702 = vunpack.c.h.b16 %v457
    %v1703 = vunpack.c.l.b16 %v458
    %v1704 = vunpack.c.h.b16 %v458
    %v1705 = vunpack.c.l.b16 %v459
    %v1706 = vunpack.c.h.b16 %v459
    %v1707 = vunpack.c.l.b16 %v460
    %v1708 = vunpack.c.h.b16 %v460
    %v1709 = vunpack.c.l.b16 %v461
    %v1710 = vunpack.c.h.b16 %v461
    %v1711 = vunpack.c.l.b16 %v462
    %v1712 = vunpack.c.h.b16 %v462
    %v1713 = vunpack.c.l.b16 %v463
    %v1714 = vunpack.c.h.b16 %v463
    %v1715 = vunpack.c.l.b16 %v464
    %v1716 = vunpack.c.h.b16 %v464
    %v1717 = vunpack.c.l.b16 %v465
    %v1718 = vunpack.c.h.b16 %v465
    %v1719 = vunpack.c.l.b16 %v466
    %v1720 = vunpack.c.h.b16 %v466
    %v1721 = vunpack.c.l.b16 %v467
    %v1722 = vunpack.c.h.b16 %v467
    %v1723 = vunpack.c.l.b16 %v468
    %v1724 = vunpack.c.h.b16 %v468
    %v1725 = vunpack.c.l.b16 %v469
    %v1726 = vunpack.c.h.b16 %v469
    %v1727 = vunpack.c.l.b16 %v470
    %v1728 = vunpack.c.h.b16 %v470
    %v1729 = vunpack.c.l.b16 %v471
    %v1730 = vunpack.c.h.b16 %v471
    %v1731 = vunpack.c.l.b16 %v472
    %v1732 = vunpack.c.h.b16 %v472
    %v1733 = vunpack.c.l.b16 %v473
    %v1734 = vunpack.c.h.b16 %v473
    %v1735 = vunpack.c.l.b16 %v474
    %v1736 = vunpack.c.h.b16 %v474
    %v1737 = vunpack.c.l.b16 %v475
    %v1738 = vunpack.c.h.b16 %v475
    %v1739 = vunpack.c.l.b16 %v476
    %v1740 = vunpack.c.h.b16 %v476
    %v1741 = vunpack.c.l.b16 %v477
    %v1742 = vunpack.c.h.b16 %v477
    %v1743 = vunpack.c.l.b16 %v478
    %v1744 = vunpack.c.h.b16 %v478
    %v1745 = vunpack.c.l.b16 %v479
    %v1746 = vunpack.c.h.b16 %v479
    %v1747 = vunpack.c.l.b16 %v480
    %v1748 = vunpack.c.h.b16 %v480
    %v1749 = vunpack.c.l.b16 %v481
    %v1750 = vunpack.c.h.b16 %v481
    %v1751 = vunpack.c.l.b16 %v482
    %v1752 = vunpack.c.h.b16 %v482
    %v1753 = vunpack.c.l.b16 %v483
    %v1754 = vunpack.c.h.b16 %v483
    %v1755 = vunpack.c.l.b16 %v484
    %v1756 = vunpack.c.h.b16 %v484
    %v1757 = vunpack.c.l.b16 %v485
    %v1758 = vunpack.c.h.b16 %v485
    %v1759 = vunpack.c.l.b16 %v486
    %v1760 = vunpack.c.h.b16 %v486
    %v1761 = vunpack.c.l.b16 %v487
    %v1762 = vunpack.c.h.b16 %v487
    %v1763 = vunpack.c.l.b16 %v488
    %v1764 = vunpack.c.h.b16 %v488
    %v1765 = vunpack.c.l.b16 %v489
    %v1766 = vunpack.c.h.b16 %v489
    %v1767 = vunpack.c.l.b16 %v490
    %v1768 = vunpack.c.h.b16 %v490
    %v1769 = vunpack.c.l.b16 %v491
    %v1770 = vunpack.c.h.b16 %v491
    %v1771 = vunpack.c.l.b16 %v492
    %v1772 = vunpack.c.h.b16 %v492
    %v1773 = vunpack.c.l.b16 %v493
    %v1774 = vunpack.c.h.b16 %v493
    %v1775 = vunpack.c.l.b16 %v494
    %v1776 = vunpack.c.h.b16 %v494
    %v1777 = vunpack.c.l.b16 %v495
    %v1778 = vunpack.c.h.b16 %v495
    %v1779 = vunpack.c.l.b16 %v496
    %v1780 = vunpack.c.h.b16 %v496
    %v1781 = vunpack.c.l.b16 %v497
    %v1782 = vunpack.c.h.b16 %v497
    %v1783 = vunpack.c.l.b16 %v498
    %v1784 = vunpack.c.h.b16 %v498
    %v1785 = vunpack.c.l.b16 %v499
    %v1786 = vunpack.c.h.b16 %v499
    %v1787 = vunpack.c.l.b16 %v500
    %v1788 = vunpack.c.h.b16 %v500
    %v1789 = vunpack.c.l.b16 %v501
    %v1790 = vunpack.c.h.b16 %v501
    %v1791 = vunpack.c.l.b16 %v502
    %v1792 = vunpack.c.h.b16 %v502
    %v1793 = vunpack.c.l.b16 %v503
    %v1794 = vunpack.c.h.b16 %v503
    %v1795 = vpack.c.b16 %v1671, %v1667
    %v1796 = vpack.c.b16 %v1672, %v1668
    %v1797 = vpack.c.b16 %v1673, %v1669
    %v1798 = vpack.c.b16 %v1674, %v1670
    %v1799 = vpack.c.b16 %v1679, %v1675
    %v1800 = vpack.c.b16 %v1680, %v1676
    %v1801 = vpack.c.b16 %v1681, %v1677
    %v1802 = vpack.c.b16 %v1682, %v1678
    %v1803 = vpack.c.b16 %v1687, %v1683
    %v1804 = vpack.c.b16 %v1688, %v1684
    %v1805 = vpack.c.b16 %v1689, %v1685
    %v1806 = vpack.c.b16 %v1690, %v1686
    %v1807 = vpack.c.b16 %v1695, %v1691
    %v1808 = vpack.c.b16 %v1696, %v1692
    %v1809 = vpack.c.b16 %v1697, %v1693
    %v1810 = vpack.c.b16 %v1698, %v1694
    %v1811 = vpack.c.b16 %v1703, %v1699
    %v1812 = vpack.c.b16 %v1704, %v1700
    %v1813 = vpack.c.b16 %v1705, %v1701
    %v1814 = vpack.c.b16 %v1706, %v1702
    %v1815 = vpack.c.b16 %v1711, %v1707
    %v1816 = vpack.c.b16 %v1712, %v1708
    %v1817 = vpack.c.b16 %v1713, %v1709
    %v1818 = vpack.c.b16 %v1714, %v1710
    %v1819 = vpack.c.b16 %v1719, %v1715
    %v1820 = vpack.c.b16 %v1720, %v1716
    %v1821 = vpack.c.b16 %v1721, %v1717
    %v1822 = vpack.c.b16 %v1722, %v1718
    %v1823 = vpack.c.b16 %v1727, %v1723
    %v1824 = vpack.c.b16 %v1728, %v1724
    %v1825 = vpack.c.b16 %v1729, %v1725
    %v1826 = vpack.c.b16 %v1730, %v1726
    %v1827 = vpack.c.b16 %v1735, %v1731
    %v1828 = vpack.c.b16 %v1736, %v1732
    %v1829 = vpack.c.b16 %v1737, %v1733
    %v1830 = vpack.c.b16 %v1738, %v1734
    %v1831 = vpack.c.b16 %v1743, %v1739
    %v1832 = vpack.c.b16 %v1744, %v1740
    %v1833 = vpack.c.b16 %v1745, %v1741
    %v1834 = vpack.c.b16 %v1746, %v1742
    %v1835 = vpack.c.b16 %v1751, %v1747
    %v1836 = vpack.c.b16 %v1752, %v1748
    %v1837 = vpack.c.b16 %v1753, %v1749
    %v1838 = vpack.c.b16 %v1754, %v1750
    %v1839 = vpack.c.b16 %v1759, %v1755
    %v1840 = vpack.c.b16 %v1760, %v1756
    %v1841 = vpack.c.b16 %v1761, %v1757
    %v1842 = vpack.c.b16 %v1762, %v1758
    %v1843 = vpack.c.b16 %v1767, %v1763
    %v1844 = vpack.c.b16 %v1768, %v1764
    %v1845 = vpack.c.b16 %v1769, %v1765
    %v1846 = vpack.c.b16 %v1770, %v1766
    %v1847 = vpack.c.b16 %v1775, %v1771
    %v1848 = vpack.c.b16 %v1776, %v1772
    %v1849 = vpack.c.b16 %v1777, %v1773
    %v1850 = vpack.c.b16 %v1778, %v1774
    %v1851 = vpack.c.b16 %v1783, %v1779
    %v1852 = vpack.c.b16 %v1784, %v1780
    %v1853 = vpack.c.b16 %v1785, %v1781
    %v1854 = vpack.c.b16 %v1786, %v1782
    %v1855 = vpack.c.b16 %v1791, %v1787
    %v1856 = vpack.c.b16 %v1792, %v1788
    %v1857 = vpack.c.b16 %v1793, %v1789
    %v1858 = vpack.c.b16 %v1794, %v1790
    %1923 = vmatprep.subr.bf16.mxu0 %v1796
    %1924 = vmatpush1.bf16.msra.mxu0 %v1795
    %1925 = vmatprep.subr.bf16.mxu0 %v1800
    %1926 = vmatpush1.bf16.msra.mxu0 %v1799
    %1927 = vmatprep.subr.bf16.mxu0 %v1804
    %1928 = vmatpush1.bf16.msra.mxu0 %v1803
    %1929 = vmatprep.subr.bf16.mxu0 %v1808
    %1930 = vmatpush1.bf16.msra.mxu0 %v1807
    %1931 = vmatprep.subr.bf16.mxu0 %v1812
    %1932 = vmatpush1.bf16.msra.mxu0 %v1811
    %1933 = vmatprep.subr.bf16.mxu0 %v1816
    %1934 = vmatpush1.bf16.msra.mxu0 %v1815
    %1935 = vmatprep.subr.bf16.mxu0 %v1820
    %1936 = vmatpush1.bf16.msra.mxu0 %v1819
    %1937 = vmatprep.subr.bf16.mxu0 %v1824
    %1938 = vmatpush1.bf16.msra.mxu0 %v1823
    %1939 = vmatprep.subr.bf16.mxu0 %v1828
    %1940 = vmatpush1.bf16.msra.mxu0 %v1827
    %1941 = vmatprep.subr.bf16.mxu0 %v1832
    %1942 = vmatpush1.bf16.msra.mxu0 %v1831
    %1943 = vmatprep.subr.bf16.mxu0 %v1836
    %1944 = vmatpush1.bf16.msra.mxu0 %v1835
    %1945 = vmatprep.subr.bf16.mxu0 %v1840
    %1946 = vmatpush1.bf16.msra.mxu0 %v1839
    %1947 = vmatprep.subr.bf16.mxu0 %v1844
    %1948 = vmatpush1.bf16.msra.mxu0 %v1843
    %1949 = vmatprep.subr.bf16.mxu0 %v1848
    %1950 = vmatpush1.bf16.msra.mxu0 %v1847
    %1951 = vmatprep.subr.bf16.mxu0 %v1852
    %1952 = vmatpush1.bf16.msra.mxu0 %v1851
    %1953 = vmatprep.subr.bf16.mxu0 %v1856
    %1954 = vmatpush1.bf16.msra.mxu0 %v1855
    %1955 = vmatprep.mubr.bf16.mxu0 %v973
    %1956 = vmatmul.mubr.bf16.gmra.mrb[0].mxu0 %v1501
    %v1957 = vpop.f32.mrb[0].mxu0
    %v1958 = vadd.f32 %v595, %v1957
    %v1959 = vpop.f32.mrb[0].mxu0
    %v1960 = vadd.f32 %v599, %v1959
    %v1961 = vpop.f32.mrb[0].mxu0
    %v1962 = vpop.f32.mrb[0].mxu0
    %1963 = vdwg.mxu0
    %1964 = vmatprep.subr.bf16.mxu0 %v1798
    %1965 = vmatpush1.bf16.msra.mxu0 %v1797
    %1966 = vmatprep.subr.bf16.mxu0 %v1802
    %1967 = vmatpush1.bf16.msra.mxu0 %v1801
    %1968 = vmatprep.subr.bf16.mxu0 %v1806
    %1969 = vmatpush1.bf16.msra.mxu0 %v1805
    %1970 = vmatprep.subr.bf16.mxu0 %v1810
    %1971 = vmatpush1.bf16.msra.mxu0 %v1809
    %1972 = vmatprep.subr.bf16.mxu0 %v1814
    %1973 = vmatpush1.bf16.msra.mxu0 %v1813
    %1974 = vmatprep.subr.bf16.mxu0 %v1818
    %1975 = vmatpush1.bf16.msra.mxu0 %v1817
    %1976 = vmatprep.subr.bf16.mxu0 %v1822
    %1977 = vmatpush1.bf16.msra.mxu0 %v1821
    %1978 = vmatprep.subr.bf16.mxu0 %v1826
    %1979 = vmatpush1.bf16.msra.mxu0 %v1825
    %1980 = vmatprep.subr.bf16.mxu0 %v1830
    %1981 = vmatpush1.bf16.msra.mxu0 %v1829
    %1982 = vmatprep.subr.bf16.mxu0 %v1834
    %1983 = vmatpush1.bf16.msra.mxu0 %v1833
    %1984 = vmatprep.subr.bf16.mxu0 %v1838
    %1985 = vmatpush1.bf16.msra.mxu0 %v1837
    %1986 = vmatprep.subr.bf16.mxu0 %v1842
    %1987 = vmatpush1.bf16.msra.mxu0 %v1841
    %1988 = vmatprep.subr.bf16.mxu0 %v1846
    %1989 = vmatpush1.bf16.msra.mxu0 %v1845
    %1990 = vmatprep.subr.bf16.mxu0 %v1850
    %1991 = vmatpush1.bf16.msra.mxu0 %v1849
    %1992 = vmatprep.subr.bf16.mxu0 %v1854
    %1993 = vmatpush1.bf16.msra.mxu0 %v1853
    %1994 = vmatprep.subr.bf16.mxu0 %v1858
    %1995 = vmatpush1.bf16.msra.mxu0 %v1857
    %1996 = vmatprep.mubr.bf16.mxu0 %v973
    %1997 = vmatmul.mubr.bf16.gmra.mrb[0].mxu0 %v1501
    %v1998 = vpop.f32.mrb[0].mxu0
    %v1999 = vadd.f32 %v603, %v1998
    %v2000 = vpop.f32.mrb[0].mxu0
    %v2001 = vadd.f32 %v607, %v2000
    %v2002 = vpop.f32.mrb[0].mxu0
    %v2003 = vpop.f32.mrb[0].mxu0
    %2004 = vdwg.mxu0
    %v2005 = vxor.u32 %v1958, 2147483648
    %v2006 = vmul.f32 %v2005, 1.442695
    %v2007 = vpow.pop %v2006
    %v2008 = vadd.f32 %v2007, 1.0
    %v2009 = vrcp.pop %v2008
    %v2010 = vmul.f32 1.0, %v2009
    %v2011 = vxor.u32 %v1960, 2147483648
    %v2012 = vmul.f32 %v2011, 1.442695
    %v2013 = vpow.pop %v2012
    %v2014 = vadd.f32 %v2013, 1.0
    %v2015 = vrcp.pop %v2014
    %v2016 = vmul.f32 1.0, %v2015
    %v2017 = vmul.f32 %v2010, %v2001
    %v2018 = vadd.f32 %v1999, %v2017
    %v2019 = vtanh.pop %v2018
    %v2020 = vsub.f32 1.0, %v2016
    %v2021 = vmul.f32 %v2020, %v2019
    %v2022 = vmul.f32 %v2016, 0.0
    %v2023 = vadd.f32 %v2021, %v2022
    %s2024 = smul.u32 3, 3
    %s2025 = smul.addr %s2024, 8
    %s2026 = scalar_lea.vmem [#allocation2], %s2025
    %v2027 = vld [vmem:[%s2026] sm:$0xff]
    %v2028 = vld [vmem:[%s2026 + $0x8] sm:$0xff]
    %v2029 = vld [vmem:[%s2026 + $0x10] sm:$0xff]
    %v2030 = vpack.c.bf16 %v1500, %v1500
    %2031 = vmatprep.subr.bf16.mxu0 %v718
    %2032 = vmatpush1.bf16.msra.mxu0 %v717
    %2033 = vmatprep.subr.bf16.mxu0 %v721
    %2034 = vmatpush1.bf16.msra.mxu0 %v720
    %2035 = vmatprep.subr.bf16.mxu0 %v724
    %2036 = vmatpush1.bf16.msra.mxu0 %v723
    %2037 = vmatprep.subr.bf16.mxu0 %v727
    %2038 = vmatpush1.bf16.msra.mxu0 %v726
    %2039 = vmatprep.subr.bf16.mxu0 %v730
    %2040 = vmatpush1.bf16.msra.mxu0 %v729
    %2041 = vmatprep.subr.bf16.mxu0 %v733
    %2042 = vmatpush1.bf16.msra.mxu0 %v732
    %2043 = vmatprep.subr.bf16.mxu0 %v736
    %2044 = vmatpush1.bf16.msra.mxu0 %v735
    %2045 = vmatprep.subr.bf16.mxu0 %v739
    %2046 = vmatpush1.bf16.msra.mxu0 %v738
    %2047 = vmatprep.subr.bf16.mxu0 0
    %2048 = vmatpush1.bf16.msra.mxu0 0
    %2049 = vmatprep.subr.bf16.mxu0 0
    %2050 = vmatpush1.bf16.msra.mxu0 0
    %2051 = vmatprep.subr.bf16.mxu0 0
    %2052 = vmatpush1.bf16.msra.mxu0 0
    %2053 = vmatprep.subr.bf16.mxu0 0
    %2054 = vmatpush1.bf16.msra.mxu0 0
    %2055 = vmatprep.subr.bf16.mxu0 0
    %2056 = vmatpush1.bf16.msra.mxu0 0
    %2057 = vmatprep.subr.bf16.mxu0 0
    %2058 = vmatpush1.bf16.msra.mxu0 0
    %2059 = vmatprep.subr.bf16.mxu0 0
    %2060 = vmatpush1.bf16.msra.mxu0 0
    %2061 = vmatprep.subr.bf16.mxu0 0
    %2062 = vmatpush1.bf16.msra.mxu0 0
    %2063 = vmatprep.mubr.bf16.mxu0 0
    %2064 = vmatmul.mubr.bf16.gmra.mrb[0].mxu0 %v2030
    %v2065 = vpop.f32.mrb[0].mxu0
    %v2066 = vadd.f32 %v364, %v2065
    %v2067 = vpop.f32.mrb[0].mxu0
    %v2068 = vadd.f32 %v368, %v2067
    %v2069 = vpop.f32.mrb[0].mxu0
    %v2070 = vpop.f32.mrb[0].mxu0
    %2071 = vdwg.mxu0
    %2072 = vmatprep.subr.bf16.mxu0 0
    %2073 = vmatpush1.bf16.msra.mxu0 %v719
    %2074 = vmatprep.subr.bf16.mxu0 0
    %2075 = vmatpush1.bf16.msra.mxu0 %v722
    %2076 = vmatprep.subr.bf16.mxu0 0
    %2077 = vmatpush1.bf16.msra.mxu0 %v725
    %2078 = vmatprep.subr.bf16.mxu0 0
    %2079 = vmatpush1.bf16.msra.mxu0 %v728
    %2080 = vmatprep.subr.bf16.mxu0 0
    %2081 = vmatpush1.bf16.msra.mxu0 %v731
    %2082 = vmatprep.subr.bf16.mxu0 0
    %2083 = vmatpush1.bf16.msra.mxu0 %v734
    %2084 = vmatprep.subr.bf16.mxu0 0
    %2085 = vmatpush1.bf16.msra.mxu0 %v737
    %2086 = vmatprep.subr.bf16.mxu0 0
    %2087 = vmatpush1.bf16.msra.mxu0 %v740
    %2088 = vmatprep.subr.bf16.mxu0 0
    %2089 = vmatpush1.bf16.msra.mxu0 0
    %2090 = vmatprep.subr.bf16.mxu0 0
    %2091 = vmatpush1.bf16.msra.mxu0 0
    %2092 = vmatprep.subr.bf16.mxu0 0
    %2093 = vmatpush1.bf16.msra.mxu0 0
    %2094 = vmatprep.subr.bf16.mxu0 0
    %2095 = vmatpush1.bf16.msra.mxu0 0
    %2096 = vmatprep.subr.bf16.mxu0 0
    %2097 = vmatpush1.bf16.msra.mxu0 0
    %2098 = vmatprep.subr.bf16.mxu0 0
    %2099 = vmatpush1.bf16.msra.mxu0 0
    %2100 = vmatprep.subr.bf16.mxu0 0
    %2101 = vmatpush1.bf16.msra.mxu0 0
    %2102 = vmatprep.subr.bf16.mxu0 0
    %2103 = vmatpush1.bf16.msra.mxu0 0
    %2104 = vmatprep.mubr.bf16.mxu0 0
    %2105 = vmatmul.mubr.bf16.gmra.mrb[0].mxu0 %v2030
    %v2106 = vpop.f32.mrb[0].mxu0
    %v2107 = vadd.f32 %v372, %v2106
    %v2108 = vpop.f32.mrb[0].mxu0
    %v2109 = vpop.f32.mrb[0].mxu0
    %v2110 = vpop.f32.mrb[0].mxu0
    %2111 = vdwg.mxu0
    %v2112 = vadd.f32 %v2027, %v2066
    %v2113 = vxor.u32 %v2112, 2147483648
    %v2114 = vmul.f32 %v2113, 1.442695
    %v2115 = vpow.pop %v2114
    %v2116 = vadd.f32 %v2115, 1.0
    %v2117 = vrcp.pop %v2116
    %v2118 = vmul.f32 1.0, %v2117
    %v2119 = vadd.f32 %v2028, %v2068
    %v2120 = vxor.u32 %v2119, 2147483648
    %v2121 = vmul.f32 %v2120, 1.442695
    %v2122 = vpow.pop %v2121
    %v2123 = vadd.f32 %v2122, 1.0
    %v2124 = vrcp.pop %v2123
    %v2125 = vmul.f32 1.0, %v2124
    %v2126 = vmul.f32 %v2118, %v2107
    %v2127 = vadd.f32 %v2029, %v2126
    %v2128 = vtanh.pop %v2127
    %v2129 = vsub.f32 1.0, %v2125
    %v2130 = vmul.f32 %v2129, %v2128
    %v2131 = vmul.f32 %v2125, %v1500
    %v2132 = vadd.f32 %v2130, %v2131
    %v2133 = vpack.c.bf16 %v1602, %v1602
    %2134 = vmatprep.subr.bf16.mxu0 %v1167
    %2135 = vmatpush1.bf16.msra.mxu0 %v1166
    %2136 = vmatprep.subr.bf16.mxu0 %v1171
    %2137 = vmatpush1.bf16.msra.mxu0 %v1170
    %2138 = vmatprep.subr.bf16.mxu0 %v1175
    %2139 = vmatpush1.bf16.msra.mxu0 %v1174
    %2140 = vmatprep.subr.bf16.mxu0 %v1179
    %2141 = vmatpush1.bf16.msra.mxu0 %v1178
    %2142 = vmatprep.subr.bf16.mxu0 %v1183
    %2143 = vmatpush1.bf16.msra.mxu0 %v1182
    %2144 = vmatprep.subr.bf16.mxu0 %v1187
    %2145 = vmatpush1.bf16.msra.mxu0 %v1186
    %2146 = vmatprep.subr.bf16.mxu0 %v1191
    %2147 = vmatpush1.bf16.msra.mxu0 %v1190
    %2148 = vmatprep.subr.bf16.mxu0 %v1195
    %2149 = vmatpush1.bf16.msra.mxu0 %v1194
    %2150 = vmatprep.subr.bf16.mxu0 %v1199
    %2151 = vmatpush1.bf16.msra.mxu0 %v1198
    %2152 = vmatprep.subr.bf16.mxu0 %v1203
    %2153 = vmatpush1.bf16.msra.mxu0 %v1202
    %2154 = vmatprep.subr.bf16.mxu0 %v1207
    %2155 = vmatpush1.bf16.msra.mxu0 %v1206
    %2156 = vmatprep.subr.bf16.mxu0 %v1211
    %2157 = vmatpush1.bf16.msra.mxu0 %v1210
    %2158 = vmatprep.subr.bf16.mxu0 %v1215
    %2159 = vmatpush1.bf16.msra.mxu0 %v1214
    %2160 = vmatprep.subr.bf16.mxu0 %v1219
    %2161 = vmatpush1.bf16.msra.mxu0 %v1218
    %2162 = vmatprep.subr.bf16.mxu0 %v1223
    %2163 = vmatpush1.bf16.msra.mxu0 %v1222
    %2164 = vmatprep.subr.bf16.mxu0 %v1227
    %2165 = vmatpush1.bf16.msra.mxu0 %v1226
    %2166 = vmatprep.mubr.bf16.mxu0 %v2133
    %2167 = vmatmul.mubr.bf16.gmra.mrb[0].mxu0 %v2030
    %v2168 = vpop.f32.mrb[0].mxu0
    %v2169 = vadd.f32 %v573, %v2168
    %v2170 = vpop.f32.mrb[0].mxu0
    %v2171 = vadd.f32 %v577, %v2170
    %v2172 = vpop.f32.mrb[0].mxu0
    %v2173 = vpop.f32.mrb[0].mxu0
    %2174 = vdwg.mxu0
    %2175 = vmatprep.subr.bf16.mxu0 %v1169
    %2176 = vmatpush1.bf16.msra.mxu0 %v1168
    %2177 = vmatprep.subr.bf16.mxu0 %v1173
    %2178 = vmatpush1.bf16.msra.mxu0 %v1172
    %2179 = vmatprep.subr.bf16.mxu0 %v1177
    %2180 = vmatpush1.bf16.msra.mxu0 %v1176
    %2181 = vmatprep.subr.bf16.mxu0 %v1181
    %2182 = vmatpush1.bf16.msra.mxu0 %v1180
    %2183 = vmatprep.subr.bf16.mxu0 %v1185
    %2184 = vmatpush1.bf16.msra.mxu0 %v1184
    %2185 = vmatprep.subr.bf16.mxu0 %v1189
    %2186 = vmatpush1.bf16.msra.mxu0 %v1188
    %2187 = vmatprep.subr.bf16.mxu0 %v1193
    %2188 = vmatpush1.bf16.msra.mxu0 %v1192
    %2189 = vmatprep.subr.bf16.mxu0 %v1197
    %2190 = vmatpush1.bf16.msra.mxu0 %v1196
    %2191 = vmatprep.subr.bf16.mxu0 %v1201
    %2192 = vmatpush1.bf16.msra.mxu0 %v1200
    %2193 = vmatprep.subr.bf16.mxu0 %v1205
    %2194 = vmatpush1.bf16.msra.mxu0 %v1204
    %2195 = vmatprep.subr.bf16.mxu0 %v1209
    %2196 = vmatpush1.bf16.msra.mxu0 %v1208
    %2197 = vmatprep.subr.bf16.mxu0 %v1213
    %2198 = vmatpush1.bf16.msra.mxu0 %v1212
    %2199 = vmatprep.subr.bf16.mxu0 %v1217
    %2200 = vmatpush1.bf16.msra.mxu0 %v1216
    %2201 = vmatprep.subr.bf16.mxu0 %v1221
    %2202 = vmatpush1.bf16.msra.mxu0 %v1220
    %2203 = vmatprep.subr.bf16.mxu0 %v1225
    %2204 = vmatpush1.bf16.msra.mxu0 %v1224
    %2205 = vmatprep.subr.bf16.mxu0 %v1229
    %2206 = vmatpush1.bf16.msra.mxu0 %v1228
    %2207 = vmatprep.mubr.bf16.mxu0 %v2133
    %2208 = vmatmul.mubr.bf16.gmra.mrb[0].mxu0 %v2030
    %v2209 = vpop.f32.mrb[0].mxu0
    %v2210 = vadd.f32 %v581, %v2209
    %v2211 = vpop.f32.mrb[0].mxu0
    %v2212 = vadd.f32 %v585, %v2211
    %v2213 = vpop.f32.mrb[0].mxu0
    %v2214 = vpop.f32.mrb[0].mxu0
    %2215 = vdwg.mxu0
    %v2216 = vxor.u32 %v2169, 2147483648
    %v2217 = vmul.f32 %v2216, 1.442695
    %v2218 = vpow.pop %v2217
    %v2219 = vadd.f32 %v2218, 1.0
    %v2220 = vrcp.pop %v2219
    %v2221 = vmul.f32 1.0, %v2220
    %v2222 = vxor.u32 %v2171, 2147483648
    %v2223 = vmul.f32 %v2222, 1.442695
    %v2224 = vpow.pop %v2223
    %v2225 = vadd.f32 %v2224, 1.0
    %v2226 = vrcp.pop %v2225
    %v2227 = vmul.f32 1.0, %v2226
    %v2228 = vmul.f32 %v2221, %v2212
    %v2229 = vadd.f32 %v2210, %v2228
    %v2230 = vtanh.pop %v2229
    %v2231 = vsub.f32 1.0, %v2227
    %v2232 = vmul.f32 %v2231, %v2230
    %v2233 = vmul.f32 %v2227, %v1602
    %v2234 = vadd.f32 %v2232, %v2233
    %v2235 = vpack.c.bf16 %v2023, %v2023
    %2236 = vmatprep.subr.bf16.mxu0 %v1796
    %2237 = vmatpush1.bf16.msra.mxu0 %v1795
    %2238 = vmatprep.subr.bf16.mxu0 %v1800
    %2239 = vmatpush1.bf16.msra.mxu0 %v1799
    %2240 = vmatprep.subr.bf16.mxu0 %v1804
    %2241 = vmatpush1.bf16.msra.mxu0 %v1803
    %2242 = vmatprep.subr.bf16.mxu0 %v1808
    %2243 = vmatpush1.bf16.msra.mxu0 %v1807
    %2244 = vmatprep.subr.bf16.mxu0 %v1812
    %2245 = vmatpush1.bf16.msra.mxu0 %v1811
    %2246 = vmatprep.subr.bf16.mxu0 %v1816
    %2247 = vmatpush1.bf16.msra.mxu0 %v1815
    %2248 = vmatprep.subr.bf16.mxu0 %v1820
    %2249 = vmatpush1.bf16.msra.mxu0 %v1819
    %2250 = vmatprep.subr.bf16.mxu0 %v1824
    %2251 = vmatpush1.bf16.msra.mxu0 %v1823
    %2252 = vmatprep.subr.bf16.mxu0 %v1828
    %2253 = vmatpush1.bf16.msra.mxu0 %v1827
    %2254 = vmatprep.subr.bf16.mxu0 %v1832
    %2255 = vmatpush1.bf16.msra.mxu0 %v1831
    %2256 = vmatprep.subr.bf16.mxu0 %v1836
    %2257 = vmatpush1.bf16.msra.mxu0 %v1835
    %2258 = vmatprep.subr.bf16.mxu0 %v1840
    %2259 = vmatpush1.bf16.msra.mxu0 %v1839
    %2260 = vmatprep.subr.bf16.mxu0 %v1844
    %2261 = vmatpush1.bf16.msra.mxu0 %v1843
    %2262 = vmatprep.subr.bf16.mxu0 %v1848
    %2263 = vmatpush1.bf16.msra.mxu0 %v1847
    %2264 = vmatprep.subr.bf16.mxu0 %v1852
    %2265 = vmatpush1.bf16.msra.mxu0 %v1851
    %2266 = vmatprep.subr.bf16.mxu0 %v1856
    %2267 = vmatpush1.bf16.msra.mxu0 %v1855
    %2268 = vmatprep.mubr.bf16.mxu0 %v2235
    %2269 = vmatmul.mubr.bf16.gmra.mrb[0].mxu0 %v2133
    %v2270 = vpop.f32.mrb[0].mxu0
    %v2271 = vadd.f32 %v595, %v2270
    %v2272 = vpop.f32.mrb[0].mxu0
    %v2273 = vadd.f32 %v599, %v2272
    %v2274 = vpop.f32.mrb[0].mxu0
    %v2275 = vpop.f32.mrb[0].mxu0
    %2276 = vdwg.mxu0
    %2277 = vmatprep.subr.bf16.mxu0 %v1798
    %2278 = vmatpush1.bf16.msra.mxu0 %v1797
    %2279 = vmatprep.subr.bf16.mxu0 %v1802
    %2280 = vmatpush1.bf16.msra.mxu0 %v1801
    %2281 = vmatprep.subr.bf16.mxu0 %v1806
    %2282 = vmatpush1.bf16.msra.mxu0 %v1805
    %2283 = vmatprep.subr.bf16.mxu0 %v1810
    %2284 = vmatpush1.bf16.msra.mxu0 %v1809
    %2285 = vmatprep.subr.bf16.mxu0 %v1814
    %2286 = vmatpush1.bf16.msra.mxu0 %v1813
    %2287 = vmatprep.subr.bf16.mxu0 %v1818
    %2288 = vmatpush1.bf16.msra.mxu0 %v1817
    %2289 = vmatprep.subr.bf16.mxu0 %v1822
    %2290 = vmatpush1.bf16.msra.mxu0 %v1821
    %2291 = vmatprep.subr.bf16.mxu0 %v1826
    %2292 = vmatpush1.bf16.msra.mxu0 %v1825
    %2293 = vmatprep.subr.bf16.mxu0 %v1830
    %2294 = vmatpush1.bf16.msra.mxu0 %v1829
    %2295 = vmatprep.subr.bf16.mxu0 %v1834
    %2296 = vmatpush1.bf16.msra.mxu0 %v1833
    %2297 = vmatprep.subr.bf16.mxu0 %v1838
    %2298 = vmatpush1.bf16.msra.mxu0 %v1837
    %2299 = vmatprep.subr.bf16.mxu0 %v1842
    %2300 = vmatpush1.bf16.msra.mxu0 %v1841
    %2301 = vmatprep.subr.bf16.mxu0 %v1846
    %2302 = vmatpush1.bf16.msra.mxu0 %v1845
    %2303 = vmatprep.subr.bf16.mxu0 %v1850
    %2304 = vmatpush1.bf16.msra.mxu0 %v1849
    %2305 = vmatprep.subr.bf16.mxu0 %v1854
    %2306 = vmatpush1.bf16.msra.mxu0 %v1853
    %2307 = vmatprep.subr.bf16.mxu0 %v1858
    %2308 = vmatpush1.bf16.msra.mxu0 %v1857
    %2309 = vmatprep.mubr.bf16.mxu0 %v2235
    %2310 = vmatmul.mubr.bf16.gmra.mrb[0].mxu0 %v2133
    %v2311 = vpop.f32.mrb[0].mxu0
    %v2312 = vadd.f32 %v603, %v2311
    %v2313 = vpop.f32.mrb[0].mxu0
    %v2314 = vadd.f32 %v607, %v2313
    %v2315 = vpop.f32.mrb[0].mxu0
    %v2316 = vpop.f32.mrb[0].mxu0
    %2317 = vdwg.mxu0
    %v2318 = vxor.u32 %v2271, 2147483648
    %v2319 = vmul.f32 %v2318, 1.442695
    %v2320 = vpow.pop %v2319
    %v2321 = vadd.f32 %v2320, 1.0
    %v2322 = vrcp.pop %v2321
    %v2323 = vmul.f32 1.0, %v2322
    %v2324 = vxor.u32 %v2273, 2147483648
    %v2325 = vmul.f32 %v2324, 1.442695
    %v2326 = vpow.pop %v2325
    %v2327 = vadd.f32 %v2326, 1.0
    %v2328 = vrcp.pop %v2327
    %v2329 = vmul.f32 1.0, %v2328
    %v2330 = vmul.f32 %v2323, %v2314
    %v2331 = vadd.f32 %v2312, %v2330
    %v2332 = vtanh.pop %v2331
    %v2333 = vsub.f32 1.0, %v2329
    %v2334 = vmul.f32 %v2333, %v2332
    %v2335 = vmul.f32 %v2329, %v2023
    %v2336 = vadd.f32 %v2334, %v2335
    %v2401 = vunpack.c.l.b16 %v504
    %v2402 = vunpack.c.h.b16 %v504
    %v2403 = vunpack.c.l.b16 %v505
    %v2404 = vunpack.c.h.b16 %v505
    %v2405 = vunpack.c.l.b16 %v506
    %v2406 = vunpack.c.h.b16 %v506
    %v2407 = vunpack.c.l.b16 %v507
    %v2408 = vunpack.c.h.b16 %v507
    %v2409 = vunpack.c.l.b16 %v508
    %v2410 = vunpack.c.h.b16 %v508
    %v2411 = vunpack.c.l.b16 %v509
    %v2412 = vunpack.c.h.b16 %v509
    %v2413 = vunpack.c.l.b16 %v510
    %v2414 = vunpack.c.h.b16 %v510
    %v2415 = vunpack.c.l.b16 %v511
    %v2416 = vunpack.c.h.b16 %v511
    %v2417 = vunpack.c.l.b16 %v512
    %v2418 = vunpack.c.h.b16 %v512
    %v2419 = vunpack.c.l.b16 %v513
    %v2420 = vunpack.c.h.b16 %v513
    %v2421 = vunpack.c.l.b16 %v514
    %v2422 = vunpack.c.h.b16 %v514
    %v2423 = vunpack.c.l.b16 %v515
    %v2424 = vunpack.c.h.b16 %v515
    %v2425 = vunpack.c.l.b16 %v516
    %v2426 = vunpack.c.h.b16 %v516
    %v2427 = vunpack.c.l.b16 %v517
    %v2428 = vunpack.c.h.b16 %v517
    %v2429 = vunpack.c.l.b16 %v518
    %v2430 = vunpack.c.h.b16 %v518
    %v2431 = vunpack.c.l.b16 %v519
    %v2432 = vunpack.c.h.b16 %v519
    %v2433 = vunpack.c.l.b16 %v520
    %v2434 = vunpack.c.h.b16 %v520
    %v2435 = vunpack.c.l.b16 %v521
    %v2436 = vunpack.c.h.b16 %v521
    %v2437 = vunpack.c.l.b16 %v522
    %v2438 = vunpack.c.h.b16 %v522
    %v2439 = vunpack.c.l.b16 %v523
    %v2440 = vunpack.c.h.b16 %v523
    %v2441 = vunpack.c.l.b16 %v524
    %v2442 = vunpack.c.h.b16 %v524
    %v2443 = vunpack.c.l.b16 %v525
    %v2444 = vunpack.c.h.b16 %v525
    %v2445 = vunpack.c.l.b16 %v526
    %v2446 = vunpack.c.h.b16 %v526
    %v2447 = vunpack.c.l.b16 %v527
    %v2448 = vunpack.c.h.b16 %v527
    %v2449 = vunpack.c.l.b16 %v528
    %v2450 = vunpack.c.h.b16 %v528
    %v2451 = vunpack.c.l.b16 %v529
    %v2452 = vunpack.c.h.b16 %v529
    %v2453 = vunpack.c.l.b16 %v530
    %v2454 = vunpack.c.h.b16 %v530
    %v2455 = vunpack.c.l.b16 %v531
    %v2456 = vunpack.c.h.b16 %v531
    %v2457 = vunpack.c.l.b16 %v532
    %v2458 = vunpack.c.h.b16 %v532
    %v2459 = vunpack.c.l.b16 %v533
    %v2460 = vunpack.c.h.b16 %v533
    %v2461 = vunpack.c.l.b16 %v534
    %v2462 = vunpack.c.h.b16 %v534
    %v2463 = vunpack.c.l.b16 %v535
    %v2464 = vunpack.c.h.b16 %v535
    %v2465 = vunpack.c.l.b16 %v536
    %v2466 = vunpack.c.h.b16 %v536
    %v2467 = vunpack.c.l.b16 %v537
    %v2468 = vunpack.c.h.b16 %v537
    %v2469 = vunpack.c.l.b16 %v538
    %v2470 = vunpack.c.h.b16 %v538
    %v2471 = vunpack.c.l.b16 %v539
    %v2472 = vunpack.c.h.b16 %v539
    %v2473 = vunpack.c.l.b16 %v540
    %v2474 = vunpack.c.h.b16 %v540
    %v2475 = vunpack.c.l.b16 %v541
    %v2476 = vunpack.c.h.b16 %v541
    %v2477 = vunpack.c.l.b16 %v542
    %v2478 = vunpack.c.h.b16 %v542
    %v2479 = vunpack.c.l.b16 %v543
    %v2480 = vunpack.c.h.b16 %v543
    %v2481 = vunpack.c.l.b16 %v544
    %v2482 = vunpack.c.h.b16 %v544
    %v2483 = vunpack.c.l.b16 %v545
    %v2484 = vunpack.c.h.b16 %v545
    %v2485 = vunpack.c.l.b16 %v546
    %v2486 = vunpack.c.h.b16 %v546
    %v2487 = vunpack.c.l.b16 %v547
    %v2488 = vunpack.c.h.b16 %v547
    %v2489 = vunpack.c.l.b16 %v548
    %v2490 = vunpack.c.h.b16 %v548
    %v2491 = vunpack.c.l.b16 %v549
    %v2492 = vunpack.c.h.b16 %v549
    %v2493 = vunpack.c.l.b16 %v550
    %v2494 = vunpack.c.h.b16 %v550
    %v2495 = vunpack.c.l.b16 %v551
    %v2496 = vunpack.c.h.b16 %v551
    %v2497 = vunpack.c.l.b16 %v552
    %v2498 = vunpack.c.h.b16 %v552
    %v2499 = vunpack.c.l.b16 %v553
    %v2500 = vunpack.c.h.b16 %v553
    %v2501 = vunpack.c.l.b16 %v554
    %v2502 = vunpack.c.h.b16 %v554
    %v2503 = vunpack.c.l.b16 %v555
    %v2504 = vunpack.c.h.b16 %v555
    %v2505 = vunpack.c.l.b16 %v556
    %v2506 = vunpack.c.h.b16 %v556
    %v2507 = vunpack.c.l.b16 %v557
    %v2508 = vunpack.c.h.b16 %v557
    %v2509 = vunpack.c.l.b16 %v558
    %v2510 = vunpack.c.h.b16 %v558
    %v2511 = vunpack.c.l.b16 %v559
    %v2512 = vunpack.c.h.b16 %v559
    %v2513 = vunpack.c.l.b16 %v560
    %v2514 = vunpack.c.h.b16 %v560
    %v2515 = vunpack.c.l.b16 %v561
    %v2516 = vunpack.c.h.b16 %v561
    %v2517 = vunpack.c.l.b16 %v562
    %v2518 = vunpack.c.h.b16 %v562
    %v2519 = vunpack.c.l.b16 %v563
    %v2520 = vunpack.c.h.b16 %v563
    %v2521 = vunpack.c.l.b16 %v564
    %v2522 = vunpack.c.h.b16 %v564
    %v2523 = vunpack.c.l.b16 %v565
    %v2524 = vunpack.c.h.b16 %v565
    %v2525 = vunpack.c.l.b16 %v566
    %v2526 = vunpack.c.h.b16 %v566
    %v2527 = vunpack.c.l.b16 %v567
    %v2528 = vunpack.c.h.b16 %v567
    %v2529 = vpack.c.b16 %v2405, %v2401
    %v2530 = vpack.c.b16 %v2406, %v2402
    %v2531 = vpack.c.b16 %v2407, %v2403
    %v2532 = vpack.c.b16 %v2408, %v2404
    %v2533 = vpack.c.b16 %v2413, %v2409
    %v2534 = vpack.c.b16 %v2414, %v2410
    %v2535 = vpack.c.b16 %v2415, %v2411
    %v2536 = vpack.c.b16 %v2416, %v2412
    %v2537 = vpack.c.b16 %v2421, %v2417
    %v2538 = vpack.c.b16 %v2422, %v2418
    %v2539 = vpack.c.b16 %v2423, %v2419
    %v2540 = vpack.c.b16 %v2424, %v2420
    %v2541 = vpack.c.b16 %v2429, %v2425
    %v2542 = vpack.c.b16 %v2430, %v2426
    %v2543 = vpack.c.b16 %v2431, %v2427
    %v2544 = vpack.c.b16 %v2432, %v2428
    %v2545 = vpack.c.b16 %v2437, %v2433
    %v2546 = vpack.c.b16 %v2438, %v2434
    %v2547 = vpack.c.b16 %v2439, %v2435
    %v2548 = vpack.c.b16 %v2440, %v2436
    %v2549 = vpack.c.b16 %v2445, %v2441
    %v2550 = vpack.c.b16 %v2446, %v2442
    %v2551 = vpack.c.b16 %v2447, %v2443
    %v2552 = vpack.c.b16 %v2448, %v2444
    %v2553 = vpack.c.b16 %v2453, %v2449
    %v2554 = vpack.c.b16 %v2454, %v2450
    %v2555 = vpack.c.b16 %v2455, %v2451
    %v2556 = vpack.c.b16 %v2456, %v2452
    %v2557 = vpack.c.b16 %v2461, %v2457
    %v2558 = vpack.c.b16 %v2462, %v2458
    %v2559 = vpack.c.b16 %v2463, %v2459
    %v2560 = vpack.c.b16 %v2464, %v2460
    %v2561 = vpack.c.b16 %v2469, %v2465
    %v2562 = vpack.c.b16 %v2470, %v2466
    %v2563 = vpack.c.b16 %v2471, %v2467
    %v2564 = vpack.c.b16 %v2472, %v2468
    %v2565 = vpack.c.b16 %v2477, %v2473
    %v2566 = vpack.c.b16 %v2478, %v2474
    %v2567 = vpack.c.b16 %v2479, %v2475
    %v2568 = vpack.c.b16 %v2480, %v2476
    %v2569 = vpack.c.b16 %v2485, %v2481
    %v2570 = vpack.c.b16 %v2486, %v2482
    %v2571 = vpack.c.b16 %v2487, %v2483
    %v2572 = vpack.c.b16 %v2488, %v2484
    %v2573 = vpack.c.b16 %v2493, %v2489
    %v2574 = vpack.c.b16 %v2494, %v2490
    %v2575 = vpack.c.b16 %v2495, %v2491
    %v2576 = vpack.c.b16 %v2496, %v2492
    %v2577 = vpack.c.b16 %v2501, %v2497
    %v2578 = vpack.c.b16 %v2502, %v2498
    %v2579 = vpack.c.b16 %v2503, %v2499
    %v2580 = vpack.c.b16 %v2504, %v2500
    %v2581 = vpack.c.b16 %v2509, %v2505
    %v2582 = vpack.c.b16 %v2510, %v2506
    %v2583 = vpack.c.b16 %v2511, %v2507
    %v2584 = vpack.c.b16 %v2512, %v2508
    %v2585 = vpack.c.b16 %v2517, %v2513
    %v2586 = vpack.c.b16 %v2518, %v2514
    %v2587 = vpack.c.b16 %v2519, %v2515
    %v2588 = vpack.c.b16 %v2520, %v2516
    %v2589 = vpack.c.b16 %v2525, %v2521
    %v2590 = vpack.c.b16 %v2526, %v2522
    %v2591 = vpack.c.b16 %v2527, %v2523
    %v2592 = vpack.c.b16 %v2528, %v2524
    %2657 = vmatprep.subr.bf16.mxu0 %v2530
    %2658 = vmatpush1.bf16.msra.mxu0 %v2529
    %2659 = vmatprep.subr.bf16.mxu0 %v2534
    %2660 = vmatpush1.bf16.msra.mxu0 %v2533
    %2661 = vmatprep.subr.bf16.mxu0 %v2538
    %2662 = vmatpush1.bf16.msra.mxu0 %v2537
    %2663 = vmatprep.subr.bf16.mxu0 %v2542
    %2664 = vmatpush1.bf16.msra.mxu0 %v2541
    %2665 = vmatprep.subr.bf16.mxu0 %v2546
    %2666 = vmatpush1.bf16.msra.mxu0 %v2545
    %2667 = vmatprep.subr.bf16.mxu0 %v2550
    %2668 = vmatpush1.bf16.msra.mxu0 %v2549
    %2669 = vmatprep.subr.bf16.mxu0 %v2554
    %2670 = vmatpush1.bf16.msra.mxu0 %v2553
    %2671 = vmatprep.subr.bf16.mxu0 %v2558
    %2672 = vmatpush1.bf16.msra.mxu0 %v2557
    %2673 = vmatprep.subr.bf16.mxu0 %v2562
    %2674 = vmatpush1.bf16.msra.mxu0 %v2561
    %2675 = vmatprep.subr.bf16.mxu0 %v2566
    %2676 = vmatpush1.bf16.msra.mxu0 %v2565
    %2677 = vmatprep.subr.bf16.mxu0 %v2570
    %2678 = vmatpush1.bf16.msra.mxu0 %v2569
    %2679 = vmatprep.subr.bf16.mxu0 %v2574
    %2680 = vmatpush1.bf16.msra.mxu0 %v2573
    %2681 = vmatprep.subr.bf16.mxu0 %v2578
    %2682 = vmatpush1.bf16.msra.mxu0 %v2577
    %2683 = vmatprep.subr.bf16.mxu0 %v2582
    %2684 = vmatpush1.bf16.msra.mxu0 %v2581
    %2685 = vmatprep.subr.bf16.mxu0 %v2586
    %2686 = vmatpush1.bf16.msra.mxu0 %v2585
    %2687 = vmatprep.subr.bf16.mxu0 %v2590
    %2688 = vmatpush1.bf16.msra.mxu0 %v2589
    %2689 = vmatprep.mubr.bf16.mxu0 %v973
    %2690 = vmatmul.mubr.bf16.gmra.mrb[0].mxu0 %v2235
    %v2691 = vpop.f32.mrb[0].mxu0
    %v2692 = vadd.f32 %v617, %v2691
    %v2693 = vpop.f32.mrb[0].mxu0
    %v2694 = vadd.f32 %v621, %v2693
    %v2695 = vpop.f32.mrb[0].mxu0
    %v2696 = vpop.f32.mrb[0].mxu0
    %2697 = vdwg.mxu0
    %2698 = vmatprep.subr.bf16.mxu0 %v2532
    %2699 = vmatpush1.bf16.msra.mxu0 %v2531
    %2700 = vmatprep.subr.bf16.mxu0 %v2536
    %2701 = vmatpush1.bf16.msra.mxu0 %v2535
    %2702 = vmatprep.subr.bf16.mxu0 %v2540
    %2703 = vmatpush1.bf16.msra.mxu0 %v2539
    %2704 = vmatprep.subr.bf16.mxu0 %v2544
    %2705 = vmatpush1.bf16.msra.mxu0 %v2543
    %2706 = vmatprep.subr.bf16.mxu0 %v2548
    %2707 = vmatpush1.bf16.msra.mxu0 %v2547
    %2708 = vmatprep.subr.bf16.mxu0 %v2552
    %2709 = vmatpush1.bf16.msra.mxu0 %v2551
    %2710 = vmatprep.subr.bf16.mxu0 %v2556
    %2711 = vmatpush1.bf16.msra.mxu0 %v2555
    %2712 = vmatprep.subr.bf16.mxu0 %v2560
    %2713 = vmatpush1.bf16.msra.mxu0 %v2559
    %2714 = vmatprep.subr.bf16.mxu0 %v2564
    %2715 = vmatpush1.bf16.msra.mxu0 %v2563
    %2716 = vmatprep.subr.bf16.mxu0 %v2568
    %2717 = vmatpush1.bf16.msra.mxu0 %v2567
    %2718 = vmatprep.subr.bf16.mxu0 %v2572
    %2719 = vmatpush1.bf16.msra.mxu0 %v2571
    %2720 = vmatprep.subr.bf16.mxu0 %v2576
    %2721 = vmatpush1.bf16.msra.mxu0 %v2575
    %2722 = vmatprep.subr.bf16.mxu0 %v2580
    %2723 = vmatpush1.bf16.msra.mxu0 %v2579
    %2724 = vmatprep.subr.bf16.mxu0 %v2584
    %2725 = vmatpush1.bf16.msra.mxu0 %v2583
    %2726 = vmatprep.subr.bf16.mxu0 %v2588
    %2727 = vmatpush1.bf16.msra.mxu0 %v2587
    %2728 = vmatprep.subr.bf16.mxu0 %v2592
    %2729 = vmatpush1.bf16.msra.mxu0 %v2591
    %2730 = vmatprep.mubr.bf16.mxu0 %v973
    %2731 = vmatmul.mubr.bf16.gmra.mrb[0].mxu0 %v2235
    %v2732 = vpop.f32.mrb[0].mxu0
    %v2733 = vadd.f32 %v625, %v2732
    %v2734 = vpop.f32.mrb[0].mxu0
    %v2735 = vadd.f32 %v629, %v2734
    %v2736 = vpop.f32.mrb[0].mxu0
    %v2737 = vpop.f32.mrb[0].mxu0
    %2738 = vdwg.mxu0
    %v2739 = vxor.u32 %v2692, 2147483648
    %v2740 = vmul.f32 %v2739, 1.442695
    %v2741 = vpow.pop %v2740
    %v2742 = vadd.f32 %v2741, 1.0
    %v2743 = vrcp.pop %v2742
    %v2744 = vmul.f32 1.0, %v2743
    %v2745 = vxor.u32 %v2694, 2147483648
    %v2746 = vmul.f32 %v2745, 1.442695
    %v2747 = vpow.pop %v2746
    %v2748 = vadd.f32 %v2747, 1.0
    %v2749 = vrcp.pop %v2748
    %v2750 = vmul.f32 1.0, %v2749
    %v2751 = vmul.f32 %v2744, %v2735
    %v2752 = vadd.f32 %v2733, %v2751
    %v2753 = vtanh.pop %v2752
    %v2754 = vsub.f32 1.0, %v2750
    %v2755 = vmul.f32 %v2754, %v2753
    %v2756 = vmul.f32 %v2750, 0.0
    %v2757 = vadd.f32 %v2755, %v2756
    %s2758 = smul.u32 4, 3
    %s2759 = smul.addr %s2758, 8
    %s2760 = scalar_lea.vmem [#allocation2], %s2759
    %v2761 = vld [vmem:[%s2760] sm:$0xff]
    %v2762 = vld [vmem:[%s2760 + $0x8] sm:$0xff]
    %v2763 = vld [vmem:[%s2760 + $0x10] sm:$0xff]
    %v2764 = vpack.c.bf16 %v2132, %v2132
    %2765 = vmatprep.subr.bf16.mxu0 %v718
    %2766 = vmatpush1.bf16.msra.mxu0 %v717
    %2767 = vmatprep.subr.bf16.mxu0 %v721
    %2768 = vmatpush1.bf16.msra.mxu0 %v720
    %2769 = vmatprep.subr.bf16.mxu0 %v724
    %2770 = vmatpush1.bf16.msra.mxu0 %v723
    %2771 = vmatprep.subr.bf16.mxu0 %v727
    %2772 = vmatpush1.bf16.msra.mxu0 %v726
    %2773 = vmatprep.subr.bf16.mxu0 %v730
    %2774 = vmatpush1.bf16.msra.mxu0 %v729
    %2775 = vmatprep.subr.bf16.mxu0 %v733
    %2776 = vmatpush1.bf16.msra.mxu0 %v732
    %2777 = vmatprep.subr.bf16.mxu0 %v736
    %2778 = vmatpush1.bf16.msra.mxu0 %v735
    %2779 = vmatprep.subr.bf16.mxu0 %v739
    %2780 = vmatpush1.bf16.msra.mxu0 %v738
    %2781 = vmatprep.subr.bf16.mxu0 0
    %2782 = vmatpush1.bf16.msra.mxu0 0
    %2783 = vmatprep.subr.bf16.mxu0 0
    %2784 = vmatpush1.bf16.msra.mxu0 0
    %2785 = vmatprep.subr.bf16.mxu0 0
    %2786 = vmatpush1.bf16.msra.mxu0 0
    %2787 = vmatprep.subr.bf16.mxu0 0
    %2788 = vmatpush1.bf16.msra.mxu0 0
    %2789 = vmatprep.subr.bf16.mxu0 0
    %2790 = vmatpush1.bf16.msra.mxu0 0
    %2791 = vmatprep.subr.bf16.mxu0 0
    %2792 = vmatpush1.bf16.msra.mxu0 0
    %2793 = vmatprep.subr.bf16.mxu0 0
    %2794 = vmatpush1.bf16.msra.mxu0 0
    %2795 = vmatprep.subr.bf16.mxu0 0
    %2796 = vmatpush1.bf16.msra.mxu0 0
    %2797 = vmatprep.mubr.bf16.mxu0 0
    %2798 = vmatmul.mubr.bf16.gmra.mrb[0].mxu0 %v2764
    %v2799 = vpop.f32.mrb[0].mxu0
    %v2800 = vadd.f32 %v364, %v2799
    %v2801 = vpop.f32.mrb[0].mxu0
    %v2802 = vadd.f32 %v368, %v2801
    %v2803 = vpop.f32.mrb[0].mxu0
    %v2804 = vpop.f32.mrb[0].mxu0
    %2805 = vdwg.mxu0
    %2806 = vmatprep.subr.bf16.mxu0 0
    %2807 = vmatpush1.bf16.msra.mxu0 %v719
    %2808 = vmatprep.subr.bf16.mxu0 0
    %2809 = vmatpush1.bf16.msra.mxu0 %v722
    %2810 = vmatprep.subr.bf16.mxu0 0
    %2811 = vmatpush1.bf16.msra.mxu0 %v725
    %2812 = vmatprep.subr.bf16.mxu0 0
    %2813 = vmatpush1.bf16.msra.mxu0 %v728
    %2814 = vmatprep.subr.bf16.mxu0 0
    %2815 = vmatpush1.bf16.msra.mxu0 %v731
    %2816 = vmatprep.subr.bf16.mxu0 0
    %2817 = vmatpush1.bf16.msra.mxu0 %v734
    %2818 = vmatprep.subr.bf16.mxu0 0
    %2819 = vmatpush1.bf16.msra.mxu0 %v737
    %2820 = vmatprep.subr.bf16.mxu0 0
    %2821 = vmatpush1.bf16.msra.mxu0 %v740
    %2822 = vmatprep.subr.bf16.mxu0 0
    %2823 = vmatpush1.bf16.msra.mxu0 0
    %2824 = vmatprep.subr.bf16.mxu0 0
    %2825 = vmatpush1.bf16.msra.mxu0 0
    %2826 = vmatprep.subr.bf16.mxu0 0
    %2827 = vmatpush1.bf16.msra.mxu0 0
    %2828 = vmatprep.subr.bf16.mxu0 0
    %2829 = vmatpush1.bf16.msra.mxu0 0
    %2830 = vmatprep.subr.bf16.mxu0 0
    %2831 = vmatpush1.bf16.msra.mxu0 0
    %2832 = vmatprep.subr.bf16.mxu0 0
    %2833 = vmatpush1.bf16.msra.mxu0 0
    %2834 = vmatprep.subr.bf16.mxu0 0
    %2835 = vmatpush1.bf16.msra.mxu0 0
    %2836 = vmatprep.subr.bf16.mxu0 0
    %2837 = vmatpush1.bf16.msra.mxu0 0
    %2838 = vmatprep.mubr.bf16.mxu0 0
    %2839 = vmatmul.mubr.bf16.gmra.mrb[0].mxu0 %v2764
    %v2840 = vpop.f32.mrb[0].mxu0
    %v2841 = vadd.f32 %v372, %v2840
    %v2842 = vpop.f32.mrb[0].mxu0
    %v2843 = vpop.f32.mrb[0].mxu0
    %v2844 = vpop.f32.mrb[0].mxu0
    %2845 = vdwg.mxu0
    %v2846 = vadd.f32 %v2761, %v2800
    %v2847 = vxor.u32 %v2846, 2147483648
    %v2848 = vmul.f32 %v2847, 1.442695
    %v2849 = vpow.pop %v2848
    %v2850 = vadd.f32 %v2849, 1.0
    %v2851 = vrcp.pop %v2850
    %v2852 = vmul.f32 1.0, %v2851
    %v2853 = vadd.f32 %v2762, %v2802
    %v2854 = vxor.u32 %v2853, 2147483648
    %v2855 = vmul.f32 %v2854, 1.442695
    %v2856 = vpow.pop %v2855
    %v2857 = vadd.f32 %v2856, 1.0
    %v2858 = vrcp.pop %v2857
    %v2859 = vmul.f32 1.0, %v2858
    %v2860 = vmul.f32 %v2852, %v2841
    %v2861 = vadd.f32 %v2763, %v2860
    %v2862 = vtanh.pop %v2861
    %v2863 = vsub.f32 1.0, %v2859
    %v2864 = vmul.f32 %v2863, %v2862
    %v2865 = vmul.f32 %v2859, %v2132
    %v2866 = vadd.f32 %v2864, %v2865
    %v2867 = vpack.c.bf16 %v2234, %v2234
    %2868 = vmatprep.subr.bf16.mxu0 %v1167
    %2869 = vmatpush1.bf16.msra.mxu0 %v1166
    %2870 = vmatprep.subr.bf16.mxu0 %v1171
    %2871 = vmatpush1.bf16.msra.mxu0 %v1170
    %2872 = vmatprep.subr.bf16.mxu0 %v1175
    %2873 = vmatpush1.bf16.msra.mxu0 %v1174
    %2874 = vmatprep.subr.bf16.mxu0 %v1179
    %2875 = vmatpush1.bf16.msra.mxu0 %v1178
    %2876 = vmatprep.subr.bf16.mxu0 %v1183
    %2877 = vmatpush1.bf16.msra.mxu0 %v1182
    %2878 = vmatprep.subr.bf16.mxu0 %v1187
    %2879 = vmatpush1.bf16.msra.mxu0 %v1186
    %2880 = vmatprep.subr.bf16.mxu0 %v1191
    %2881 = vmatpush1.bf16.msra.mxu0 %v1190
    %2882 = vmatprep.subr.bf16.mxu0 %v1195
    %2883 = vmatpush1.bf16.msra.mxu0 %v1194
    %2884 = vmatprep.subr.bf16.mxu0 %v1199
    %2885 = vmatpush1.bf16.msra.mxu0 %v1198
    %2886 = vmatprep.subr.bf16.mxu0 %v1203
    %2887 = vmatpush1.bf16.msra.mxu0 %v1202
    %2888 = vmatprep.subr.bf16.mxu0 %v1207
    %2889 = vmatpush1.bf16.msra.mxu0 %v1206
    %2890 = vmatprep.subr.bf16.mxu0 %v1211
    %2891 = vmatpush1.bf16.msra.mxu0 %v1210
    %2892 = vmatprep.subr.bf16.mxu0 %v1215
    %2893 = vmatpush1.bf16.msra.mxu0 %v1214
    %2894 = vmatprep.subr.bf16.mxu0 %v1219
    %2895 = vmatpush1.bf16.msra.mxu0 %v1218
    %2896 = vmatprep.subr.bf16.mxu0 %v1223
    %2897 = vmatpush1.bf16.msra.mxu0 %v1222
    %2898 = vmatprep.subr.bf16.mxu0 %v1227
    %2899 = vmatpush1.bf16.msra.mxu0 %v1226
    %2900 = vmatprep.mubr.bf16.mxu0 %v2867
    %2901 = vmatmul.mubr.bf16.gmra.mrb[0].mxu0 %v2764
    %v2902 = vpop.f32.mrb[0].mxu0
    %v2903 = vadd.f32 %v573, %v2902
    %v2904 = vpop.f32.mrb[0].mxu0
    %v2905 = vadd.f32 %v577, %v2904
    %v2906 = vpop.f32.mrb[0].mxu0
    %v2907 = vpop.f32.mrb[0].mxu0
    %2908 = vdwg.mxu0
    %2909 = vmatprep.subr.bf16.mxu0 %v1169
    %2910 = vmatpush1.bf16.msra.mxu0 %v1168
    %2911 = vmatprep.subr.bf16.mxu0 %v1173
    %2912 = vmatpush1.bf16.msra.mxu0 %v1172
    %2913 = vmatprep.subr.bf16.mxu0 %v1177
    %2914 = vmatpush1.bf16.msra.mxu0 %v1176
    %2915 = vmatprep.subr.bf16.mxu0 %v1181
    %2916 = vmatpush1.bf16.msra.mxu0 %v1180
    %2917 = vmatprep.subr.bf16.mxu0 %v1185
    %2918 = vmatpush1.bf16.msra.mxu0 %v1184
    %2919 = vmatprep.subr.bf16.mxu0 %v1189
    %2920 = vmatpush1.bf16.msra.mxu0 %v1188
    %2921 = vmatprep.subr.bf16.mxu0 %v1193
    %2922 = vmatpush1.bf16.msra.mxu0 %v1192
    %2923 = vmatprep.subr.bf16.mxu0 %v1197
    %2924 = vmatpush1.bf16.msra.mxu0 %v1196
    %2925 = vmatprep.subr.bf16.mxu0 %v1201
    %2926 = vmatpush1.bf16.msra.mxu0 %v1200
    %2927 = vmatprep.subr.bf16.mxu0 %v1205
    %2928 = vmatpush1.bf16.msra.mxu0 %v1204
    %2929 = vmatprep.subr.bf16.mxu0 %v1209
    %2930 = vmatpush1.bf16.msra.mxu0 %v1208
    %2931 = vmatprep.subr.bf16.mxu0 %v1213
    %2932 = vmatpush1.bf16.msra.mxu0 %v1212
    %2933 = vmatprep.subr.bf16.mxu0 %v1217
    %2934 = vmatpush1.bf16.msra.mxu0 %v1216
    %2935 = vmatprep.subr.bf16.mxu0 %v1221
    %2936 = vmatpush1.bf16.msra.mxu0 %v1220
    %2937 = vmatprep.subr.bf16.mxu0 %v1225
    %2938 = vmatpush1.bf16.msra.mxu0 %v1224
    %2939 = vmatprep.subr.bf16.mxu0 %v1229
    %2940 = vmatpush1.bf16.msra.mxu0 %v1228
    %2941 = vmatprep.mubr.bf16.mxu0 %v2867
    %2942 = vmatmul.mubr.bf16.gmra.mrb[0].mxu0 %v2764
    %v2943 = vpop.f32.mrb[0].mxu0
    %v2944 = vadd.f32 %v581, %v2943
    %v2945 = vpop.f32.mrb[0].mxu0
    %v2946 = vadd.f32 %v585, %v2945
    %v2947 = vpop.f32.mrb[0].mxu0
    %v2948 = vpop.f32.mrb[0].mxu0
    %2949 = vdwg.mxu0
    %v2950 = vxor.u32 %v2903, 2147483648
    %v2951 = vmul.f32 %v2950, 1.442695
    %v2952 = vpow.pop %v2951
    %v2953 = vadd.f32 %v2952, 1.0
    %v2954 = vrcp.pop %v2953
    %v2955 = vmul.f32 1.0, %v2954
    %v2956 = vxor.u32 %v2905, 2147483648
    %v2957 = vmul.f32 %v2956, 1.442695
    %v2958 = vpow.pop %v2957
    %v2959 = vadd.f32 %v2958, 1.0
    %v2960 = vrcp.pop %v2959
    %v2961 = vmul.f32 1.0, %v2960
    %v2962 = vmul.f32 %v2955, %v2946
    %v2963 = vadd.f32 %v2944, %v2962
    %v2964 = vtanh.pop %v2963
    %v2965 = vsub.f32 1.0, %v2961
    %v2966 = vmul.f32 %v2965, %v2964
    %v2967 = vmul.f32 %v2961, %v2234
    %v2968 = vadd.f32 %v2966, %v2967
    %v2969 = vpack.c.bf16 %v2336, %v2336
    %2970 = vmatprep.subr.bf16.mxu0 %v1796
    %2971 = vmatpush1.bf16.msra.mxu0 %v1795
    %2972 = vmatprep.subr.bf16.mxu0 %v1800
    %2973 = vmatpush1.bf16.msra.mxu0 %v1799
    %2974 = vmatprep.subr.bf16.mxu0 %v1804
    %2975 = vmatpush1.bf16.msra.mxu0 %v1803
    %2976 = vmatprep.subr.bf16.mxu0 %v1808
    %2977 = vmatpush1.bf16.msra.mxu0 %v1807
    %2978 = vmatprep.subr.bf16.mxu0 %v1812
    %2979 = vmatpush1.bf16.msra.mxu0 %v1811
    %2980 = vmatprep.subr.bf16.mxu0 %v1816
    %2981 = vmatpush1.bf16.msra.mxu0 %v1815
    %2982 = vmatprep.subr.bf16.mxu0 %v1820
    %2983 = vmatpush1.bf16.msra.mxu0 %v1819
    %2984 = vmatprep.subr.bf16.mxu0 %v1824
    %2985 = vmatpush1.bf16.msra.mxu0 %v1823
    %2986 = vmatprep.subr.bf16.mxu0 %v1828
    %2987 = vmatpush1.bf16.msra.mxu0 %v1827
    %2988 = vmatprep.subr.bf16.mxu0 %v1832
    %2989 = vmatpush1.bf16.msra.mxu0 %v1831
    %2990 = vmatprep.subr.bf16.mxu0 %v1836
    %2991 = vmatpush1.bf16.msra.mxu0 %v1835
    %2992 = vmatprep.subr.bf16.mxu0 %v1840
    %2993 = vmatpush1.bf16.msra.mxu0 %v1839
    %2994 = vmatprep.subr.bf16.mxu0 %v1844
    %2995 = vmatpush1.bf16.msra.mxu0 %v1843
    %2996 = vmatprep.subr.bf16.mxu0 %v1848
    %2997 = vmatpush1.bf16.msra.mxu0 %v1847
    %2998 = vmatprep.subr.bf16.mxu0 %v1852
    %2999 = vmatpush1.bf16.msra.mxu0 %v1851
    %3000 = vmatprep.subr.bf16.mxu0 %v1856
    %3001 = vmatpush1.bf16.msra.mxu0 %v1855
    %3002 = vmatprep.mubr.bf16.mxu0 %v2969
    %3003 = vmatmul.mubr.bf16.gmra.mrb[0].mxu0 %v2867
    %v3004 = vpop.f32.mrb[0].mxu0
    %v3005 = vadd.f32 %v595, %v3004
    %v3006 = vpop.f32.mrb[0].mxu0
    %v3007 = vadd.f32 %v599, %v3006
    %v3008 = vpop.f32.mrb[0].mxu0
    %v3009 = vpop.f32.mrb[0].mxu0
    %3010 = vdwg.mxu0
    %3011 = vmatprep.subr.bf16.mxu0 %v1798
    %3012 = vmatpush1.bf16.msra.mxu0 %v1797
    %3013 = vmatprep.subr.bf16.mxu0 %v1802
    %3014 = vmatpush1.bf16.msra.mxu0 %v1801
    %3015 = vmatprep.subr.bf16.mxu0 %v1806
    %3016 = vmatpush1.bf16.msra.mxu0 %v1805
    %3017 = vmatprep.subr.bf16.mxu0 %v1810
    %3018 = vmatpush1.bf16.msra.mxu0 %v1809
    %3019 = vmatprep.subr.bf16.mxu0 %v1814
    %3020 = vmatpush1.bf16.msra.mxu0 %v1813
    %3021 = vmatprep.subr.bf16.mxu0 %v1818
    %3022 = vmatpush1.bf16.msra.mxu0 %v1817
    %3023 = vmatprep.subr.bf16.mxu0 %v1822
    %3024 = vmatpush1.bf16.msra.mxu0 %v1821
    %3025 = vmatprep.subr.bf16.mxu0 %v1826
    %3026 = vmatpush1.bf16.msra.mxu0 %v1825
    %3027 = vmatprep.subr.bf16.mxu0 %v1830
    %3028 = vmatpush1.bf16.msra.mxu0 %v1829
    %3029 = vmatprep.subr.bf16.mxu0 %v1834
    %3030 = vmatpush1.bf16.msra.mxu0 %v1833
    %3031 = vmatprep.subr.bf16.mxu0 %v1838
    %3032 = vmatpush1.bf16.msra.mxu0 %v1837
    %3033 = vmatprep.subr.bf16.mxu0 %v1842
    %3034 = vmatpush1.bf16.msra.mxu0 %v1841
    %3035 = vmatprep.subr.bf16.mxu0 %v1846
    %3036 = vmatpush1.bf16.msra.mxu0 %v1845
    %3037 = vmatprep.subr.bf16.mxu0 %v1850
    %3038 = vmatpush1.bf16.msra.mxu0 %v1849
    %3039 = vmatprep.subr.bf16.mxu0 %v1854
    %3040 = vmatpush1.bf16.msra.mxu0 %v1853
    %3041 = vmatprep.subr.bf16.mxu0 %v1858
    %3042 = vmatpush1.bf16.msra.mxu0 %v1857
    %3043 = vmatprep.mubr.bf16.mxu0 %v2969
    %3044 = vmatmul.mubr.bf16.gmra.mrb[0].mxu0 %v2867
    %v3045 = vpop.f32.mrb[0].mxu0
    %v3046 = vadd.f32 %v603, %v3045
    %v3047 = vpop.f32.mrb[0].mxu0
    %v3048 = vadd.f32 %v607, %v3047
    %v3049 = vpop.f32.mrb[0].mxu0
    %v3050 = vpop.f32.mrb[0].mxu0
    %3051 = vdwg.mxu0
    %v3052 = vxor.u32 %v3005, 2147483648
    %v3053 = vmul.f32 %v3052, 1.442695
    %v3054 = vpow.pop %v3053
    %v3055 = vadd.f32 %v3054, 1.0
    %v3056 = vrcp.pop %v3055
    %v3057 = vmul.f32 1.0, %v3056
    %v3058 = vxor.u32 %v3007, 2147483648
    %v3059 = vmul.f32 %v3058, 1.442695
    %v3060 = vpow.pop %v3059
    %v3061 = vadd.f32 %v3060, 1.0
    %v3062 = vrcp.pop %v3061
    %v3063 = vmul.f32 1.0, %v3062
    %v3064 = vmul.f32 %v3057, %v3048
    %v3065 = vadd.f32 %v3046, %v3064
    %v3066 = vtanh.pop %v3065
    %v3067 = vsub.f32 1.0, %v3063
    %v3068 = vmul.f32 %v3067, %v3066
    %v3069 = vmul.f32 %v3063, %v2336
    %v3070 = vadd.f32 %v3068, %v3069
    %v3071 = vpack.c.bf16 %v2757, %v2757
    %3072 = vmatprep.subr.bf16.mxu0 %v2530
    %3073 = vmatpush1.bf16.msra.mxu0 %v2529
    %3074 = vmatprep.subr.bf16.mxu0 %v2534
    %3075 = vmatpush1.bf16.msra.mxu0 %v2533
    %3076 = vmatprep.subr.bf16.mxu0 %v2538
    %3077 = vmatpush1.bf16.msra.mxu0 %v2537
    %3078 = vmatprep.subr.bf16.mxu0 %v2542
    %3079 = vmatpush1.bf16.msra.mxu0 %v2541
    %3080 = vmatprep.subr.bf16.mxu0 %v2546
    %3081 = vmatpush1.bf16.msra.mxu0 %v2545
    %3082 = vmatprep.subr.bf16.mxu0 %v2550
    %3083 = vmatpush1.bf16.msra.mxu0 %v2549
    %3084 = vmatprep.subr.bf16.mxu0 %v2554
    %3085 = vmatpush1.bf16.msra.mxu0 %v2553
    %3086 = vmatprep.subr.bf16.mxu0 %v2558
    %3087 = vmatpush1.bf16.msra.mxu0 %v2557
    %3088 = vmatprep.subr.bf16.mxu0 %v2562
    %3089 = vmatpush1.bf16.msra.mxu0 %v2561
    %3090 = vmatprep.subr.bf16.mxu0 %v2566
    %3091 = vmatpush1.bf16.msra.mxu0 %v2565
    %3092 = vmatprep.subr.bf16.mxu0 %v2570
    %3093 = vmatpush1.bf16.msra.mxu0 %v2569
    %3094 = vmatprep.subr.bf16.mxu0 %v2574
    %3095 = vmatpush1.bf16.msra.mxu0 %v2573
    %3096 = vmatprep.subr.bf16.mxu0 %v2578
    %3097 = vmatpush1.bf16.msra.mxu0 %v2577
    %3098 = vmatprep.subr.bf16.mxu0 %v2582
    %3099 = vmatpush1.bf16.msra.mxu0 %v2581
    %3100 = vmatprep.subr.bf16.mxu0 %v2586
    %3101 = vmatpush1.bf16.msra.mxu0 %v2585
    %3102 = vmatprep.subr.bf16.mxu0 %v2590
    %3103 = vmatpush1.bf16.msra.mxu0 %v2589
    %3104 = vmatprep.mubr.bf16.mxu0 %v3071
    %3105 = vmatmul.mubr.bf16.gmra.mrb[0].mxu0 %v2969
    %v3106 = vpop.f32.mrb[0].mxu0
    %v3107 = vadd.f32 %v617, %v3106
    %v3108 = vpop.f32.mrb[0].mxu0
    %v3109 = vadd.f32 %v621, %v3108
    %v3110 = vpop.f32.mrb[0].mxu0
    %v3111 = vpop.f32.mrb[0].mxu0
    %3112 = vdwg.mxu0
    %3113 = vmatprep.subr.bf16.mxu0 %v2532
    %3114 = vmatpush1.bf16.msra.mxu0 %v2531
    %3115 = vmatprep.subr.bf16.mxu0 %v2536
    %3116 = vmatpush1.bf16.msra.mxu0 %v2535
    %3117 = vmatprep.subr.bf16.mxu0 %v2540
    %3118 = vmatpush1.bf16.msra.mxu0 %v2539
    %3119 = vmatprep.subr.bf16.mxu0 %v2544
    %3120 = vmatpush1.bf16.msra.mxu0 %v2543
    %3121 = vmatprep.subr.bf16.mxu0 %v2548
    %3122 = vmatpush1.bf16.msra.mxu0 %v2547
    %3123 = vmatprep.subr.bf16.mxu0 %v2552
    %3124 = vmatpush1.bf16.msra.mxu0 %v2551
    %3125 = vmatprep.subr.bf16.mxu0 %v2556
    %3126 = vmatpush1.bf16.msra.mxu0 %v2555
    %3127 = vmatprep.subr.bf16.mxu0 %v2560
    %3128 = vmatpush1.bf16.msra.mxu0 %v2559
    %3129 = vmatprep.subr.bf16.mxu0 %v2564
    %3130 = vmatpush1.bf16.msra.mxu0 %v2563
    %3131 = vmatprep.subr.bf16.mxu0 %v2568
    %3132 = vmatpush1.bf16.msra.mxu0 %v2567
    %3133 = vmatprep.subr.bf16.mxu0 %v2572
    %3134 = vmatpush1.bf16.msra.mxu0 %v2571
    %3135 = vmatprep.subr.bf16.mxu0 %v2576
    %3136 = vmatpush1.bf16.msra.mxu0 %v2575
    %3137 = vmatprep.subr.bf16.mxu0 %v2580
    %3138 = vmatpush1.bf16.msra.mxu0 %v2579
    %3139 = vmatprep.subr.bf16.mxu0 %v2584
    %3140 = vmatpush1.bf16.msra.mxu0 %v2583
    %3141 = vmatprep.subr.bf16.mxu0 %v2588
    %3142 = vmatpush1.bf16.msra.mxu0 %v2587
    %3143 = vmatprep.subr.bf16.mxu0 %v2592
    %3144 = vmatpush1.bf16.msra.mxu0 %v2591
    %3145 = vmatprep.mubr.bf16.mxu0 %v3071
    %3146 = vmatmul.mubr.bf16.gmra.mrb[0].mxu0 %v2969
    %v3147 = vpop.f32.mrb[0].mxu0
    %v3148 = vadd.f32 %v625, %v3147
    %v3149 = vpop.f32.mrb[0].mxu0
    %v3150 = vadd.f32 %v629, %v3149
    %v3151 = vpop.f32.mrb[0].mxu0
    %v3152 = vpop.f32.mrb[0].mxu0
    %3153 = vdwg.mxu0
    %v3154 = vxor.u32 %v3107, 2147483648
    %v3155 = vmul.f32 %v3154, 1.442695
    %v3156 = vpow.pop %v3155
    %v3157 = vadd.f32 %v3156, 1.0
    %v3158 = vrcp.pop %v3157
    %v3159 = vmul.f32 1.0, %v3158
    %v3160 = vxor.u32 %v3109, 2147483648
    %v3161 = vmul.f32 %v3160, 1.442695
    %v3162 = vpow.pop %v3161
    %v3163 = vadd.f32 %v3162, 1.0
    %v3164 = vrcp.pop %v3163
    %v3165 = vmul.f32 1.0, %v3164
    %v3166 = vmul.f32 %v3159, %v3150
    %v3167 = vadd.f32 %v3148, %v3166
    %v3168 = vtanh.pop %v3167
    %v3169 = vsub.f32 1.0, %v3165
    %v3170 = vmul.f32 %v3169, %v3168
    %v3171 = vmul.f32 %v3165, %v2757
    %v3172 = vadd.f32 %v3170, %v3171
    %s3173 = smul.u32 5, 3
    %s3174 = smul.addr %s3173, 8
    %s3175 = scalar_lea.vmem [#allocation2], %s3174
    %v3176 = vld [vmem:[%s3175] sm:$0xff]
    %v3177 = vld [vmem:[%s3175 + $0x8] sm:$0xff]
    %v3178 = vld [vmem:[%s3175 + $0x10] sm:$0xff]
    %v3179 = vpack.c.bf16 %v2866, %v2866
    %3180 = vmatprep.subr.bf16.mxu0 %v718
    %3181 = vmatpush1.bf16.msra.mxu0 %v717
    %3182 = vmatprep.subr.bf16.mxu0 %v721
    %3183 = vmatpush1.bf16.msra.mxu0 %v720
    %3184 = vmatprep.subr.bf16.mxu0 %v724
    %3185 = vmatpush1.bf16.msra.mxu0 %v723
    %3186 = vmatprep.subr.bf16.mxu0 %v727
    %3187 = vmatpush1.bf16.msra.mxu0 %v726
    %3188 = vmatprep.subr.bf16.mxu0 %v730
    %3189 = vmatpush1.bf16.msra.mxu0 %v729
    %3190 = vmatprep.subr.bf16.mxu0 %v733
    %3191 = vmatpush1.bf16.msra.mxu0 %v732
    %3192 = vmatprep.subr.bf16.mxu0 %v736
    %3193 = vmatpush1.bf16.msra.mxu0 %v735
    %3194 = vmatprep.subr.bf16.mxu0 %v739
    %3195 = vmatpush1.bf16.msra.mxu0 %v738
    %3196 = vmatprep.subr.bf16.mxu0 0
    %3197 = vmatpush1.bf16.msra.mxu0 0
    %3198 = vmatprep.subr.bf16.mxu0 0
    %3199 = vmatpush1.bf16.msra.mxu0 0
    %3200 = vmatprep.subr.bf16.mxu0 0
    %3201 = vmatpush1.bf16.msra.mxu0 0
    %3202 = vmatprep.subr.bf16.mxu0 0
    %3203 = vmatpush1.bf16.msra.mxu0 0
    %3204 = vmatprep.subr.bf16.mxu0 0
    %3205 = vmatpush1.bf16.msra.mxu0 0
    %3206 = vmatprep.subr.bf16.mxu0 0
    %3207 = vmatpush1.bf16.msra.mxu0 0
    %3208 = vmatprep.subr.bf16.mxu0 0
    %3209 = vmatpush1.bf16.msra.mxu0 0
    %3210 = vmatprep.subr.bf16.mxu0 0
    %3211 = vmatpush1.bf16.msra.mxu0 0
    %3212 = vmatprep.mubr.bf16.mxu0 0
    %3213 = vmatmul.mubr.bf16.gmra.mrb[0].mxu0 %v3179
    %v3214 = vpop.f32.mrb[0].mxu0
    %v3215 = vadd.f32 %v364, %v3214
    %v3216 = vpop.f32.mrb[0].mxu0
    %v3217 = vadd.f32 %v368, %v3216
    %v3218 = vpop.f32.mrb[0].mxu0
    %v3219 = vpop.f32.mrb[0].mxu0
    %3220 = vdwg.mxu0
    %3221 = vmatprep.subr.bf16.mxu0 0
    %3222 = vmatpush1.bf16.msra.mxu0 %v719
    %3223 = vmatprep.subr.bf16.mxu0 0
    %3224 = vmatpush1.bf16.msra.mxu0 %v722
    %3225 = vmatprep.subr.bf16.mxu0 0
    %3226 = vmatpush1.bf16.msra.mxu0 %v725
    %3227 = vmatprep.subr.bf16.mxu0 0
    %3228 = vmatpush1.bf16.msra.mxu0 %v728
    %3229 = vmatprep.subr.bf16.mxu0 0
    %3230 = vmatpush1.bf16.msra.mxu0 %v731
    %3231 = vmatprep.subr.bf16.mxu0 0
    %3232 = vmatpush1.bf16.msra.mxu0 %v734
    %3233 = vmatprep.subr.bf16.mxu0 0
    %3234 = vmatpush1.bf16.msra.mxu0 %v737
    %3235 = vmatprep.subr.bf16.mxu0 0
    %3236 = vmatpush1.bf16.msra.mxu0 %v740
    %3237 = vmatprep.subr.bf16.mxu0 0
    %3238 = vmatpush1.bf16.msra.mxu0 0
    %3239 = vmatprep.subr.bf16.mxu0 0
    %3240 = vmatpush1.bf16.msra.mxu0 0
    %3241 = vmatprep.subr.bf16.mxu0 0
    %3242 = vmatpush1.bf16.msra.mxu0 0
    %3243 = vmatprep.subr.bf16.mxu0 0
    %3244 = vmatpush1.bf16.msra.mxu0 0
    %3245 = vmatprep.subr.bf16.mxu0 0
    %3246 = vmatpush1.bf16.msra.mxu0 0
    %3247 = vmatprep.subr.bf16.mxu0 0
    %3248 = vmatpush1.bf16.msra.mxu0 0
    %3249 = vmatprep.subr.bf16.mxu0 0
    %3250 = vmatpush1.bf16.msra.mxu0 0
    %3251 = vmatprep.subr.bf16.mxu0 0
    %3252 = vmatpush1.bf16.msra.mxu0 0
    %3253 = vmatprep.mubr.bf16.mxu0 0
    %3254 = vmatmul.mubr.bf16.gmra.mrb[0].mxu0 %v3179
    %v3255 = vpop.f32.mrb[0].mxu0
    %v3256 = vadd.f32 %v372, %v3255
    %v3257 = vpop.f32.mrb[0].mxu0
    %v3258 = vpop.f32.mrb[0].mxu0
    %v3259 = vpop.f32.mrb[0].mxu0
    %3260 = vdwg.mxu0
    %v3261 = vadd.f32 %v3176, %v3215
    %v3262 = vxor.u32 %v3261, 2147483648
    %v3263 = vmul.f32 %v3262, 1.442695
    %v3264 = vpow.pop %v3263
    %v3265 = vadd.f32 %v3264, 1.0
    %v3266 = vrcp.pop %v3265
    %v3267 = vmul.f32 1.0, %v3266
    %v3268 = vadd.f32 %v3177, %v3217
    %v3269 = vxor.u32 %v3268, 2147483648
    %v3270 = vmul.f32 %v3269, 1.442695
    %v3271 = vpow.pop %v3270
    %v3272 = vadd.f32 %v3271, 1.0
    %v3273 = vrcp.pop %v3272
    %v3274 = vmul.f32 1.0, %v3273
    %v3275 = vmul.f32 %v3267, %v3256
    %v3276 = vadd.f32 %v3178, %v3275
    %v3277 = vtanh.pop %v3276
    %v3278 = vsub.f32 1.0, %v3274
    %v3279 = vmul.f32 %v3278, %v3277
    %v3280 = vmul.f32 %v3274, %v2866
    %v3281 = vadd.f32 %v3279, %v3280
    %v3282 = vpack.c.bf16 %v2968, %v2968
    %3283 = vmatprep.subr.bf16.mxu0 %v1167
    %3284 = vmatpush1.bf16.msra.mxu0 %v1166
    %3285 = vmatprep.subr.bf16.mxu0 %v1171
    %3286 = vmatpush1.bf16.msra.mxu0 %v1170
    %3287 = vmatprep.subr.bf16.mxu0 %v1175
    %3288 = vmatpush1.bf16.msra.mxu0 %v1174
    %3289 = vmatprep.subr.bf16.mxu0 %v1179
    %3290 = vmatpush1.bf16.msra.mxu0 %v1178
    %3291 = vmatprep.subr.bf16.mxu0 %v1183
    %3292 = vmatpush1.bf16.msra.mxu0 %v1182
    %3293 = vmatprep.subr.bf16.mxu0 %v1187
    %3294 = vmatpush1.bf16.msra.mxu0 %v1186
    %3295 = vmatprep.subr.bf16.mxu0 %v1191
    %3296 = vmatpush1.bf16.msra.mxu0 %v1190
    %3297 = vmatprep.subr.bf16.mxu0 %v1195
    %3298 = vmatpush1.bf16.msra.mxu0 %v1194
    %3299 = vmatprep.subr.bf16.mxu0 %v1199
    %3300 = vmatpush1.bf16.msra.mxu0 %v1198
    %3301 = vmatprep.subr.bf16.mxu0 %v1203
    %3302 = vmatpush1.bf16.msra.mxu0 %v1202
    %3303 = vmatprep.subr.bf16.mxu0 %v1207
    %3304 = vmatpush1.bf16.msra.mxu0 %v1206
    %3305 = vmatprep.subr.bf16.mxu0 %v1211
    %3306 = vmatpush1.bf16.msra.mxu0 %v1210
    %3307 = vmatprep.subr.bf16.mxu0 %v1215
    %3308 = vmatpush1.bf16.msra.mxu0 %v1214
    %3309 = vmatprep.subr.bf16.mxu0 %v1219
    %3310 = vmatpush1.bf16.msra.mxu0 %v1218
    %3311 = vmatprep.subr.bf16.mxu0 %v1223
    %3312 = vmatpush1.bf16.msra.mxu0 %v1222
    %3313 = vmatprep.subr.bf16.mxu0 %v1227
    %3314 = vmatpush1.bf16.msra.mxu0 %v1226
    %3315 = vmatprep.mubr.bf16.mxu0 %v3282
    %3316 = vmatmul.mubr.bf16.gmra.mrb[0].mxu0 %v3179
    %v3317 = vpop.f32.mrb[0].mxu0
    %v3318 = vadd.f32 %v573, %v3317
    %v3319 = vpop.f32.mrb[0].mxu0
    %v3320 = vadd.f32 %v577, %v3319
    %v3321 = vpop.f32.mrb[0].mxu0
    %v3322 = vpop.f32.mrb[0].mxu0
    %3323 = vdwg.mxu0
    %3324 = vmatprep.subr.bf16.mxu0 %v1169
    %3325 = vmatpush1.bf16.msra.mxu0 %v1168
    %3326 = vmatprep.subr.bf16.mxu0 %v1173
    %3327 = vmatpush1.bf16.msra.mxu0 %v1172
    %3328 = vmatprep.subr.bf16.mxu0 %v1177
    %3329 = vmatpush1.bf16.msra.mxu0 %v1176
    %3330 = vmatprep.subr.bf16.mxu0 %v1181
    %3331 = vmatpush1.bf16.msra.mxu0 %v1180
    %3332 = vmatprep.subr.bf16.mxu0 %v1185
    %3333 = vmatpush1.bf16.msra.mxu0 %v1184
    %3334 = vmatprep.subr.bf16.mxu0 %v1189
    %3335 = vmatpush1.bf16.msra.mxu0 %v1188
    %3336 = vmatprep.subr.bf16.mxu0 %v1193
    %3337 = vmatpush1.bf16.msra.mxu0 %v1192
    %3338 = vmatprep.subr.bf16.mxu0 %v1197
    %3339 = vmatpush1.bf16.msra.mxu0 %v1196
    %3340 = vmatprep.subr.bf16.mxu0 %v1201
    %3341 = vmatpush1.bf16.msra.mxu0 %v1200
    %3342 = vmatprep.subr.bf16.mxu0 %v1205
    %3343 = vmatpush1.bf16.msra.mxu0 %v1204
    %3344 = vmatprep.subr.bf16.mxu0 %v1209
    %3345 = vmatpush1.bf16.msra.mxu0 %v1208
    %3346 = vmatprep.subr.bf16.mxu0 %v1213
    %3347 = vmatpush1.bf16.msra.mxu0 %v1212
    %3348 = vmatprep.subr.bf16.mxu0 %v1217
    %3349 = vmatpush1.bf16.msra.mxu0 %v1216
    %3350 = vmatprep.subr.bf16.mxu0 %v1221
    %3351 = vmatpush1.bf16.msra.mxu0 %v1220
    %3352 = vmatprep.subr.bf16.mxu0 %v1225
    %3353 = vmatpush1.bf16.msra.mxu0 %v1224
    %3354 = vmatprep.subr.bf16.mxu0 %v1229
    %3355 = vmatpush1.bf16.msra.mxu0 %v1228
    %3356 = vmatprep.mubr.bf16.mxu0 %v3282
    %3357 = vmatmul.mubr.bf16.gmra.mrb[0].mxu0 %v3179
    %v3358 = vpop.f32.mrb[0].mxu0
    %v3359 = vadd.f32 %v581, %v3358
    %v3360 = vpop.f32.mrb[0].mxu0
    %v3361 = vadd.f32 %v585, %v3360
    %v3362 = vpop.f32.mrb[0].mxu0
    %v3363 = vpop.f32.mrb[0].mxu0
    %3364 = vdwg.mxu0
    %v3365 = vxor.u32 %v3318, 2147483648
    %v3366 = vmul.f32 %v3365, 1.442695
    %v3367 = vpow.pop %v3366
    %v3368 = vadd.f32 %v3367, 1.0
    %v3369 = vrcp.pop %v3368
    %v3370 = vmul.f32 1.0, %v3369
    %v3371 = vxor.u32 %v3320, 2147483648
    %v3372 = vmul.f32 %v3371, 1.442695
    %v3373 = vpow.pop %v3372
    %v3374 = vadd.f32 %v3373, 1.0
    %v3375 = vrcp.pop %v3374
    %v3376 = vmul.f32 1.0, %v3375
    %v3377 = vmul.f32 %v3370, %v3361
    %v3378 = vadd.f32 %v3359, %v3377
    %v3379 = vtanh.pop %v3378
    %v3380 = vsub.f32 1.0, %v3376
    %v3381 = vmul.f32 %v3380, %v3379
    %v3382 = vmul.f32 %v3376, %v2968
    %v3383 = vadd.f32 %v3381, %v3382
    %v3384 = vpack.c.bf16 %v3070, %v3070
    %3385 = vmatprep.subr.bf16.mxu0 %v1796
    %3386 = vmatpush1.bf16.msra.mxu0 %v1795
    %3387 = vmatprep.subr.bf16.mxu0 %v1800
    %3388 = vmatpush1.bf16.msra.mxu0 %v1799
    %3389 = vmatprep.subr.bf16.mxu0 %v1804
    %3390 = vmatpush1.bf16.msra.mxu0 %v1803
    %3391 = vmatprep.subr.bf16.mxu0 %v1808
    %3392 = vmatpush1.bf16.msra.mxu0 %v1807
    %3393 = vmatprep.subr.bf16.mxu0 %v1812
    %3394 = vmatpush1.bf16.msra.mxu0 %v1811
    %3395 = vmatprep.subr.bf16.mxu0 %v1816
    %3396 = vmatpush1.bf16.msra.mxu0 %v1815
    %3397 = vmatprep.subr.bf16.mxu0 %v1820
    %3398 = vmatpush1.bf16.msra.mxu0 %v1819
    %3399 = vmatprep.subr.bf16.mxu0 %v1824
    %3400 = vmatpush1.bf16.msra.mxu0 %v1823
    %3401 = vmatprep.subr.bf16.mxu0 %v1828
    %3402 = vmatpush1.bf16.msra.mxu0 %v1827
    %3403 = vmatprep.subr.bf16.mxu0 %v1832
    %3404 = vmatpush1.bf16.msra.mxu0 %v1831
    %3405 = vmatprep.subr.bf16.mxu0 %v1836
    %3406 = vmatpush1.bf16.msra.mxu0 %v1835
    %3407 = vmatprep.subr.bf16.mxu0 %v1840
    %3408 = vmatpush1.bf16.msra.mxu0 %v1839
    %3409 = vmatprep.subr.bf16.mxu0 %v1844
    %3410 = vmatpush1.bf16.msra.mxu0 %v1843
    %3411 = vmatprep.subr.bf16.mxu0 %v1848
    %3412 = vmatpush1.bf16.msra.mxu0 %v1847
    %3413 = vmatprep.subr.bf16.mxu0 %v1852
    %3414 = vmatpush1.bf16.msra.mxu0 %v1851
    %3415 = vmatprep.subr.bf16.mxu0 %v1856
    %3416 = vmatpush1.bf16.msra.mxu0 %v1855
    %3417 = vmatprep.mubr.bf16.mxu0 %v3384
    %3418 = vmatmul.mubr.bf16.gmra.mrb[0].mxu0 %v3282
    %v3419 = vpop.f32.mrb[0].mxu0
    %v3420 = vadd.f32 %v595, %v3419
    %v3421 = vpop.f32.mrb[0].mxu0
    %v3422 = vadd.f32 %v599, %v3421
    %v3423 = vpop.f32.mrb[0].mxu0
    %v3424 = vpop.f32.mrb[0].mxu0
    %3425 = vdwg.mxu0
    %3426 = vmatprep.subr.bf16.mxu0 %v1798
    %3427 = vmatpush1.bf16.msra.mxu0 %v1797
    %3428 = vmatprep.subr.bf16.mxu0 %v1802
    %3429 = vmatpush1.bf16.msra.mxu0 %v1801
    %3430 = vmatprep.subr.bf16.mxu0 %v1806
    %3431 = vmatpush1.bf16.msra.mxu0 %v1805
    %3432 = vmatprep.subr.bf16.mxu0 %v1810
    %3433 = vmatpush1.bf16.msra.mxu0 %v1809
    %3434 = vmatprep.subr.bf16.mxu0 %v1814
    %3435 = vmatpush1.bf16.msra.mxu0 %v1813
    %3436 = vmatprep.subr.bf16.mxu0 %v1818
    %3437 = vmatpush1.bf16.msra.mxu0 %v1817
    %3438 = vmatprep.subr.bf16.mxu0 %v1822
    %3439 = vmatpush1.bf16.msra.mxu0 %v1821
    %3440 = vmatprep.subr.bf16.mxu0 %v1826
    %3441 = vmatpush1.bf16.msra.mxu0 %v1825
    %3442 = vmatprep.subr.bf16.mxu0 %v1830
    %3443 = vmatpush1.bf16.msra.mxu0 %v1829
    %3444 = vmatprep.subr.bf16.mxu0 %v1834
    %3445 = vmatpush1.bf16.msra.mxu0 %v1833
    %3446 = vmatprep.subr.bf16.mxu0 %v1838
    %3447 = vmatpush1.bf16.msra.mxu0 %v1837
    %3448 = vmatprep.subr.bf16.mxu0 %v1842
    %3449 = vmatpush1.bf16.msra.mxu0 %v1841
    %3450 = vmatprep.subr.bf16.mxu0 %v1846
    %3451 = vmatpush1.bf16.msra.mxu0 %v1845
    %3452 = vmatprep.subr.bf16.mxu0 %v1850
    %3453 = vmatpush1.bf16.msra.mxu0 %v1849
    %3454 = vmatprep.subr.bf16.mxu0 %v1854
    %3455 = vmatpush1.bf16.msra.mxu0 %v1853
    %3456 = vmatprep.subr.bf16.mxu0 %v1858
    %3457 = vmatpush1.bf16.msra.mxu0 %v1857
    %3458 = vmatprep.mubr.bf16.mxu0 %v3384
    %3459 = vmatmul.mubr.bf16.gmra.mrb[0].mxu0 %v3282
    %v3460 = vpop.f32.mrb[0].mxu0
    %v3461 = vadd.f32 %v603, %v3460
    %v3462 = vpop.f32.mrb[0].mxu0
    %v3463 = vadd.f32 %v607, %v3462
    %v3464 = vpop.f32.mrb[0].mxu0
    %v3465 = vpop.f32.mrb[0].mxu0
    %3466 = vdwg.mxu0
    %v3467 = vxor.u32 %v3420, 2147483648
    %v3468 = vmul.f32 %v3467, 1.442695
    %v3469 = vpow.pop %v3468
    %v3470 = vadd.f32 %v3469, 1.0
    %v3471 = vrcp.pop %v3470
    %v3472 = vmul.f32 1.0, %v3471
    %v3473 = vxor.u32 %v3422, 2147483648
    %v3474 = vmul.f32 %v3473, 1.442695
    %v3475 = vpow.pop %v3474
    %v3476 = vadd.f32 %v3475, 1.0
    %v3477 = vrcp.pop %v3476
    %v3478 = vmul.f32 1.0, %v3477
    %v3479 = vmul.f32 %v3472, %v3463
    %v3480 = vadd.f32 %v3461, %v3479
    %v3481 = vtanh.pop %v3480
    %v3482 = vsub.f32 1.0, %v3478
    %v3483 = vmul.f32 %v3482, %v3481
    %v3484 = vmul.f32 %v3478, %v3070
    %v3485 = vadd.f32 %v3483, %v3484
    %v3486 = vpack.c.bf16 %v3172, %v3172
    %3487 = vmatprep.subr.bf16.mxu0 %v2530
    %3488 = vmatpush1.bf16.msra.mxu0 %v2529
    %3489 = vmatprep.subr.bf16.mxu0 %v2534
    %3490 = vmatpush1.bf16.msra.mxu0 %v2533
    %3491 = vmatprep.subr.bf16.mxu0 %v2538
    %3492 = vmatpush1.bf16.msra.mxu0 %v2537
    %3493 = vmatprep.subr.bf16.mxu0 %v2542
    %3494 = vmatpush1.bf16.msra.mxu0 %v2541
    %3495 = vmatprep.subr.bf16.mxu0 %v2546
    %3496 = vmatpush1.bf16.msra.mxu0 %v2545
    %3497 = vmatprep.subr.bf16.mxu0 %v2550
    %3498 = vmatpush1.bf16.msra.mxu0 %v2549
    %3499 = vmatprep.subr.bf16.mxu0 %v2554
    %3500 = vmatpush1.bf16.msra.mxu0 %v2553
    %3501 = vmatprep.subr.bf16.mxu0 %v2558
    %3502 = vmatpush1.bf16.msra.mxu0 %v2557
    %3503 = vmatprep.subr.bf16.mxu0 %v2562
    %3504 = vmatpush1.bf16.msra.mxu0 %v2561
    %3505 = vmatprep.subr.bf16.mxu0 %v2566
    %3506 = vmatpush1.bf16.msra.mxu0 %v2565
    %3507 = vmatprep.subr.bf16.mxu0 %v2570
    %3508 = vmatpush1.bf16.msra.mxu0 %v2569
    %3509 = vmatprep.subr.bf16.mxu0 %v2574
    %3510 = vmatpush1.bf16.msra.mxu0 %v2573
    %3511 = vmatprep.subr.bf16.mxu0 %v2578
    %3512 = vmatpush1.bf16.msra.mxu0 %v2577
    %3513 = vmatprep.subr.bf16.mxu0 %v2582
    %3514 = vmatpush1.bf16.msra.mxu0 %v2581
    %3515 = vmatprep.subr.bf16.mxu0 %v2586
    %3516 = vmatpush1.bf16.msra.mxu0 %v2585
    %3517 = vmatprep.subr.bf16.mxu0 %v2590
    %3518 = vmatpush1.bf16.msra.mxu0 %v2589
    %3519 = vmatprep.mubr.bf16.mxu0 %v3486
    %3520 = vmatmul.mubr.bf16.gmra.mrb[0].mxu0 %v3384
    %v3521 = vpop.f32.mrb[0].mxu0
    %v3522 = vadd.f32 %v617, %v3521
    %v3523 = vpop.f32.mrb[0].mxu0
    %v3524 = vadd.f32 %v621, %v3523
    %v3525 = vpop.f32.mrb[0].mxu0
    %v3526 = vpop.f32.mrb[0].mxu0
    %3527 = vdwg.mxu0
    %3528 = vmatprep.subr.bf16.mxu0 %v2532
    %3529 = vmatpush1.bf16.msra.mxu0 %v2531
    %3530 = vmatprep.subr.bf16.mxu0 %v2536
    %3531 = vmatpush1.bf16.msra.mxu0 %v2535
    %3532 = vmatprep.subr.bf16.mxu0 %v2540
    %3533 = vmatpush1.bf16.msra.mxu0 %v2539
    %3534 = vmatprep.subr.bf16.mxu0 %v2544
    %3535 = vmatpush1.bf16.msra.mxu0 %v2543
    %3536 = vmatprep.subr.bf16.mxu0 %v2548
    %3537 = vmatpush1.bf16.msra.mxu0 %v2547
    %3538 = vmatprep.subr.bf16.mxu0 %v2552
    %3539 = vmatpush1.bf16.msra.mxu0 %v2551
    %3540 = vmatprep.subr.bf16.mxu0 %v2556
    %3541 = vmatpush1.bf16.msra.mxu0 %v2555
    %3542 = vmatprep.subr.bf16.mxu0 %v2560
    %3543 = vmatpush1.bf16.msra.mxu0 %v2559
    %3544 = vmatprep.subr.bf16.mxu0 %v2564
    %3545 = vmatpush1.bf16.msra.mxu0 %v2563
    %3546 = vmatprep.subr.bf16.mxu0 %v2568
    %3547 = vmatpush1.bf16.msra.mxu0 %v2567
    %3548 = vmatprep.subr.bf16.mxu0 %v2572
    %3549 = vmatpush1.bf16.msra.mxu0 %v2571
    %3550 = vmatprep.subr.bf16.mxu0 %v2576
    %3551 = vmatpush1.bf16.msra.mxu0 %v2575
    %3552 = vmatprep.subr.bf16.mxu0 %v2580
    %3553 = vmatpush1.bf16.msra.mxu0 %v2579
    %3554 = vmatprep.subr.bf16.mxu0 %v2584
    %3555 = vmatpush1.bf16.msra.mxu0 %v2583
    %3556 = vmatprep.subr.bf16.mxu0 %v2588
    %3557 = vmatpush1.bf16.msra.mxu0 %v2587
    %3558 = vmatprep.subr.bf16.mxu0 %v2592
    %3559 = vmatpush1.bf16.msra.mxu0 %v2591
    %3560 = vmatprep.mubr.bf16.mxu0 %v3486
    %3561 = vmatmul.mubr.bf16.gmra.mrb[0].mxu0 %v3384
    %v3562 = vpop.f32.mrb[0].mxu0
    %v3563 = vadd.f32 %v625, %v3562
    %v3564 = vpop.f32.mrb[0].mxu0
    %v3565 = vadd.f32 %v629, %v3564
    %v3566 = vpop.f32.mrb[0].mxu0
    %v3567 = vpop.f32.mrb[0].mxu0
    %3568 = vdwg.mxu0
    %v3569 = vxor.u32 %v3522, 2147483648
    %v3570 = vmul.f32 %v3569, 1.442695
    %v3571 = vpow.pop %v3570
    %v3572 = vadd.f32 %v3571, 1.0
    %v3573 = vrcp.pop %v3572
    %v3574 = vmul.f32 1.0, %v3573
    %v3575 = vxor.u32 %v3524, 2147483648
    %v3576 = vmul.f32 %v3575, 1.442695
    %v3577 = vpow.pop %v3576
    %v3578 = vadd.f32 %v3577, 1.0
    %v3579 = vrcp.pop %v3578
    %v3580 = vmul.f32 1.0, %v3579
    %v3581 = vmul.f32 %v3574, %v3565
    %v3582 = vadd.f32 %v3563, %v3581
    %v3583 = vtanh.pop %v3582
    %v3584 = vsub.f32 1.0, %v3580
    %v3585 = vmul.f32 %v3584, %v3583
    %v3586 = vmul.f32 %v3580, %v3172
    %v3587 = vadd.f32 %v3585, %v3586
    %s3588 = smul.u32 6, 3
    %s3589 = smul.addr %s3588, 8
    %s3590 = scalar_lea.vmem [#allocation2], %s3589
    %v3591 = vld [vmem:[%s3590] sm:$0xff]
    %v3592 = vld [vmem:[%s3590 + $0x8] sm:$0xff]
    %v3593 = vld [vmem:[%s3590 + $0x10] sm:$0xff]
    %v3594 = vpack.c.bf16 %v3281, %v3281
    %3595 = vmatprep.subr.bf16.mxu0 %v718
    %3596 = vmatpush1.bf16.msra.mxu0 %v717
    %3597 = vmatprep.subr.bf16.mxu0 %v721
    %3598 = vmatpush1.bf16.msra.mxu0 %v720
    %3599 = vmatprep.subr.bf16.mxu0 %v724
    %3600 = vmatpush1.bf16.msra.mxu0 %v723
    %3601 = vmatprep.subr.bf16.mxu0 %v727
    %3602 = vmatpush1.bf16.msra.mxu0 %v726
    %3603 = vmatprep.subr.bf16.mxu0 %v730
    %3604 = vmatpush1.bf16.msra.mxu0 %v729
    %3605 = vmatprep.subr.bf16.mxu0 %v733
    %3606 = vmatpush1.bf16.msra.mxu0 %v732
    %3607 = vmatprep.subr.bf16.mxu0 %v736
    %3608 = vmatpush1.bf16.msra.mxu0 %v735
    %3609 = vmatprep.subr.bf16.mxu0 %v739
    %3610 = vmatpush1.bf16.msra.mxu0 %v738
    %3611 = vmatprep.subr.bf16.mxu0 0
    %3612 = vmatpush1.bf16.msra.mxu0 0
    %3613 = vmatprep.subr.bf16.mxu0 0
    %3614 = vmatpush1.bf16.msra.mxu0 0
    %3615 = vmatprep.subr.bf16.mxu0 0
    %3616 = vmatpush1.bf16.msra.mxu0 0
    %3617 = vmatprep.subr.bf16.mxu0 0
    %3618 = vmatpush1.bf16.msra.mxu0 0
    %3619 = vmatprep.subr.bf16.mxu0 0
    %3620 = vmatpush1.bf16.msra.mxu0 0
    %3621 = vmatprep.subr.bf16.mxu0 0
    %3622 = vmatpush1.bf16.msra.mxu0 0
    %3623 = vmatprep.subr.bf16.mxu0 0
    %3624 = vmatpush1.bf16.msra.mxu0 0
    %3625 = vmatprep.subr.bf16.mxu0 0
    %3626 = vmatpush1.bf16.msra.mxu0 0
    %3627 = vmatprep.mubr.bf16.mxu0 0
    %3628 = vmatmul.mubr.bf16.gmra.mrb[0].mxu0 %v3594
    %v3629 = vpop.f32.mrb[0].mxu0
    %v3630 = vadd.f32 %v364, %v3629
    %v3631 = vpop.f32.mrb[0].mxu0
    %v3632 = vadd.f32 %v368, %v3631
    %v3633 = vpop.f32.mrb[0].mxu0
    %v3634 = vpop.f32.mrb[0].mxu0
    %3635 = vdwg.mxu0
    %3636 = vmatprep.subr.bf16.mxu0 0
    %3637 = vmatpush1.bf16.msra.mxu0 %v719
    %3638 = vmatprep.subr.bf16.mxu0 0
    %3639 = vmatpush1.bf16.msra.mxu0 %v722
    %3640 = vmatprep.subr.bf16.mxu0 0
    %3641 = vmatpush1.bf16.msra.mxu0 %v725
    %3642 = vmatprep.subr.bf16.mxu0 0
    %3643 = vmatpush1.bf16.msra.mxu0 %v728
    %3644 = vmatprep.subr.bf16.mxu0 0
    %3645 = vmatpush1.bf16.msra.mxu0 %v731
    %3646 = vmatprep.subr.bf16.mxu0 0
    %3647 = vmatpush1.bf16.msra.mxu0 %v734
    %3648 = vmatprep.subr.bf16.mxu0 0
    %3649 = vmatpush1.bf16.msra.mxu0 %v737
    %3650 = vmatprep.subr.bf16.mxu0 0
    %3651 = vmatpush1.bf16.msra.mxu0 %v740
    %3652 = vmatprep.subr.bf16.mxu0 0
    %3653 = vmatpush1.bf16.msra.mxu0 0
    %3654 = vmatprep.subr.bf16.mxu0 0
    %3655 = vmatpush1.bf16.msra.mxu0 0
    %3656 = vmatprep.subr.bf16.mxu0 0
    %3657 = vmatpush1.bf16.msra.mxu0 0
    %3658 = vmatprep.subr.bf16.mxu0 0
    %3659 = vmatpush1.bf16.msra.mxu0 0
    %3660 = vmatprep.subr.bf16.mxu0 0
    %3661 = vmatpush1.bf16.msra.mxu0 0
    %3662 = vmatprep.subr.bf16.mxu0 0
    %3663 = vmatpush1.bf16.msra.mxu0 0
    %3664 = vmatprep.subr.bf16.mxu0 0
    %3665 = vmatpush1.bf16.msra.mxu0 0
    %3666 = vmatprep.subr.bf16.mxu0 0
    %3667 = vmatpush1.bf16.msra.mxu0 0
    %3668 = vmatprep.mubr.bf16.mxu0 0
    %3669 = vmatmul.mubr.bf16.gmra.mrb[0].mxu0 %v3594
    %v3670 = vpop.f32.mrb[0].mxu0
    %v3671 = vadd.f32 %v372, %v3670
    %v3672 = vpop.f32.mrb[0].mxu0
    %v3673 = vpop.f32.mrb[0].mxu0
    %v3674 = vpop.f32.mrb[0].mxu0
    %3675 = vdwg.mxu0
    %v3676 = vadd.f32 %v3591, %v3630
    %v3677 = vxor.u32 %v3676, 2147483648
    %v3678 = vmul.f32 %v3677, 1.442695
    %v3679 = vpow.pop %v3678
    %v3680 = vadd.f32 %v3679, 1.0
    %v3681 = vrcp.pop %v3680
    %v3682 = vmul.f32 1.0, %v3681
    %v3683 = vadd.f32 %v3592, %v3632
    %v3684 = vxor.u32 %v3683, 2147483648
    %v3685 = vmul.f32 %v3684, 1.442695
    %v3686 = vpow.pop %v3685
    %v3687 = vadd.f32 %v3686, 1.0
    %v3688 = vrcp.pop %v3687
    %v3689 = vmul.f32 1.0, %v3688
    %v3690 = vmul.f32 %v3682, %v3671
    %v3691 = vadd.f32 %v3593, %v3690
    %v3692 = vtanh.pop %v3691
    %v3693 = vsub.f32 1.0, %v3689
    %v3694 = vmul.f32 %v3693, %v3692
    %v3695 = vmul.f32 %v3689, %v3281
    %v3696 = vadd.f32 %v3694, %v3695
    %v3697 = vpack.c.bf16 %v3383, %v3383
    %3698 = vmatprep.subr.bf16.mxu0 %v1167
    %3699 = vmatpush1.bf16.msra.mxu0 %v1166
    %3700 = vmatprep.subr.bf16.mxu0 %v1171
    %3701 = vmatpush1.bf16.msra.mxu0 %v1170
    %3702 = vmatprep.subr.bf16.mxu0 %v1175
    %3703 = vmatpush1.bf16.msra.mxu0 %v1174
    %3704 = vmatprep.subr.bf16.mxu0 %v1179
    %3705 = vmatpush1.bf16.msra.mxu0 %v1178
    %3706 = vmatprep.subr.bf16.mxu0 %v1183
    %3707 = vmatpush1.bf16.msra.mxu0 %v1182
    %3708 = vmatprep.subr.bf16.mxu0 %v1187
    %3709 = vmatpush1.bf16.msra.mxu0 %v1186
    %3710 = vmatprep.subr.bf16.mxu0 %v1191
    %3711 = vmatpush1.bf16.msra.mxu0 %v1190
    %3712 = vmatprep.subr.bf16.mxu0 %v1195
    %3713 = vmatpush1.bf16.msra.mxu0 %v1194
    %3714 = vmatprep.subr.bf16.mxu0 %v1199
    %3715 = vmatpush1.bf16.msra.mxu0 %v1198
    %3716 = vmatprep.subr.bf16.mxu0 %v1203
    %3717 = vmatpush1.bf16.msra.mxu0 %v1202
    %3718 = vmatprep.subr.bf16.mxu0 %v1207
    %3719 = vmatpush1.bf16.msra.mxu0 %v1206
    %3720 = vmatprep.subr.bf16.mxu0 %v1211
    %3721 = vmatpush1.bf16.msra.mxu0 %v1210
    %3722 = vmatprep.subr.bf16.mxu0 %v1215
    %3723 = vmatpush1.bf16.msra.mxu0 %v1214
    %3724 = vmatprep.subr.bf16.mxu0 %v1219
    %3725 = vmatpush1.bf16.msra.mxu0 %v1218
    %3726 = vmatprep.subr.bf16.mxu0 %v1223
    %3727 = vmatpush1.bf16.msra.mxu0 %v1222
    %3728 = vmatprep.subr.bf16.mxu0 %v1227
    %3729 = vmatpush1.bf16.msra.mxu0 %v1226
    %3730 = vmatprep.mubr.bf16.mxu0 %v3697
    %3731 = vmatmul.mubr.bf16.gmra.mrb[0].mxu0 %v3594
    %v3732 = vpop.f32.mrb[0].mxu0
    %v3733 = vadd.f32 %v573, %v3732
    %v3734 = vpop.f32.mrb[0].mxu0
    %v3735 = vadd.f32 %v577, %v3734
    %v3736 = vpop.f32.mrb[0].mxu0
    %v3737 = vpop.f32.mrb[0].mxu0
    %3738 = vdwg.mxu0
    %3739 = vmatprep.subr.bf16.mxu0 %v1169
    %3740 = vmatpush1.bf16.msra.mxu0 %v1168
    %3741 = vmatprep.subr.bf16.mxu0 %v1173
    %3742 = vmatpush1.bf16.msra.mxu0 %v1172
    %3743 = vmatprep.subr.bf16.mxu0 %v1177
    %3744 = vmatpush1.bf16.msra.mxu0 %v1176
    %3745 = vmatprep.subr.bf16.mxu0 %v1181
    %3746 = vmatpush1.bf16.msra.mxu0 %v1180
    %3747 = vmatprep.subr.bf16.mxu0 %v1185
    %3748 = vmatpush1.bf16.msra.mxu0 %v1184
    %3749 = vmatprep.subr.bf16.mxu0 %v1189
    %3750 = vmatpush1.bf16.msra.mxu0 %v1188
    %3751 = vmatprep.subr.bf16.mxu0 %v1193
    %3752 = vmatpush1.bf16.msra.mxu0 %v1192
    %3753 = vmatprep.subr.bf16.mxu0 %v1197
    %3754 = vmatpush1.bf16.msra.mxu0 %v1196
    %3755 = vmatprep.subr.bf16.mxu0 %v1201
    %3756 = vmatpush1.bf16.msra.mxu0 %v1200
    %3757 = vmatprep.subr.bf16.mxu0 %v1205
    %3758 = vmatpush1.bf16.msra.mxu0 %v1204
    %3759 = vmatprep.subr.bf16.mxu0 %v1209
    %3760 = vmatpush1.bf16.msra.mxu0 %v1208
    %3761 = vmatprep.subr.bf16.mxu0 %v1213
    %3762 = vmatpush1.bf16.msra.mxu0 %v1212
    %3763 = vmatprep.subr.bf16.mxu0 %v1217
    %3764 = vmatpush1.bf16.msra.mxu0 %v1216
    %3765 = vmatprep.subr.bf16.mxu0 %v1221
    %3766 = vmatpush1.bf16.msra.mxu0 %v1220
    %3767 = vmatprep.subr.bf16.mxu0 %v1225
    %3768 = vmatpush1.bf16.msra.mxu0 %v1224
    %3769 = vmatprep.subr.bf16.mxu0 %v1229
    %3770 = vmatpush1.bf16.msra.mxu0 %v1228
    %3771 = vmatprep.mubr.bf16.mxu0 %v3697
    %3772 = vmatmul.mubr.bf16.gmra.mrb[0].mxu0 %v3594
    %v3773 = vpop.f32.mrb[0].mxu0
    %v3774 = vadd.f32 %v581, %v3773
    %v3775 = vpop.f32.mrb[0].mxu0
    %v3776 = vadd.f32 %v585, %v3775
    %v3777 = vpop.f32.mrb[0].mxu0
    %v3778 = vpop.f32.mrb[0].mxu0
    %3779 = vdwg.mxu0
    %v3780 = vxor.u32 %v3733, 2147483648
    %v3781 = vmul.f32 %v3780, 1.442695
    %v3782 = vpow.pop %v3781
    %v3783 = vadd.f32 %v3782, 1.0
    %v3784 = vrcp.pop %v3783
    %v3785 = vmul.f32 1.0, %v3784
    %v3786 = vxor.u32 %v3735, 2147483648
    %v3787 = vmul.f32 %v3786, 1.442695
    %v3788 = vpow.pop %v3787
    %v3789 = vadd.f32 %v3788, 1.0
    %v3790 = vrcp.pop %v3789
    %v3791 = vmul.f32 1.0, %v3790
    %v3792 = vmul.f32 %v3785, %v3776
    %v3793 = vadd.f32 %v3774, %v3792
    %v3794 = vtanh.pop %v3793
    %v3795 = vsub.f32 1.0, %v3791
    %v3796 = vmul.f32 %v3795, %v3794
    %v3797 = vmul.f32 %v3791, %v3383
    %v3798 = vadd.f32 %v3796, %v3797
    %v3799 = vpack.c.bf16 %v3485, %v3485
    %3800 = vmatprep.subr.bf16.mxu0 %v1796
    %3801 = vmatpush1.bf16.msra.mxu0 %v1795
    %3802 = vmatprep.subr.bf16.mxu0 %v1800
    %3803 = vmatpush1.bf16.msra.mxu0 %v1799
    %3804 = vmatprep.subr.bf16.mxu0 %v1804
    %3805 = vmatpush1.bf16.msra.mxu0 %v1803
    %3806 = vmatprep.subr.bf16.mxu0 %v1808
    %3807 = vmatpush1.bf16.msra.mxu0 %v1807
    %3808 = vmatprep.subr.bf16.mxu0 %v1812
    %3809 = vmatpush1.bf16.msra.mxu0 %v1811
    %3810 = vmatprep.subr.bf16.mxu0 %v1816
    %3811 = vmatpush1.bf16.msra.mxu0 %v1815
    %3812 = vmatprep.subr.bf16.mxu0 %v1820
    %3813 = vmatpush1.bf16.msra.mxu0 %v1819
    %3814 = vmatprep.subr.bf16.mxu0 %v1824
    %3815 = vmatpush1.bf16.msra.mxu0 %v1823
    %3816 = vmatprep.subr.bf16.mxu0 %v1828
    %3817 = vmatpush1.bf16.msra.mxu0 %v1827
    %3818 = vmatprep.subr.bf16.mxu0 %v1832
    %3819 = vmatpush1.bf16.msra.mxu0 %v1831
    %3820 = vmatprep.subr.bf16.mxu0 %v1836
    %3821 = vmatpush1.bf16.msra.mxu0 %v1835
    %3822 = vmatprep.subr.bf16.mxu0 %v1840
    %3823 = vmatpush1.bf16.msra.mxu0 %v1839
    %3824 = vmatprep.subr.bf16.mxu0 %v1844
    %3825 = vmatpush1.bf16.msra.mxu0 %v1843
    %3826 = vmatprep.subr.bf16.mxu0 %v1848
    %3827 = vmatpush1.bf16.msra.mxu0 %v1847
    %3828 = vmatprep.subr.bf16.mxu0 %v1852
    %3829 = vmatpush1.bf16.msra.mxu0 %v1851
    %3830 = vmatprep.subr.bf16.mxu0 %v1856
    %3831 = vmatpush1.bf16.msra.mxu0 %v1855
    %3832 = vmatprep.mubr.bf16.mxu0 %v3799
    %3833 = vmatmul.mubr.bf16.gmra.mrb[0].mxu0 %v3697
    %v3834 = vpop.f32.mrb[0].mxu0
    %v3835 = vadd.f32 %v595, %v3834
    %v3836 = vpop.f32.mrb[0].mxu0
    %v3837 = vadd.f32 %v599, %v3836
    %v3838 = vpop.f32.mrb[0].mxu0
    %v3839 = vpop.f32.mrb[0].mxu0
    %3840 = vdwg.mxu0
    %3841 = vmatprep.subr.bf16.mxu0 %v1798
    %3842 = vmatpush1.bf16.msra.mxu0 %v1797
    %3843 = vmatprep.subr.bf16.mxu0 %v1802
    %3844 = vmatpush1.bf16.msra.mxu0 %v1801
    %3845 = vmatprep.subr.bf16.mxu0 %v1806
    %3846 = vmatpush1.bf16.msra.mxu0 %v1805
    %3847 = vmatprep.subr.bf16.mxu0 %v1810
    %3848 = vmatpush1.bf16.msra.mxu0 %v1809
    %3849 = vmatprep.subr.bf16.mxu0 %v1814
    %3850 = vmatpush1.bf16.msra.mxu0 %v1813
    %3851 = vmatprep.subr.bf16.mxu0 %v1818
    %3852 = vmatpush1.bf16.msra.mxu0 %v1817
    %3853 = vmatprep.subr.bf16.mxu0 %v1822
    %3854 = vmatpush1.bf16.msra.mxu0 %v1821
    %3855 = vmatprep.subr.bf16.mxu0 %v1826
    %3856 = vmatpush1.bf16.msra.mxu0 %v1825
    %3857 = vmatprep.subr.bf16.mxu0 %v1830
    %3858 = vmatpush1.bf16.msra.mxu0 %v1829
    %3859 = vmatprep.subr.bf16.mxu0 %v1834
    %3860 = vmatpush1.bf16.msra.mxu0 %v1833
    %3861 = vmatprep.subr.bf16.mxu0 %v1838
    %3862 = vmatpush1.bf16.msra.mxu0 %v1837
    %3863 = vmatprep.subr.bf16.mxu0 %v1842
    %3864 = vmatpush1.bf16.msra.mxu0 %v1841
    %3865 = vmatprep.subr.bf16.mxu0 %v1846
    %3866 = vmatpush1.bf16.msra.mxu0 %v1845
    %3867 = vmatprep.subr.bf16.mxu0 %v1850
    %3868 = vmatpush1.bf16.msra.mxu0 %v1849
    %3869 = vmatprep.subr.bf16.mxu0 %v1854
    %3870 = vmatpush1.bf16.msra.mxu0 %v1853
    %3871 = vmatprep.subr.bf16.mxu0 %v1858
    %3872 = vmatpush1.bf16.msra.mxu0 %v1857
    %3873 = vmatprep.mubr.bf16.mxu0 %v3799
    %3874 = vmatmul.mubr.bf16.gmra.mrb[0].mxu0 %v3697
    %v3875 = vpop.f32.mrb[0].mxu0
    %v3876 = vadd.f32 %v603, %v3875
    %v3877 = vpop.f32.mrb[0].mxu0
    %v3878 = vadd.f32 %v607, %v3877
    %v3879 = vpop.f32.mrb[0].mxu0
    %v3880 = vpop.f32.mrb[0].mxu0
    %3881 = vdwg.mxu0
    %v3882 = vxor.u32 %v3835, 2147483648
    %v3883 = vmul.f32 %v3882, 1.442695
    %v3884 = vpow.pop %v3883
    %v3885 = vadd.f32 %v3884, 1.0
    %v3886 = vrcp.pop %v3885
    %v3887 = vmul.f32 1.0, %v3886
    %v3888 = vxor.u32 %v3837, 2147483648
    %v3889 = vmul.f32 %v3888, 1.442695
    %v3890 = vpow.pop %v3889
    %v3891 = vadd.f32 %v3890, 1.0
    %v3892 = vrcp.pop %v3891
    %v3893 = vmul.f32 1.0, %v3892
    %v3894 = vmul.f32 %v3887, %v3878
    %v3895 = vadd.f32 %v3876, %v3894
    %v3896 = vtanh.pop %v3895
    %v3897 = vsub.f32 1.0, %v3893
    %v3898 = vmul.f32 %v3897, %v3896
    %v3899 = vmul.f32 %v3893, %v3485
    %v3900 = vadd.f32 %v3898, %v3899
    %v3901 = vpack.c.bf16 %v3587, %v3587
    %3902 = vmatprep.subr.bf16.mxu0 %v2530
    %3903 = vmatpush1.bf16.msra.mxu0 %v2529
    %3904 = vmatprep.subr.bf16.mxu0 %v2534
    %3905 = vmatpush1.bf16.msra.mxu0 %v2533
    %3906 = vmatprep.subr.bf16.mxu0 %v2538
    %3907 = vmatpush1.bf16.msra.mxu0 %v2537
    %3908 = vmatprep.subr.bf16.mxu0 %v2542
    %3909 = vmatpush1.bf16.msra.mxu0 %v2541
    %3910 = vmatprep.subr.bf16.mxu0 %v2546
    %3911 = vmatpush1.bf16.msra.mxu0 %v2545
    %3912 = vmatprep.subr.bf16.mxu0 %v2550
    %3913 = vmatpush1.bf16.msra.mxu0 %v2549
    %3914 = vmatprep.subr.bf16.mxu0 %v2554
    %3915 = vmatpush1.bf16.msra.mxu0 %v2553
    %3916 = vmatprep.subr.bf16.mxu0 %v2558
    %3917 = vmatpush1.bf16.msra.mxu0 %v2557
    %3918 = vmatprep.subr.bf16.mxu0 %v2562
    %3919 = vmatpush1.bf16.msra.mxu0 %v2561
    %3920 = vmatprep.subr.bf16.mxu0 %v2566
    %3921 = vmatpush1.bf16.msra.mxu0 %v2565
    %3922 = vmatprep.subr.bf16.mxu0 %v2570
    %3923 = vmatpush1.bf16.msra.mxu0 %v2569
    %3924 = vmatprep.subr.bf16.mxu0 %v2574
    %3925 = vmatpush1.bf16.msra.mxu0 %v2573
    %3926 = vmatprep.subr.bf16.mxu0 %v2578
    %3927 = vmatpush1.bf16.msra.mxu0 %v2577
    %3928 = vmatprep.subr.bf16.mxu0 %v2582
    %3929 = vmatpush1.bf16.msra.mxu0 %v2581
    %3930 = vmatprep.subr.bf16.mxu0 %v2586
    %3931 = vmatpush1.bf16.msra.mxu0 %v2585
    %3932 = vmatprep.subr.bf16.mxu0 %v2590
    %3933 = vmatpush1.bf16.msra.mxu0 %v2589
    %3934 = vmatprep.mubr.bf16.mxu0 %v3901
    %3935 = vmatmul.mubr.bf16.gmra.mrb[0].mxu0 %v3799
    %v3936 = vpop.f32.mrb[0].mxu0
    %v3937 = vadd.f32 %v617, %v3936
    %v3938 = vpop.f32.mrb[0].mxu0
    %v3939 = vadd.f32 %v621, %v3938
    %v3940 = vpop.f32.mrb[0].mxu0
    %v3941 = vpop.f32.mrb[0].mxu0
    %3942 = vdwg.mxu0
    %3943 = vmatprep.subr.bf16.mxu0 %v2532
    %3944 = vmatpush1.bf16.msra.mxu0 %v2531
    %3945 = vmatprep.subr.bf16.mxu0 %v2536
    %3946 = vmatpush1.bf16.msra.mxu0 %v2535
    %3947 = vmatprep.subr.bf16.mxu0 %v2540
    %3948 = vmatpush1.bf16.msra.mxu0 %v2539
    %3949 = vmatprep.subr.bf16.mxu0 %v2544
    %3950 = vmatpush1.bf16.msra.mxu0 %v2543
    %3951 = vmatprep.subr.bf16.mxu0 %v2548
    %3952 = vmatpush1.bf16.msra.mxu0 %v2547
    %3953 = vmatprep.subr.bf16.mxu0 %v2552
    %3954 = vmatpush1.bf16.msra.mxu0 %v2551
    %3955 = vmatprep.subr.bf16.mxu0 %v2556
    %3956 = vmatpush1.bf16.msra.mxu0 %v2555
    %3957 = vmatprep.subr.bf16.mxu0 %v2560
    %3958 = vmatpush1.bf16.msra.mxu0 %v2559
    %3959 = vmatprep.subr.bf16.mxu0 %v2564
    %3960 = vmatpush1.bf16.msra.mxu0 %v2563
    %3961 = vmatprep.subr.bf16.mxu0 %v2568
    %3962 = vmatpush1.bf16.msra.mxu0 %v2567
    %3963 = vmatprep.subr.bf16.mxu0 %v2572
    %3964 = vmatpush1.bf16.msra.mxu0 %v2571
    %3965 = vmatprep.subr.bf16.mxu0 %v2576
    %3966 = vmatpush1.bf16.msra.mxu0 %v2575
    %3967 = vmatprep.subr.bf16.mxu0 %v2580
    %3968 = vmatpush1.bf16.msra.mxu0 %v2579
    %3969 = vmatprep.subr.bf16.mxu0 %v2584
    %3970 = vmatpush1.bf16.msra.mxu0 %v2583
    %3971 = vmatprep.subr.bf16.mxu0 %v2588
    %3972 = vmatpush1.bf16.msra.mxu0 %v2587
    %3973 = vmatprep.subr.bf16.mxu0 %v2592
    %3974 = vmatpush1.bf16.msra.mxu0 %v2591
    %3975 = vmatprep.mubr.bf16.mxu0 %v3901
    %3976 = vmatmul.mubr.bf16.gmra.mrb[0].mxu0 %v3799
    %v3977 = vpop.f32.mrb[0].mxu0
    %v3978 = vadd.f32 %v625, %v3977
    %v3979 = vpop.f32.mrb[0].mxu0
    %v3980 = vadd.f32 %v629, %v3979
    %v3981 = vpop.f32.mrb[0].mxu0
    %v3982 = vpop.f32.mrb[0].mxu0
    %3983 = vdwg.mxu0
    %v3984 = vxor.u32 %v3937, 2147483648
    %v3985 = vmul.f32 %v3984, 1.442695
    %v3986 = vpow.pop %v3985
    %v3987 = vadd.f32 %v3986, 1.0
    %v3988 = vrcp.pop %v3987
    %v3989 = vmul.f32 1.0, %v3988
    %v3990 = vxor.u32 %v3939, 2147483648
    %v3991 = vmul.f32 %v3990, 1.442695
    %v3992 = vpow.pop %v3991
    %v3993 = vadd.f32 %v3992, 1.0
    %v3994 = vrcp.pop %v3993
    %v3995 = vmul.f32 1.0, %v3994
    %v3996 = vmul.f32 %v3989, %v3980
    %v3997 = vadd.f32 %v3978, %v3996
    %v3998 = vtanh.pop %v3997
    %v3999 = vsub.f32 1.0, %v3995
    %v4000 = vmul.f32 %v3999, %v3998
    %v4001 = vmul.f32 %v3995, %v3587
    %v4002 = vadd.f32 %v4000, %v4001
    %s4003 = smul.u32 7, 3
    %s4004 = smul.addr %s4003, 8
    %s4005 = scalar_lea.vmem [#allocation2], %s4004
    %v4006 = vld [vmem:[%s4005] sm:$0xff]
    %v4007 = vld [vmem:[%s4005 + $0x8] sm:$0xff]
    %v4008 = vld [vmem:[%s4005 + $0x10] sm:$0xff]
    %v4009 = vpack.c.bf16 %v3696, %v3696
    %4010 = vmatprep.subr.bf16.mxu0 %v718
    %4011 = vmatpush1.bf16.msra.mxu0 %v717
    %4012 = vmatprep.subr.bf16.mxu0 %v721
    %4013 = vmatpush1.bf16.msra.mxu0 %v720
    %4014 = vmatprep.subr.bf16.mxu0 %v724
    %4015 = vmatpush1.bf16.msra.mxu0 %v723
    %4016 = vmatprep.subr.bf16.mxu0 %v727
    %4017 = vmatpush1.bf16.msra.mxu0 %v726
    %4018 = vmatprep.subr.bf16.mxu0 %v730
    %4019 = vmatpush1.bf16.msra.mxu0 %v729
    %4020 = vmatprep.subr.bf16.mxu0 %v733
    %4021 = vmatpush1.bf16.msra.mxu0 %v732
    %4022 = vmatprep.subr.bf16.mxu0 %v736
    %4023 = vmatpush1.bf16.msra.mxu0 %v735
    %4024 = vmatprep.subr.bf16.mxu0 %v739
    %4025 = vmatpush1.bf16.msra.mxu0 %v738
    %4026 = vmatprep.subr.bf16.mxu0 0
    %4027 = vmatpush1.bf16.msra.mxu0 0
    %4028 = vmatprep.subr.bf16.mxu0 0
    %4029 = vmatpush1.bf16.msra.mxu0 0
    %4030 = vmatprep.subr.bf16.mxu0 0
    %4031 = vmatpush1.bf16.msra.mxu0 0
    %4032 = vmatprep.subr.bf16.mxu0 0
    %4033 = vmatpush1.bf16.msra.mxu0 0
    %4034 = vmatprep.subr.bf16.mxu0 0
    %4035 = vmatpush1.bf16.msra.mxu0 0
    %4036 = vmatprep.subr.bf16.mxu0 0
    %4037 = vmatpush1.bf16.msra.mxu0 0
    %4038 = vmatprep.subr.bf16.mxu0 0
    %4039 = vmatpush1.bf16.msra.mxu0 0
    %4040 = vmatprep.subr.bf16.mxu0 0
    %4041 = vmatpush1.bf16.msra.mxu0 0
    %4042 = vmatprep.mubr.bf16.mxu0 0
    %4043 = vmatmul.mubr.bf16.gmra.mrb[0].mxu0 %v4009
    %v4044 = vpop.f32.mrb[0].mxu0
    %v4045 = vadd.f32 %v364, %v4044
    %v4046 = vpop.f32.mrb[0].mxu0
    %v4047 = vadd.f32 %v368, %v4046
    %v4048 = vpop.f32.mrb[0].mxu0
    %v4049 = vpop.f32.mrb[0].mxu0
    %4050 = vdwg.mxu0
    %4051 = vmatprep.subr.bf16.mxu0 0
    %4052 = vmatpush1.bf16.msra.mxu0 %v719
    %4053 = vmatprep.subr.bf16.mxu0 0
    %4054 = vmatpush1.bf16.msra.mxu0 %v722
    %4055 = vmatprep.subr.bf16.mxu0 0
    %4056 = vmatpush1.bf16.msra.mxu0 %v725
    %4057 = vmatprep.subr.bf16.mxu0 0
    %4058 = vmatpush1.bf16.msra.mxu0 %v728
    %4059 = vmatprep.subr.bf16.mxu0 0
    %4060 = vmatpush1.bf16.msra.mxu0 %v731
    %4061 = vmatprep.subr.bf16.mxu0 0
    %4062 = vmatpush1.bf16.msra.mxu0 %v734
    %4063 = vmatprep.subr.bf16.mxu0 0
    %4064 = vmatpush1.bf16.msra.mxu0 %v737
    %4065 = vmatprep.subr.bf16.mxu0 0
    %4066 = vmatpush1.bf16.msra.mxu0 %v740
    %4067 = vmatprep.subr.bf16.mxu0 0
    %4068 = vmatpush1.bf16.msra.mxu0 0
    %4069 = vmatprep.subr.bf16.mxu0 0
    %4070 = vmatpush1.bf16.msra.mxu0 0
    %4071 = vmatprep.subr.bf16.mxu0 0
    %4072 = vmatpush1.bf16.msra.mxu0 0
    %4073 = vmatprep.subr.bf16.mxu0 0
    %4074 = vmatpush1.bf16.msra.mxu0 0
    %4075 = vmatprep.subr.bf16.mxu0 0
    %4076 = vmatpush1.bf16.msra.mxu0 0
    %4077 = vmatprep.subr.bf16.mxu0 0
    %4078 = vmatpush1.bf16.msra.mxu0 0
    %4079 = vmatprep.subr.bf16.mxu0 0
    %4080 = vmatpush1.bf16.msra.mxu0 0
    %4081 = vmatprep.subr.bf16.mxu0 0
    %4082 = vmatpush1.bf16.msra.mxu0 0
    %4083 = vmatprep.mubr.bf16.mxu0 0
    %4084 = vmatmul.mubr.bf16.gmra.mrb[0].mxu0 %v4009
    %v4085 = vpop.f32.mrb[0].mxu0
    %v4086 = vadd.f32 %v372, %v4085
    %v4087 = vpop.f32.mrb[0].mxu0
    %v4088 = vpop.f32.mrb[0].mxu0
    %v4089 = vpop.f32.mrb[0].mxu0
    %4090 = vdwg.mxu0
    %v4091 = vadd.f32 %v4006, %v4045
    %v4092 = vxor.u32 %v4091, 2147483648
    %v4093 = vmul.f32 %v4092, 1.442695
    %v4094 = vpow.pop %v4093
    %v4095 = vadd.f32 %v4094, 1.0
    %v4096 = vrcp.pop %v4095
    %v4097 = vmul.f32 1.0, %v4096
    %v4098 = vadd.f32 %v4007, %v4047
    %v4099 = vxor.u32 %v4098, 2147483648
    %v4100 = vmul.f32 %v4099, 1.442695
    %v4101 = vpow.pop %v4100
    %v4102 = vadd.f32 %v4101, 1.0
    %v4103 = vrcp.pop %v4102
    %v4104 = vmul.f32 1.0, %v4103
    %v4105 = vmul.f32 %v4097, %v4086
    %v4106 = vadd.f32 %v4008, %v4105
    %v4107 = vtanh.pop %v4106
    %v4108 = vsub.f32 1.0, %v4104
    %v4109 = vmul.f32 %v4108, %v4107
    %v4110 = vmul.f32 %v4104, %v3696
    %v4111 = vadd.f32 %v4109, %v4110
    %v4112 = vpack.c.bf16 %v3798, %v3798
    %4113 = vmatprep.subr.bf16.mxu0 %v1167
    %4114 = vmatpush1.bf16.msra.mxu0 %v1166
    %4115 = vmatprep.subr.bf16.mxu0 %v1171
    %4116 = vmatpush1.bf16.msra.mxu0 %v1170
    %4117 = vmatprep.subr.bf16.mxu0 %v1175
    %4118 = vmatpush1.bf16.msra.mxu0 %v1174
    %4119 = vmatprep.subr.bf16.mxu0 %v1179
    %4120 = vmatpush1.bf16.msra.mxu0 %v1178
    %4121 = vmatprep.subr.bf16.mxu0 %v1183
    %4122 = vmatpush1.bf16.msra.mxu0 %v1182
    %4123 = vmatprep.subr.bf16.mxu0 %v1187
    %4124 = vmatpush1.bf16.msra.mxu0 %v1186
    %4125 = vmatprep.subr.bf16.mxu0 %v1191
    %4126 = vmatpush1.bf16.msra.mxu0 %v1190
    %4127 = vmatprep.subr.bf16.mxu0 %v1195
    %4128 = vmatpush1.bf16.msra.mxu0 %v1194
    %4129 = vmatprep.subr.bf16.mxu0 %v1199
    %4130 = vmatpush1.bf16.msra.mxu0 %v1198
    %4131 = vmatprep.subr.bf16.mxu0 %v1203
    %4132 = vmatpush1.bf16.msra.mxu0 %v1202
    %4133 = vmatprep.subr.bf16.mxu0 %v1207
    %4134 = vmatpush1.bf16.msra.mxu0 %v1206
    %4135 = vmatprep.subr.bf16.mxu0 %v1211
    %4136 = vmatpush1.bf16.msra.mxu0 %v1210
    %4137 = vmatprep.subr.bf16.mxu0 %v1215
    %4138 = vmatpush1.bf16.msra.mxu0 %v1214
    %4139 = vmatprep.subr.bf16.mxu0 %v1219
    %4140 = vmatpush1.bf16.msra.mxu0 %v1218
    %4141 = vmatprep.subr.bf16.mxu0 %v1223
    %4142 = vmatpush1.bf16.msra.mxu0 %v1222
    %4143 = vmatprep.subr.bf16.mxu0 %v1227
    %4144 = vmatpush1.bf16.msra.mxu0 %v1226
    %4145 = vmatprep.mubr.bf16.mxu0 %v4112
    %4146 = vmatmul.mubr.bf16.gmra.mrb[0].mxu0 %v4009
    %v4147 = vpop.f32.mrb[0].mxu0
    %v4148 = vadd.f32 %v573, %v4147
    %v4149 = vpop.f32.mrb[0].mxu0
    %v4150 = vadd.f32 %v577, %v4149
    %v4151 = vpop.f32.mrb[0].mxu0
    %v4152 = vpop.f32.mrb[0].mxu0
    %4153 = vdwg.mxu0
    %4154 = vmatprep.subr.bf16.mxu0 %v1169
    %4155 = vmatpush1.bf16.msra.mxu0 %v1168
    %4156 = vmatprep.subr.bf16.mxu0 %v1173
    %4157 = vmatpush1.bf16.msra.mxu0 %v1172
    %4158 = vmatprep.subr.bf16.mxu0 %v1177
    %4159 = vmatpush1.bf16.msra.mxu0 %v1176
    %4160 = vmatprep.subr.bf16.mxu0 %v1181
    %4161 = vmatpush1.bf16.msra.mxu0 %v1180
    %4162 = vmatprep.subr.bf16.mxu0 %v1185
    %4163 = vmatpush1.bf16.msra.mxu0 %v1184
    %4164 = vmatprep.subr.bf16.mxu0 %v1189
    %4165 = vmatpush1.bf16.msra.mxu0 %v1188
    %4166 = vmatprep.subr.bf16.mxu0 %v1193
    %4167 = vmatpush1.bf16.msra.mxu0 %v1192
    %4168 = vmatprep.subr.bf16.mxu0 %v1197
    %4169 = vmatpush1.bf16.msra.mxu0 %v1196
    %4170 = vmatprep.subr.bf16.mxu0 %v1201
    %4171 = vmatpush1.bf16.msra.mxu0 %v1200
    %4172 = vmatprep.subr.bf16.mxu0 %v1205
    %4173 = vmatpush1.bf16.msra.mxu0 %v1204
    %4174 = vmatprep.subr.bf16.mxu0 %v1209
    %4175 = vmatpush1.bf16.msra.mxu0 %v1208
    %4176 = vmatprep.subr.bf16.mxu0 %v1213
    %4177 = vmatpush1.bf16.msra.mxu0 %v1212
    %4178 = vmatprep.subr.bf16.mxu0 %v1217
    %4179 = vmatpush1.bf16.msra.mxu0 %v1216
    %4180 = vmatprep.subr.bf16.mxu0 %v1221
    %4181 = vmatpush1.bf16.msra.mxu0 %v1220
    %4182 = vmatprep.subr.bf16.mxu0 %v1225
    %4183 = vmatpush1.bf16.msra.mxu0 %v1224
    %4184 = vmatprep.subr.bf16.mxu0 %v1229
    %4185 = vmatpush1.bf16.msra.mxu0 %v1228
    %4186 = vmatprep.mubr.bf16.mxu0 %v4112
    %4187 = vmatmul.mubr.bf16.gmra.mrb[0].mxu0 %v4009
    %v4188 = vpop.f32.mrb[0].mxu0
    %v4189 = vadd.f32 %v581, %v4188
    %v4190 = vpop.f32.mrb[0].mxu0
    %v4191 = vadd.f32 %v585, %v4190
    %v4192 = vpop.f32.mrb[0].mxu0
    %v4193 = vpop.f32.mrb[0].mxu0
    %4194 = vdwg.mxu0
    %v4195 = vxor.u32 %v4148, 2147483648
    %v4196 = vmul.f32 %v4195, 1.442695
    %v4197 = vpow.pop %v4196
    %v4198 = vadd.f32 %v4197, 1.0
    %v4199 = vrcp.pop %v4198
    %v4200 = vmul.f32 1.0, %v4199
    %v4201 = vxor.u32 %v4150, 2147483648
    %v4202 = vmul.f32 %v4201, 1.442695
    %v4203 = vpow.pop %v4202
    %v4204 = vadd.f32 %v4203, 1.0
    %v4205 = vrcp.pop %v4204
    %v4206 = vmul.f32 1.0, %v4205
    %v4207 = vmul.f32 %v4200, %v4191
    %v4208 = vadd.f32 %v4189, %v4207
    %v4209 = vtanh.pop %v4208
    %v4210 = vsub.f32 1.0, %v4206
    %v4211 = vmul.f32 %v4210, %v4209
    %v4212 = vmul.f32 %v4206, %v3798
    %v4213 = vadd.f32 %v4211, %v4212
    %v4214 = vpack.c.bf16 %v3900, %v3900
    %4215 = vmatprep.subr.bf16.mxu0 %v1796
    %4216 = vmatpush1.bf16.msra.mxu0 %v1795
    %4217 = vmatprep.subr.bf16.mxu0 %v1800
    %4218 = vmatpush1.bf16.msra.mxu0 %v1799
    %4219 = vmatprep.subr.bf16.mxu0 %v1804
    %4220 = vmatpush1.bf16.msra.mxu0 %v1803
    %4221 = vmatprep.subr.bf16.mxu0 %v1808
    %4222 = vmatpush1.bf16.msra.mxu0 %v1807
    %4223 = vmatprep.subr.bf16.mxu0 %v1812
    %4224 = vmatpush1.bf16.msra.mxu0 %v1811
    %4225 = vmatprep.subr.bf16.mxu0 %v1816
    %4226 = vmatpush1.bf16.msra.mxu0 %v1815
    %4227 = vmatprep.subr.bf16.mxu0 %v1820
    %4228 = vmatpush1.bf16.msra.mxu0 %v1819
    %4229 = vmatprep.subr.bf16.mxu0 %v1824
    %4230 = vmatpush1.bf16.msra.mxu0 %v1823
    %4231 = vmatprep.subr.bf16.mxu0 %v1828
    %4232 = vmatpush1.bf16.msra.mxu0 %v1827
    %4233 = vmatprep.subr.bf16.mxu0 %v1832
    %4234 = vmatpush1.bf16.msra.mxu0 %v1831
    %4235 = vmatprep.subr.bf16.mxu0 %v1836
    %4236 = vmatpush1.bf16.msra.mxu0 %v1835
    %4237 = vmatprep.subr.bf16.mxu0 %v1840
    %4238 = vmatpush1.bf16.msra.mxu0 %v1839
    %4239 = vmatprep.subr.bf16.mxu0 %v1844
    %4240 = vmatpush1.bf16.msra.mxu0 %v1843
    %4241 = vmatprep.subr.bf16.mxu0 %v1848
    %4242 = vmatpush1.bf16.msra.mxu0 %v1847
    %4243 = vmatprep.subr.bf16.mxu0 %v1852
    %4244 = vmatpush1.bf16.msra.mxu0 %v1851
    %4245 = vmatprep.subr.bf16.mxu0 %v1856
    %4246 = vmatpush1.bf16.msra.mxu0 %v1855
    %4247 = vmatprep.mubr.bf16.mxu0 %v4214
    %4248 = vmatmul.mubr.bf16.gmra.mrb[0].mxu0 %v4112
    %v4249 = vpop.f32.mrb[0].mxu0
    %v4250 = vadd.f32 %v595, %v4249
    %v4251 = vpop.f32.mrb[0].mxu0
    %v4252 = vadd.f32 %v599, %v4251
    %v4253 = vpop.f32.mrb[0].mxu0
    %v4254 = vpop.f32.mrb[0].mxu0
    %4255 = vdwg.mxu0
    %4256 = vmatprep.subr.bf16.mxu0 %v1798
    %4257 = vmatpush1.bf16.msra.mxu0 %v1797
    %4258 = vmatprep.subr.bf16.mxu0 %v1802
    %4259 = vmatpush1.bf16.msra.mxu0 %v1801
    %4260 = vmatprep.subr.bf16.mxu0 %v1806
    %4261 = vmatpush1.bf16.msra.mxu0 %v1805
    %4262 = vmatprep.subr.bf16.mxu0 %v1810
    %4263 = vmatpush1.bf16.msra.mxu0 %v1809
    %4264 = vmatprep.subr.bf16.mxu0 %v1814
    %4265 = vmatpush1.bf16.msra.mxu0 %v1813
    %4266 = vmatprep.subr.bf16.mxu0 %v1818
    %4267 = vmatpush1.bf16.msra.mxu0 %v1817
    %4268 = vmatprep.subr.bf16.mxu0 %v1822
    %4269 = vmatpush1.bf16.msra.mxu0 %v1821
    %4270 = vmatprep.subr.bf16.mxu0 %v1826
    %4271 = vmatpush1.bf16.msra.mxu0 %v1825
    %4272 = vmatprep.subr.bf16.mxu0 %v1830
    %4273 = vmatpush1.bf16.msra.mxu0 %v1829
    %4274 = vmatprep.subr.bf16.mxu0 %v1834
    %4275 = vmatpush1.bf16.msra.mxu0 %v1833
    %4276 = vmatprep.subr.bf16.mxu0 %v1838
    %4277 = vmatpush1.bf16.msra.mxu0 %v1837
    %4278 = vmatprep.subr.bf16.mxu0 %v1842
    %4279 = vmatpush1.bf16.msra.mxu0 %v1841
    %4280 = vmatprep.subr.bf16.mxu0 %v1846
    %4281 = vmatpush1.bf16.msra.mxu0 %v1845
    %4282 = vmatprep.subr.bf16.mxu0 %v1850
    %4283 = vmatpush1.bf16.msra.mxu0 %v1849
    %4284 = vmatprep.subr.bf16.mxu0 %v1854
    %4285 = vmatpush1.bf16.msra.mxu0 %v1853
    %4286 = vmatprep.subr.bf16.mxu0 %v1858
    %4287 = vmatpush1.bf16.msra.mxu0 %v1857
    %4288 = vmatprep.mubr.bf16.mxu0 %v4214
    %4289 = vmatmul.mubr.bf16.gmra.mrb[0].mxu0 %v4112
    %v4290 = vpop.f32.mrb[0].mxu0
    %v4291 = vadd.f32 %v603, %v4290
    %v4292 = vpop.f32.mrb[0].mxu0
    %v4293 = vadd.f32 %v607, %v4292
    %v4294 = vpop.f32.mrb[0].mxu0
    %v4295 = vpop.f32.mrb[0].mxu0
    %4296 = vdwg.mxu0
    %v4297 = vxor.u32 %v4250, 2147483648
    %v4298 = vmul.f32 %v4297, 1.442695
    %v4299 = vpow.pop %v4298
    %v4300 = vadd.f32 %v4299, 1.0
    %v4301 = vrcp.pop %v4300
    %v4302 = vmul.f32 1.0, %v4301
    %v4303 = vxor.u32 %v4252, 2147483648
    %v4304 = vmul.f32 %v4303, 1.442695
    %v4305 = vpow.pop %v4304
    %v4306 = vadd.f32 %v4305, 1.0
    %v4307 = vrcp.pop %v4306
    %v4308 = vmul.f32 1.0, %v4307
    %v4309 = vmul.f32 %v4302, %v4293
    %v4310 = vadd.f32 %v4291, %v4309
    %v4311 = vtanh.pop %v4310
    %v4312 = vsub.f32 1.0, %v4308
    %v4313 = vmul.f32 %v4312, %v4311
    %v4314 = vmul.f32 %v4308, %v3900
    %v4315 = vadd.f32 %v4313, %v4314
    %v4316 = vpack.c.bf16 %v4002, %v4002
    %4317 = vmatprep.subr.bf16.mxu0 %v2530
    %4318 = vmatpush1.bf16.msra.mxu0 %v2529
    %4319 = vmatprep.subr.bf16.mxu0 %v2534
    %4320 = vmatpush1.bf16.msra.mxu0 %v2533
    %4321 = vmatprep.subr.bf16.mxu0 %v2538
    %4322 = vmatpush1.bf16.msra.mxu0 %v2537
    %4323 = vmatprep.subr.bf16.mxu0 %v2542
    %4324 = vmatpush1.bf16.msra.mxu0 %v2541
    %4325 = vmatprep.subr.bf16.mxu0 %v2546
    %4326 = vmatpush1.bf16.msra.mxu0 %v2545
    %4327 = vmatprep.subr.bf16.mxu0 %v2550
    %4328 = vmatpush1.bf16.msra.mxu0 %v2549
    %4329 = vmatprep.subr.bf16.mxu0 %v2554
    %4330 = vmatpush1.bf16.msra.mxu0 %v2553
    %4331 = vmatprep.subr.bf16.mxu0 %v2558
    %4332 = vmatpush1.bf16.msra.mxu0 %v2557
    %4333 = vmatprep.subr.bf16.mxu0 %v2562
    %4334 = vmatpush1.bf16.msra.mxu0 %v2561
    %4335 = vmatprep.subr.bf16.mxu0 %v2566
    %4336 = vmatpush1.bf16.msra.mxu0 %v2565
    %4337 = vmatprep.subr.bf16.mxu0 %v2570
    %4338 = vmatpush1.bf16.msra.mxu0 %v2569
    %4339 = vmatprep.subr.bf16.mxu0 %v2574
    %4340 = vmatpush1.bf16.msra.mxu0 %v2573
    %4341 = vmatprep.subr.bf16.mxu0 %v2578
    %4342 = vmatpush1.bf16.msra.mxu0 %v2577
    %4343 = vmatprep.subr.bf16.mxu0 %v2582
    %4344 = vmatpush1.bf16.msra.mxu0 %v2581
    %4345 = vmatprep.subr.bf16.mxu0 %v2586
    %4346 = vmatpush1.bf16.msra.mxu0 %v2585
    %4347 = vmatprep.subr.bf16.mxu0 %v2590
    %4348 = vmatpush1.bf16.msra.mxu0 %v2589
    %4349 = vmatprep.mubr.bf16.mxu0 %v4316
    %4350 = vmatmul.mubr.bf16.gmra.mrb[0].mxu0 %v4214
    %v4351 = vpop.f32.mrb[0].mxu0
    %v4352 = vadd.f32 %v617, %v4351
    %v4353 = vpop.f32.mrb[0].mxu0
    %v4354 = vadd.f32 %v621, %v4353
    %v4355 = vpop.f32.mrb[0].mxu0
    %v4356 = vpop.f32.mrb[0].mxu0
    %4357 = vdwg.mxu0
    %4358 = vmatprep.subr.bf16.mxu0 %v2532
    %4359 = vmatpush1.bf16.msra.mxu0 %v2531
    %4360 = vmatprep.subr.bf16.mxu0 %v2536
    %4361 = vmatpush1.bf16.msra.mxu0 %v2535
    %4362 = vmatprep.subr.bf16.mxu0 %v2540
    %4363 = vmatpush1.bf16.msra.mxu0 %v2539
    %4364 = vmatprep.subr.bf16.mxu0 %v2544
    %4365 = vmatpush1.bf16.msra.mxu0 %v2543
    %4366 = vmatprep.subr.bf16.mxu0 %v2548
    %4367 = vmatpush1.bf16.msra.mxu0 %v2547
    %4368 = vmatprep.subr.bf16.mxu0 %v2552
    %4369 = vmatpush1.bf16.msra.mxu0 %v2551
    %4370 = vmatprep.subr.bf16.mxu0 %v2556
    %4371 = vmatpush1.bf16.msra.mxu0 %v2555
    %4372 = vmatprep.subr.bf16.mxu0 %v2560
    %4373 = vmatpush1.bf16.msra.mxu0 %v2559
    %4374 = vmatprep.subr.bf16.mxu0 %v2564
    %4375 = vmatpush1.bf16.msra.mxu0 %v2563
    %4376 = vmatprep.subr.bf16.mxu0 %v2568
    %4377 = vmatpush1.bf16.msra.mxu0 %v2567
    %4378 = vmatprep.subr.bf16.mxu0 %v2572
    %4379 = vmatpush1.bf16.msra.mxu0 %v2571
    %4380 = vmatprep.subr.bf16.mxu0 %v2576
    %4381 = vmatpush1.bf16.msra.mxu0 %v2575
    %4382 = vmatprep.subr.bf16.mxu0 %v2580
    %4383 = vmatpush1.bf16.msra.mxu0 %v2579
    %4384 = vmatprep.subr.bf16.mxu0 %v2584
    %4385 = vmatpush1.bf16.msra.mxu0 %v2583
    %4386 = vmatprep.subr.bf16.mxu0 %v2588
    %4387 = vmatpush1.bf16.msra.mxu0 %v2587
    %4388 = vmatprep.subr.bf16.mxu0 %v2592
    %4389 = vmatpush1.bf16.msra.mxu0 %v2591
    %4390 = vmatprep.mubr.bf16.mxu0 %v4316
    %4391 = vmatmul.mubr.bf16.gmra.mrb[0].mxu0 %v4214
    %v4392 = vpop.f32.mrb[0].mxu0
    %v4393 = vadd.f32 %v625, %v4392
    %v4394 = vpop.f32.mrb[0].mxu0
    %v4395 = vadd.f32 %v629, %v4394
    %v4396 = vpop.f32.mrb[0].mxu0
    %v4397 = vpop.f32.mrb[0].mxu0
    %4398 = vdwg.mxu0
    %v4399 = vxor.u32 %v4352, 2147483648
    %v4400 = vmul.f32 %v4399, 1.442695
    %v4401 = vpow.pop %v4400
    %v4402 = vadd.f32 %v4401, 1.0
    %v4403 = vrcp.pop %v4402
    %v4404 = vmul.f32 1.0, %v4403
    %v4405 = vxor.u32 %v4354, 2147483648
    %v4406 = vmul.f32 %v4405, 1.442695
    %v4407 = vpow.pop %v4406
    %v4408 = vadd.f32 %v4407, 1.0
    %v4409 = vrcp.pop %v4408
    %v4410 = vmul.f32 1.0, %v4409
    %v4411 = vmul.f32 %v4404, %v4395
    %v4412 = vadd.f32 %v4393, %v4411
    %v4413 = vtanh.pop %v4412
    %v4414 = vsub.f32 1.0, %v4410
    %v4415 = vmul.f32 %v4414, %v4413
    %v4416 = vmul.f32 %v4410, %v4002
    %v4417 = vadd.f32 %v4415, %v4416
    %v4418 = vpack.c.bf16 %v4111, %v4111
    %v4419 = vpack.c.bf16 %v4213, %v4213
    %4420 = vmatprep.subr.bf16.mxu0 %v1167
    %4421 = vmatpush1.bf16.msra.mxu0 %v1166
    %4422 = vmatprep.subr.bf16.mxu0 %v1171
    %4423 = vmatpush1.bf16.msra.mxu0 %v1170
    %4424 = vmatprep.subr.bf16.mxu0 %v1175
    %4425 = vmatpush1.bf16.msra.mxu0 %v1174
    %4426 = vmatprep.subr.bf16.mxu0 %v1179
    %4427 = vmatpush1.bf16.msra.mxu0 %v1178
    %4428 = vmatprep.subr.bf16.mxu0 %v1183
    %4429 = vmatpush1.bf16.msra.mxu0 %v1182
    %4430 = vmatprep.subr.bf16.mxu0 %v1187
    %4431 = vmatpush1.bf16.msra.mxu0 %v1186
    %4432 = vmatprep.subr.bf16.mxu0 %v1191
    %4433 = vmatpush1.bf16.msra.mxu0 %v1190
    %4434 = vmatprep.subr.bf16.mxu0 %v1195
    %4435 = vmatpush1.bf16.msra.mxu0 %v1194
    %4436 = vmatprep.subr.bf16.mxu0 %v1199
    %4437 = vmatpush1.bf16.msra.mxu0 %v1198
    %4438 = vmatprep.subr.bf16.mxu0 %v1203
    %4439 = vmatpush1.bf16.msra.mxu0 %v1202
    %4440 = vmatprep.subr.bf16.mxu0 %v1207
    %4441 = vmatpush1.bf16.msra.mxu0 %v1206
    %4442 = vmatprep.subr.bf16.mxu0 %v1211
    %4443 = vmatpush1.bf16.msra.mxu0 %v1210
    %4444 = vmatprep.subr.bf16.mxu0 %v1215
    %4445 = vmatpush1.bf16.msra.mxu0 %v1214
    %4446 = vmatprep.subr.bf16.mxu0 %v1219
    %4447 = vmatpush1.bf16.msra.mxu0 %v1218
    %4448 = vmatprep.subr.bf16.mxu0 %v1223
    %4449 = vmatpush1.bf16.msra.mxu0 %v1222
    %4450 = vmatprep.subr.bf16.mxu0 %v1227
    %4451 = vmatpush1.bf16.msra.mxu0 %v1226
    %4452 = vmatprep.mubr.bf16.mxu0 %v4419
    %4453 = vmatmul.mubr.bf16.gmra.mrb[0].mxu0 %v4418
    %v4454 = vpop.f32.mrb[0].mxu0
    %v4455 = vadd.f32 %v573, %v4454
    %v4456 = vpop.f32.mrb[0].mxu0
    %v4457 = vadd.f32 %v577, %v4456
    %v4458 = vpop.f32.mrb[0].mxu0
    %v4459 = vpop.f32.mrb[0].mxu0
    %4460 = vdwg.mxu0
    %4461 = vmatprep.subr.bf16.mxu0 %v1169
    %4462 = vmatpush1.bf16.msra.mxu0 %v1168
    %4463 = vmatprep.subr.bf16.mxu0 %v1173
    %4464 = vmatpush1.bf16.msra.mxu0 %v1172
    %4465 = vmatprep.subr.bf16.mxu0 %v1177
    %4466 = vmatpush1.bf16.msra.mxu0 %v1176
    %4467 = vmatprep.subr.bf16.mxu0 %v1181
    %4468 = vmatpush1.bf16.msra.mxu0 %v1180
    %4469 = vmatprep.subr.bf16.mxu0 %v1185
    %4470 = vmatpush1.bf16.msra.mxu0 %v1184
    %4471 = vmatprep.subr.bf16.mxu0 %v1189
    %4472 = vmatpush1.bf16.msra.mxu0 %v1188
    %4473 = vmatprep.subr.bf16.mxu0 %v1193
    %4474 = vmatpush1.bf16.msra.mxu0 %v1192
    %4475 = vmatprep.subr.bf16.mxu0 %v1197
    %4476 = vmatpush1.bf16.msra.mxu0 %v1196
    %4477 = vmatprep.subr.bf16.mxu0 %v1201
    %4478 = vmatpush1.bf16.msra.mxu0 %v1200
    %4479 = vmatprep.subr.bf16.mxu0 %v1205
    %4480 = vmatpush1.bf16.msra.mxu0 %v1204
    %4481 = vmatprep.subr.bf16.mxu0 %v1209
    %4482 = vmatpush1.bf16.msra.mxu0 %v1208
    %4483 = vmatprep.subr.bf16.mxu0 %v1213
    %4484 = vmatpush1.bf16.msra.mxu0 %v1212
    %4485 = vmatprep.subr.bf16.mxu0 %v1217
    %4486 = vmatpush1.bf16.msra.mxu0 %v1216
    %4487 = vmatprep.subr.bf16.mxu0 %v1221
    %4488 = vmatpush1.bf16.msra.mxu0 %v1220
    %4489 = vmatprep.subr.bf16.mxu0 %v1225
    %4490 = vmatpush1.bf16.msra.mxu0 %v1224
    %4491 = vmatprep.subr.bf16.mxu0 %v1229
    %4492 = vmatpush1.bf16.msra.mxu0 %v1228
    %4493 = vmatprep.mubr.bf16.mxu0 %v4419
    %4494 = vmatmul.mubr.bf16.gmra.mrb[0].mxu0 %v4418
    %v4495 = vpop.f32.mrb[0].mxu0
    %v4496 = vadd.f32 %v581, %v4495
    %v4497 = vpop.f32.mrb[0].mxu0
    %v4498 = vadd.f32 %v585, %v4497
    %v4499 = vpop.f32.mrb[0].mxu0
    %v4500 = vpop.f32.mrb[0].mxu0
    %4501 = vdwg.mxu0
    %v4502 = vxor.u32 %v4455, 2147483648
    %v4503 = vmul.f32 %v4502, 1.442695
    %v4504 = vpow.pop %v4503
    %v4505 = vadd.f32 %v4504, 1.0
    %v4506 = vrcp.pop %v4505
    %v4507 = vmul.f32 1.0, %v4506
    %v4508 = vxor.u32 %v4457, 2147483648
    %v4509 = vmul.f32 %v4508, 1.442695
    %v4510 = vpow.pop %v4509
    %v4511 = vadd.f32 %v4510, 1.0
    %v4512 = vrcp.pop %v4511
    %v4513 = vmul.f32 1.0, %v4512
    %v4514 = vmul.f32 %v4507, %v4498
    %v4515 = vadd.f32 %v4496, %v4514
    %v4516 = vtanh.pop %v4515
    %v4517 = vsub.f32 1.0, %v4513
    %v4518 = vmul.f32 %v4517, %v4516
    %v4519 = vmul.f32 %v4513, %v4213
    %v4520 = vadd.f32 %v4518, %v4519
    %v4521 = vpack.c.bf16 %v4315, %v4315
    %4522 = vmatprep.subr.bf16.mxu0 %v1796
    %4523 = vmatpush1.bf16.msra.mxu0 %v1795
    %4524 = vmatprep.subr.bf16.mxu0 %v1800
    %4525 = vmatpush1.bf16.msra.mxu0 %v1799
    %4526 = vmatprep.subr.bf16.mxu0 %v1804
    %4527 = vmatpush1.bf16.msra.mxu0 %v1803
    %4528 = vmatprep.subr.bf16.mxu0 %v1808
    %4529 = vmatpush1.bf16.msra.mxu0 %v1807
    %4530 = vmatprep.subr.bf16.mxu0 %v1812
    %4531 = vmatpush1.bf16.msra.mxu0 %v1811
    %4532 = vmatprep.subr.bf16.mxu0 %v1816
    %4533 = vmatpush1.bf16.msra.mxu0 %v1815
    %4534 = vmatprep.subr.bf16.mxu0 %v1820
    %4535 = vmatpush1.bf16.msra.mxu0 %v1819
    %4536 = vmatprep.subr.bf16.mxu0 %v1824
    %4537 = vmatpush1.bf16.msra.mxu0 %v1823
    %4538 = vmatprep.subr.bf16.mxu0 %v1828
    %4539 = vmatpush1.bf16.msra.mxu0 %v1827
    %4540 = vmatprep.subr.bf16.mxu0 %v1832
    %4541 = vmatpush1.bf16.msra.mxu0 %v1831
    %4542 = vmatprep.subr.bf16.mxu0 %v1836
    %4543 = vmatpush1.bf16.msra.mxu0 %v1835
    %4544 = vmatprep.subr.bf16.mxu0 %v1840
    %4545 = vmatpush1.bf16.msra.mxu0 %v1839
    %4546 = vmatprep.subr.bf16.mxu0 %v1844
    %4547 = vmatpush1.bf16.msra.mxu0 %v1843
    %4548 = vmatprep.subr.bf16.mxu0 %v1848
    %4549 = vmatpush1.bf16.msra.mxu0 %v1847
    %4550 = vmatprep.subr.bf16.mxu0 %v1852
    %4551 = vmatpush1.bf16.msra.mxu0 %v1851
    %4552 = vmatprep.subr.bf16.mxu0 %v1856
    %4553 = vmatpush1.bf16.msra.mxu0 %v1855
    %4554 = vmatprep.mubr.bf16.mxu0 %v4521
    %4555 = vmatmul.mubr.bf16.gmra.mrb[0].mxu0 %v4419
    %v4556 = vpop.f32.mrb[0].mxu0
    %v4557 = vadd.f32 %v595, %v4556
    %v4558 = vpop.f32.mrb[0].mxu0
    %v4559 = vadd.f32 %v599, %v4558
    %v4560 = vpop.f32.mrb[0].mxu0
    %v4561 = vpop.f32.mrb[0].mxu0
    %4562 = vdwg.mxu0
    %4563 = vmatprep.subr.bf16.mxu0 %v1798
    %4564 = vmatpush1.bf16.msra.mxu0 %v1797
    %4565 = vmatprep.subr.bf16.mxu0 %v1802
    %4566 = vmatpush1.bf16.msra.mxu0 %v1801
    %4567 = vmatprep.subr.bf16.mxu0 %v1806
    %4568 = vmatpush1.bf16.msra.mxu0 %v1805
    %4569 = vmatprep.subr.bf16.mxu0 %v1810
    %4570 = vmatpush1.bf16.msra.mxu0 %v1809
    %4571 = vmatprep.subr.bf16.mxu0 %v1814
    %4572 = vmatpush1.bf16.msra.mxu0 %v1813
    %4573 = vmatprep.subr.bf16.mxu0 %v1818
    %4574 = vmatpush1.bf16.msra.mxu0 %v1817
    %4575 = vmatprep.subr.bf16.mxu0 %v1822
    %4576 = vmatpush1.bf16.msra.mxu0 %v1821
    %4577 = vmatprep.subr.bf16.mxu0 %v1826
    %4578 = vmatpush1.bf16.msra.mxu0 %v1825
    %4579 = vmatprep.subr.bf16.mxu0 %v1830
    %4580 = vmatpush1.bf16.msra.mxu0 %v1829
    %4581 = vmatprep.subr.bf16.mxu0 %v1834
    %4582 = vmatpush1.bf16.msra.mxu0 %v1833
    %4583 = vmatprep.subr.bf16.mxu0 %v1838
    %4584 = vmatpush1.bf16.msra.mxu0 %v1837
    %4585 = vmatprep.subr.bf16.mxu0 %v1842
    %4586 = vmatpush1.bf16.msra.mxu0 %v1841
    %4587 = vmatprep.subr.bf16.mxu0 %v1846
    %4588 = vmatpush1.bf16.msra.mxu0 %v1845
    %4589 = vmatprep.subr.bf16.mxu0 %v1850
    %4590 = vmatpush1.bf16.msra.mxu0 %v1849
    %4591 = vmatprep.subr.bf16.mxu0 %v1854
    %4592 = vmatpush1.bf16.msra.mxu0 %v1853
    %4593 = vmatprep.subr.bf16.mxu0 %v1858
    %4594 = vmatpush1.bf16.msra.mxu0 %v1857
    %4595 = vmatprep.mubr.bf16.mxu0 %v4521
    %4596 = vmatmul.mubr.bf16.gmra.mrb[0].mxu0 %v4419
    %v4597 = vpop.f32.mrb[0].mxu0
    %v4598 = vadd.f32 %v603, %v4597
    %v4599 = vpop.f32.mrb[0].mxu0
    %v4600 = vadd.f32 %v607, %v4599
    %v4601 = vpop.f32.mrb[0].mxu0
    %v4602 = vpop.f32.mrb[0].mxu0
    %4603 = vdwg.mxu0
    %v4604 = vxor.u32 %v4557, 2147483648
    %v4605 = vmul.f32 %v4604, 1.442695
    %v4606 = vpow.pop %v4605
    %v4607 = vadd.f32 %v4606, 1.0
    %v4608 = vrcp.pop %v4607
    %v4609 = vmul.f32 1.0, %v4608
    %v4610 = vxor.u32 %v4559, 2147483648
    %v4611 = vmul.f32 %v4610, 1.442695
    %v4612 = vpow.pop %v4611
    %v4613 = vadd.f32 %v4612, 1.0
    %v4614 = vrcp.pop %v4613
    %v4615 = vmul.f32 1.0, %v4614
    %v4616 = vmul.f32 %v4609, %v4600
    %v4617 = vadd.f32 %v4598, %v4616
    %v4618 = vtanh.pop %v4617
    %v4619 = vsub.f32 1.0, %v4615
    %v4620 = vmul.f32 %v4619, %v4618
    %v4621 = vmul.f32 %v4615, %v4315
    %v4622 = vadd.f32 %v4620, %v4621
    %v4623 = vpack.c.bf16 %v4417, %v4417
    %4624 = vmatprep.subr.bf16.mxu0 %v2530
    %4625 = vmatpush1.bf16.msra.mxu0 %v2529
    %4626 = vmatprep.subr.bf16.mxu0 %v2534
    %4627 = vmatpush1.bf16.msra.mxu0 %v2533
    %4628 = vmatprep.subr.bf16.mxu0 %v2538
    %4629 = vmatpush1.bf16.msra.mxu0 %v2537
    %4630 = vmatprep.subr.bf16.mxu0 %v2542
    %4631 = vmatpush1.bf16.msra.mxu0 %v2541
    %4632 = vmatprep.subr.bf16.mxu0 %v2546
    %4633 = vmatpush1.bf16.msra.mxu0 %v2545
    %4634 = vmatprep.subr.bf16.mxu0 %v2550
    %4635 = vmatpush1.bf16.msra.mxu0 %v2549
    %4636 = vmatprep.subr.bf16.mxu0 %v2554
    %4637 = vmatpush1.bf16.msra.mxu0 %v2553
    %4638 = vmatprep.subr.bf16.mxu0 %v2558
    %4639 = vmatpush1.bf16.msra.mxu0 %v2557
    %4640 = vmatprep.subr.bf16.mxu0 %v2562
    %4641 = vmatpush1.bf16.msra.mxu0 %v2561
    %4642 = vmatprep.subr.bf16.mxu0 %v2566
    %4643 = vmatpush1.bf16.msra.mxu0 %v2565
    %4644 = vmatprep.subr.bf16.mxu0 %v2570
    %4645 = vmatpush1.bf16.msra.mxu0 %v2569
    %4646 = vmatprep.subr.bf16.mxu0 %v2574
    %4647 = vmatpush1.bf16.msra.mxu0 %v2573
    %4648 = vmatprep.subr.bf16.mxu0 %v2578
    %4649 = vmatpush1.bf16.msra.mxu0 %v2577
    %4650 = vmatprep.subr.bf16.mxu0 %v2582
    %4651 = vmatpush1.bf16.msra.mxu0 %v2581
    %4652 = vmatprep.subr.bf16.mxu0 %v2586
    %4653 = vmatpush1.bf16.msra.mxu0 %v2585
    %4654 = vmatprep.subr.bf16.mxu0 %v2590
    %4655 = vmatpush1.bf16.msra.mxu0 %v2589
    %4656 = vmatprep.mubr.bf16.mxu0 %v4623
    %4657 = vmatmul.mubr.bf16.gmra.mrb[0].mxu0 %v4521
    %v4658 = vpop.f32.mrb[0].mxu0
    %v4659 = vadd.f32 %v617, %v4658
    %v4660 = vpop.f32.mrb[0].mxu0
    %v4661 = vadd.f32 %v621, %v4660
    %v4662 = vpop.f32.mrb[0].mxu0
    %v4663 = vpop.f32.mrb[0].mxu0
    %4664 = vdwg.mxu0
    %4665 = vmatprep.subr.bf16.mxu0 %v2532
    %4666 = vmatpush1.bf16.msra.mxu0 %v2531
    %4667 = vmatprep.subr.bf16.mxu0 %v2536
    %4668 = vmatpush1.bf16.msra.mxu0 %v2535
    %4669 = vmatprep.subr.bf16.mxu0 %v2540
    %4670 = vmatpush1.bf16.msra.mxu0 %v2539
    %4671 = vmatprep.subr.bf16.mxu0 %v2544
    %4672 = vmatpush1.bf16.msra.mxu0 %v2543
    %4673 = vmatprep.subr.bf16.mxu0 %v2548
    %4674 = vmatpush1.bf16.msra.mxu0 %v2547
    %4675 = vmatprep.subr.bf16.mxu0 %v2552
    %4676 = vmatpush1.bf16.msra.mxu0 %v2551
    %4677 = vmatprep.subr.bf16.mxu0 %v2556
    %4678 = vmatpush1.bf16.msra.mxu0 %v2555
    %4679 = vmatprep.subr.bf16.mxu0 %v2560
    %4680 = vmatpush1.bf16.msra.mxu0 %v2559
    %4681 = vmatprep.subr.bf16.mxu0 %v2564
    %4682 = vmatpush1.bf16.msra.mxu0 %v2563
    %4683 = vmatprep.subr.bf16.mxu0 %v2568
    %4684 = vmatpush1.bf16.msra.mxu0 %v2567
    %4685 = vmatprep.subr.bf16.mxu0 %v2572
    %4686 = vmatpush1.bf16.msra.mxu0 %v2571
    %4687 = vmatprep.subr.bf16.mxu0 %v2576
    %4688 = vmatpush1.bf16.msra.mxu0 %v2575
    %4689 = vmatprep.subr.bf16.mxu0 %v2580
    %4690 = vmatpush1.bf16.msra.mxu0 %v2579
    %4691 = vmatprep.subr.bf16.mxu0 %v2584
    %4692 = vmatpush1.bf16.msra.mxu0 %v2583
    %4693 = vmatprep.subr.bf16.mxu0 %v2588
    %4694 = vmatpush1.bf16.msra.mxu0 %v2587
    %4695 = vmatprep.subr.bf16.mxu0 %v2592
    %4696 = vmatpush1.bf16.msra.mxu0 %v2591
    %4697 = vmatprep.mubr.bf16.mxu0 %v4623
    %4698 = vmatmul.mubr.bf16.gmra.mrb[0].mxu0 %v4521
    %v4699 = vpop.f32.mrb[0].mxu0
    %v4700 = vadd.f32 %v625, %v4699
    %v4701 = vpop.f32.mrb[0].mxu0
    %v4702 = vadd.f32 %v629, %v4701
    %v4703 = vpop.f32.mrb[0].mxu0
    %v4704 = vpop.f32.mrb[0].mxu0
    %4705 = vdwg.mxu0
    %v4706 = vxor.u32 %v4659, 2147483648
    %v4707 = vmul.f32 %v4706, 1.442695
    %v4708 = vpow.pop %v4707
    %v4709 = vadd.f32 %v4708, 1.0
    %v4710 = vrcp.pop %v4709
    %v4711 = vmul.f32 1.0, %v4710
    %v4712 = vxor.u32 %v4661, 2147483648
    %v4713 = vmul.f32 %v4712, 1.442695
    %v4714 = vpow.pop %v4713
    %v4715 = vadd.f32 %v4714, 1.0
    %v4716 = vrcp.pop %v4715
    %v4717 = vmul.f32 1.0, %v4716
    %v4718 = vmul.f32 %v4711, %v4702
    %v4719 = vadd.f32 %v4700, %v4718
    %v4720 = vtanh.pop %v4719
    %v4721 = vsub.f32 1.0, %v4717
    %v4722 = vmul.f32 %v4721, %v4720
    %v4723 = vmul.f32 %v4717, %v4417
    %v4724 = vadd.f32 %v4722, %v4723
    %v4725 = vpack.c.bf16 %v4520, %v4520
    %v4726 = vpack.c.bf16 %v4622, %v4622
    %4727 = vmatprep.subr.bf16.mxu0 %v1796
    %4728 = vmatpush1.bf16.msra.mxu0 %v1795
    %4729 = vmatprep.subr.bf16.mxu0 %v1800
    %4730 = vmatpush1.bf16.msra.mxu0 %v1799
    %4731 = vmatprep.subr.bf16.mxu0 %v1804
    %4732 = vmatpush1.bf16.msra.mxu0 %v1803
    %4733 = vmatprep.subr.bf16.mxu0 %v1808
    %4734 = vmatpush1.bf16.msra.mxu0 %v1807
    %4735 = vmatprep.subr.bf16.mxu0 %v1812
    %4736 = vmatpush1.bf16.msra.mxu0 %v1811
    %4737 = vmatprep.subr.bf16.mxu0 %v1816
    %4738 = vmatpush1.bf16.msra.mxu0 %v1815
    %4739 = vmatprep.subr.bf16.mxu0 %v1820
    %4740 = vmatpush1.bf16.msra.mxu0 %v1819
    %4741 = vmatprep.subr.bf16.mxu0 %v1824
    %4742 = vmatpush1.bf16.msra.mxu0 %v1823
    %4743 = vmatprep.subr.bf16.mxu0 %v1828
    %4744 = vmatpush1.bf16.msra.mxu0 %v1827
    %4745 = vmatprep.subr.bf16.mxu0 %v1832
    %4746 = vmatpush1.bf16.msra.mxu0 %v1831
    %4747 = vmatprep.subr.bf16.mxu0 %v1836
    %4748 = vmatpush1.bf16.msra.mxu0 %v1835
    %4749 = vmatprep.subr.bf16.mxu0 %v1840
    %4750 = vmatpush1.bf16.msra.mxu0 %v1839
    %4751 = vmatprep.subr.bf16.mxu0 %v1844
    %4752 = vmatpush1.bf16.msra.mxu0 %v1843
    %4753 = vmatprep.subr.bf16.mxu0 %v1848
    %4754 = vmatpush1.bf16.msra.mxu0 %v1847
    %4755 = vmatprep.subr.bf16.mxu0 %v1852
    %4756 = vmatpush1.bf16.msra.mxu0 %v1851
    %4757 = vmatprep.subr.bf16.mxu0 %v1856
    %4758 = vmatpush1.bf16.msra.mxu0 %v1855
    %4759 = vmatprep.mubr.bf16.mxu0 %v4726
    %4760 = vmatmul.mubr.bf16.gmra.mrb[0].mxu0 %v4725
    %v4761 = vpop.f32.mrb[0].mxu0
    %v4762 = vadd.f32 %v595, %v4761
    %v4763 = vpop.f32.mrb[0].mxu0
    %v4764 = vadd.f32 %v599, %v4763
    %v4765 = vpop.f32.mrb[0].mxu0
    %v4766 = vpop.f32.mrb[0].mxu0
    %4767 = vdwg.mxu0
    %4768 = vmatprep.subr.bf16.mxu0 %v1798
    %4769 = vmatpush1.bf16.msra.mxu0 %v1797
    %4770 = vmatprep.subr.bf16.mxu0 %v1802
    %4771 = vmatpush1.bf16.msra.mxu0 %v1801
    %4772 = vmatprep.subr.bf16.mxu0 %v1806
    %4773 = vmatpush1.bf16.msra.mxu0 %v1805
    %4774 = vmatprep.subr.bf16.mxu0 %v1810
    %4775 = vmatpush1.bf16.msra.mxu0 %v1809
    %4776 = vmatprep.subr.bf16.mxu0 %v1814
    %4777 = vmatpush1.bf16.msra.mxu0 %v1813
    %4778 = vmatprep.subr.bf16.mxu0 %v1818
    %4779 = vmatpush1.bf16.msra.mxu0 %v1817
    %4780 = vmatprep.subr.bf16.mxu0 %v1822
    %4781 = vmatpush1.bf16.msra.mxu0 %v1821
    %4782 = vmatprep.subr.bf16.mxu0 %v1826
    %4783 = vmatpush1.bf16.msra.mxu0 %v1825
    %4784 = vmatprep.subr.bf16.mxu0 %v1830
    %4785 = vmatpush1.bf16.msra.mxu0 %v1829
    %4786 = vmatprep.subr.bf16.mxu0 %v1834
    %4787 = vmatpush1.bf16.msra.mxu0 %v1833
    %4788 = vmatprep.subr.bf16.mxu0 %v1838
    %4789 = vmatpush1.bf16.msra.mxu0 %v1837
    %4790 = vmatprep.subr.bf16.mxu0 %v1842
    %4791 = vmatpush1.bf16.msra.mxu0 %v1841
    %4792 = vmatprep.subr.bf16.mxu0 %v1846
    %4793 = vmatpush1.bf16.msra.mxu0 %v1845
    %4794 = vmatprep.subr.bf16.mxu0 %v1850
    %4795 = vmatpush1.bf16.msra.mxu0 %v1849
    %4796 = vmatprep.subr.bf16.mxu0 %v1854
    %4797 = vmatpush1.bf16.msra.mxu0 %v1853
    %4798 = vmatprep.subr.bf16.mxu0 %v1858
    %4799 = vmatpush1.bf16.msra.mxu0 %v1857
    %4800 = vmatprep.mubr.bf16.mxu0 %v4726
    %4801 = vmatmul.mubr.bf16.gmra.mrb[0].mxu0 %v4725
    %v4802 = vpop.f32.mrb[0].mxu0
    %v4803 = vadd.f32 %v603, %v4802
    %v4804 = vpop.f32.mrb[0].mxu0
    %v4805 = vadd.f32 %v607, %v4804
    %v4806 = vpop.f32.mrb[0].mxu0
    %v4807 = vpop.f32.mrb[0].mxu0
    %4808 = vdwg.mxu0
    %v4809 = vxor.u32 %v4762, 2147483648
    %v4810 = vmul.f32 %v4809, 1.442695
    %v4811 = vpow.pop %v4810
    %v4812 = vadd.f32 %v4811, 1.0
    %v4813 = vrcp.pop %v4812
    %v4814 = vmul.f32 1.0, %v4813
    %v4815 = vxor.u32 %v4764, 2147483648
    %v4816 = vmul.f32 %v4815, 1.442695
    %v4817 = vpow.pop %v4816
    %v4818 = vadd.f32 %v4817, 1.0
    %v4819 = vrcp.pop %v4818
    %v4820 = vmul.f32 1.0, %v4819
    %v4821 = vmul.f32 %v4814, %v4805
    %v4822 = vadd.f32 %v4803, %v4821
    %v4823 = vtanh.pop %v4822
    %v4824 = vsub.f32 1.0, %v4820
    %v4825 = vmul.f32 %v4824, %v4823
    %v4826 = vmul.f32 %v4820, %v4622
    %v4827 = vadd.f32 %v4825, %v4826
    %v4828 = vpack.c.bf16 %v4724, %v4724
    %4829 = vmatprep.subr.bf16.mxu0 %v2530
    %4830 = vmatpush1.bf16.msra.mxu0 %v2529
    %4831 = vmatprep.subr.bf16.mxu0 %v2534
    %4832 = vmatpush1.bf16.msra.mxu0 %v2533
    %4833 = vmatprep.subr.bf16.mxu0 %v2538
    %4834 = vmatpush1.bf16.msra.mxu0 %v2537
    %4835 = vmatprep.subr.bf16.mxu0 %v2542
    %4836 = vmatpush1.bf16.msra.mxu0 %v2541
    %4837 = vmatprep.subr.bf16.mxu0 %v2546
    %4838 = vmatpush1.bf16.msra.mxu0 %v2545
    %4839 = vmatprep.subr.bf16.mxu0 %v2550
    %4840 = vmatpush1.bf16.msra.mxu0 %v2549
    %4841 = vmatprep.subr.bf16.mxu0 %v2554
    %4842 = vmatpush1.bf16.msra.mxu0 %v2553
    %4843 = vmatprep.subr.bf16.mxu0 %v2558
    %4844 = vmatpush1.bf16.msra.mxu0 %v2557
    %4845 = vmatprep.subr.bf16.mxu0 %v2562
    %4846 = vmatpush1.bf16.msra.mxu0 %v2561
    %4847 = vmatprep.subr.bf16.mxu0 %v2566
    %4848 = vmatpush1.bf16.msra.mxu0 %v2565
    %4849 = vmatprep.subr.bf16.mxu0 %v2570
    %4850 = vmatpush1.bf16.msra.mxu0 %v2569
    %4851 = vmatprep.subr.bf16.mxu0 %v2574
    %4852 = vmatpush1.bf16.msra.mxu0 %v2573
    %4853 = vmatprep.subr.bf16.mxu0 %v2578
    %4854 = vmatpush1.bf16.msra.mxu0 %v2577
    %4855 = vmatprep.subr.bf16.mxu0 %v2582
    %4856 = vmatpush1.bf16.msra.mxu0 %v2581
    %4857 = vmatprep.subr.bf16.mxu0 %v2586
    %4858 = vmatpush1.bf16.msra.mxu0 %v2585
    %4859 = vmatprep.subr.bf16.mxu0 %v2590
    %4860 = vmatpush1.bf16.msra.mxu0 %v2589
    %4861 = vmatprep.mubr.bf16.mxu0 %v4828
    %4862 = vmatmul.mubr.bf16.gmra.mrb[0].mxu0 %v4726
    %v4863 = vpop.f32.mrb[0].mxu0
    %v4864 = vadd.f32 %v617, %v4863
    %v4865 = vpop.f32.mrb[0].mxu0
    %v4866 = vadd.f32 %v621, %v4865
    %v4867 = vpop.f32.mrb[0].mxu0
    %v4868 = vpop.f32.mrb[0].mxu0
    %4869 = vdwg.mxu0
    %4870 = vmatprep.subr.bf16.mxu0 %v2532
    %4871 = vmatpush1.bf16.msra.mxu0 %v2531
    %4872 = vmatprep.subr.bf16.mxu0 %v2536
    %4873 = vmatpush1.bf16.msra.mxu0 %v2535
    %4874 = vmatprep.subr.bf16.mxu0 %v2540
    %4875 = vmatpush1.bf16.msra.mxu0 %v2539
    %4876 = vmatprep.subr.bf16.mxu0 %v2544
    %4877 = vmatpush1.bf16.msra.mxu0 %v2543
    %4878 = vmatprep.subr.bf16.mxu0 %v2548
    %4879 = vmatpush1.bf16.msra.mxu0 %v2547
    %4880 = vmatprep.subr.bf16.mxu0 %v2552
    %4881 = vmatpush1.bf16.msra.mxu0 %v2551
    %4882 = vmatprep.subr.bf16.mxu0 %v2556
    %4883 = vmatpush1.bf16.msra.mxu0 %v2555
    %4884 = vmatprep.subr.bf16.mxu0 %v2560
    %4885 = vmatpush1.bf16.msra.mxu0 %v2559
    %4886 = vmatprep.subr.bf16.mxu0 %v2564
    %4887 = vmatpush1.bf16.msra.mxu0 %v2563
    %4888 = vmatprep.subr.bf16.mxu0 %v2568
    %4889 = vmatpush1.bf16.msra.mxu0 %v2567
    %4890 = vmatprep.subr.bf16.mxu0 %v2572
    %4891 = vmatpush1.bf16.msra.mxu0 %v2571
    %4892 = vmatprep.subr.bf16.mxu0 %v2576
    %4893 = vmatpush1.bf16.msra.mxu0 %v2575
    %4894 = vmatprep.subr.bf16.mxu0 %v2580
    %4895 = vmatpush1.bf16.msra.mxu0 %v2579
    %4896 = vmatprep.subr.bf16.mxu0 %v2584
    %4897 = vmatpush1.bf16.msra.mxu0 %v2583
    %4898 = vmatprep.subr.bf16.mxu0 %v2588
    %4899 = vmatpush1.bf16.msra.mxu0 %v2587
    %4900 = vmatprep.subr.bf16.mxu0 %v2592
    %4901 = vmatpush1.bf16.msra.mxu0 %v2591
    %4902 = vmatprep.mubr.bf16.mxu0 %v4828
    %4903 = vmatmul.mubr.bf16.gmra.mrb[0].mxu0 %v4726
    %v4904 = vpop.f32.mrb[0].mxu0
    %v4905 = vadd.f32 %v625, %v4904
    %v4906 = vpop.f32.mrb[0].mxu0
    %v4907 = vadd.f32 %v629, %v4906
    %v4908 = vpop.f32.mrb[0].mxu0
    %v4909 = vpop.f32.mrb[0].mxu0
    %4910 = vdwg.mxu0
    %v4911 = vxor.u32 %v4864, 2147483648
    %v4912 = vmul.f32 %v4911, 1.442695
    %v4913 = vpow.pop %v4912
    %v4914 = vadd.f32 %v4913, 1.0
    %v4915 = vrcp.pop %v4914
    %v4916 = vmul.f32 1.0, %v4915
    %v4917 = vxor.u32 %v4866, 2147483648
    %v4918 = vmul.f32 %v4917, 1.442695
    %v4919 = vpow.pop %v4918
    %v4920 = vadd.f32 %v4919, 1.0
    %v4921 = vrcp.pop %v4920
    %v4922 = vmul.f32 1.0, %v4921
    %v4923 = vmul.f32 %v4916, %v4907
    %v4924 = vadd.f32 %v4905, %v4923
    %v4925 = vtanh.pop %v4924
    %v4926 = vsub.f32 1.0, %v4922
    %v4927 = vmul.f32 %v4926, %v4925
    %v4928 = vmul.f32 %v4922, %v4724
    %v4929 = vadd.f32 %v4927, %v4928
    %v4930 = vpack.c.bf16 %v4827, %v4827
    %v4931 = vpack.c.bf16 %v4929, %v4929
    %4932 = vmatprep.subr.bf16.mxu0 %v2530
    %4933 = vmatpush1.bf16.msra.mxu0 %v2529
    %4934 = vmatprep.subr.bf16.mxu0 %v2534
    %4935 = vmatpush1.bf16.msra.mxu0 %v2533
    %4936 = vmatprep.subr.bf16.mxu0 %v2538
    %4937 = vmatpush1.bf16.msra.mxu0 %v2537
    %4938 = vmatprep.subr.bf16.mxu0 %v2542
    %4939 = vmatpush1.bf16.msra.mxu0 %v2541
    %4940 = vmatprep.subr.bf16.mxu0 %v2546
    %4941 = vmatpush1.bf16.msra.mxu0 %v2545
    %4942 = vmatprep.subr.bf16.mxu0 %v2550
    %4943 = vmatpush1.bf16.msra.mxu0 %v2549
    %4944 = vmatprep.subr.bf16.mxu0 %v2554
    %4945 = vmatpush1.bf16.msra.mxu0 %v2553
    %4946 = vmatprep.subr.bf16.mxu0 %v2558
    %4947 = vmatpush1.bf16.msra.mxu0 %v2557
    %4948 = vmatprep.subr.bf16.mxu0 %v2562
    %4949 = vmatpush1.bf16.msra.mxu0 %v2561
    %4950 = vmatprep.subr.bf16.mxu0 %v2566
    %4951 = vmatpush1.bf16.msra.mxu0 %v2565
    %4952 = vmatprep.subr.bf16.mxu0 %v2570
    %4953 = vmatpush1.bf16.msra.mxu0 %v2569
    %4954 = vmatprep.subr.bf16.mxu0 %v2574
    %4955 = vmatpush1.bf16.msra.mxu0 %v2573
    %4956 = vmatprep.subr.bf16.mxu0 %v2578
    %4957 = vmatpush1.bf16.msra.mxu0 %v2577
    %4958 = vmatprep.subr.bf16.mxu0 %v2582
    %4959 = vmatpush1.bf16.msra.mxu0 %v2581
    %4960 = vmatprep.subr.bf16.mxu0 %v2586
    %4961 = vmatpush1.bf16.msra.mxu0 %v2585
    %4962 = vmatprep.subr.bf16.mxu0 %v2590
    %4963 = vmatpush1.bf16.msra.mxu0 %v2589
    %4964 = vmatprep.mubr.bf16.mxu0 %v4931
    %4965 = vmatmul.mubr.bf16.gmra.mrb[0].mxu0 %v4930
    %v4966 = vpop.f32.mrb[0].mxu0
    %v4967 = vadd.f32 %v617, %v4966
    %v4968 = vpop.f32.mrb[0].mxu0
    %v4969 = vadd.f32 %v621, %v4968
    %v4970 = vpop.f32.mrb[0].mxu0
    %v4971 = vpop.f32.mrb[0].mxu0
    %4972 = vdwg.mxu0
    %4973 = vmatprep.subr.bf16.mxu0 %v2532
    %4974 = vmatpush1.bf16.msra.mxu0 %v2531
    %4975 = vmatprep.subr.bf16.mxu0 %v2536
    %4976 = vmatpush1.bf16.msra.mxu0 %v2535
    %4977 = vmatprep.subr.bf16.mxu0 %v2540
    %4978 = vmatpush1.bf16.msra.mxu0 %v2539
    %4979 = vmatprep.subr.bf16.mxu0 %v2544
    %4980 = vmatpush1.bf16.msra.mxu0 %v2543
    %4981 = vmatprep.subr.bf16.mxu0 %v2548
    %4982 = vmatpush1.bf16.msra.mxu0 %v2547
    %4983 = vmatprep.subr.bf16.mxu0 %v2552
    %4984 = vmatpush1.bf16.msra.mxu0 %v2551
    %4985 = vmatprep.subr.bf16.mxu0 %v2556
    %4986 = vmatpush1.bf16.msra.mxu0 %v2555
    %4987 = vmatprep.subr.bf16.mxu0 %v2560
    %4988 = vmatpush1.bf16.msra.mxu0 %v2559
    %4989 = vmatprep.subr.bf16.mxu0 %v2564
    %4990 = vmatpush1.bf16.msra.mxu0 %v2563
    %4991 = vmatprep.subr.bf16.mxu0 %v2568
    %4992 = vmatpush1.bf16.msra.mxu0 %v2567
    %4993 = vmatprep.subr.bf16.mxu0 %v2572
    %4994 = vmatpush1.bf16.msra.mxu0 %v2571
    %4995 = vmatprep.subr.bf16.mxu0 %v2576
    %4996 = vmatpush1.bf16.msra.mxu0 %v2575
    %4997 = vmatprep.subr.bf16.mxu0 %v2580
    %4998 = vmatpush1.bf16.msra.mxu0 %v2579
    %4999 = vmatprep.subr.bf16.mxu0 %v2584
    %5000 = vmatpush1.bf16.msra.mxu0 %v2583
    %5001 = vmatprep.subr.bf16.mxu0 %v2588
    %5002 = vmatpush1.bf16.msra.mxu0 %v2587
    %5003 = vmatprep.subr.bf16.mxu0 %v2592
    %5004 = vmatpush1.bf16.msra.mxu0 %v2591
    %5005 = vmatprep.mubr.bf16.mxu0 %v4931
    %5006 = vmatmul.mubr.bf16.gmra.mrb[0].mxu0 %v4930
    %v5007 = vpop.f32.mrb[0].mxu0
    %v5008 = vadd.f32 %v625, %v5007
    %v5009 = vpop.f32.mrb[0].mxu0
    %v5010 = vadd.f32 %v629, %v5009
    %v5011 = vpop.f32.mrb[0].mxu0
    %v5012 = vpop.f32.mrb[0].mxu0
    %5013 = vdwg.mxu0
    %v5014 = vxor.u32 %v4967, 2147483648
    %v5015 = vmul.f32 %v5014, 1.442695
    %v5016 = vpow.pop %v5015
    %v5017 = vadd.f32 %v5016, 1.0
    %v5018 = vrcp.pop %v5017
    %v5019 = vmul.f32 1.0, %v5018
    %v5020 = vxor.u32 %v4969, 2147483648
    %v5021 = vmul.f32 %v5020, 1.442695
    %v5022 = vpow.pop %v5021
    %v5023 = vadd.f32 %v5022, 1.0
    %v5024 = vrcp.pop %v5023
    %v5025 = vmul.f32 1.0, %v5024
    %v5026 = vmul.f32 %v5019, %v5010
    %v5027 = vadd.f32 %v5008, %v5026
    %v5028 = vtanh.pop %v5027
    %v5029 = vsub.f32 1.0, %v5025
    %v5030 = vmul.f32 %v5029, %v5028
    %v5031 = vmul.f32 %v5025, %v4929
    %v5032 = vadd.f32 %v5030, %v5031
    %v5033 = vxor.u32 %v5032, 2147483648
    %v5034 = vmul.f32 %v5033, 1.442695
    %v5035 = vpow.pop %v5034
    %v5036 = vadd.f32 %v5035, 1.0
    %v5037 = vrcp.pop %v5036
    %v5038 = vmul.f32 1.0, %v5037
    %v5039 = vmul.f32 %v5032, %v5038
    %vm5040 = vcmp.ge.f32.partialorder %v5032, -2.2
    %vm5041 = vcmp.lt.f32.partialorder %v5032, -1.8
    %vm5042 = vmand %vm5040, %vm5041
    %v5043 = vsel %vm5042, 1.0, 0.0
    %vm5044 = vcmp.ge.f32.partialorder %v5032, -1.8
    %vm5045 = vcmp.lt.f32.partialorder %v5032, -1.4
    %vm5046 = vmand %vm5044, %vm5045
    %v5047 = vsel %vm5046, 1.0, 0.0
    %vm5048 = vcmp.ge.f32.partialorder %v5032, -1.4
    %vm5049 = vcmp.lt.f32.partialorder %v5032, -1.0
    %vm5050 = vmand %vm5048, %vm5049
    %v5051 = vsel %vm5050, 1.0, 0.0
    %vm5052 = vcmp.ge.f32.partialorder %v5032, -1.0
    %vm5053 = vcmp.lt.f32.partialorder %v5032, -0.6
    %vm5054 = vmand %vm5052, %vm5053
    %v5055 = vsel %vm5054, 1.0, 0.0
    %vm5056 = vcmp.ge.f32.partialorder %v5032, -0.6
    %vm5057 = vcmp.lt.f32.partialorder %v5032, -0.2
    %vm5058 = vmand %vm5056, %vm5057
    %v5059 = vsel %vm5058, 1.0, 0.0
    %vm5060 = vcmp.ge.f32.partialorder %v5032, -0.2
    %vm5061 = vcmp.lt.f32.partialorder %v5032, 0.2
    %vm5062 = vmand %vm5060, %vm5061
    %v5063 = vsel %vm5062, 1.0, 0.0
    %vm5064 = vcmp.ge.f32.partialorder %v5032, 0.2
    %vm5065 = vcmp.lt.f32.partialorder %v5032, 0.6
    %vm5066 = vmand %vm5064, %vm5065
    %v5067 = vsel %vm5066, 1.0, 0.0
    %vm5068 = vcmp.ge.f32.partialorder %v5032, 0.6
    %vm5069 = vcmp.lt.f32.partialorder %v5032, 1.0
    %vm5070 = vmand %vm5068, %vm5069
    %v5071 = vsel %vm5070, 1.0, 0.0
    %vm5072 = vcmp.ge.f32.partialorder %v5032, 1.0
    %vm5073 = vcmp.lt.f32.partialorder %v5032, 1.4
    %vm5074 = vmand %vm5072, %vm5073
    %v5075 = vsel %vm5074, 1.0, 0.0
    %vm5076 = vcmp.ge.f32.partialorder %v5032, 1.4
    %vm5077 = vcmp.lt.f32.partialorder %v5032, 1.8
    %vm5078 = vmand %vm5076, %vm5077
    %v5079 = vsel %vm5078, 1.0, 0.0
    %vm5080 = vcmp.ge.f32.partialorder %v5032, 1.8
    %vm5081 = vcmp.lt.f32.partialorder %v5032, 2.2
    %vm5082 = vmand %vm5080, %vm5081
    %v5083 = vsel %vm5082, 1.0, 0.0
    %v5084 = vsub.f32 %v5032, -2.2
    %v5085 = vmul.f32 %v5084, %v5043
    %v5086 = vsub.f32 -1.4, %v5032
    %v5087 = vmul.f32 %v5086, %v5047
    %v5088 = vadd.f32 %v5085, %v5087
    %v5089 = vmul.f32 %v5088, 2.5
    %v5090 = vsub.f32 %v5032, -1.8
    %v5091 = vmul.f32 %v5090, %v5047
    %v5092 = vsub.f32 -1.0, %v5032
    %v5093 = vmul.f32 %v5092, %v5051
    %v5094 = vadd.f32 %v5091, %v5093
    %v5095 = vmul.f32 %v5094, 2.5
    %v5096 = vsub.f32 %v5032, -1.4
    %v5097 = vmul.f32 %v5096, %v5051
    %v5098 = vsub.f32 -0.6, %v5032
    %v5099 = vmul.f32 %v5098, %v5055
    %v5100 = vadd.f32 %v5097, %v5099
    %v5101 = vmul.f32 %v5100, 2.5
    %v5102 = vsub.f32 %v5032, -1.0
    %v5103 = vmul.f32 %v5102, %v5055
    %v5104 = vsub.f32 -0.2, %v5032
    %v5105 = vmul.f32 %v5104, %v5059
    %v5106 = vadd.f32 %v5103, %v5105
    %v5107 = vmul.f32 %v5106, 2.5
    %v5108 = vsub.f32 %v5032, -0.6
    %v5109 = vmul.f32 %v5108, %v5059
    %v5110 = vsub.f32 0.2, %v5032
    %v5111 = vmul.f32 %v5110, %v5063
    %v5112 = vadd.f32 %v5109, %v5111
    %v5113 = vmul.f32 %v5112, 2.5
    %v5114 = vsub.f32 %v5032, -0.2
    %v5115 = vmul.f32 %v5114, %v5063
    %v5116 = vsub.f32 0.6, %v5032
    %v5117 = vmul.f32 %v5116, %v5067
    %v5118 = vadd.f32 %v5115, %v5117
    %v5119 = vmul.f32 %v5118, 2.5
    %v5120 = vsub.f32 %v5032, 0.2
    %v5121 = vmul.f32 %v5120, %v5067
    %v5122 = vsub.f32 1.0, %v5032
    %v5123 = vmul.f32 %v5122, %v5071
    %v5124 = vadd.f32 %v5121, %v5123
    %v5125 = vmul.f32 %v5124, 2.5
    %v5126 = vsub.f32 %v5032, 0.6
    %v5127 = vmul.f32 %v5126, %v5071
    %v5128 = vsub.f32 1.4, %v5032
    %v5129 = vmul.f32 %v5128, %v5075
    %v5130 = vadd.f32 %v5127, %v5129
    %v5131 = vmul.f32 %v5130, 2.5
    %v5132 = vsub.f32 %v5032, 1.0
    %v5133 = vmul.f32 %v5132, %v5075
    %v5134 = vsub.f32 1.8, %v5032
    %v5135 = vmul.f32 %v5134, %v5079
    %v5136 = vadd.f32 %v5133, %v5135
    %v5137 = vmul.f32 %v5136, 2.5
    %v5138 = vsub.f32 %v5032, 1.4
    %v5139 = vmul.f32 %v5138, %v5079
    %v5140 = vsub.f32 2.2, %v5032
    %v5141 = vmul.f32 %v5140, %v5083
    %v5142 = vadd.f32 %v5139, %v5141
    %v5143 = vmul.f32 %v5142, 2.5
    %v5144 = vmul.f32 %v5084, %v5089
    %v5145 = vmul.f32 %v5092, %v5095
    %v5146 = vadd.f32 %v5144, %v5145
    %v5147 = vmul.f32 %v5146, 1.25
    %v5148 = vmul.f32 %v5090, %v5095
    %v5149 = vmul.f32 %v5098, %v5101
    %v5150 = vadd.f32 %v5148, %v5149
    %v5151 = vmul.f32 %v5150, 1.25
    %v5152 = vmul.f32 %v5096, %v5101
    %v5153 = vmul.f32 %v5104, %v5107
    %v5154 = vadd.f32 %v5152, %v5153
    %v5155 = vmul.f32 %v5154, 1.25
    %v5156 = vmul.f32 %v5102, %v5107
    %v5157 = vmul.f32 %v5110, %v5113
    %v5158 = vadd.f32 %v5156, %v5157
    %v5159 = vmul.f32 %v5158, 1.25
    %v5160 = vmul.f32 %v5108, %v5113
    %v5161 = vmul.f32 %v5116, %v5119
    %v5162 = vadd.f32 %v5160, %v5161
    %v5163 = vmul.f32 %v5162, 1.25
    %v5164 = vmul.f32 %v5114, %v5119
    %v5165 = vmul.f32 %v5122, %v5125
    %v5166 = vadd.f32 %v5164, %v5165
    %v5167 = vmul.f32 %v5166, 1.25
    %v5168 = vmul.f32 %v5120, %v5125
    %v5169 = vmul.f32 %v5128, %v5131
    %v5170 = vadd.f32 %v5168, %v5169
    %v5171 = vmul.f32 %v5170, 1.25
    %v5172 = vmul.f32 %v5126, %v5131
    %v5173 = vmul.f32 %v5134, %v5137
    %v5174 = vadd.f32 %v5172, %v5173
    %v5175 = vmul.f32 %v5174, 1.25
    %v5176 = vmul.f32 %v5132, %v5137
    %v5177 = vmul.f32 %v5140, %v5143
    %v5178 = vadd.f32 %v5176, %v5177
    %v5179 = vmul.f32 %v5178, 1.25
    %v5180 = vmul.f32 %v5084, %v5147
    %v5181 = vmul.f32 %v5098, %v5151
    %v5182 = vadd.f32 %v5180, %v5181
    %v5183 = vmul.f32 %v5182, 0.8333333
    %v5184 = vmul.f32 %v5090, %v5151
    %v5185 = vmul.f32 %v5104, %v5155
    %v5186 = vadd.f32 %v5184, %v5185
    %v5187 = vmul.f32 %v5186, 0.8333333
    %v5188 = vmul.f32 %v5096, %v5155
    %v5189 = vmul.f32 %v5110, %v5159
    %v5190 = vadd.f32 %v5188, %v5189
    %v5191 = vmul.f32 %v5190, 0.8333333
    %v5192 = vmul.f32 %v5102, %v5159
    %v5193 = vmul.f32 %v5116, %v5163
    %v5194 = vadd.f32 %v5192, %v5193
    %v5195 = vmul.f32 %v5194, 0.8333333
    %v5196 = vmul.f32 %v5108, %v5163
    %v5197 = vmul.f32 %v5122, %v5167
    %v5198 = vadd.f32 %v5196, %v5197
    %v5199 = vmul.f32 %v5198, 0.8333333
    %v5200 = vmul.f32 %v5114, %v5167
    %v5201 = vmul.f32 %v5128, %v5171
    %v5202 = vadd.f32 %v5200, %v5201
    %v5203 = vmul.f32 %v5202, 0.8333333
    %v5204 = vmul.f32 %v5120, %v5171
    %v5205 = vmul.f32 %v5134, %v5175
    %v5206 = vadd.f32 %v5204, %v5205
    %v5207 = vmul.f32 %v5206, 0.8333333
    %v5208 = vmul.f32 %v5126, %v5175
    %v5209 = vmul.f32 %v5140, %v5179
    %v5210 = vadd.f32 %v5208, %v5209
    %v5211 = vmul.f32 %v5210, 0.8333333
    %v5212 = vpack.c.bf16 %v5039, %v5039
    %v5213 = vpack.c.bf16 %v5183, %v5183
    %v5214 = vpack.c.bf16 %v5187, %v5187
    %v5215 = vpack.c.bf16 %v5191, %v5191
    %v5216 = vpack.c.bf16 %v5195, %v5195
    %v5217 = vpack.c.bf16 %v5199, %v5199
    %v5218 = vpack.c.bf16 %v5203, %v5203
    %v5219 = vpack.c.bf16 %v5207, %v5207
    %v5220 = vpack.c.bf16 %v5211, %v5211
    %v5221 = vld [vmem:[%s11] sm:$0xf]
    %v5222 = vld [vmem:[%s11 + $0x4] sm:$0xf]
    %v5223 = vld [vmem:[%s11 + $0x8] sm:$0xf]
    %v5224 = vld [vmem:[%s11 + $0xc] sm:$0xf]
    %v5225 = vld [vmem:[%s11 + $0x10] sm:$0xf]
    %v5226 = vld [vmem:[%s11 + $0x14] sm:$0xf]
    %v5227 = vld [vmem:[%s11 + $0x18] sm:$0xf]
    %v5228 = vld [vmem:[%s11 + $0x1c] sm:$0xf]
    %v5229 = vld [vmem:[%s11 + $0x20] sm:$0xf]
    %v5230 = vld [vmem:[%s11 + $0x24] sm:$0xf]
    %v5231 = vld [vmem:[%s11 + $0x28] sm:$0xf]
    %v5232 = vld [vmem:[%s11 + $0x2c] sm:$0xf]
    %v5233 = vld [vmem:[%s11 + $0x30] sm:$0xf]
    %v5234 = vld [vmem:[%s11 + $0x34] sm:$0xf]
    %v5235 = vld [vmem:[%s11 + $0x38] sm:$0xf]
    %v5236 = vld [vmem:[%s11 + $0x3c] sm:$0xf]
    %v5237 = vld [vmem:[%s11 + $0x40] sm:$0xf]
    %v5238 = vld [vmem:[%s11 + $0x44] sm:$0xf]
    %v5239 = vld [vmem:[%s11 + $0x48] sm:$0xf]
    %v5240 = vld [vmem:[%s11 + $0x4c] sm:$0xf]
    %v5241 = vld [vmem:[%s11 + $0x50] sm:$0xf]
    %v5242 = vld [vmem:[%s11 + $0x54] sm:$0xf]
    %v5243 = vld [vmem:[%s11 + $0x58] sm:$0xf]
    %v5244 = vld [vmem:[%s11 + $0x5c] sm:$0xf]
    %v5245 = vld [vmem:[%s11 + $0x60] sm:$0xf]
    %v5246 = vld [vmem:[%s11 + $0x64] sm:$0xf]
    %v5247 = vld [vmem:[%s11 + $0x68] sm:$0xf]
    %v5248 = vld [vmem:[%s11 + $0x6c] sm:$0xf]
    %v5249 = vld [vmem:[%s11 + $0x70] sm:$0xf]
    %v5250 = vld [vmem:[%s11 + $0x74] sm:$0xf]
    %v5251 = vld [vmem:[%s11 + $0x78] sm:$0xf]
    %v5252 = vld [vmem:[%s11 + $0x7c] sm:$0xf]
    %v5253 = vld [vmem:[%s11 + $0x80] sm:$0xf]
    %v5254 = vld [vmem:[%s11 + $0x84] sm:$0xf]
    %v5255 = vld [vmem:[%s11 + $0x88] sm:$0xf]
    %v5256 = vld [vmem:[%s11 + $0x8c] sm:$0xf]
    %v5257 = vld [vmem:[%s11 + $0x90] sm:$0xf]
    %v5258 = vld [vmem:[%s11 + $0x94] sm:$0xf]
    %v5259 = vld [vmem:[%s11 + $0x98] sm:$0xf]
    %v5260 = vld [vmem:[%s11 + $0x9c] sm:$0xf]
    %v5261 = vld [vmem:[%s11 + $0xa0] sm:$0xf]
    %v5262 = vld [vmem:[%s11 + $0xa4] sm:$0xf]
    %v5263 = vld [vmem:[%s11 + $0xa8] sm:$0xf]
    %v5264 = vld [vmem:[%s11 + $0xac] sm:$0xf]
    %v5265 = vld [vmem:[%s11 + $0xb0] sm:$0xf]
    %v5266 = vld [vmem:[%s11 + $0xb4] sm:$0xf]
    %v5267 = vld [vmem:[%s11 + $0xb8] sm:$0xf]
    %v5268 = vld [vmem:[%s11 + $0xbc] sm:$0xf]
    %v5269 = vld [vmem:[%s11 + $0xc0] sm:$0xf]
    %v5270 = vld [vmem:[%s11 + $0xc4] sm:$0xf]
    %v5271 = vld [vmem:[%s11 + $0xc8] sm:$0xf]
    %v5272 = vld [vmem:[%s11 + $0xcc] sm:$0xf]
    %v5273 = vld [vmem:[%s11 + $0xd0] sm:$0xf]
    %v5274 = vld [vmem:[%s11 + $0xd4] sm:$0xf]
    %v5275 = vld [vmem:[%s11 + $0xd8] sm:$0xf]
    %v5276 = vld [vmem:[%s11 + $0xdc] sm:$0xf]
    %v5277 = vld [vmem:[%s11 + $0xe0] sm:$0xf]
    %v5278 = vld [vmem:[%s11 + $0xe4] sm:$0xf]
    %v5279 = vld [vmem:[%s11 + $0xe8] sm:$0xf]
    %v5280 = vld [vmem:[%s11 + $0xec] sm:$0xf]
    %v5281 = vld [vmem:[%s11 + $0xf0] sm:$0xf]
    %v5282 = vld [vmem:[%s11 + $0xf4] sm:$0xf]
    %v5283 = vld [vmem:[%s11 + $0xf8] sm:$0xf]
    %v5284 = vld [vmem:[%s11 + $0xfc] sm:$0xf]
    %v5285 = vld [vmem:[%s11 + $0x100] sm:$0xf]
    %v5286 = vld [vmem:[%s11 + $0x104] sm:$0xf]
    %v5287 = vld [vmem:[%s11 + $0x108] sm:$0xf]
    %v5288 = vld [vmem:[%s11 + $0x10c] sm:$0xf]
    %v5289 = vld [vmem:[%s11 + $0x110] sm:$0xf]
    %v5290 = vld [vmem:[%s11 + $0x114] sm:$0xf]
    %v5291 = vld [vmem:[%s11 + $0x118] sm:$0xf]
    %v5292 = vld [vmem:[%s11 + $0x11c] sm:$0xf]
    %v5293 = vld [vmem:[%s11 + $0x120] sm:$0xf]
    %v5294 = vld [vmem:[%s11 + $0x124] sm:$0xf]
    %v5295 = vld [vmem:[%s11 + $0x128] sm:$0xf]
    %v5296 = vld [vmem:[%s11 + $0x12c] sm:$0xf]
    %v5297 = vld [vmem:[%s11 + $0x130] sm:$0xf]
    %v5298 = vld [vmem:[%s11 + $0x134] sm:$0xf]
    %v5299 = vld [vmem:[%s11 + $0x138] sm:$0xf]
    %v5300 = vld [vmem:[%s11 + $0x13c] sm:$0xf]
    %v5301 = vld [vmem:[%s11 + $0x140] sm:$0xf]
    %v5302 = vld [vmem:[%s11 + $0x144] sm:$0xf]
    %v5303 = vld [vmem:[%s11 + $0x148] sm:$0xf]
    %v5304 = vld [vmem:[%s11 + $0x14c] sm:$0xf]
    %v5305 = vld [vmem:[%s11 + $0x150] sm:$0xf]
    %v5306 = vld [vmem:[%s11 + $0x154] sm:$0xf]
    %v5307 = vld [vmem:[%s11 + $0x158] sm:$0xf]
    %v5308 = vld [vmem:[%s11 + $0x15c] sm:$0xf]
    %v5309 = vld [vmem:[%s11 + $0x160] sm:$0xf]
    %v5310 = vld [vmem:[%s11 + $0x164] sm:$0xf]
    %v5311 = vld [vmem:[%s11 + $0x168] sm:$0xf]
    %v5312 = vld [vmem:[%s11 + $0x16c] sm:$0xf]
    %v5313 = vld [vmem:[%s11 + $0x170] sm:$0xf]
    %v5314 = vld [vmem:[%s11 + $0x174] sm:$0xf]
    %v5315 = vld [vmem:[%s11 + $0x178] sm:$0xf]
    %v5316 = vld [vmem:[%s11 + $0x17c] sm:$0xf]
    %v5317 = vld [vmem:[%s11 + $0x180] sm:$0xf]
    %v5318 = vld [vmem:[%s11 + $0x184] sm:$0xf]
    %v5319 = vld [vmem:[%s11 + $0x188] sm:$0xf]
    %v5320 = vld [vmem:[%s11 + $0x18c] sm:$0xf]
    %v5321 = vld [vmem:[%s11 + $0x190] sm:$0xf]
    %v5322 = vld [vmem:[%s11 + $0x194] sm:$0xf]
    %v5323 = vld [vmem:[%s11 + $0x198] sm:$0xf]
    %v5324 = vld [vmem:[%s11 + $0x19c] sm:$0xf]
    %v5325 = vld [vmem:[%s11 + $0x1a0] sm:$0xf]
    %v5326 = vld [vmem:[%s11 + $0x1a4] sm:$0xf]
    %v5327 = vld [vmem:[%s11 + $0x1a8] sm:$0xf]
    %v5328 = vld [vmem:[%s11 + $0x1ac] sm:$0xf]
    %v5329 = vld [vmem:[%s11 + $0x1b0] sm:$0xf]
    %v5330 = vld [vmem:[%s11 + $0x1b4] sm:$0xf]
    %v5331 = vld [vmem:[%s11 + $0x1b8] sm:$0xf]
    %v5332 = vld [vmem:[%s11 + $0x1bc] sm:$0xf]
    %v5333 = vld [vmem:[%s11 + $0x1c0] sm:$0xf]
    %v5334 = vld [vmem:[%s11 + $0x1c4] sm:$0xf]
    %v5335 = vld [vmem:[%s11 + $0x1c8] sm:$0xf]
    %v5336 = vld [vmem:[%s11 + $0x1cc] sm:$0xf]
    %v5337 = vld [vmem:[%s11 + $0x1d0] sm:$0xf]
    %v5338 = vld [vmem:[%s11 + $0x1d4] sm:$0xf]
    %v5339 = vld [vmem:[%s11 + $0x1d8] sm:$0xf]
    %v5340 = vld [vmem:[%s11 + $0x1dc] sm:$0xf]
    %v5341 = vld [vmem:[%s11 + $0x1e0] sm:$0xf]
    %v5342 = vld [vmem:[%s11 + $0x1e4] sm:$0xf]
    %v5343 = vld [vmem:[%s11 + $0x1e8] sm:$0xf]
    %v5344 = vld [vmem:[%s11 + $0x1ec] sm:$0xf]
    %v5345 = vld [vmem:[%s11 + $0x1f0] sm:$0xf]
    %v5346 = vld [vmem:[%s11 + $0x1f4] sm:$0xf]
    %v5347 = vld [vmem:[%s11 + $0x1f8] sm:$0xf]
    %v5348 = vld [vmem:[%s11 + $0x1fc] sm:$0xf]
    %v5349 = vld [vmem:[%s11 + $0x200] sm:$0xf]
    %v5350 = vld [vmem:[%s11 + $0x204] sm:$0xf]
    %v5351 = vld [vmem:[%s11 + $0x208] sm:$0xf]
    %v5352 = vld [vmem:[%s11 + $0x20c] sm:$0xf]
    %v5353 = vld [vmem:[%s11 + $0x210] sm:$0xf]
    %v5354 = vld [vmem:[%s11 + $0x214] sm:$0xf]
    %v5355 = vld [vmem:[%s11 + $0x218] sm:$0xf]
    %v5356 = vld [vmem:[%s11 + $0x21c] sm:$0xf]
    %v5357 = vld [vmem:[%s11 + $0x220] sm:$0xf]
    %v5358 = vld [vmem:[%s11 + $0x224] sm:$0xf]
    %v5359 = vld [vmem:[%s11 + $0x228] sm:$0xf]
    %v5360 = vld [vmem:[%s11 + $0x22c] sm:$0xf]
    %v5361 = vld [vmem:[%s11 + $0x230] sm:$0xf]
    %v5362 = vld [vmem:[%s11 + $0x234] sm:$0xf]
    %v5363 = vld [vmem:[%s11 + $0x238] sm:$0xf]
    %v5364 = vld [vmem:[%s11 + $0x23c] sm:$0xf]
    %v5509 = vunpack.c.l.b16 %v5221
    %v5510 = vunpack.c.l.b16 %v5222
    %v5511 = vunpack.c.l.b16 %v5223
    %v5512 = vunpack.c.l.b16 %v5224
    %v5513 = vunpack.c.l.b16 %v5225
    %v5514 = vunpack.c.l.b16 %v5226
    %v5515 = vunpack.c.l.b16 %v5227
    %v5516 = vunpack.c.l.b16 %v5228
    %v5517 = vunpack.c.l.b16 %v5229
    %v5518 = vunpack.c.l.b16 %v5230
    %v5519 = vunpack.c.l.b16 %v5231
    %v5520 = vunpack.c.l.b16 %v5232
    %v5521 = vunpack.c.l.b16 %v5233
    %v5522 = vunpack.c.l.b16 %v5234
    %v5523 = vunpack.c.l.b16 %v5235
    %v5524 = vunpack.c.l.b16 %v5236
    %v5525 = vunpack.c.l.b16 %v5237
    %v5526 = vunpack.c.l.b16 %v5238
    %v5527 = vunpack.c.l.b16 %v5239
    %v5528 = vunpack.c.l.b16 %v5240
    %v5529 = vunpack.c.l.b16 %v5241
    %v5530 = vunpack.c.l.b16 %v5242
    %v5531 = vunpack.c.l.b16 %v5243
    %v5532 = vunpack.c.l.b16 %v5244
    %v5533 = vunpack.c.l.b16 %v5245
    %v5534 = vunpack.c.l.b16 %v5246
    %v5535 = vunpack.c.l.b16 %v5247
    %v5536 = vunpack.c.l.b16 %v5248
    %v5537 = vunpack.c.l.b16 %v5249
    %v5538 = vunpack.c.l.b16 %v5250
    %v5539 = vunpack.c.l.b16 %v5251
    %v5540 = vunpack.c.l.b16 %v5252
    %v5541 = vunpack.c.l.b16 %v5253
    %v5542 = vunpack.c.l.b16 %v5254
    %v5543 = vunpack.c.l.b16 %v5255
    %v5544 = vunpack.c.l.b16 %v5256
    %v5545 = vunpack.c.l.b16 %v5257
    %v5546 = vunpack.c.l.b16 %v5258
    %v5547 = vunpack.c.l.b16 %v5259
    %v5548 = vunpack.c.l.b16 %v5260
    %v5549 = vunpack.c.l.b16 %v5261
    %v5550 = vunpack.c.l.b16 %v5262
    %v5551 = vunpack.c.l.b16 %v5263
    %v5552 = vunpack.c.l.b16 %v5264
    %v5553 = vunpack.c.l.b16 %v5265
    %v5554 = vunpack.c.l.b16 %v5266
    %v5555 = vunpack.c.l.b16 %v5267
    %v5556 = vunpack.c.l.b16 %v5268
    %v5557 = vunpack.c.l.b16 %v5269
    %v5558 = vunpack.c.l.b16 %v5270
    %v5559 = vunpack.c.l.b16 %v5271
    %v5560 = vunpack.c.l.b16 %v5272
    %v5561 = vunpack.c.l.b16 %v5273
    %v5562 = vunpack.c.l.b16 %v5274
    %v5563 = vunpack.c.l.b16 %v5275
    %v5564 = vunpack.c.l.b16 %v5276
    %v5565 = vunpack.c.l.b16 %v5277
    %v5566 = vunpack.c.l.b16 %v5278
    %v5567 = vunpack.c.l.b16 %v5279
    %v5568 = vunpack.c.l.b16 %v5280
    %v5569 = vunpack.c.l.b16 %v5281
    %v5570 = vunpack.c.l.b16 %v5282
    %v5571 = vunpack.c.l.b16 %v5283
    %v5572 = vunpack.c.l.b16 %v5284
    %v5573 = vunpack.c.l.b16 %v5285
    %v5574 = vunpack.c.l.b16 %v5286
    %v5575 = vunpack.c.l.b16 %v5287
    %v5576 = vunpack.c.l.b16 %v5288
    %v5577 = vunpack.c.l.b16 %v5289
    %v5578 = vunpack.c.l.b16 %v5290
    %v5579 = vunpack.c.l.b16 %v5291
    %v5580 = vunpack.c.l.b16 %v5292
    %v5581 = vunpack.c.l.b16 %v5293
    %v5582 = vunpack.c.l.b16 %v5294
    %v5583 = vunpack.c.l.b16 %v5295
    %v5584 = vunpack.c.l.b16 %v5296
    %v5585 = vunpack.c.l.b16 %v5297
    %v5586 = vunpack.c.l.b16 %v5298
    %v5587 = vunpack.c.l.b16 %v5299
    %v5588 = vunpack.c.l.b16 %v5300
    %v5589 = vunpack.c.l.b16 %v5301
    %v5590 = vunpack.c.l.b16 %v5302
    %v5591 = vunpack.c.l.b16 %v5303
    %v5592 = vunpack.c.l.b16 %v5304
    %v5593 = vunpack.c.l.b16 %v5305
    %v5594 = vunpack.c.l.b16 %v5306
    %v5595 = vunpack.c.l.b16 %v5307
    %v5596 = vunpack.c.l.b16 %v5308
    %v5597 = vunpack.c.l.b16 %v5309
    %v5598 = vunpack.c.l.b16 %v5310
    %v5599 = vunpack.c.l.b16 %v5311
    %v5600 = vunpack.c.l.b16 %v5312
    %v5601 = vunpack.c.l.b16 %v5313
    %v5602 = vunpack.c.l.b16 %v5314
    %v5603 = vunpack.c.l.b16 %v5315
    %v5604 = vunpack.c.l.b16 %v5316
    %v5605 = vunpack.c.l.b16 %v5317
    %v5606 = vunpack.c.l.b16 %v5318
    %v5607 = vunpack.c.l.b16 %v5319
    %v5608 = vunpack.c.l.b16 %v5320
    %v5609 = vunpack.c.l.b16 %v5321
    %v5610 = vunpack.c.l.b16 %v5322
    %v5611 = vunpack.c.l.b16 %v5323
    %v5612 = vunpack.c.l.b16 %v5324
    %v5613 = vunpack.c.l.b16 %v5325
    %v5614 = vunpack.c.l.b16 %v5326
    %v5615 = vunpack.c.l.b16 %v5327
    %v5616 = vunpack.c.l.b16 %v5328
    %v5617 = vunpack.c.l.b16 %v5329
    %v5618 = vunpack.c.l.b16 %v5330
    %v5619 = vunpack.c.l.b16 %v5331
    %v5620 = vunpack.c.l.b16 %v5332
    %v5621 = vunpack.c.l.b16 %v5333
    %v5622 = vunpack.c.l.b16 %v5334
    %v5623 = vunpack.c.l.b16 %v5335
    %v5624 = vunpack.c.l.b16 %v5336
    %v5625 = vunpack.c.l.b16 %v5337
    %v5626 = vunpack.c.l.b16 %v5338
    %v5627 = vunpack.c.l.b16 %v5339
    %v5628 = vunpack.c.l.b16 %v5340
    %v5629 = vunpack.c.l.b16 %v5341
    %v5630 = vunpack.c.l.b16 %v5342
    %v5631 = vunpack.c.l.b16 %v5343
    %v5632 = vunpack.c.l.b16 %v5344
    %v5633 = vunpack.c.l.b16 %v5345
    %v5634 = vunpack.c.l.b16 %v5346
    %v5635 = vunpack.c.l.b16 %v5347
    %v5636 = vunpack.c.l.b16 %v5348
    %v5637 = vunpack.c.l.b16 %v5349
    %v5638 = vunpack.c.l.b16 %v5350
    %v5639 = vunpack.c.l.b16 %v5351
    %v5640 = vunpack.c.l.b16 %v5352
    %v5641 = vunpack.c.l.b16 %v5353
    %v5642 = vunpack.c.l.b16 %v5354
    %v5643 = vunpack.c.l.b16 %v5355
    %v5644 = vunpack.c.l.b16 %v5356
    %v5645 = vunpack.c.l.b16 %v5357
    %v5646 = vunpack.c.l.b16 %v5358
    %v5647 = vunpack.c.l.b16 %v5359
    %v5648 = vunpack.c.l.b16 %v5360
    %v5649 = vunpack.c.l.b16 %v5361
    %v5650 = vunpack.c.l.b16 %v5362
    %v5651 = vunpack.c.l.b16 %v5363
    %v5652 = vunpack.c.l.b16 %v5364
    %v5653 = vpack.c.b16 %v5510, %v5509
    %v5654 = vpack.c.b16 %v5512, %v5511
    %v5655 = vpack.c.b16 %v5514, %v5513
    %v5656 = vpack.c.b16 %v5516, %v5515
    %v5657 = vpack.c.b16 %v5518, %v5517
    %v5658 = vpack.c.b16 %v5520, %v5519
    %v5659 = vpack.c.b16 %v5522, %v5521
    %v5660 = vpack.c.b16 %v5524, %v5523
    %v5661 = vpack.c.b16 %v5526, %v5525
    %v5662 = vpack.c.b16 %v5528, %v5527
    %v5663 = vpack.c.b16 %v5530, %v5529
    %v5664 = vpack.c.b16 %v5532, %v5531
    %v5665 = vpack.c.b16 %v5534, %v5533
    %v5666 = vpack.c.b16 %v5536, %v5535
    %v5667 = vpack.c.b16 %v5538, %v5537
    %v5668 = vpack.c.b16 %v5540, %v5539
    %v5669 = vpack.c.b16 %v5542, %v5541
    %v5670 = vpack.c.b16 %v5544, %v5543
    %v5671 = vpack.c.b16 %v5546, %v5545
    %v5672 = vpack.c.b16 %v5548, %v5547
    %v5673 = vpack.c.b16 %v5550, %v5549
    %v5674 = vpack.c.b16 %v5552, %v5551
    %v5675 = vpack.c.b16 %v5554, %v5553
    %v5676 = vpack.c.b16 %v5556, %v5555
    %v5677 = vpack.c.b16 %v5558, %v5557
    %v5678 = vpack.c.b16 %v5560, %v5559
    %v5679 = vpack.c.b16 %v5562, %v5561
    %v5680 = vpack.c.b16 %v5564, %v5563
    %v5681 = vpack.c.b16 %v5566, %v5565
    %v5682 = vpack.c.b16 %v5568, %v5567
    %v5683 = vpack.c.b16 %v5570, %v5569
    %v5684 = vpack.c.b16 %v5572, %v5571
    %v5685 = vpack.c.b16 %v5574, %v5573
    %v5686 = vpack.c.b16 %v5576, %v5575
    %v5687 = vpack.c.b16 %v5578, %v5577
    %v5688 = vpack.c.b16 %v5580, %v5579
    %v5689 = vpack.c.b16 %v5582, %v5581
    %v5690 = vpack.c.b16 %v5584, %v5583
    %v5691 = vpack.c.b16 %v5586, %v5585
    %v5692 = vpack.c.b16 %v5588, %v5587
    %v5693 = vpack.c.b16 %v5590, %v5589
    %v5694 = vpack.c.b16 %v5592, %v5591
    %v5695 = vpack.c.b16 %v5594, %v5593
    %v5696 = vpack.c.b16 %v5596, %v5595
    %v5697 = vpack.c.b16 %v5598, %v5597
    %v5698 = vpack.c.b16 %v5600, %v5599
    %v5699 = vpack.c.b16 %v5602, %v5601
    %v5700 = vpack.c.b16 %v5604, %v5603
    %v5701 = vpack.c.b16 %v5606, %v5605
    %v5702 = vpack.c.b16 %v5608, %v5607
    %v5703 = vpack.c.b16 %v5610, %v5609
    %v5704 = vpack.c.b16 %v5612, %v5611
    %v5705 = vpack.c.b16 %v5614, %v5613
    %v5706 = vpack.c.b16 %v5616, %v5615
    %v5707 = vpack.c.b16 %v5618, %v5617
    %v5708 = vpack.c.b16 %v5620, %v5619
    %v5709 = vpack.c.b16 %v5622, %v5621
    %v5710 = vpack.c.b16 %v5624, %v5623
    %v5711 = vpack.c.b16 %v5626, %v5625
    %v5712 = vpack.c.b16 %v5628, %v5627
    %v5713 = vpack.c.b16 %v5630, %v5629
    %v5714 = vpack.c.b16 %v5632, %v5631
    %v5715 = vpack.c.b16 %v5634, %v5633
    %v5716 = vpack.c.b16 %v5636, %v5635
    %v5717 = vpack.c.b16 %v5638, %v5637
    %v5718 = vpack.c.b16 %v5640, %v5639
    %v5719 = vpack.c.b16 %v5642, %v5641
    %v5720 = vpack.c.b16 %v5644, %v5643
    %v5721 = vpack.c.b16 %v5646, %v5645
    %v5722 = vpack.c.b16 %v5648, %v5647
    %v5723 = vpack.c.b16 %v5650, %v5649
    %v5724 = vpack.c.b16 %v5652, %v5651
    %5797 = vmatprep.subr.bf16.mxu0 0
    %5798 = vmatpush1.bf16.msra.mxu0 %v5653
    %5799 = vmatprep.subr.bf16.mxu0 0
    %5800 = vmatpush1.bf16.msra.mxu0 %v5654
    %5801 = vmatprep.subr.bf16.mxu0 0
    %5802 = vmatpush1.bf16.msra.mxu0 %v5655
    %5803 = vmatprep.subr.bf16.mxu0 0
    %5804 = vmatpush1.bf16.msra.mxu0 %v5656
    %5805 = vmatprep.subr.bf16.mxu0 0
    %5806 = vmatpush1.bf16.msra.mxu0 %v5657
    %5807 = vmatprep.subr.bf16.mxu0 0
    %5808 = vmatpush1.bf16.msra.mxu0 %v5658
    %5809 = vmatprep.subr.bf16.mxu0 0
    %5810 = vmatpush1.bf16.msra.mxu0 %v5659
    %5811 = vmatprep.subr.bf16.mxu0 0
    %5812 = vmatpush1.bf16.msra.mxu0 %v5660
    %5813 = vmatprep.subr.bf16.mxu0 0
    %5814 = vmatpush1.bf16.msra.mxu0 %v5661
    %5815 = vmatprep.subr.bf16.mxu0 0
    %5816 = vmatpush1.bf16.msra.mxu0 %v5662
    %5817 = vmatprep.subr.bf16.mxu0 0
    %5818 = vmatpush1.bf16.msra.mxu0 %v5663
    %5819 = vmatprep.subr.bf16.mxu0 0
    %5820 = vmatpush1.bf16.msra.mxu0 %v5664
    %5821 = vmatprep.subr.bf16.mxu0 0
    %5822 = vmatpush1.bf16.msra.mxu0 %v5665
    %5823 = vmatprep.subr.bf16.mxu0 0
    %5824 = vmatpush1.bf16.msra.mxu0 %v5666
    %5825 = vmatprep.subr.bf16.mxu0 0
    %5826 = vmatpush1.bf16.msra.mxu0 %v5667
    %5827 = vmatprep.subr.bf16.mxu0 0
    %5828 = vmatpush1.bf16.msra.mxu0 %v5668
    %5829 = vmatprep.mubr.bf16.mxu0 %v5213
    %5830 = vmatmul.mubr.bf16.gmra.mrb[0].mxu0 %v5212
    %v5831 = vpop.f32.mrb[0].mxu0
    %v5832 = vadd.f32 0.0, %v5831
    %v5833 = vpop.f32.mrb[0].mxu0
    %v5834 = vpop.f32.mrb[0].mxu0
    %v5835 = vpop.f32.mrb[0].mxu0
    %5836 = vdwg.mxu0
    %5837 = vmatprep.subr.bf16.mxu0 0
    %5838 = vmatpush1.bf16.msra.mxu0 %v5669
    %5839 = vmatprep.subr.bf16.mxu0 0
    %5840 = vmatpush1.bf16.msra.mxu0 %v5670
    %5841 = vmatprep.subr.bf16.mxu0 0
    %5842 = vmatpush1.bf16.msra.mxu0 %v5671
    %5843 = vmatprep.subr.bf16.mxu0 0
    %5844 = vmatpush1.bf16.msra.mxu0 %v5672
    %5845 = vmatprep.subr.bf16.mxu0 0
    %5846 = vmatpush1.bf16.msra.mxu0 %v5673
    %5847 = vmatprep.subr.bf16.mxu0 0
    %5848 = vmatpush1.bf16.msra.mxu0 %v5674
    %5849 = vmatprep.subr.bf16.mxu0 0
    %5850 = vmatpush1.bf16.msra.mxu0 %v5675
    %5851 = vmatprep.subr.bf16.mxu0 0
    %5852 = vmatpush1.bf16.msra.mxu0 %v5676
    %5853 = vmatprep.subr.bf16.mxu0 0
    %5854 = vmatpush1.bf16.msra.mxu0 %v5677
    %5855 = vmatprep.subr.bf16.mxu0 0
    %5856 = vmatpush1.bf16.msra.mxu0 %v5678
    %5857 = vmatprep.subr.bf16.mxu0 0
    %5858 = vmatpush1.bf16.msra.mxu0 %v5679
    %5859 = vmatprep.subr.bf16.mxu0 0
    %5860 = vmatpush1.bf16.msra.mxu0 %v5680
    %5861 = vmatprep.subr.bf16.mxu0 0
    %5862 = vmatpush1.bf16.msra.mxu0 %v5681
    %5863 = vmatprep.subr.bf16.mxu0 0
    %5864 = vmatpush1.bf16.msra.mxu0 %v5682
    %5865 = vmatprep.subr.bf16.mxu0 0
    %5866 = vmatpush1.bf16.msra.mxu0 %v5683
    %5867 = vmatprep.subr.bf16.mxu0 0
    %5868 = vmatpush1.bf16.msra.mxu0 %v5684
    %5869 = vmatprep.mubr.bf16.mxu0 %v5215
    %5870 = vmatmul.mubr.bf16.gmra.mrb[0].mxu0 %v5214
    %v5871 = vpop.f32.mrb[0].mxu0
    %v5872 = vadd.f32 %v5832, %v5871
    %v5873 = vpop.f32.mrb[0].mxu0
    %v5874 = vpop.f32.mrb[0].mxu0
    %v5875 = vpop.f32.mrb[0].mxu0
    %5876 = vdwg.mxu0
    %5877 = vmatprep.subr.bf16.mxu0 0
    %5878 = vmatpush1.bf16.msra.mxu0 %v5685
    %5879 = vmatprep.subr.bf16.mxu0 0
    %5880 = vmatpush1.bf16.msra.mxu0 %v5686
    %5881 = vmatprep.subr.bf16.mxu0 0
    %5882 = vmatpush1.bf16.msra.mxu0 %v5687
    %5883 = vmatprep.subr.bf16.mxu0 0
    %5884 = vmatpush1.bf16.msra.mxu0 %v5688
    %5885 = vmatprep.subr.bf16.mxu0 0
    %5886 = vmatpush1.bf16.msra.mxu0 %v5689
    %5887 = vmatprep.subr.bf16.mxu0 0
    %5888 = vmatpush1.bf16.msra.mxu0 %v5690
    %5889 = vmatprep.subr.bf16.mxu0 0
    %5890 = vmatpush1.bf16.msra.mxu0 %v5691
    %5891 = vmatprep.subr.bf16.mxu0 0
    %5892 = vmatpush1.bf16.msra.mxu0 %v5692
    %5893 = vmatprep.subr.bf16.mxu0 0
    %5894 = vmatpush1.bf16.msra.mxu0 %v5693
    %5895 = vmatprep.subr.bf16.mxu0 0
    %5896 = vmatpush1.bf16.msra.mxu0 %v5694
    %5897 = vmatprep.subr.bf16.mxu0 0
    %5898 = vmatpush1.bf16.msra.mxu0 %v5695
    %5899 = vmatprep.subr.bf16.mxu0 0
    %5900 = vmatpush1.bf16.msra.mxu0 %v5696
    %5901 = vmatprep.subr.bf16.mxu0 0
    %5902 = vmatpush1.bf16.msra.mxu0 %v5697
    %5903 = vmatprep.subr.bf16.mxu0 0
    %5904 = vmatpush1.bf16.msra.mxu0 %v5698
    %5905 = vmatprep.subr.bf16.mxu0 0
    %5906 = vmatpush1.bf16.msra.mxu0 %v5699
    %5907 = vmatprep.subr.bf16.mxu0 0
    %5908 = vmatpush1.bf16.msra.mxu0 %v5700
    %5909 = vmatprep.mubr.bf16.mxu0 %v5217
    %5910 = vmatmul.mubr.bf16.gmra.mrb[0].mxu0 %v5216
    %v5911 = vpop.f32.mrb[0].mxu0
    %v5912 = vadd.f32 %v5872, %v5911
    %v5913 = vpop.f32.mrb[0].mxu0
    %v5914 = vpop.f32.mrb[0].mxu0
    %v5915 = vpop.f32.mrb[0].mxu0
    %5916 = vdwg.mxu0
    %5917 = vmatprep.subr.bf16.mxu0 0
    %5918 = vmatpush1.bf16.msra.mxu0 %v5701
    %5919 = vmatprep.subr.bf16.mxu0 0
    %5920 = vmatpush1.bf16.msra.mxu0 %v5702
    %5921 = vmatprep.subr.bf16.mxu0 0
    %5922 = vmatpush1.bf16.msra.mxu0 %v5703
    %5923 = vmatprep.subr.bf16.mxu0 0
    %5924 = vmatpush1.bf16.msra.mxu0 %v5704
    %5925 = vmatprep.subr.bf16.mxu0 0
    %5926 = vmatpush1.bf16.msra.mxu0 %v5705
    %5927 = vmatprep.subr.bf16.mxu0 0
    %5928 = vmatpush1.bf16.msra.mxu0 %v5706
    %5929 = vmatprep.subr.bf16.mxu0 0
    %5930 = vmatpush1.bf16.msra.mxu0 %v5707
    %5931 = vmatprep.subr.bf16.mxu0 0
    %5932 = vmatpush1.bf16.msra.mxu0 %v5708
    %5933 = vmatprep.subr.bf16.mxu0 0
    %5934 = vmatpush1.bf16.msra.mxu0 %v5709
    %5935 = vmatprep.subr.bf16.mxu0 0
    %5936 = vmatpush1.bf16.msra.mxu0 %v5710
    %5937 = vmatprep.subr.bf16.mxu0 0
    %5938 = vmatpush1.bf16.msra.mxu0 %v5711
    %5939 = vmatprep.subr.bf16.mxu0 0
    %5940 = vmatpush1.bf16.msra.mxu0 %v5712
    %5941 = vmatprep.subr.bf16.mxu0 0
    %5942 = vmatpush1.bf16.msra.mxu0 %v5713
    %5943 = vmatprep.subr.bf16.mxu0 0
    %5944 = vmatpush1.bf16.msra.mxu0 %v5714
    %5945 = vmatprep.subr.bf16.mxu0 0
    %5946 = vmatpush1.bf16.msra.mxu0 %v5715
    %5947 = vmatprep.subr.bf16.mxu0 0
    %5948 = vmatpush1.bf16.msra.mxu0 %v5716
    %5949 = vmatprep.mubr.bf16.mxu0 %v5219
    %5950 = vmatmul.mubr.bf16.gmra.mrb[0].mxu0 %v5218
    %v5951 = vpop.f32.mrb[0].mxu0
    %v5952 = vadd.f32 %v5912, %v5951
    %v5953 = vpop.f32.mrb[0].mxu0
    %v5954 = vpop.f32.mrb[0].mxu0
    %v5955 = vpop.f32.mrb[0].mxu0
    %5956 = vdwg.mxu0
    %5957 = vmatprep.subr.bf16.mxu0 0
    %5958 = vmatpush1.bf16.msra.mxu0 %v5717
    %5959 = vmatprep.subr.bf16.mxu0 0
    %5960 = vmatpush1.bf16.msra.mxu0 %v5718
    %5961 = vmatprep.subr.bf16.mxu0 0
    %5962 = vmatpush1.bf16.msra.mxu0 %v5719
    %5963 = vmatprep.subr.bf16.mxu0 0
    %5964 = vmatpush1.bf16.msra.mxu0 %v5720
    %5965 = vmatprep.subr.bf16.mxu0 0
    %5966 = vmatpush1.bf16.msra.mxu0 %v5721
    %5967 = vmatprep.subr.bf16.mxu0 0
    %5968 = vmatpush1.bf16.msra.mxu0 %v5722
    %5969 = vmatprep.subr.bf16.mxu0 0
    %5970 = vmatpush1.bf16.msra.mxu0 %v5723
    %5971 = vmatprep.subr.bf16.mxu0 0
    %5972 = vmatpush1.bf16.msra.mxu0 %v5724
    %5973 = vmatprep.subr.bf16.mxu0 0
    %5974 = vmatpush1.bf16.msra.mxu0 0
    %5975 = vmatprep.subr.bf16.mxu0 0
    %5976 = vmatpush1.bf16.msra.mxu0 0
    %5977 = vmatprep.subr.bf16.mxu0 0
    %5978 = vmatpush1.bf16.msra.mxu0 0
    %5979 = vmatprep.subr.bf16.mxu0 0
    %5980 = vmatpush1.bf16.msra.mxu0 0
    %5981 = vmatprep.subr.bf16.mxu0 0
    %5982 = vmatpush1.bf16.msra.mxu0 0
    %5983 = vmatprep.subr.bf16.mxu0 0
    %5984 = vmatpush1.bf16.msra.mxu0 0
    %5985 = vmatprep.subr.bf16.mxu0 0
    %5986 = vmatpush1.bf16.msra.mxu0 0
    %5987 = vmatprep.subr.bf16.mxu0 0
    %5988 = vmatpush1.bf16.msra.mxu0 0
    %5989 = vmatprep.mubr.bf16.mxu0 0
    %5990 = vmatmul.mubr.bf16.gmra.mrb[0].mxu0 %v5220
    %v5991 = vpop.f32.mrb[0].mxu0
    %v5992 = vadd.f32 %v5952, %v5991
    %v5993 = vpop.f32.mrb[0].mxu0
    %v5994 = vpop.f32.mrb[0].mxu0
    %v5995 = vpop.f32.mrb[0].mxu0
    %5996 = vdwg.mxu0
    %v5997 = vxor.u32 %v5992, 2147483648
    %v5998 = vmul.f32 %v5997, 1.442695
    %v5999 = vpow.pop %v5998
    %v6000 = vadd.f32 %v5999, 1.0
    %v6001 = vrcp.pop %v6000
    %v6002 = vmul.f32 1.0, %v6001
    %v6003 = vmul.f32 %v5992, %v6002
    %vm6004 = vcmp.ge.f32.partialorder %v5992, -2.2
    %vm6005 = vcmp.lt.f32.partialorder %v5992, -1.8
    %vm6006 = vmand %vm6004, %vm6005
    %v6007 = vsel %vm6006, 1.0, 0.0
    %vm6008 = vcmp.ge.f32.partialorder %v5992, -1.8
    %vm6009 = vcmp.lt.f32.partialorder %v5992, -1.4
    %vm6010 = vmand %vm6008, %vm6009
    %v6011 = vsel %vm6010, 1.0, 0.0
    %vm6012 = vcmp.ge.f32.partialorder %v5992, -1.4
    %vm6013 = vcmp.lt.f32.partialorder %v5992, -1.0
    %vm6014 = vmand %vm6012, %vm6013
    %v6015 = vsel %vm6014, 1.0, 0.0
    %vm6016 = vcmp.ge.f32.partialorder %v5992, -1.0
    %vm6017 = vcmp.lt.f32.partialorder %v5992, -0.6
    %vm6018 = vmand %vm6016, %vm6017
    %v6019 = vsel %vm6018, 1.0, 0.0
    %vm6020 = vcmp.ge.f32.partialorder %v5992, -0.6
    %vm6021 = vcmp.lt.f32.partialorder %v5992, -0.2
    %vm6022 = vmand %vm6020, %vm6021
    %v6023 = vsel %vm6022, 1.0, 0.0
    %vm6024 = vcmp.ge.f32.partialorder %v5992, -0.2
    %vm6025 = vcmp.lt.f32.partialorder %v5992, 0.2
    %vm6026 = vmand %vm6024, %vm6025
    %v6027 = vsel %vm6026, 1.0, 0.0
    %vm6028 = vcmp.ge.f32.partialorder %v5992, 0.2
    %vm6029 = vcmp.lt.f32.partialorder %v5992, 0.6
    %vm6030 = vmand %vm6028, %vm6029
    %v6031 = vsel %vm6030, 1.0, 0.0
    %vm6032 = vcmp.ge.f32.partialorder %v5992, 0.6
    %vm6033 = vcmp.lt.f32.partialorder %v5992, 1.0
    %vm6034 = vmand %vm6032, %vm6033
    %v6035 = vsel %vm6034, 1.0, 0.0
    %vm6036 = vcmp.ge.f32.partialorder %v5992, 1.0
    %vm6037 = vcmp.lt.f32.partialorder %v5992, 1.4
    %vm6038 = vmand %vm6036, %vm6037
    %v6039 = vsel %vm6038, 1.0, 0.0
    %vm6040 = vcmp.ge.f32.partialorder %v5992, 1.4
    %vm6041 = vcmp.lt.f32.partialorder %v5992, 1.8
    %vm6042 = vmand %vm6040, %vm6041
    %v6043 = vsel %vm6042, 1.0, 0.0
    %vm6044 = vcmp.ge.f32.partialorder %v5992, 1.8
    %vm6045 = vcmp.lt.f32.partialorder %v5992, 2.2
    %vm6046 = vmand %vm6044, %vm6045
    %v6047 = vsel %vm6046, 1.0, 0.0
    %v6048 = vsub.f32 %v5992, -2.2
    %v6049 = vmul.f32 %v6048, %v6007
    %v6050 = vsub.f32 -1.4, %v5992
    %v6051 = vmul.f32 %v6050, %v6011
    %v6052 = vadd.f32 %v6049, %v6051
    %v6053 = vmul.f32 %v6052, 2.5
    %v6054 = vsub.f32 %v5992, -1.8
    %v6055 = vmul.f32 %v6054, %v6011
    %v6056 = vsub.f32 -1.0, %v5992
    %v6057 = vmul.f32 %v6056, %v6015
    %v6058 = vadd.f32 %v6055, %v6057
    %v6059 = vmul.f32 %v6058, 2.5
    %v6060 = vsub.f32 %v5992, -1.4
    %v6061 = vmul.f32 %v6060, %v6015
    %v6062 = vsub.f32 -0.6, %v5992
    %v6063 = vmul.f32 %v6062, %v6019
    %v6064 = vadd.f32 %v6061, %v6063
    %v6065 = vmul.f32 %v6064, 2.5
    %v6066 = vsub.f32 %v5992, -1.0
    %v6067 = vmul.f32 %v6066, %v6019
    %v6068 = vsub.f32 -0.2, %v5992
    %v6069 = vmul.f32 %v6068, %v6023
    %v6070 = vadd.f32 %v6067, %v6069
    %v6071 = vmul.f32 %v6070, 2.5
    %v6072 = vsub.f32 %v5992, -0.6
    %v6073 = vmul.f32 %v6072, %v6023
    %v6074 = vsub.f32 0.2, %v5992
    %v6075 = vmul.f32 %v6074, %v6027
    %v6076 = vadd.f32 %v6073, %v6075
    %v6077 = vmul.f32 %v6076, 2.5
    %v6078 = vsub.f32 %v5992, -0.2
    %v6079 = vmul.f32 %v6078, %v6027
    %v6080 = vsub.f32 0.6, %v5992
    %v6081 = vmul.f32 %v6080, %v6031
    %v6082 = vadd.f32 %v6079, %v6081
    %v6083 = vmul.f32 %v6082, 2.5
    %v6084 = vsub.f32 %v5992, 0.2
    %v6085 = vmul.f32 %v6084, %v6031
    %v6086 = vsub.f32 1.0, %v5992
    %v6087 = vmul.f32 %v6086, %v6035
    %v6088 = vadd.f32 %v6085, %v6087
    %v6089 = vmul.f32 %v6088, 2.5
    %v6090 = vsub.f32 %v5992, 0.6
    %v6091 = vmul.f32 %v6090, %v6035
    %v6092 = vsub.f32 1.4, %v5992
    %v6093 = vmul.f32 %v6092, %v6039
    %v6094 = vadd.f32 %v6091, %v6093
    %v6095 = vmul.f32 %v6094, 2.5
    %v6096 = vsub.f32 %v5992, 1.0
    %v6097 = vmul.f32 %v6096, %v6039
    %v6098 = vsub.f32 1.8, %v5992
    %v6099 = vmul.f32 %v6098, %v6043
    %v6100 = vadd.f32 %v6097, %v6099
    %v6101 = vmul.f32 %v6100, 2.5
    %v6102 = vsub.f32 %v5992, 1.4
    %v6103 = vmul.f32 %v6102, %v6043
    %v6104 = vsub.f32 2.2, %v5992
    %v6105 = vmul.f32 %v6104, %v6047
    %v6106 = vadd.f32 %v6103, %v6105
    %v6107 = vmul.f32 %v6106, 2.5
    %v6108 = vmul.f32 %v6048, %v6053
    %v6109 = vmul.f32 %v6056, %v6059
    %v6110 = vadd.f32 %v6108, %v6109
    %v6111 = vmul.f32 %v6110, 1.25
    %v6112 = vmul.f32 %v6054, %v6059
    %v6113 = vmul.f32 %v6062, %v6065
    %v6114 = vadd.f32 %v6112, %v6113
    %v6115 = vmul.f32 %v6114, 1.25
    %v6116 = vmul.f32 %v6060, %v6065
    %v6117 = vmul.f32 %v6068, %v6071
    %v6118 = vadd.f32 %v6116, %v6117
    %v6119 = vmul.f32 %v6118, 1.25
    %v6120 = vmul.f32 %v6066, %v6071
    %v6121 = vmul.f32 %v6074, %v6077
    %v6122 = vadd.f32 %v6120, %v6121
    %v6123 = vmul.f32 %v6122, 1.25
    %v6124 = vmul.f32 %v6072, %v6077
    %v6125 = vmul.f32 %v6080, %v6083
    %v6126 = vadd.f32 %v6124, %v6125
    %v6127 = vmul.f32 %v6126, 1.25
    %v6128 = vmul.f32 %v6078, %v6083
    %v6129 = vmul.f32 %v6086, %v6089
    %v6130 = vadd.f32 %v6128, %v6129
    %v6131 = vmul.f32 %v6130, 1.25
    %v6132 = vmul.f32 %v6084, %v6089
    %v6133 = vmul.f32 %v6092, %v6095
    %v6134 = vadd.f32 %v6132, %v6133
    %v6135 = vmul.f32 %v6134, 1.25
    %v6136 = vmul.f32 %v6090, %v6095
    %v6137 = vmul.f32 %v6098, %v6101
    %v6138 = vadd.f32 %v6136, %v6137
    %v6139 = vmul.f32 %v6138, 1.25
    %v6140 = vmul.f32 %v6096, %v6101
    %v6141 = vmul.f32 %v6104, %v6107
    %v6142 = vadd.f32 %v6140, %v6141
    %v6143 = vmul.f32 %v6142, 1.25
    %v6144 = vmul.f32 %v6048, %v6111
    %v6145 = vmul.f32 %v6062, %v6115
    %v6146 = vadd.f32 %v6144, %v6145
    %v6147 = vmul.f32 %v6146, 0.8333333
    %v6148 = vmul.f32 %v6054, %v6115
    %v6149 = vmul.f32 %v6068, %v6119
    %v6150 = vadd.f32 %v6148, %v6149
    %v6151 = vmul.f32 %v6150, 0.8333333
    %v6152 = vmul.f32 %v6060, %v6119
    %v6153 = vmul.f32 %v6074, %v6123
    %v6154 = vadd.f32 %v6152, %v6153
    %v6155 = vmul.f32 %v6154, 0.8333333
    %v6156 = vmul.f32 %v6066, %v6123
    %v6157 = vmul.f32 %v6080, %v6127
    %v6158 = vadd.f32 %v6156, %v6157
    %v6159 = vmul.f32 %v6158, 0.8333333
    %v6160 = vmul.f32 %v6072, %v6127
    %v6161 = vmul.f32 %v6086, %v6131
    %v6162 = vadd.f32 %v6160, %v6161
    %v6163 = vmul.f32 %v6162, 0.8333333
    %v6164 = vmul.f32 %v6078, %v6131
    %v6165 = vmul.f32 %v6092, %v6135
    %v6166 = vadd.f32 %v6164, %v6165
    %v6167 = vmul.f32 %v6166, 0.8333333
    %v6168 = vmul.f32 %v6084, %v6135
    %v6169 = vmul.f32 %v6098, %v6139
    %v6170 = vadd.f32 %v6168, %v6169
    %v6171 = vmul.f32 %v6170, 0.8333333
    %v6172 = vmul.f32 %v6090, %v6139
    %v6173 = vmul.f32 %v6104, %v6143
    %v6174 = vadd.f32 %v6172, %v6173
    %v6175 = vmul.f32 %v6174, 0.8333333
    %6177 = vrot.lane.b32.xlu0 %v6147, 64
    %v6178 = vpop.permute.xlu0 %6177
    %6181 = vrot.lane.b32.xlu0 %v6155, 64
    %v6182 = vpop.permute.xlu0 %6181
    %6185 = vrot.lane.b32.xlu0 %v6163, 64
    %v6186 = vpop.permute.xlu0 %6185
    %6189 = vrot.lane.b32.xlu0 %v6171, 64
    %v6190 = vpop.permute.xlu0 %6189
    %vm6192 = vcmask 523264
    %v6193 = vsel %vm6192, %v6003, %v6178
    %v6194 = vsel %vm6192, %v6151, %v6182
    %v6195 = vsel %vm6192, %v6159, %v6186
    %v6196 = vsel %vm6192, %v6167, %v6190
    %v6197 = vpack.c.bf16 %v6193, %v6193
    %v6198 = vpack.c.bf16 %v6194, %v6194
    %v6199 = vpack.c.bf16 %v6195, %v6195
    %v6200 = vpack.c.bf16 %v6196, %v6196
    %v6201 = vpack.c.bf16 %v6175, %v6175
    %v6202 = vld [vmem:[%s12] sm:$0xf]
    %v6203 = vld [vmem:[%s12 + $0x4] sm:$0xf]
    %v6204 = vld [vmem:[%s12 + $0x8] sm:$0xf]
    %v6205 = vld [vmem:[%s12 + $0xc] sm:$0xf]
    %v6206 = vld [vmem:[%s12 + $0x10] sm:$0xf]
    %v6207 = vld [vmem:[%s12 + $0x14] sm:$0xf]
    %v6208 = vld [vmem:[%s12 + $0x18] sm:$0xf]
    %v6209 = vld [vmem:[%s12 + $0x1c] sm:$0xf]
    %v6210 = vld [vmem:[%s12 + $0x20] sm:$0xf]
    %v6211 = vld [vmem:[%s12 + $0x24] sm:$0xf]
    %v6212 = vld [vmem:[%s12 + $0x28] sm:$0xf]
    %v6213 = vld [vmem:[%s12 + $0x2c] sm:$0xf]
    %v6214 = vld [vmem:[%s12 + $0x30] sm:$0xf]
    %v6215 = vld [vmem:[%s12 + $0x34] sm:$0xf]
    %v6216 = vld [vmem:[%s12 + $0x38] sm:$0xf]
    %v6217 = vld [vmem:[%s12 + $0x3c] sm:$0xf]
    %v6218 = vld [vmem:[%s12 + $0x40] sm:$0xf]
    %v6219 = vld [vmem:[%s12 + $0x44] sm:$0xf]
    %v6220 = vld [vmem:[%s12 + $0x48] sm:$0xf]
    %v6221 = vld [vmem:[%s12 + $0x4c] sm:$0xf]
    %v6222 = vld [vmem:[%s12 + $0x50] sm:$0xf]
    %v6223 = vld [vmem:[%s12 + $0x54] sm:$0xf]
    %v6224 = vld [vmem:[%s12 + $0x58] sm:$0xf]
    %v6225 = vld [vmem:[%s12 + $0x5c] sm:$0xf]
    %v6226 = vld [vmem:[%s12 + $0x60] sm:$0xf]
    %v6227 = vld [vmem:[%s12 + $0x64] sm:$0xf]
    %v6228 = vld [vmem:[%s12 + $0x68] sm:$0xf]
    %v6229 = vld [vmem:[%s12 + $0x6c] sm:$0xf]
    %v6230 = vld [vmem:[%s12 + $0x70] sm:$0xf]
    %v6231 = vld [vmem:[%s12 + $0x74] sm:$0xf]
    %v6232 = vld [vmem:[%s12 + $0x78] sm:$0xf]
    %v6233 = vld [vmem:[%s12 + $0x7c] sm:$0xf]
    %v6234 = vld [vmem:[%s12 + $0x80] sm:$0xf]
    %v6235 = vld [vmem:[%s12 + $0x84] sm:$0xf]
    %v6236 = vld [vmem:[%s12 + $0x88] sm:$0xf]
    %v6237 = vld [vmem:[%s12 + $0x8c] sm:$0xf]
    %v6238 = vld [vmem:[%s12 + $0x90] sm:$0xf]
    %v6239 = vld [vmem:[%s12 + $0x94] sm:$0xf]
    %v6240 = vld [vmem:[%s12 + $0x98] sm:$0xf]
    %v6241 = vld [vmem:[%s12 + $0x9c] sm:$0xf]
    %v6242 = vld [vmem:[%s12 + $0xa0] sm:$0xf]
    %v6243 = vld [vmem:[%s12 + $0xa4] sm:$0xf]
    %v6244 = vld [vmem:[%s12 + $0xa8] sm:$0xf]
    %v6245 = vld [vmem:[%s12 + $0xac] sm:$0xf]
    %v6246 = vld [vmem:[%s12 + $0xb0] sm:$0xf]
    %v6247 = vld [vmem:[%s12 + $0xb4] sm:$0xf]
    %v6248 = vld [vmem:[%s12 + $0xb8] sm:$0xf]
    %v6249 = vld [vmem:[%s12 + $0xbc] sm:$0xf]
    %v6250 = vld [vmem:[%s12 + $0xc0] sm:$0xf]
    %v6251 = vld [vmem:[%s12 + $0xc4] sm:$0xf]
    %v6252 = vld [vmem:[%s12 + $0xc8] sm:$0xf]
    %v6253 = vld [vmem:[%s12 + $0xcc] sm:$0xf]
    %v6254 = vld [vmem:[%s12 + $0xd0] sm:$0xf]
    %v6255 = vld [vmem:[%s12 + $0xd4] sm:$0xf]
    %v6256 = vld [vmem:[%s12 + $0xd8] sm:$0xf]
    %v6257 = vld [vmem:[%s12 + $0xdc] sm:$0xf]
    %v6258 = vld [vmem:[%s12 + $0xe0] sm:$0xf]
    %v6259 = vld [vmem:[%s12 + $0xe4] sm:$0xf]
    %v6260 = vld [vmem:[%s12 + $0xe8] sm:$0xf]
    %v6261 = vld [vmem:[%s12 + $0xec] sm:$0xf]
    %v6262 = vld [vmem:[%s12 + $0xf0] sm:$0xf]
    %v6263 = vld [vmem:[%s12 + $0xf4] sm:$0xf]
    %v6264 = vld [vmem:[%s12 + $0xf8] sm:$0xf]
    %v6265 = vld [vmem:[%s12 + $0xfc] sm:$0xf]
    %v6266 = vld [vmem:[%s12 + $0x100] sm:$0xf]
    %v6267 = vld [vmem:[%s12 + $0x104] sm:$0xf]
    %v6268 = vld [vmem:[%s12 + $0x108] sm:$0xf]
    %v6269 = vld [vmem:[%s12 + $0x10c] sm:$0xf]
    %v6270 = vld [vmem:[%s12 + $0x110] sm:$0xf]
    %v6271 = vld [vmem:[%s12 + $0x114] sm:$0xf]
    %v6272 = vld [vmem:[%s12 + $0x118] sm:$0xf]
    %v6273 = vld [vmem:[%s12 + $0x11c] sm:$0xf]
    %v6346 = vunpack.c.l.b16 %v6202
    %v6347 = vunpack.c.l.b16 %v6203
    %v6348 = vunpack.c.l.b16 %v6204
    %v6349 = vunpack.c.l.b16 %v6205
    %v6350 = vunpack.c.l.b16 %v6206
    %v6351 = vunpack.c.l.b16 %v6207
    %v6352 = vunpack.c.l.b16 %v6208
    %v6353 = vunpack.c.l.b16 %v6209
    %v6354 = vunpack.c.l.b16 %v6210
    %v6355 = vunpack.c.l.b16 %v6211
    %v6356 = vunpack.c.l.b16 %v6212
    %v6357 = vunpack.c.l.b16 %v6213
    %v6358 = vunpack.c.l.b16 %v6214
    %v6359 = vunpack.c.l.b16 %v6215
    %v6360 = vunpack.c.l.b16 %v6216
    %v6361 = vunpack.c.l.b16 %v6217
    %v6362 = vunpack.c.l.b16 %v6218
    %v6363 = vunpack.c.l.b16 %v6219
    %v6364 = vunpack.c.l.b16 %v6220
    %v6365 = vunpack.c.l.b16 %v6221
    %v6366 = vunpack.c.l.b16 %v6222
    %v6367 = vunpack.c.l.b16 %v6223
    %v6368 = vunpack.c.l.b16 %v6224
    %v6369 = vunpack.c.l.b16 %v6225
    %v6370 = vunpack.c.l.b16 %v6226
    %v6371 = vunpack.c.l.b16 %v6227
    %v6372 = vunpack.c.l.b16 %v6228
    %v6373 = vunpack.c.l.b16 %v6229
    %v6374 = vunpack.c.l.b16 %v6230
    %v6375 = vunpack.c.l.b16 %v6231
    %v6376 = vunpack.c.l.b16 %v6232
    %v6377 = vunpack.c.l.b16 %v6233
    %v6378 = vunpack.c.l.b16 %v6234
    %v6379 = vunpack.c.l.b16 %v6235
    %v6380 = vunpack.c.l.b16 %v6236
    %v6381 = vunpack.c.l.b16 %v6237
    %v6382 = vunpack.c.l.b16 %v6238
    %v6383 = vunpack.c.l.b16 %v6239
    %v6384 = vunpack.c.l.b16 %v6240
    %v6385 = vunpack.c.l.b16 %v6241
    %v6386 = vunpack.c.l.b16 %v6242
    %v6387 = vunpack.c.l.b16 %v6243
    %v6388 = vunpack.c.l.b16 %v6244
    %v6389 = vunpack.c.l.b16 %v6245
    %v6390 = vunpack.c.l.b16 %v6246
    %v6391 = vunpack.c.l.b16 %v6247
    %v6392 = vunpack.c.l.b16 %v6248
    %v6393 = vunpack.c.l.b16 %v6249
    %v6394 = vunpack.c.l.b16 %v6250
    %v6395 = vunpack.c.l.b16 %v6251
    %v6396 = vunpack.c.l.b16 %v6252
    %v6397 = vunpack.c.l.b16 %v6253
    %v6398 = vunpack.c.l.b16 %v6254
    %v6399 = vunpack.c.l.b16 %v6255
    %v6400 = vunpack.c.l.b16 %v6256
    %v6401 = vunpack.c.l.b16 %v6257
    %v6402 = vunpack.c.l.b16 %v6258
    %v6403 = vunpack.c.l.b16 %v6259
    %v6404 = vunpack.c.l.b16 %v6260
    %v6405 = vunpack.c.l.b16 %v6261
    %v6406 = vunpack.c.l.b16 %v6262
    %v6407 = vunpack.c.l.b16 %v6263
    %v6408 = vunpack.c.l.b16 %v6264
    %v6409 = vunpack.c.l.b16 %v6265
    %v6410 = vunpack.c.l.b16 %v6266
    %v6411 = vunpack.c.l.b16 %v6267
    %v6412 = vunpack.c.l.b16 %v6268
    %v6413 = vunpack.c.l.b16 %v6269
    %v6414 = vunpack.c.l.b16 %v6270
    %v6415 = vunpack.c.l.b16 %v6271
    %v6416 = vunpack.c.l.b16 %v6272
    %v6417 = vunpack.c.l.b16 %v6273
    %v6418 = vpack.c.b16 %v6347, %v6346
    %v6419 = vpack.c.b16 %v6349, %v6348
    %v6420 = vpack.c.b16 %v6351, %v6350
    %v6421 = vpack.c.b16 %v6353, %v6352
    %v6422 = vpack.c.b16 %v6355, %v6354
    %v6423 = vpack.c.b16 %v6357, %v6356
    %v6424 = vpack.c.b16 %v6359, %v6358
    %v6425 = vpack.c.b16 %v6361, %v6360
    %v6426 = vpack.c.b16 %v6363, %v6362
    %v6427 = vpack.c.b16 %v6365, %v6364
    %v6428 = vpack.c.b16 %v6367, %v6366
    %v6429 = vpack.c.b16 %v6369, %v6368
    %v6430 = vpack.c.b16 %v6371, %v6370
    %v6431 = vpack.c.b16 %v6373, %v6372
    %v6432 = vpack.c.b16 %v6375, %v6374
    %v6433 = vpack.c.b16 %v6377, %v6376
    %v6434 = vpack.c.b16 %v6379, %v6378
    %v6435 = vpack.c.b16 %v6381, %v6380
    %v6436 = vpack.c.b16 %v6383, %v6382
    %v6437 = vpack.c.b16 %v6385, %v6384
    %v6438 = vpack.c.b16 %v6387, %v6386
    %v6439 = vpack.c.b16 %v6389, %v6388
    %v6440 = vpack.c.b16 %v6391, %v6390
    %v6441 = vpack.c.b16 %v6393, %v6392
    %v6442 = vpack.c.b16 %v6395, %v6394
    %v6443 = vpack.c.b16 %v6397, %v6396
    %v6444 = vpack.c.b16 %v6399, %v6398
    %v6445 = vpack.c.b16 %v6401, %v6400
    %v6446 = vpack.c.b16 %v6403, %v6402
    %v6447 = vpack.c.b16 %v6405, %v6404
    %v6448 = vpack.c.b16 %v6407, %v6406
    %v6449 = vpack.c.b16 %v6409, %v6408
    %v6450 = vpack.c.b16 %v6411, %v6410
    %v6451 = vpack.c.b16 %v6413, %v6412
    %v6452 = vpack.c.b16 %v6415, %v6414
    %v6453 = vpack.c.b16 %v6417, %v6416
    %v6491 = vsel %vm6192, %v6201, 0
    %6493 = vmatprep.subr.bf16.mxu0 0
    %6494 = vmatpush1.bf16.msra.mxu0 %v6418
    %6495 = vmatprep.subr.bf16.mxu0 0
    %6496 = vmatpush1.bf16.msra.mxu0 %v6419
    %6497 = vmatprep.subr.bf16.mxu0 0
    %6498 = vmatpush1.bf16.msra.mxu0 %v6420
    %6499 = vmatprep.subr.bf16.mxu0 0
    %6500 = vmatpush1.bf16.msra.mxu0 %v6421
    %6501 = vmatprep.subr.bf16.mxu0 0
    %6502 = vmatpush1.bf16.msra.mxu0 %v6422
    %6503 = vmatprep.subr.bf16.mxu0 0
    %6504 = vmatpush1.bf16.msra.mxu0 %v6423
    %6505 = vmatprep.subr.bf16.mxu0 0
    %6506 = vmatpush1.bf16.msra.mxu0 %v6424
    %6507 = vmatprep.subr.bf16.mxu0 0
    %6508 = vmatpush1.bf16.msra.mxu0 %v6425
    %6509 = vmatprep.subr.bf16.mxu0 0
    %6510 = vmatpush1.bf16.msra.mxu0 %v6426
    %6511 = vmatprep.subr.bf16.mxu0 0
    %6512 = vmatpush1.bf16.msra.mxu0 %v6427
    %6513 = vmatprep.subr.bf16.mxu0 0
    %6514 = vmatpush1.bf16.msra.mxu0 %v6428
    %6515 = vmatprep.subr.bf16.mxu0 0
    %6516 = vmatpush1.bf16.msra.mxu0 %v6429
    %6517 = vmatprep.subr.bf16.mxu0 0
    %6518 = vmatpush1.bf16.msra.mxu0 %v6430
    %6519 = vmatprep.subr.bf16.mxu0 0
    %6520 = vmatpush1.bf16.msra.mxu0 %v6431
    %6521 = vmatprep.subr.bf16.mxu0 0
    %6522 = vmatpush1.bf16.msra.mxu0 %v6432
    %6523 = vmatprep.subr.bf16.mxu0 0
    %6524 = vmatpush1.bf16.msra.mxu0 %v6433
    %6525 = vmatprep.mubr.bf16.mxu0 %v6198
    %6526 = vmatmul.mubr.bf16.gmra.mrb[0].mxu0 %v6197
    %v6527 = vpop.f32.mrb[0].mxu0
    %v6528 = vadd.f32 0.0, %v6527
    %v6529 = vpop.f32.mrb[0].mxu0
    %v6530 = vpop.f32.mrb[0].mxu0
    %v6531 = vpop.f32.mrb[0].mxu0
    %6532 = vdwg.mxu0
    %6533 = vmatprep.subr.bf16.mxu0 0
    %6534 = vmatpush1.bf16.msra.mxu0 %v6434
    %6535 = vmatprep.subr.bf16.mxu0 0
    %6536 = vmatpush1.bf16.msra.mxu0 %v6435
    %6537 = vmatprep.subr.bf16.mxu0 0
    %6538 = vmatpush1.bf16.msra.mxu0 %v6436
    %6539 = vmatprep.subr.bf16.mxu0 0
    %6540 = vmatpush1.bf16.msra.mxu0 %v6437
    %6541 = vmatprep.subr.bf16.mxu0 0
    %6542 = vmatpush1.bf16.msra.mxu0 %v6438
    %6543 = vmatprep.subr.bf16.mxu0 0
    %6544 = vmatpush1.bf16.msra.mxu0 %v6439
    %6545 = vmatprep.subr.bf16.mxu0 0
    %6546 = vmatpush1.bf16.msra.mxu0 %v6440
    %6547 = vmatprep.subr.bf16.mxu0 0
    %6548 = vmatpush1.bf16.msra.mxu0 %v6441
    %6549 = vmatprep.subr.bf16.mxu0 0
    %6550 = vmatpush1.bf16.msra.mxu0 %v6442
    %6551 = vmatprep.subr.bf16.mxu0 0
    %6552 = vmatpush1.bf16.msra.mxu0 %v6443
    %6553 = vmatprep.subr.bf16.mxu0 0
    %6554 = vmatpush1.bf16.msra.mxu0 %v6444
    %6555 = vmatprep.subr.bf16.mxu0 0
    %6556 = vmatpush1.bf16.msra.mxu0 %v6445
    %6557 = vmatprep.subr.bf16.mxu0 0
    %6558 = vmatpush1.bf16.msra.mxu0 %v6446
    %6559 = vmatprep.subr.bf16.mxu0 0
    %6560 = vmatpush1.bf16.msra.mxu0 %v6447
    %6561 = vmatprep.subr.bf16.mxu0 0
    %6562 = vmatpush1.bf16.msra.mxu0 %v6448
    %6563 = vmatprep.subr.bf16.mxu0 0
    %6564 = vmatpush1.bf16.msra.mxu0 %v6449
    %6565 = vmatprep.mubr.bf16.mxu0 %v6200
    %6566 = vmatmul.mubr.bf16.gmra.mrb[0].mxu0 %v6199
    %v6567 = vpop.f32.mrb[0].mxu0
    %v6568 = vadd.f32 %v6528, %v6567
    %v6569 = vpop.f32.mrb[0].mxu0
    %v6570 = vpop.f32.mrb[0].mxu0
    %v6571 = vpop.f32.mrb[0].mxu0
    %6572 = vdwg.mxu0
    %6573 = vmatprep.subr.bf16.mxu0 0
    %6574 = vmatpush1.bf16.msra.mxu0 %v6450
    %6575 = vmatprep.subr.bf16.mxu0 0
    %6576 = vmatpush1.bf16.msra.mxu0 %v6451
    %6577 = vmatprep.subr.bf16.mxu0 0
    %6578 = vmatpush1.bf16.msra.mxu0 %v6452
    %6579 = vmatprep.subr.bf16.mxu0 0
    %6580 = vmatpush1.bf16.msra.mxu0 %v6453
    %6581 = vmatprep.subr.bf16.mxu0 0
    %6582 = vmatpush1.bf16.msra.mxu0 0
    %6583 = vmatprep.subr.bf16.mxu0 0
    %6584 = vmatpush1.bf16.msra.mxu0 0
    %6585 = vmatprep.subr.bf16.mxu0 0
    %6586 = vmatpush1.bf16.msra.mxu0 0
    %6587 = vmatprep.subr.bf16.mxu0 0
    %6588 = vmatpush1.bf16.msra.mxu0 0
    %6589 = vmatprep.subr.bf16.mxu0 0
    %6590 = vmatpush1.bf16.msra.mxu0 0
    %6591 = vmatprep.subr.bf16.mxu0 0
    %6592 = vmatpush1.bf16.msra.mxu0 0
    %6593 = vmatprep.subr.bf16.mxu0 0
    %6594 = vmatpush1.bf16.msra.mxu0 0
    %6595 = vmatprep.subr.bf16.mxu0 0
    %6596 = vmatpush1.bf16.msra.mxu0 0
    %6597 = vmatprep.subr.bf16.mxu0 0
    %6598 = vmatpush1.bf16.msra.mxu0 0
    %6599 = vmatprep.subr.bf16.mxu0 0
    %6600 = vmatpush1.bf16.msra.mxu0 0
    %6601 = vmatprep.subr.bf16.mxu0 0
    %6602 = vmatpush1.bf16.msra.mxu0 0
    %6603 = vmatprep.subr.bf16.mxu0 0
    %6604 = vmatpush1.bf16.msra.mxu0 0
    %6605 = vmatprep.mubr.bf16.mxu0 0
    %6606 = vmatmul.mubr.bf16.gmra.mrb[0].mxu0 %v6491
    %v6607 = vpop.f32.mrb[0].mxu0
    %v6608 = vadd.f32 %v6568, %v6607
    %v6609 = vpop.f32.mrb[0].mxu0
    %v6610 = vpop.f32.mrb[0].mxu0
    %v6611 = vpop.f32.mrb[0].mxu0
    %6612 = vdwg.mxu0
    %v6613 = vxor.u32 %v6608, 2147483648
    %v6614 = vmul.f32 %v6613, 1.442695
    %v6615 = vpow.pop %v6614
    %v6616 = vadd.f32 %v6615, 1.0
    %v6617 = vrcp.pop %v6616
    %v6618 = vmul.f32 1.0, %v6617
    %6619 = vst [vmem:[#allocation9] sm:$0xff] %v6618
    // Predicated region
    $region66: #{tpu_custom_call.1} parent=1 // pred_check
      _
    $region67: #{tpu_custom_call.1} parent=1 // pred_check_branch
      %6621 = sbr.rel (0) target = $region69
    $region68: #{tpu_custom_call.1} parent=1 // pred_region
      %s6623 = ssub.s32 128, 128
      %6624 = vsyncadd [#allocation5], %s6623
      %s6626 = sshll.u32 [#allocation9], 4
      %s6627 = int_to_ptr.vmem [resolvable:$true] %s6626
      %6629 = dma.vmem_to_hbm [thread:$0]  %s6627, 128, %s13, [#allocation5]
    $region69: #{tpu_custom_call.1} parent=1 // pred_fallthru
      _
    // Predicated region
    $region70: #{tpu_custom_call.1} parent=1 // pred_check
      _
    $region71: #{tpu_custom_call.1} parent=1 // pred_check_branch
      %6631 = sbr.rel (0) target = $region73
    $region72: #{tpu_custom_call.1} parent=1 // pred_region
      %6632 = dma.done [#allocation5], 128
    $region73: #{tpu_custom_call.1} parent=1 // pred_fallthru
      _
    %6633 = vsyncpa [#allocation4], 1
    %6634 = vsyncpa [#allocation7], 1
    %6635 = vsyncpa [#allocation5], 1

</llo_original>
